<compile_context>
chip_gen: v7x
topology: tpu7x:2x2x1
jax: 0.10.0
libtpu: 0.0.40
codegen_flags: <defaults>
</compile_context>

<pallas_src>
import functools
import math

import jax
import jax.numpy as jnp
from jax.experimental import pallas as pl
from jax.experimental.pallas import tpu as pltpu


# ----------------------------------------------------------------------------
# Fused kernel
# ----------------------------------------------------------------------------

def _layernorm(x, g, b, eps):
    x = x.astype(jnp.float32)
    mu = jnp.mean(x, axis=-1, keepdims=True)
    var = jnp.mean(jnp.square(x - mu), axis=-1, keepdims=True)
    return (x - mu) * jax.lax.rsqrt(var + eps) * g + b


def _fused_kernel(*refs, depth_block, num_heads, embed_dim, num_obj, obj_len,
                  seq_obj, pred_cls, eps):
    if pred_cls:
        (x_ctx_ref, emb_ref, xobj0_ref, norm_gb_ref,
         wqkv_ref, bqkv_ref, wo_ref, w1_ref, w2_ref, vec_ref,
         pool_ref, cls_gb_ref, cls_w_ref, cls_b_ref,
         out_ref, cls_ref, ctx_vmem) = refs
    else:
        (x_ctx_ref, emb_ref, xobj0_ref, norm_gb_ref,
         wqkv_ref, bqkv_ref, wo_ref, w1_ref, w2_ref, vec_ref,
         out_ref, ctx_vmem) = refs

    C, H, S = embed_dim, num_heads, seq_obj
    chunk = pl.program_id(1)

    # ---- first chunk of each batch element: build resident state ------------
    @pl.when(chunk == 0)
    def _init():
        # (x + pos_embed + time_embed) -> LayerNorm, kept resident in VMEM (bf16)
        xc = x_ctx_ref[0].astype(jnp.float32) + emb_ref[0].astype(jnp.float32)
        ctx_vmem[...] = _layernorm(xc, norm_gb_ref[0:1, :], norm_gb_ref[1:2, :],
                                   eps).astype(jnp.bfloat16)
        # object token stream starts from the (bg +) object embeddings
        out_ref[0] = xobj0_ref[0].astype(out_ref.dtype)

    x = out_ref[0].astype(jnp.float32)       # (S, C) resident object stream
    ctx_bf = ctx_vmem[...]                   # (Sc, C) bf16 normalized context

    for l in range(depth_block):             # static unroll over layers in this chunk
        vl = vec_ref[l]                      # (10, 4C): ln_g[0:3], ln_b[3:6], bo[6:8], b1[8], b2[9]

        def attention(xq_bf, xkv_bf, i, l=l, vl=vl):
            base = 3 * H * i
            heads = []
            for h in range(H):               # MXU has no batch dim; unrolled heads
                wq = wqkv_ref[l, base + h]           # (C, hd) bf16 (1/sqrt(hd) folded)
                wk = wqkv_ref[l, base + H + h]
                wv = wqkv_ref[l, base + 2 * H + h]
                q = jnp.dot(xq_bf, wq, preferred_element_type=jnp.float32) \
                    + bqkv_ref[l, base + h]
                k = jnp.dot(xkv_bf, wk, preferred_element_type=jnp.float32) \
                    + bqkv_ref[l, base + H + h]
                v = jnp.dot(xkv_bf, wv, preferred_element_type=jnp.float32) \
                    + bqkv_ref[l, base + 2 * H + h]
                s = jax.lax.dot_general(q.astype(jnp.bfloat16), k.astype(jnp.bfloat16),
                                        (((1,), (1,)), ((), ())),
                                        preferred_element_type=jnp.float32)
                s = jnp.exp(s - jnp.max(s, axis=-1, keepdims=True))
                s = s * pl.reciprocal(jnp.sum(s, axis=-1, keepdims=True), approx=True)
                heads.append(jnp.dot(s.astype(jnp.bfloat16), v.astype(jnp.bfloat16),
                                     preferred_element_type=jnp.float32))
            # single lane-concatenate + ONE full-width output projection
            o = jnp.concatenate(heads, axis=-1)                  # (Sq, C)
            y = jnp.dot(o.astype(jnp.bfloat16), wo_ref[l, i],
                        preferred_element_type=jnp.float32)
            return y + vl[6 + i:7 + i, :C]

        # self-attention (pre-norm); bf16 cast done once and reused for q and kv
        h_bf = _layernorm(x, vl[0:1, :C], vl[3:4, :C], eps).astype(jnp.bfloat16)
        x = x + attention(h_bf, h_bf, 0)
        # cross-attention to the (pre-normalized, bf16-resident) context
        h_bf = _layernorm(x, vl[1:2, :C], vl[4:5, :C], eps).astype(jnp.bfloat16)
        x = x + attention(h_bf, ctx_bf, 1)
        # MLP
        hm = _layernorm(x, vl[2:3, :C], vl[5:6, :C], eps)
        m = jnp.dot(hm.astype(jnp.bfloat16), w1_ref[l],
                    preferred_element_type=jnp.float32) + vl[8:9, :]
        # TODO(synk): reference nn.GELU() is exact erf; tanh approximation used here
        # (guaranteed Mosaic lowering), ~1e-3 relative mismatch.
        m = jax.nn.gelu(m)
        x = x + jnp.dot(m.astype(jnp.bfloat16), w2_ref[l],
                        preferred_element_type=jnp.float32) + vl[9:10, :C]

    out_ref[0] = x.astype(out_ref.dtype)

    if pred_cls:
        @pl.when(chunk == pl.num_programs(1) - 1)
        def _cls():
            xo = x[S - num_obj * obj_len:, :]                    # (No*Lo, C)
            xm = jnp.dot(pool_ref[...], xo,
                         preferred_element_type=jnp.float32)     # (No, C) mean over Lo
            xn = _layernorm(xm, cls_gb_ref[0:1, :], cls_gb_ref[1:2, :], eps)
            logits = jnp.dot(xn, cls_w_ref[...],
                             preferred_element_type=jnp.float32) + cls_b_ref[...]
            e = jnp.exp(logits - jnp.max(logits, axis=-1, keepdims=True))
            # exact reciprocal for the cls softmax (probabilities sum to 1)
            cls_ref[0] = (e / jnp.sum(e, axis=-1, keepdims=True)).astype(cls_ref.dtype)


# ----------------------------------------------------------------------------
# One-time host-side parameter repack into the kernel layout
# ----------------------------------------------------------------------------

def pack_params(params, cfg, depth):
    C = cfg['embed_dim']
    H = cfg['num_heads']
    hd = C // H
    assert C == H * hd
    No = cfg['num_obj']
    L = cfg['latent_shape'][0] * cfg['latent_shape'][1]
    Lo = cfg['obj_shape'][0] * cfg['obj_shape'][1]
    Hid = 4 * C

    def head_major(w):               # (depth, 2, C, C) -> (depth, 2, H, C, hd)
        return w.reshape(depth, 2, C, H, hd).transpose(0, 1, 3, 2, 4)

    def head_bias(b):                # (depth, 2, C) -> (depth, 2, H, 1, hd)
        return b.reshape(depth, 2, H, 1, hd)

    scale = 1.0 / math.sqrt(hd)      # folded into Wq / bq
    wqkvh = jnp.stack([head_major(params['wq'] * scale),
                       head_major(params['wk']),
                       head_major(params['wv'])], axis=2)        # (depth, 2, 3, H, C, hd)
    wqkvh = wqkvh.reshape(depth, 6 * H, C, hd).astype(jnp.bfloat16)
    bqkvh = jnp.stack([head_bias(params['bq'] * scale),
                       head_bias(params['bk']),
                       head_bias(params['bv'])], axis=2)
    bqkvh = bqkvh.reshape(depth, 6 * H, 1, hd).astype(jnp.float32)

    def pad_c(v):                    # pad last dim C -> 4C
        return jnp.pad(v, [(0, 0)] * (v.ndim - 1) + [(0, Hid - v.shape[-1])])

    vecs = jnp.concatenate([
        pad_c(params['ln_g']),                       # rows 0-2: LN gammas
        pad_c(params['ln_b']),                       # rows 3-5: LN betas
        pad_c(params['bo']),                         # rows 6-7: bo (self, cross)
        params['b1'].reshape(depth, 1, Hid),         # row 8: MLP b1
        pad_c(params['b2'].reshape(depth, 1, C)),    # row 9: MLP b2
    ], axis=1).astype(jnp.float32)                   # (depth, 10, 4C)

    if cfg['decompose_embed_oe']:
        obj_embed = params['obj_spatial_embed'] + params['obj_num_embed']
    else:
        obj_embed = params['obj_embed']
    x_obj0 = obj_embed.reshape(1, No * Lo, C)
    if cfg['has_bg']:
        x_obj0 = jnp.concatenate([params['pos_embed'].reshape(1, L, C), x_obj0], axis=1)

    kp = {
        'pos_embed': params['pos_embed'],
        'time_embed': params['time_embed'],
        'x_obj0': x_obj0.astype(jnp.float32),
        'norm_gb': jnp.stack([params['norm_g'], params['norm_b']]),
        'wqkvh': wqkvh,
        'bqkvh': bqkvh,
        'wo': params['wo'].astype(jnp.bfloat16),
        'w1': params['w1'].astype(jnp.bfloat16),
        'w2': params['w2'].astype(jnp.bfloat16),
        'vecs': vecs,
    }
    if cfg['pred_cls']:
        kp['pool'] = jnp.repeat(jnp.eye(No, dtype=jnp.float32), Lo, axis=1) / float(Lo)
        kp['cls_gb'] = jnp.stack([params['cls_g'], params['cls_b']])
        kp['cls_w'] = params['cls_w']
        kp['cls_bias'] = params['cls_bias']
    return kp


# ----------------------------------------------------------------------------
# LayerEstimator forward: everything except tiny embed glue runs in one kernel.
# ----------------------------------------------------------------------------

def layer_estimator_forward(kp, x, cfg):
    B, T, L, C = x.shape
    No = cfg['num_obj']
    Lo = cfg['obj_shape'][0] * cfg['obj_shape'][1]
    NL = cfg['num_lyt']
    H = cfg['num_heads']
    hd = C // H
    pred_cls = cfg['pred_cls']
    has_bg = cfg['has_bg']
    depth = kp['wo'].shape[0]
    Sc = T * L
    S = kp['x_obj0'].shape[1]

    x_ctx = x.reshape(B, Sc, C)
    emb = (kp['pos_embed'] + kp['time_embed'][:, :T]).reshape(1, Sc, C)

    # --- layers per grid step: keep as many resident as fit a ~6 MiB budget ---
    per_layer_bytes = 16 * C * C * 2 + (40 * C + 6 * C) * 4   # bf16 weights + f32 vecs
    budget = 6 << 20
    fitting = [d for d in range(1, depth + 1)
               if depth % d == 0 and d <= 8 and d * per_layer_bytes <= budget]
    depth_block = max(fitting) if fitting else 1
    n_chunks = depth // depth_block

    vmem_need = (2 * depth_block * per_layer_bytes            # double-buffered weights
                 + 4 * Sc * C * 4 + Sc * C * 2                # ctx blocks + bf16 scratch
                 + 2 * S * C * 4 + (8 << 20))                 # out block + temporaries
    vmem_limit = int(min(64 << 20, max(32 << 20, vmem_need)))

    idx_b3 = lambda b, c: (b, 0, 0)
    idx_03 = lambda b, c: (0, 0, 0)
    idx_02 = lambda b, c: (0, 0)
    idx_c3 = lambda b, c: (c, 0, 0)
    idx_c4 = lambda b, c: (c, 0, 0, 0)

    in_specs = [
        pl.BlockSpec((1, Sc, C), idx_b3),                     # context tokens (per batch)
        pl.BlockSpec((1, Sc, C), idx_03),                     # pos+time embed
        pl.BlockSpec((1, S, C), idx_03),                      # initial object stream
        pl.BlockSpec((2, C), idx_02),                         # ctx norm gamma/beta
        pl.BlockSpec((depth_block, 6 * H, C, hd), idx_c4),    # head-major Wq/Wk/Wv (scaled)
        pl.BlockSpec((depth_block, 6 * H, 1, hd), idx_c4),    # head-major bq/bk/bv
        pl.BlockSpec((depth_block, 2, C, C), idx_c4),         # Wo (self, cross)
        pl.BlockSpec((depth_block, C, 4 * C), idx_c3),        # MLP W1
        pl.BlockSpec((depth_block, 4 * C, C), idx_c3),        # MLP W2
        pl.BlockSpec((depth_block, 10, 4 * C), idx_c3),       # packed per-layer LN/bias slab
    ]
    inputs = [x_ctx, emb, kp['x_obj0'], kp['norm_gb'],
              kp['wqkvh'], kp['bqkvh'], kp['wo'], kp['w1'], kp['w2'], kp['vecs']]

    if pred_cls:
        in_specs += [pl.BlockSpec((No, No * Lo), idx_02),     # per-object mean pooling
                     pl.BlockSpec((2, C), idx_02),            # cls norm gamma/beta
                     pl.BlockSpec((C, NL), idx_02),           # cls head weight
                     pl.BlockSpec((1, NL), idx_02)]           # cls head bias
        inputs += [kp['pool'], kp['cls_gb'], kp['cls_w'], kp['cls_bias']]
        out_shape = (jax.ShapeDtypeStruct((B, S, C), x.dtype),
                     jax.ShapeDtypeStruct((B, No, NL), jnp.float32))
        out_specs = (pl.BlockSpec((1, S, C), idx_b3),
                     pl.BlockSpec((1, No, NL), idx_b3))
    else:
        out_shape = jax.ShapeDtypeStruct((B, S, C), x.dtype)
        out_specs = pl.BlockSpec((1, S, C), idx_b3)

    kernel = functools.partial(
        _fused_kernel, depth_block=depth_block, num_heads=H, embed_dim=C,
        num_obj=No, obj_len=Lo, seq_obj=S, pred_cls=pred_cls, eps=1e-5)

    result = pl.pallas_call(
        kernel,
        out_shape=out_shape,
        grid=(B, n_chunks),
        in_specs=in_specs,
        out_specs=out_specs,
        scratch_shapes=[pltpu.VMEM((Sc, C), jnp.bfloat16)],
        compiler_params=pltpu.CompilerParams(
            dimension_semantics=("parallel", "arbitrary"),
            vmem_limit_bytes=vmem_limit),
    )(*inputs)

    if pred_cls:
        x_seq, cls = result
    else:
        x_seq, cls = result, None

    x_bg = x_seq[:, :L] if has_bg else None
    x_obj = x_seq[:, S - No * Lo:].reshape(B, No, Lo, C)
    return x_obj, x_bg, cls


# ----------------------------------------------------------------------------
# Deterministic synthetic parameter init (trunc_normal_ ~ N(0, 0.02))
# ----------------------------------------------------------------------------

def init_params(key, cfg, num_timesteps, depth):
    C = cfg['embed_dim']
    No = cfg['num_obj']
    L = cfg['latent_shape'][0] * cfg['latent_shape'][1]
    Lo = cfg['obj_shape'][0] * cfg['obj_shape'][1]
    Hid = 4 * C
    keys = iter(jax.random.split(key, 32))

    def tn(shape, std=0.02):
        # TODO(synk): trunc_normal_ approximated by an unclipped normal (synthetic init).
        return (std * jax.random.normal(next(keys), shape)).astype(jnp.float32)

    params = {
        'time_embed': tn((1, num_timesteps, 1, C)),
        'pos_embed': tn((1, 1, L, C)),
        'norm_g': jnp.ones((C,), jnp.float32),
        'norm_b': jnp.zeros((C,), jnp.float32),
        # per-layer params; axis 1 of attention params = {self, cross}
        'ln_g': jnp.ones((depth, 3, C), jnp.float32),
        'ln_b': jnp.zeros((depth, 3, C), jnp.float32),
        'wq': tn((depth, 2, C, C)), 'bq': tn((depth, 2, C)),
        'wk': tn((depth, 2, C, C)), 'bk': tn((depth, 2, C)),
        'wv': tn((depth, 2, C, C)), 'bv': tn((depth, 2, C)),
        'wo': tn((depth, 2, C, C)), 'bo': tn((depth, 2, C)),
        'w1': tn((depth, C, Hid)), 'b1': tn((depth, Hid)),
        'w2': tn((depth, Hid, C)), 'b2': tn((depth, C)),
    }
    if cfg['decompose_embed_oe']:
        params['obj_spatial_embed'] = tn((1, 1, Lo, C))
        params['obj_num_embed'] = tn((1, No, 1, C))
    else:
        params['obj_embed'] = tn((1, No, Lo, C))
    if cfg['pred_cls']:
        params['cls_g'] = jnp.ones((C,), jnp.float32)
        params['cls_b'] = jnp.zeros((C,), jnp.float32)
        params['cls_w'] = tn((C, cfg['num_lyt']))
        params['cls_bias'] = tn((1, cfg['num_lyt']))
    return params


# ----------------------------------------------------------------------------
# Main
# ----------------------------------------------------------------------------

if __name__ == "__main__":
    cfg = dict(
        num_obj=2,
        latent_shape=(4, 4),     # L = 16
        obj_shape=(2, 2),        # Lo = 4
        embed_dim=32,
        num_heads=4,
        num_lyt=5,
        has_bg=True,
        pred_cls=True,
        decompose_embed_oe=True,
    )
    depth = 2
    num_timesteps = 4
    B, T = 2, 2
    L = cfg['latent_shape'][0] * cfg['latent_shape'][1]
    Lo = cfg['obj_shape'][0] * cfg['obj_shape'][1]
    C = cfg['embed_dim']

    key = jax.random.PRNGKey(0)
    kx, kparam = jax.random.split(key)
    x = jax.random.normal(kx, (B, T, L, C), dtype=jnp.float32)
    params = init_params(kparam, cfg, num_timesteps, depth)
    kparams = pack_params(params, cfg, depth)        # one-time repack into kernel layout

    fwd = jax.jit(functools.partial(layer_estimator_forward, cfg=cfg))
    x_obj, x_bg, cls = fwd(kparams, x)
    jax.block_until_ready((x_obj, x_bg, cls))

    assert x_obj.shape == (B, cfg['num_obj'], Lo, C)
    assert x_bg.shape == (B, L, C)
    assert cls.shape == (B, cfg['num_obj'], cfg['num_lyt'])
    assert bool(jnp.all(jnp.isfinite(x_obj)))
    assert bool(jnp.all(jnp.isfinite(x_bg)))
    assert bool(jnp.all(jnp.isfinite(cls)))
    assert bool(jnp.all(jnp.abs(jnp.sum(cls, axis=-1) - 1.0) < 1e-5))
    print("KERNEL_OK")
</pallas_src>

<mosaic_0001>
module attributes {stable_mosaic.version = 11 : i64} {
  func.func @_fused_kernel(%arg0: i32, %arg1: i32, %arg2: memref<1x32x32xf32, #tpu.memory_space<vmem>>, %arg3: memref<1x32x32xf32, #tpu.memory_space<vmem>>, %arg4: memref<1x24x32xf32, #tpu.memory_space<vmem>>, %arg5: memref<2x32xf32, #tpu.memory_space<vmem>>, %arg6: memref<2x24x32x8xbf16, #tpu.memory_space<vmem>>, %arg7: memref<2x24x1x8xf32, #tpu.memory_space<vmem>>, %arg8: memref<2x2x32x32xbf16, #tpu.memory_space<vmem>>, %arg9: memref<2x32x128xbf16, #tpu.memory_space<vmem>>, %arg10: memref<2x128x32xbf16, #tpu.memory_space<vmem>>, %arg11: memref<2x10x128xf32, #tpu.memory_space<vmem>>, %arg12: memref<2x8xf32, #tpu.memory_space<vmem>>, %arg13: memref<2x32xf32, #tpu.memory_space<vmem>>, %arg14: memref<32x5xf32, #tpu.memory_space<vmem>>, %arg15: memref<1x5xf32, #tpu.memory_space<vmem>>, %arg16: memref<1x24x32xf32, #tpu.memory_space<vmem>>, %arg17: memref<1x2x5xf32, #tpu.memory_space<vmem>>, %arg18: memref<32x32xbf16, #tpu.memory_space<vmem>>) attributes {dimension_semantics = [#tpu.dimension_semantics<parallel>, #tpu.dimension_semantics<arbitrary>], iteration_bounds = array<i64: 2, 1>, scalar_prefetch = 0 : i64, scratch_operands = 1 : i64, tpu.core_type = #tpu.core_type<tc>, window_params = [{transform_indices = @transform_0, window_bounds = array<i64: 1, 32, 32>}, {pipeline_mode = #tpu.pipeline_mode<synchronous>, transform_indices = @transform_1, window_bounds = array<i64: 1, 32, 32>}, {pipeline_mode = #tpu.pipeline_mode<synchronous>, transform_indices = @transform_2, window_bounds = array<i64: 1, 24, 32>}, {pipeline_mode = #tpu.pipeline_mode<synchronous>, transform_indices = @transform_3, window_bounds = array<i64: 2, 32>}, {transform_indices = @transform_4, window_bounds = array<i64: 2, 24, 32, 8>}, {transform_indices = @transform_5, window_bounds = array<i64: 2, 24, 1, 8>}, {transform_indices = @transform_6, window_bounds = array<i64: 2, 2, 32, 32>}, {transform_indices = @transform_7, window_bounds = array<i64: 2, 32, 128>}, {transform_indices = @transform_8, window_bounds = array<i64: 2, 128, 32>}, {transform_indices = @transform_9, window_bounds = array<i64: 2, 10, 128>}, {pipeline_mode = #tpu.pipeline_mode<synchronous>, transform_indices = @transform_10, window_bounds = array<i64: 2, 8>}, {pipeline_mode = #tpu.pipeline_mode<synchronous>, transform_indices = @transform_11, window_bounds = array<i64: 2, 32>}, {pipeline_mode = #tpu.pipeline_mode<synchronous>, transform_indices = @transform_12, window_bounds = array<i64: 32, 5>}, {pipeline_mode = #tpu.pipeline_mode<synchronous>, transform_indices = @transform_13, window_bounds = array<i64: 1, 5>}, {transform_indices = @transform_14, window_bounds = array<i64: 1, 24, 32>}, {transform_indices = @transform_15, window_bounds = array<i64: 1, 2, 5>}]} {
    %c0_i32 = arith.constant 0 : i32
    %0 = arith.cmpi eq, %arg1, %c0_i32 : i32
    %1 = arith.extui %0 : i1 to i32
    %c0_i32_0 = arith.constant 0 : i32
    %2 = arith.cmpi ne, %1, %c0_i32_0 : i32
    scf.if %2 {
      %c0_562 = arith.constant 0 : index
      %c0_563 = arith.constant 0 : index
      %c0_564 = arith.constant 0 : index
      %848 = vector.load %arg2[%c0_562, %c0_563, %c0_564] : memref<1x32x32xf32, #tpu.memory_space<vmem>>, vector<1x32x32xf32>
      %849 = vector.shape_cast %848 : vector<1x32x32xf32> to vector<32x32xf32>
      %c0_565 = arith.constant 0 : index
      %c0_566 = arith.constant 0 : index
      %c0_567 = arith.constant 0 : index
      %850 = vector.load %arg3[%c0_565, %c0_566, %c0_567] : memref<1x32x32xf32, #tpu.memory_space<vmem>>, vector<1x32x32xf32>
      %851 = vector.shape_cast %850 : vector<1x32x32xf32> to vector<32x32xf32>
      %852 = arith.addf %849, %851 : vector<32x32xf32>
      %c0_568 = arith.constant 0 : index
      %c0_569 = arith.constant 0 : index
      %853 = vector.load %arg5[%c0_568, %c0_569] : memref<2x32xf32, #tpu.memory_space<vmem>>, vector<1x32xf32>
      %c1_570 = arith.constant 1 : index
      %c0_571 = arith.constant 0 : index
      %854 = vector.load %arg5[%c1_570, %c0_571] : memref<2x32xf32, #tpu.memory_space<vmem>>, vector<1x32xf32>
      %cst_572 = arith.constant dense<0.000000e+00> : vector<32xf32>
      %855 = vector.multi_reduction <add>, %852, %cst_572 [1] : vector<32x32xf32> to vector<32xf32>
      %856 = vector.shape_cast %855 : vector<32xf32> to vector<32x1xf32>
      %cst_573 = arith.constant 3.200000e+01 : f32
      %857 = vector.broadcast %cst_573 : f32 to vector<32x1xf32>
      %858 = arith.divf %856, %857 : vector<32x1xf32>
      %859 = vector.broadcast %858 : vector<32x1xf32> to vector<32x32xf32>
      %860 = arith.subf %852, %859 : vector<32x32xf32>
      %861 = arith.mulf %860, %860 : vector<32x32xf32>
      %cst_574 = arith.constant dense<0.000000e+00> : vector<32xf32>
      %862 = vector.multi_reduction <add>, %861, %cst_574 [1] : vector<32x32xf32> to vector<32xf32>
      %863 = vector.shape_cast %862 : vector<32xf32> to vector<32x1xf32>
      %cst_575 = arith.constant 3.200000e+01 : f32
      %864 = vector.broadcast %cst_575 : f32 to vector<32x1xf32>
      %865 = arith.divf %863, %864 : vector<32x1xf32>
      %866 = vector.broadcast %858 : vector<32x1xf32> to vector<32x32xf32>
      %867 = arith.subf %852, %866 : vector<32x32xf32>
      %cst_576 = arith.constant 9.99999974E-6 : f32
      %868 = vector.broadcast %cst_576 : f32 to vector<32x1xf32>
      %869 = arith.addf %865, %868 : vector<32x1xf32>
      %870 = math.rsqrt %869 : vector<32x1xf32>
      %871 = vector.broadcast %870 : vector<32x1xf32> to vector<32x32xf32>
      %872 = arith.mulf %867, %871 : vector<32x32xf32>
      %873 = vector.broadcast %853 : vector<1x32xf32> to vector<32x32xf32>
      %874 = arith.mulf %872, %873 : vector<32x32xf32>
      %875 = vector.broadcast %854 : vector<1x32xf32> to vector<32x32xf32>
      %876 = arith.addf %874, %875 : vector<32x32xf32>
      %877 = arith.truncf %876 : vector<32x32xf32> to vector<32x32xbf16>
      %c0_577 = arith.constant 0 : index
      %c0_578 = arith.constant 0 : index
      %878 = vector.load %arg18[%c0_577, %c0_578] : memref<32x32xbf16, #tpu.memory_space<vmem>>, vector<32x32xbf16>
      tpu.vector_store %arg18[%c0_577, %c0_578], %877 {strides = array<i32>} : memref<32x32xbf16, #tpu.memory_space<vmem>>, vector<32x32xbf16>,
      %c0_579 = arith.constant 0 : index
      %c0_580 = arith.constant 0 : index
      %c0_581 = arith.constant 0 : index
      %879 = vector.load %arg4[%c0_579, %c0_580, %c0_581] : memref<1x24x32xf32, #tpu.memory_space<vmem>>, vector<1x24x32xf32>
      %880 = vector.shape_cast %879 : vector<1x24x32xf32> to vector<24x32xf32>
      %c0_582 = arith.constant 0 : index
      %c0_583 = arith.constant 0 : index
      %c0_584 = arith.constant 0 : index
      %881 = vector.load %arg16[%c0_582, %c0_583, %c0_584] : memref<1x24x32xf32, #tpu.memory_space<vmem>>, vector<1x24x32xf32>
      %882 = vector.shape_cast %881 : vector<1x24x32xf32> to vector<24x32xf32>
      %883 = vector.shape_cast %880 : vector<24x32xf32> to vector<1x24x32xf32>
      tpu.vector_store %arg16[%c0_582, %c0_583, %c0_584], %883 {strides = array<i32>} : memref<1x24x32xf32, #tpu.memory_space<vmem>>, vector<1x24x32xf32>,
    } else {
    }
    %c0 = arith.constant 0 : index
    %c0_1 = arith.constant 0 : index
    %c0_2 = arith.constant 0 : index
    %3 = vector.load %arg16[%c0, %c0_1, %c0_2] : memref<1x24x32xf32, #tpu.memory_space<vmem>>, vector<1x24x32xf32>
    %4 = vector.shape_cast %3 : vector<1x24x32xf32> to vector<24x32xf32>
    %c0_3 = arith.constant 0 : index
    %c0_4 = arith.constant 0 : index
    %5 = vector.load %arg18[%c0_3, %c0_4] : memref<32x32xbf16, #tpu.memory_space<vmem>>, vector<32x32xbf16>
    %c0_5 = arith.constant 0 : index
    %c0_6 = arith.constant 0 : index
    %c0_7 = arith.constant 0 : index
    %6 = vector.load %arg11[%c0_5, %c0_6, %c0_7] : memref<2x10x128xf32, #tpu.memory_space<vmem>>, vector<1x10x128xf32>
    %7 = vector.shape_cast %6 : vector<1x10x128xf32> to vector<10x128xf32>
    %8 = vector.extract_strided_slice %7 {offsets = [0, 0], sizes = [1, 32], strides = [1, 1]} : vector<10x128xf32> to vector<1x32xf32>
    %9 = vector.extract_strided_slice %7 {offsets = [3, 0], sizes = [1, 32], strides = [1, 1]} : vector<10x128xf32> to vector<1x32xf32>
    %cst = arith.constant dense<0.000000e+00> : vector<24xf32>
    %10 = vector.multi_reduction <add>, %4, %cst [1] : vector<24x32xf32> to vector<24xf32>
    %11 = vector.shape_cast %10 : vector<24xf32> to vector<24x1xf32>
    %cst_8 = arith.constant 3.200000e+01 : f32
    %12 = vector.broadcast %cst_8 : f32 to vector<24x1xf32>
    %13 = arith.divf %11, %12 : vector<24x1xf32>
    %14 = vector.broadcast %13 : vector<24x1xf32> to vector<24x32xf32>
    %15 = arith.subf %4, %14 : vector<24x32xf32>
    %16 = arith.mulf %15, %15 : vector<24x32xf32>
    %cst_9 = arith.constant dense<0.000000e+00> : vector<24xf32>
    %17 = vector.multi_reduction <add>, %16, %cst_9 [1] : vector<24x32xf32> to vector<24xf32>
    %18 = vector.shape_cast %17 : vector<24xf32> to vector<24x1xf32>
    %cst_10 = arith.constant 3.200000e+01 : f32
    %19 = vector.broadcast %cst_10 : f32 to vector<24x1xf32>
    %20 = arith.divf %18, %19 : vector<24x1xf32>
    %21 = vector.broadcast %13 : vector<24x1xf32> to vector<24x32xf32>
    %22 = arith.subf %4, %21 : vector<24x32xf32>
    %cst_11 = arith.constant 9.99999974E-6 : f32
    %23 = vector.broadcast %cst_11 : f32 to vector<24x1xf32>
    %24 = arith.addf %20, %23 : vector<24x1xf32>
    %25 = math.rsqrt %24 : vector<24x1xf32>
    %26 = vector.broadcast %25 : vector<24x1xf32> to vector<24x32xf32>
    %27 = arith.mulf %22, %26 : vector<24x32xf32>
    %28 = vector.broadcast %8 : vector<1x32xf32> to vector<24x32xf32>
    %29 = arith.mulf %27, %28 : vector<24x32xf32>
    %30 = vector.broadcast %9 : vector<1x32xf32> to vector<24x32xf32>
    %31 = arith.addf %29, %30 : vector<24x32xf32>
    %32 = arith.truncf %31 : vector<24x32xf32> to vector<24x32xbf16>
    %c0_12 = arith.constant 0 : index
    %c0_13 = arith.constant 0 : index
    %c0_14 = arith.constant 0 : index
    %c0_15 = arith.constant 0 : index
    %33 = vector.load %arg6[%c0_12, %c0_13, %c0_14, %c0_15] : memref<2x24x32x8xbf16, #tpu.memory_space<vmem>>, vector<1x1x32x8xbf16>
    %34 = vector.shape_cast %33 : vector<1x1x32x8xbf16> to vector<32x8xbf16>
    %c0_16 = arith.constant 0 : index
    %c4 = arith.constant 4 : index
    %c0_17 = arith.constant 0 : index
    %c0_18 = arith.constant 0 : index
    %35 = vector.load %arg6[%c0_16, %c4, %c0_17, %c0_18] : memref<2x24x32x8xbf16, #tpu.memory_space<vmem>>, vector<1x1x32x8xbf16>
    %36 = vector.shape_cast %35 : vector<1x1x32x8xbf16> to vector<32x8xbf16>
    %c0_19 = arith.constant 0 : index
    %c8 = arith.constant 8 : index
    %c0_20 = arith.constant 0 : index
    %c0_21 = arith.constant 0 : index
    %37 = vector.load %arg6[%c0_19, %c8, %c0_20, %c0_21] : memref<2x24x32x8xbf16, #tpu.memory_space<vmem>>, vector<1x1x32x8xbf16>
    %38 = vector.shape_cast %37 : vector<1x1x32x8xbf16> to vector<32x8xbf16>
    %cst_22 = arith.constant dense<0.000000e+00> : vector<24x8xf32>
    %39 = tpu.matmul %32, %34, %cst_22 {dimension_numbers = #tpu.dot_dimension_numbers<[1], [0], [0], [1], [0, 0, 1, 1], [], []>} : vector<24x32xbf16>, vector<32x8xbf16>, vector<24x8xf32> -> vector<24x8xf32>
    %c0_23 = arith.constant 0 : index
    %c0_24 = arith.constant 0 : index
    %c0_25 = arith.constant 0 : index
    %c0_26 = arith.constant 0 : index
    %40 = vector.load %arg7[%c0_23, %c0_24, %c0_25, %c0_26] : memref<2x24x1x8xf32, #tpu.memory_space<vmem>>, vector<1x1x1x8xf32>
    %41 = vector.shape_cast %40 : vector<1x1x1x8xf32> to vector<1x8xf32>
    %42 = vector.broadcast %41 : vector<1x8xf32> to vector<24x8xf32>
    %43 = arith.addf %39, %42 : vector<24x8xf32>
    %cst_27 = arith.constant dense<0.000000e+00> : vector<24x8xf32>
    %44 = tpu.matmul %32, %36, %cst_27 {dimension_numbers = #tpu.dot_dimension_numbers<[1], [0], [0], [1], [0, 0, 1, 1], [], []>} : vector<24x32xbf16>, vector<32x8xbf16>, vector<24x8xf32> -> vector<24x8xf32>
    %c0_28 = arith.constant 0 : index
    %c4_29 = arith.constant 4 : index
    %c0_30 = arith.constant 0 : index
    %c0_31 = arith.constant 0 : index
    %45 = vector.load %arg7[%c0_28, %c4_29, %c0_30, %c0_31] : memref<2x24x1x8xf32, #tpu.memory_space<vmem>>, vector<1x1x1x8xf32>
    %46 = vector.shape_cast %45 : vector<1x1x1x8xf32> to vector<1x8xf32>
    %47 = vector.broadcast %46 : vector<1x8xf32> to vector<24x8xf32>
    %48 = arith.addf %44, %47 : vector<24x8xf32>
    %cst_32 = arith.constant dense<0.000000e+00> : vector<24x8xf32>
    %49 = tpu.matmul %32, %38, %cst_32 {dimension_numbers = #tpu.dot_dimension_numbers<[1], [0], [0], [1], [0, 0, 1, 1], [], []>} : vector<24x32xbf16>, vector<32x8xbf16>, vector<24x8xf32> -> vector<24x8xf32>
    %c0_33 = arith.constant 0 : index
    %c8_34 = arith.constant 8 : index
    %c0_35 = arith.constant 0 : index
    %c0_36 = arith.constant 0 : index
    %50 = vector.load %arg7[%c0_33, %c8_34, %c0_35, %c0_36] : memref<2x24x1x8xf32, #tpu.memory_space<vmem>>, vector<1x1x1x8xf32>
    %51 = vector.shape_cast %50 : vector<1x1x1x8xf32> to vector<1x8xf32>
    %52 = vector.broadcast %51 : vector<1x8xf32> to vector<24x8xf32>
    %53 = arith.addf %49, %52 : vector<24x8xf32>
    %54 = arith.truncf %43 : vector<24x8xf32> to vector<24x8xbf16>
    %55 = arith.truncf %48 : vector<24x8xf32> to vector<24x8xbf16>
    %cst_37 = arith.constant dense<0.000000e+00> : vector<24x24xf32>
    %56 = tpu.matmul %54, %55, %cst_37 {dimension_numbers = #tpu.dot_dimension_numbers<[1], [1], [0], [0], [0, 0, 1, 0], [], []>} : vector<24x8xbf16>, vector<24x8xbf16>, vector<24x24xf32> -> vector<24x24xf32>
    %cst_38 = arith.constant dense<0xFF800000> : vector<24xf32>
    %57 = vector.multi_reduction <maximumf>, %56, %cst_38 [1] : vector<24x24xf32> to vector<24xf32>
    %58 = vector.shape_cast %57 : vector<24xf32> to vector<24x1xf32>
    %59 = vector.broadcast %58 : vector<24x1xf32> to vector<24x24xf32>
    %60 = arith.subf %56, %59 : vector<24x24xf32>
    %61 = math.exp %60 : vector<24x24xf32>
    %cst_39 = arith.constant dense<0.000000e+00> : vector<24xf32>
    %62 = vector.multi_reduction <add>, %61, %cst_39 [1] : vector<24x24xf32> to vector<24xf32>
    %63 = vector.shape_cast %62 : vector<24xf32> to vector<24x1xf32>
    %64 = tpu.reciprocal %63 {approx = true} : vector<24x1xf32> -> vector<24x1xf32>
    %65 = vector.broadcast %64 : vector<24x1xf32> to vector<24x24xf32>
    %66 = arith.mulf %61, %65 : vector<24x24xf32>
    %67 = arith.truncf %66 : vector<24x24xf32> to vector<24x24xbf16>
    %68 = arith.truncf %53 : vector<24x8xf32> to vector<24x8xbf16>
    %cst_40 = arith.constant dense<0.000000e+00> : vector<24x8xf32>
    %69 = tpu.matmul %67, %68, %cst_40 {dimension_numbers = #tpu.dot_dimension_numbers<[1], [0], [0], [1], [0, 0, 1, 1], [], []>} : vector<24x24xbf16>, vector<24x8xbf16>, vector<24x8xf32> -> vector<24x8xf32>
    %c0_41 = arith.constant 0 : index
    %c1 = arith.constant 1 : index
    %c0_42 = arith.constant 0 : index
    %c0_43 = arith.constant 0 : index
    %70 = vector.load %arg6[%c0_41, %c1, %c0_42, %c0_43] : memref<2x24x32x8xbf16, #tpu.memory_space<vmem>>, vector<1x1x32x8xbf16>
    %71 = vector.shape_cast %70 : vector<1x1x32x8xbf16> to vector<32x8xbf16>
    %c0_44 = arith.constant 0 : index
    %c5 = arith.constant 5 : index
    %c0_45 = arith.constant 0 : index
    %c0_46 = arith.constant 0 : index
    %72 = vector.load %arg6[%c0_44, %c5, %c0_45, %c0_46] : memref<2x24x32x8xbf16, #tpu.memory_space<vmem>>, vector<1x1x32x8xbf16>
    %73 = vector.shape_cast %72 : vector<1x1x32x8xbf16> to vector<32x8xbf16>
    %c0_47 = arith.constant 0 : index
    %c9 = arith.constant 9 : index
    %c0_48 = arith.constant 0 : index
    %c0_49 = arith.constant 0 : index
    %74 = vector.load %arg6[%c0_47, %c9, %c0_48, %c0_49] : memref<2x24x32x8xbf16, #tpu.memory_space<vmem>>, vector<1x1x32x8xbf16>
    %75 = vector.shape_cast %74 : vector<1x1x32x8xbf16> to vector<32x8xbf16>
    %cst_50 = arith.constant dense<0.000000e+00> : vector<24x8xf32>
    %76 = tpu.matmul %32, %71, %cst_50 {dimension_numbers = #tpu.dot_dimension_numbers<[1], [0], [0], [1], [0, 0, 1, 1], [], []>} : vector<24x32xbf16>, vector<32x8xbf16>, vector<24x8xf32> -> vector<24x8xf32>
    %c0_51 = arith.constant 0 : index
    %c1_52 = arith.constant 1 : index
    %c0_53 = arith.constant 0 : index
    %c0_54 = arith.constant 0 : index
    %77 = vector.load %arg7[%c0_51, %c1_52, %c0_53, %c0_54] : memref<2x24x1x8xf32, #tpu.memory_space<vmem>>, vector<1x1x1x8xf32>
    %78 = vector.shape_cast %77 : vector<1x1x1x8xf32> to vector<1x8xf32>
    %79 = vector.broadcast %78 : vector<1x8xf32> to vector<24x8xf32>
    %80 = arith.addf %76, %79 : vector<24x8xf32>
    %cst_55 = arith.constant dense<0.000000e+00> : vector<24x8xf32>
    %81 = tpu.matmul %32, %73, %cst_55 {dimension_numbers = #tpu.dot_dimension_numbers<[1], [0], [0], [1], [0, 0, 1, 1], [], []>} : vector<24x32xbf16>, vector<32x8xbf16>, vector<24x8xf32> -> vector<24x8xf32>
    %c0_56 = arith.constant 0 : index
    %c5_57 = arith.constant 5 : index
    %c0_58 = arith.constant 0 : index
    %c0_59 = arith.constant 0 : index
    %82 = vector.load %arg7[%c0_56, %c5_57, %c0_58, %c0_59] : memref<2x24x1x8xf32, #tpu.memory_space<vmem>>, vector<1x1x1x8xf32>
    %83 = vector.shape_cast %82 : vector<1x1x1x8xf32> to vector<1x8xf32>
    %84 = vector.broadcast %83 : vector<1x8xf32> to vector<24x8xf32>
    %85 = arith.addf %81, %84 : vector<24x8xf32>
    %cst_60 = arith.constant dense<0.000000e+00> : vector<24x8xf32>
    %86 = tpu.matmul %32, %75, %cst_60 {dimension_numbers = #tpu.dot_dimension_numbers<[1], [0], [0], [1], [0, 0, 1, 1], [], []>} : vector<24x32xbf16>, vector<32x8xbf16>, vector<24x8xf32> -> vector<24x8xf32>
    %c0_61 = arith.constant 0 : index
    %c9_62 = arith.constant 9 : index
    %c0_63 = arith.constant 0 : index
    %c0_64 = arith.constant 0 : index
    %87 = vector.load %arg7[%c0_61, %c9_62, %c0_63, %c0_64] : memref<2x24x1x8xf32, #tpu.memory_space<vmem>>, vector<1x1x1x8xf32>
    %88 = vector.shape_cast %87 : vector<1x1x1x8xf32> to vector<1x8xf32>
    %89 = vector.broadcast %88 : vector<1x8xf32> to vector<24x8xf32>
    %90 = arith.addf %86, %89 : vector<24x8xf32>
    %91 = arith.truncf %80 : vector<24x8xf32> to vector<24x8xbf16>
    %92 = arith.truncf %85 : vector<24x8xf32> to vector<24x8xbf16>
    %cst_65 = arith.constant dense<0.000000e+00> : vector<24x24xf32>
    %93 = tpu.matmul %91, %92, %cst_65 {dimension_numbers = #tpu.dot_dimension_numbers<[1], [1], [0], [0], [0, 0, 1, 0], [], []>} : vector<24x8xbf16>, vector<24x8xbf16>, vector<24x24xf32> -> vector<24x24xf32>
    %cst_66 = arith.constant dense<0xFF800000> : vector<24xf32>
    %94 = vector.multi_reduction <maximumf>, %93, %cst_66 [1] : vector<24x24xf32> to vector<24xf32>
    %95 = vector.shape_cast %94 : vector<24xf32> to vector<24x1xf32>
    %96 = vector.broadcast %95 : vector<24x1xf32> to vector<24x24xf32>
    %97 = arith.subf %93, %96 : vector<24x24xf32>
    %98 = math.exp %97 : vector<24x24xf32>
    %cst_67 = arith.constant dense<0.000000e+00> : vector<24xf32>
    %99 = vector.multi_reduction <add>, %98, %cst_67 [1] : vector<24x24xf32> to vector<24xf32>
    %100 = vector.shape_cast %99 : vector<24xf32> to vector<24x1xf32>
    %101 = tpu.reciprocal %100 {approx = true} : vector<24x1xf32> -> vector<24x1xf32>
    %102 = vector.broadcast %101 : vector<24x1xf32> to vector<24x24xf32>
    %103 = arith.mulf %98, %102 : vector<24x24xf32>
    %104 = arith.truncf %103 : vector<24x24xf32> to vector<24x24xbf16>
    %105 = arith.truncf %90 : vector<24x8xf32> to vector<24x8xbf16>
    %cst_68 = arith.constant dense<0.000000e+00> : vector<24x8xf32>
    %106 = tpu.matmul %104, %105, %cst_68 {dimension_numbers = #tpu.dot_dimension_numbers<[1], [0], [0], [1], [0, 0, 1, 1], [], []>} : vector<24x24xbf16>, vector<24x8xbf16>, vector<24x8xf32> -> vector<24x8xf32>
    %c0_69 = arith.constant 0 : index
    %c2 = arith.constant 2 : index
    %c0_70 = arith.constant 0 : index
    %c0_71 = arith.constant 0 : index
    %107 = vector.load %arg6[%c0_69, %c2, %c0_70, %c0_71] : memref<2x24x32x8xbf16, #tpu.memory_space<vmem>>, vector<1x1x32x8xbf16>
    %108 = vector.shape_cast %107 : vector<1x1x32x8xbf16> to vector<32x8xbf16>
    %c0_72 = arith.constant 0 : index
    %c6 = arith.constant 6 : index
    %c0_73 = arith.constant 0 : index
    %c0_74 = arith.constant 0 : index
    %109 = vector.load %arg6[%c0_72, %c6, %c0_73, %c0_74] : memref<2x24x32x8xbf16, #tpu.memory_space<vmem>>, vector<1x1x32x8xbf16>
    %110 = vector.shape_cast %109 : vector<1x1x32x8xbf16> to vector<32x8xbf16>
    %c0_75 = arith.constant 0 : index
    %c10 = arith.constant 10 : index
    %c0_76 = arith.constant 0 : index
    %c0_77 = arith.constant 0 : index
    %111 = vector.load %arg6[%c0_75, %c10, %c0_76, %c0_77] : memref<2x24x32x8xbf16, #tpu.memory_space<vmem>>, vector<1x1x32x8xbf16>
    %112 = vector.shape_cast %111 : vector<1x1x32x8xbf16> to vector<32x8xbf16>
    %cst_78 = arith.constant dense<0.000000e+00> : vector<24x8xf32>
    %113 = tpu.matmul %32, %108, %cst_78 {dimension_numbers = #tpu.dot_dimension_numbers<[1], [0], [0], [1], [0, 0, 1, 1], [], []>} : vector<24x32xbf16>, vector<32x8xbf16>, vector<24x8xf32> -> vector<24x8xf32>
    %c0_79 = arith.constant 0 : index
    %c2_80 = arith.constant 2 : index
    %c0_81 = arith.constant 0 : index
    %c0_82 = arith.constant 0 : index
    %114 = vector.load %arg7[%c0_79, %c2_80, %c0_81, %c0_82] : memref<2x24x1x8xf32, #tpu.memory_space<vmem>>, vector<1x1x1x8xf32>
    %115 = vector.shape_cast %114 : vector<1x1x1x8xf32> to vector<1x8xf32>
    %116 = vector.broadcast %115 : vector<1x8xf32> to vector<24x8xf32>
    %117 = arith.addf %113, %116 : vector<24x8xf32>
    %cst_83 = arith.constant dense<0.000000e+00> : vector<24x8xf32>
    %118 = tpu.matmul %32, %110, %cst_83 {dimension_numbers = #tpu.dot_dimension_numbers<[1], [0], [0], [1], [0, 0, 1, 1], [], []>} : vector<24x32xbf16>, vector<32x8xbf16>, vector<24x8xf32> -> vector<24x8xf32>
    %c0_84 = arith.constant 0 : index
    %c6_85 = arith.constant 6 : index
    %c0_86 = arith.constant 0 : index
    %c0_87 = arith.constant 0 : index
    %119 = vector.load %arg7[%c0_84, %c6_85, %c0_86, %c0_87] : memref<2x24x1x8xf32, #tpu.memory_space<vmem>>, vector<1x1x1x8xf32>
    %120 = vector.shape_cast %119 : vector<1x1x1x8xf32> to vector<1x8xf32>
    %121 = vector.broadcast %120 : vector<1x8xf32> to vector<24x8xf32>
    %122 = arith.addf %118, %121 : vector<24x8xf32>
    %cst_88 = arith.constant dense<0.000000e+00> : vector<24x8xf32>
    %123 = tpu.matmul %32, %112, %cst_88 {dimension_numbers = #tpu.dot_dimension_numbers<[1], [0], [0], [1], [0, 0, 1, 1], [], []>} : vector<24x32xbf16>, vector<32x8xbf16>, vector<24x8xf32> -> vector<24x8xf32>
    %c0_89 = arith.constant 0 : index
    %c10_90 = arith.constant 10 : index
    %c0_91 = arith.constant 0 : index
    %c0_92 = arith.constant 0 : index
    %124 = vector.load %arg7[%c0_89, %c10_90, %c0_91, %c0_92] : memref<2x24x1x8xf32, #tpu.memory_space<vmem>>, vector<1x1x1x8xf32>
    %125 = vector.shape_cast %124 : vector<1x1x1x8xf32> to vector<1x8xf32>
    %126 = vector.broadcast %125 : vector<1x8xf32> to vector<24x8xf32>
    %127 = arith.addf %123, %126 : vector<24x8xf32>
    %128 = arith.truncf %117 : vector<24x8xf32> to vector<24x8xbf16>
    %129 = arith.truncf %122 : vector<24x8xf32> to vector<24x8xbf16>
    %cst_93 = arith.constant dense<0.000000e+00> : vector<24x24xf32>
    %130 = tpu.matmul %128, %129, %cst_93 {dimension_numbers = #tpu.dot_dimension_numbers<[1], [1], [0], [0], [0, 0, 1, 0], [], []>} : vector<24x8xbf16>, vector<24x8xbf16>, vector<24x24xf32> -> vector<24x24xf32>
    %cst_94 = arith.constant dense<0xFF800000> : vector<24xf32>
    %131 = vector.multi_reduction <maximumf>, %130, %cst_94 [1] : vector<24x24xf32> to vector<24xf32>
    %132 = vector.shape_cast %131 : vector<24xf32> to vector<24x1xf32>
    %133 = vector.broadcast %132 : vector<24x1xf32> to vector<24x24xf32>
    %134 = arith.subf %130, %133 : vector<24x24xf32>
    %135 = math.exp %134 : vector<24x24xf32>
    %cst_95 = arith.constant dense<0.000000e+00> : vector<24xf32>
    %136 = vector.multi_reduction <add>, %135, %cst_95 [1] : vector<24x24xf32> to vector<24xf32>
    %137 = vector.shape_cast %136 : vector<24xf32> to vector<24x1xf32>
    %138 = tpu.reciprocal %137 {approx = true} : vector<24x1xf32> -> vector<24x1xf32>
    %139 = vector.broadcast %138 : vector<24x1xf32> to vector<24x24xf32>
    %140 = arith.mulf %135, %139 : vector<24x24xf32>
    %141 = arith.truncf %140 : vector<24x24xf32> to vector<24x24xbf16>
    %142 = arith.truncf %127 : vector<24x8xf32> to vector<24x8xbf16>
    %cst_96 = arith.constant dense<0.000000e+00> : vector<24x8xf32>
    %143 = tpu.matmul %141, %142, %cst_96 {dimension_numbers = #tpu.dot_dimension_numbers<[1], [0], [0], [1], [0, 0, 1, 1], [], []>} : vector<24x24xbf16>, vector<24x8xbf16>, vector<24x8xf32> -> vector<24x8xf32>
    %c0_97 = arith.constant 0 : index
    %c3 = arith.constant 3 : index
    %c0_98 = arith.constant 0 : index
    %c0_99 = arith.constant 0 : index
    %144 = vector.load %arg6[%c0_97, %c3, %c0_98, %c0_99] : memref<2x24x32x8xbf16, #tpu.memory_space<vmem>>, vector<1x1x32x8xbf16>
    %145 = vector.shape_cast %144 : vector<1x1x32x8xbf16> to vector<32x8xbf16>
    %c0_100 = arith.constant 0 : index
    %c7 = arith.constant 7 : index
    %c0_101 = arith.constant 0 : index
    %c0_102 = arith.constant 0 : index
    %146 = vector.load %arg6[%c0_100, %c7, %c0_101, %c0_102] : memref<2x24x32x8xbf16, #tpu.memory_space<vmem>>, vector<1x1x32x8xbf16>
    %147 = vector.shape_cast %146 : vector<1x1x32x8xbf16> to vector<32x8xbf16>
    %c0_103 = arith.constant 0 : index
    %c11 = arith.constant 11 : index
    %c0_104 = arith.constant 0 : index
    %c0_105 = arith.constant 0 : index
    %148 = vector.load %arg6[%c0_103, %c11, %c0_104, %c0_105] : memref<2x24x32x8xbf16, #tpu.memory_space<vmem>>, vector<1x1x32x8xbf16>
    %149 = vector.shape_cast %148 : vector<1x1x32x8xbf16> to vector<32x8xbf16>
    %cst_106 = arith.constant dense<0.000000e+00> : vector<24x8xf32>
    %150 = tpu.matmul %32, %145, %cst_106 {dimension_numbers = #tpu.dot_dimension_numbers<[1], [0], [0], [1], [0, 0, 1, 1], [], []>} : vector<24x32xbf16>, vector<32x8xbf16>, vector<24x8xf32> -> vector<24x8xf32>
    %c0_107 = arith.constant 0 : index
    %c3_108 = arith.constant 3 : index
    %c0_109 = arith.constant 0 : index
    %c0_110 = arith.constant 0 : index
    %151 = vector.load %arg7[%c0_107, %c3_108, %c0_109, %c0_110] : memref<2x24x1x8xf32, #tpu.memory_space<vmem>>, vector<1x1x1x8xf32>
    %152 = vector.shape_cast %151 : vector<1x1x1x8xf32> to vector<1x8xf32>
    %153 = vector.broadcast %152 : vector<1x8xf32> to vector<24x8xf32>
    %154 = arith.addf %150, %153 : vector<24x8xf32>
    %cst_111 = arith.constant dense<0.000000e+00> : vector<24x8xf32>
    %155 = tpu.matmul %32, %147, %cst_111 {dimension_numbers = #tpu.dot_dimension_numbers<[1], [0], [0], [1], [0, 0, 1, 1], [], []>} : vector<24x32xbf16>, vector<32x8xbf16>, vector<24x8xf32> -> vector<24x8xf32>
    %c0_112 = arith.constant 0 : index
    %c7_113 = arith.constant 7 : index
    %c0_114 = arith.constant 0 : index
    %c0_115 = arith.constant 0 : index
    %156 = vector.load %arg7[%c0_112, %c7_113, %c0_114, %c0_115] : memref<2x24x1x8xf32, #tpu.memory_space<vmem>>, vector<1x1x1x8xf32>
    %157 = vector.shape_cast %156 : vector<1x1x1x8xf32> to vector<1x8xf32>
    %158 = vector.broadcast %157 : vector<1x8xf32> to vector<24x8xf32>
    %159 = arith.addf %155, %158 : vector<24x8xf32>
    %cst_116 = arith.constant dense<0.000000e+00> : vector<24x8xf32>
    %160 = tpu.matmul %32, %149, %cst_116 {dimension_numbers = #tpu.dot_dimension_numbers<[1], [0], [0], [1], [0, 0, 1, 1], [], []>} : vector<24x32xbf16>, vector<32x8xbf16>, vector<24x8xf32> -> vector<24x8xf32>
    %c0_117 = arith.constant 0 : index
    %c11_118 = arith.constant 11 : index
    %c0_119 = arith.constant 0 : index
    %c0_120 = arith.constant 0 : index
    %161 = vector.load %arg7[%c0_117, %c11_118, %c0_119, %c0_120] : memref<2x24x1x8xf32, #tpu.memory_space<vmem>>, vector<1x1x1x8xf32>
    %162 = vector.shape_cast %161 : vector<1x1x1x8xf32> to vector<1x8xf32>
    %163 = vector.broadcast %162 : vector<1x8xf32> to vector<24x8xf32>
    %164 = arith.addf %160, %163 : vector<24x8xf32>
    %165 = arith.truncf %154 : vector<24x8xf32> to vector<24x8xbf16>
    %166 = arith.truncf %159 : vector<24x8xf32> to vector<24x8xbf16>
    %cst_121 = arith.constant dense<0.000000e+00> : vector<24x24xf32>
    %167 = tpu.matmul %165, %166, %cst_121 {dimension_numbers = #tpu.dot_dimension_numbers<[1], [1], [0], [0], [0, 0, 1, 0], [], []>} : vector<24x8xbf16>, vector<24x8xbf16>, vector<24x24xf32> -> vector<24x24xf32>
    %cst_122 = arith.constant dense<0xFF800000> : vector<24xf32>
    %168 = vector.multi_reduction <maximumf>, %167, %cst_122 [1] : vector<24x24xf32> to vector<24xf32>
    %169 = vector.shape_cast %168 : vector<24xf32> to vector<24x1xf32>
    %170 = vector.broadcast %169 : vector<24x1xf32> to vector<24x24xf32>
    %171 = arith.subf %167, %170 : vector<24x24xf32>
    %172 = math.exp %171 : vector<24x24xf32>
    %cst_123 = arith.constant dense<0.000000e+00> : vector<24xf32>
    %173 = vector.multi_reduction <add>, %172, %cst_123 [1] : vector<24x24xf32> to vector<24xf32>
    %174 = vector.shape_cast %173 : vector<24xf32> to vector<24x1xf32>
    %175 = tpu.reciprocal %174 {approx = true} : vector<24x1xf32> -> vector<24x1xf32>
    %176 = vector.broadcast %175 : vector<24x1xf32> to vector<24x24xf32>
    %177 = arith.mulf %172, %176 : vector<24x24xf32>
    %178 = arith.truncf %177 : vector<24x24xf32> to vector<24x24xbf16>
    %179 = arith.truncf %164 : vector<24x8xf32> to vector<24x8xbf16>
    %cst_124 = arith.constant dense<0.000000e+00> : vector<24x8xf32>
    %180 = tpu.matmul %178, %179, %cst_124 {dimension_numbers = #tpu.dot_dimension_numbers<[1], [0], [0], [1], [0, 0, 1, 1], [], []>} : vector<24x24xbf16>, vector<24x8xbf16>, vector<24x8xf32> -> vector<24x8xf32>
    %181 = tpu.concatenate %69, %106, %143, %180 in 1 : vector<24x8xf32>, vector<24x8xf32>, vector<24x8xf32>, vector<24x8xf32> -> vector<24x32xf32>
    %182 = arith.truncf %181 : vector<24x32xf32> to vector<24x32xbf16>
    %c0_125 = arith.constant 0 : index
    %c0_126 = arith.constant 0 : index
    %c0_127 = arith.constant 0 : index
    %c0_128 = arith.constant 0 : index
    %183 = vector.load %arg8[%c0_125, %c0_126, %c0_127, %c0_128] : memref<2x2x32x32xbf16, #tpu.memory_space<vmem>>, vector<1x1x32x32xbf16>
    %184 = vector.shape_cast %183 : vector<1x1x32x32xbf16> to vector<32x32xbf16>
    %cst_129 = arith.constant dense<0.000000e+00> : vector<24x32xf32>
    %185 = tpu.matmul %182, %184, %cst_129 {dimension_numbers = #tpu.dot_dimension_numbers<[1], [0], [0], [1], [0, 0, 1, 1], [], []>} : vector<24x32xbf16>, vector<32x32xbf16>, vector<24x32xf32> -> vector<24x32xf32>
    %186 = vector.extract_strided_slice %7 {offsets = [6, 0], sizes = [1, 32], strides = [1, 1]} : vector<10x128xf32> to vector<1x32xf32>
    %187 = vector.broadcast %186 : vector<1x32xf32> to vector<24x32xf32>
    %188 = arith.addf %185, %187 : vector<24x32xf32>
    %189 = arith.addf %4, %188 : vector<24x32xf32>
    %190 = vector.extract_strided_slice %7 {offsets = [1, 0], sizes = [1, 32], strides = [1, 1]} : vector<10x128xf32> to vector<1x32xf32>
    %191 = vector.extract_strided_slice %7 {offsets = [4, 0], sizes = [1, 32], strides = [1, 1]} : vector<10x128xf32> to vector<1x32xf32>
    %cst_130 = arith.constant dense<0.000000e+00> : vector<24xf32>
    %192 = vector.multi_reduction <add>, %189, %cst_130 [1] : vector<24x32xf32> to vector<24xf32>
    %193 = vector.shape_cast %192 : vector<24xf32> to vector<24x1xf32>
    %cst_131 = arith.constant 3.200000e+01 : f32
    %194 = vector.broadcast %cst_131 : f32 to vector<24x1xf32>
    %195 = arith.divf %193, %194 : vector<24x1xf32>
    %196 = vector.broadcast %195 : vector<24x1xf32> to vector<24x32xf32>
    %197 = arith.subf %189, %196 : vector<24x32xf32>
    %198 = arith.mulf %197, %197 : vector<24x32xf32>
    %cst_132 = arith.constant dense<0.000000e+00> : vector<24xf32>
    %199 = vector.multi_reduction <add>, %198, %cst_132 [1] : vector<24x32xf32> to vector<24xf32>
    %200 = vector.shape_cast %199 : vector<24xf32> to vector<24x1xf32>
    %cst_133 = arith.constant 3.200000e+01 : f32
    %201 = vector.broadcast %cst_133 : f32 to vector<24x1xf32>
    %202 = arith.divf %200, %201 : vector<24x1xf32>
    %203 = vector.broadcast %195 : vector<24x1xf32> to vector<24x32xf32>
    %204 = arith.subf %189, %203 : vector<24x32xf32>
    %cst_134 = arith.constant 9.99999974E-6 : f32
    %205 = vector.broadcast %cst_134 : f32 to vector<24x1xf32>
    %206 = arith.addf %202, %205 : vector<24x1xf32>
    %207 = math.rsqrt %206 : vector<24x1xf32>
    %208 = vector.broadcast %207 : vector<24x1xf32> to vector<24x32xf32>
    %209 = arith.mulf %204, %208 : vector<24x32xf32>
    %210 = vector.broadcast %190 : vector<1x32xf32> to vector<24x32xf32>
    %211 = arith.mulf %209, %210 : vector<24x32xf32>
    %212 = vector.broadcast %191 : vector<1x32xf32> to vector<24x32xf32>
    %213 = arith.addf %211, %212 : vector<24x32xf32>
    %214 = arith.truncf %213 : vector<24x32xf32> to vector<24x32xbf16>
    %c0_135 = arith.constant 0 : index
    %c12 = arith.constant 12 : index
    %c0_136 = arith.constant 0 : index
    %c0_137 = arith.constant 0 : index
    %215 = vector.load %arg6[%c0_135, %c12, %c0_136, %c0_137] : memref<2x24x32x8xbf16, #tpu.memory_space<vmem>>, vector<1x1x32x8xbf16>
    %216 = vector.shape_cast %215 : vector<1x1x32x8xbf16> to vector<32x8xbf16>
    %c0_138 = arith.constant 0 : index
    %c16 = arith.constant 16 : index
    %c0_139 = arith.constant 0 : index
    %c0_140 = arith.constant 0 : index
    %217 = vector.load %arg6[%c0_138, %c16, %c0_139, %c0_140] : memref<2x24x32x8xbf16, #tpu.memory_space<vmem>>, vector<1x1x32x8xbf16>
    %218 = vector.shape_cast %217 : vector<1x1x32x8xbf16> to vector<32x8xbf16>
    %c0_141 = arith.constant 0 : index
    %c20 = arith.constant 20 : index
    %c0_142 = arith.constant 0 : index
    %c0_143 = arith.constant 0 : index
    %219 = vector.load %arg6[%c0_141, %c20, %c0_142, %c0_143] : memref<2x24x32x8xbf16, #tpu.memory_space<vmem>>, vector<1x1x32x8xbf16>
    %220 = vector.shape_cast %219 : vector<1x1x32x8xbf16> to vector<32x8xbf16>
    %cst_144 = arith.constant dense<0.000000e+00> : vector<24x8xf32>
    %221 = tpu.matmul %214, %216, %cst_144 {dimension_numbers = #tpu.dot_dimension_numbers<[1], [0], [0], [1], [0, 0, 1, 1], [], []>} : vector<24x32xbf16>, vector<32x8xbf16>, vector<24x8xf32> -> vector<24x8xf32>
    %c0_145 = arith.constant 0 : index
    %c12_146 = arith.constant 12 : index
    %c0_147 = arith.constant 0 : index
    %c0_148 = arith.constant 0 : index
    %222 = vector.load %arg7[%c0_145, %c12_146, %c0_147, %c0_148] : memref<2x24x1x8xf32, #tpu.memory_space<vmem>>, vector<1x1x1x8xf32>
    %223 = vector.shape_cast %222 : vector<1x1x1x8xf32> to vector<1x8xf32>
    %224 = vector.broadcast %223 : vector<1x8xf32> to vector<24x8xf32>
    %225 = arith.addf %221, %224 : vector<24x8xf32>
    %cst_149 = arith.constant dense<0.000000e+00> : vector<32x8xf32>
    %226 = tpu.matmul %5, %218, %cst_149 {dimension_numbers = #tpu.dot_dimension_numbers<[1], [0], [0], [1], [0, 0, 1, 1], [], []>} : vector<32x32xbf16>, vector<32x8xbf16>, vector<32x8xf32> -> vector<32x8xf32>
    %c0_150 = arith.constant 0 : index
    %c16_151 = arith.constant 16 : index
    %c0_152 = arith.constant 0 : index
    %c0_153 = arith.constant 0 : index
    %227 = vector.load %arg7[%c0_150, %c16_151, %c0_152, %c0_153] : memref<2x24x1x8xf32, #tpu.memory_space<vmem>>, vector<1x1x1x8xf32>
    %228 = vector.shape_cast %227 : vector<1x1x1x8xf32> to vector<1x8xf32>
    %229 = vector.broadcast %228 : vector<1x8xf32> to vector<32x8xf32>
    %230 = arith.addf %226, %229 : vector<32x8xf32>
    %cst_154 = arith.constant dense<0.000000e+00> : vector<32x8xf32>
    %231 = tpu.matmul %5, %220, %cst_154 {dimension_numbers = #tpu.dot_dimension_numbers<[1], [0], [0], [1], [0, 0, 1, 1], [], []>} : vector<32x32xbf16>, vector<32x8xbf16>, vector<32x8xf32> -> vector<32x8xf32>
    %c0_155 = arith.constant 0 : index
    %c20_156 = arith.constant 20 : index
    %c0_157 = arith.constant 0 : index
    %c0_158 = arith.constant 0 : index
    %232 = vector.load %arg7[%c0_155, %c20_156, %c0_157, %c0_158] : memref<2x24x1x8xf32, #tpu.memory_space<vmem>>, vector<1x1x1x8xf32>
    %233 = vector.shape_cast %232 : vector<1x1x1x8xf32> to vector<1x8xf32>
    %234 = vector.broadcast %233 : vector<1x8xf32> to vector<32x8xf32>
    %235 = arith.addf %231, %234 : vector<32x8xf32>
    %236 = arith.truncf %225 : vector<24x8xf32> to vector<24x8xbf16>
    %237 = arith.truncf %230 : vector<32x8xf32> to vector<32x8xbf16>
    %cst_159 = arith.constant dense<0.000000e+00> : vector<24x32xf32>
    %238 = tpu.matmul %236, %237, %cst_159 {dimension_numbers = #tpu.dot_dimension_numbers<[1], [1], [0], [0], [0, 0, 1, 0], [], []>} : vector<24x8xbf16>, vector<32x8xbf16>, vector<24x32xf32> -> vector<24x32xf32>
    %cst_160 = arith.constant dense<0xFF800000> : vector<24xf32>
    %239 = vector.multi_reduction <maximumf>, %238, %cst_160 [1] : vector<24x32xf32> to vector<24xf32>
    %240 = vector.shape_cast %239 : vector<24xf32> to vector<24x1xf32>
    %241 = vector.broadcast %240 : vector<24x1xf32> to vector<24x32xf32>
    %242 = arith.subf %238, %241 : vector<24x32xf32>
    %243 = math.exp %242 : vector<24x32xf32>
    %cst_161 = arith.constant dense<0.000000e+00> : vector<24xf32>
    %244 = vector.multi_reduction <add>, %243, %cst_161 [1] : vector<24x32xf32> to vector<24xf32>
    %245 = vector.shape_cast %244 : vector<24xf32> to vector<24x1xf32>
    %246 = tpu.reciprocal %245 {approx = true} : vector<24x1xf32> -> vector<24x1xf32>
    %247 = vector.broadcast %246 : vector<24x1xf32> to vector<24x32xf32>
    %248 = arith.mulf %243, %247 : vector<24x32xf32>
    %249 = arith.truncf %248 : vector<24x32xf32> to vector<24x32xbf16>
    %250 = arith.truncf %235 : vector<32x8xf32> to vector<32x8xbf16>
    %cst_162 = arith.constant dense<0.000000e+00> : vector<24x8xf32>
    %251 = tpu.matmul %249, %250, %cst_162 {dimension_numbers = #tpu.dot_dimension_numbers<[1], [0], [0], [1], [0, 0, 1, 1], [], []>} : vector<24x32xbf16>, vector<32x8xbf16>, vector<24x8xf32> -> vector<24x8xf32>
    %c0_163 = arith.constant 0 : index
    %c13 = arith.constant 13 : index
    %c0_164 = arith.constant 0 : index
    %c0_165 = arith.constant 0 : index
    %252 = vector.load %arg6[%c0_163, %c13, %c0_164, %c0_165] : memref<2x24x32x8xbf16, #tpu.memory_space<vmem>>, vector<1x1x32x8xbf16>
    %253 = vector.shape_cast %252 : vector<1x1x32x8xbf16> to vector<32x8xbf16>
    %c0_166 = arith.constant 0 : index
    %c17 = arith.constant 17 : index
    %c0_167 = arith.constant 0 : index
    %c0_168 = arith.constant 0 : index
    %254 = vector.load %arg6[%c0_166, %c17, %c0_167, %c0_168] : memref<2x24x32x8xbf16, #tpu.memory_space<vmem>>, vector<1x1x32x8xbf16>
    %255 = vector.shape_cast %254 : vector<1x1x32x8xbf16> to vector<32x8xbf16>
    %c0_169 = arith.constant 0 : index
    %c21 = arith.constant 21 : index
    %c0_170 = arith.constant 0 : index
    %c0_171 = arith.constant 0 : index
    %256 = vector.load %arg6[%c0_169, %c21, %c0_170, %c0_171] : memref<2x24x32x8xbf16, #tpu.memory_space<vmem>>, vector<1x1x32x8xbf16>
    %257 = vector.shape_cast %256 : vector<1x1x32x8xbf16> to vector<32x8xbf16>
    %cst_172 = arith.constant dense<0.000000e+00> : vector<24x8xf32>
    %258 = tpu.matmul %214, %253, %cst_172 {dimension_numbers = #tpu.dot_dimension_numbers<[1], [0], [0], [1], [0, 0, 1, 1], [], []>} : vector<24x32xbf16>, vector<32x8xbf16>, vector<24x8xf32> -> vector<24x8xf32>
    %c0_173 = arith.constant 0 : index
    %c13_174 = arith.constant 13 : index
    %c0_175 = arith.constant 0 : index
    %c0_176 = arith.constant 0 : index
    %259 = vector.load %arg7[%c0_173, %c13_174, %c0_175, %c0_176] : memref<2x24x1x8xf32, #tpu.memory_space<vmem>>, vector<1x1x1x8xf32>
    %260 = vector.shape_cast %259 : vector<1x1x1x8xf32> to vector<1x8xf32>
    %261 = vector.broadcast %260 : vector<1x8xf32> to vector<24x8xf32>
    %262 = arith.addf %258, %261 : vector<24x8xf32>
    %cst_177 = arith.constant dense<0.000000e+00> : vector<32x8xf32>
    %263 = tpu.matmul %5, %255, %cst_177 {dimension_numbers = #tpu.dot_dimension_numbers<[1], [0], [0], [1], [0, 0, 1, 1], [], []>} : vector<32x32xbf16>, vector<32x8xbf16>, vector<32x8xf32> -> vector<32x8xf32>
    %c0_178 = arith.constant 0 : index
    %c17_179 = arith.constant 17 : index
    %c0_180 = arith.constant 0 : index
    %c0_181 = arith.constant 0 : index
    %264 = vector.load %arg7[%c0_178, %c17_179, %c0_180, %c0_181] : memref<2x24x1x8xf32, #tpu.memory_space<vmem>>, vector<1x1x1x8xf32>
    %265 = vector.shape_cast %264 : vector<1x1x1x8xf32> to vector<1x8xf32>
    %266 = vector.broadcast %265 : vector<1x8xf32> to vector<32x8xf32>
    %267 = arith.addf %263, %266 : vector<32x8xf32>
    %cst_182 = arith.constant dense<0.000000e+00> : vector<32x8xf32>
    %268 = tpu.matmul %5, %257, %cst_182 {dimension_numbers = #tpu.dot_dimension_numbers<[1], [0], [0], [1], [0, 0, 1, 1], [], []>} : vector<32x32xbf16>, vector<32x8xbf16>, vector<32x8xf32> -> vector<32x8xf32>
    %c0_183 = arith.constant 0 : index
    %c21_184 = arith.constant 21 : index
    %c0_185 = arith.constant 0 : index
    %c0_186 = arith.constant 0 : index
    %269 = vector.load %arg7[%c0_183, %c21_184, %c0_185, %c0_186] : memref<2x24x1x8xf32, #tpu.memory_space<vmem>>, vector<1x1x1x8xf32>
    %270 = vector.shape_cast %269 : vector<1x1x1x8xf32> to vector<1x8xf32>
    %271 = vector.broadcast %270 : vector<1x8xf32> to vector<32x8xf32>
    %272 = arith.addf %268, %271 : vector<32x8xf32>
    %273 = arith.truncf %262 : vector<24x8xf32> to vector<24x8xbf16>
    %274 = arith.truncf %267 : vector<32x8xf32> to vector<32x8xbf16>
    %cst_187 = arith.constant dense<0.000000e+00> : vector<24x32xf32>
    %275 = tpu.matmul %273, %274, %cst_187 {dimension_numbers = #tpu.dot_dimension_numbers<[1], [1], [0], [0], [0, 0, 1, 0], [], []>} : vector<24x8xbf16>, vector<32x8xbf16>, vector<24x32xf32> -> vector<24x32xf32>
    %cst_188 = arith.constant dense<0xFF800000> : vector<24xf32>
    %276 = vector.multi_reduction <maximumf>, %275, %cst_188 [1] : vector<24x32xf32> to vector<24xf32>
    %277 = vector.shape_cast %276 : vector<24xf32> to vector<24x1xf32>
    %278 = vector.broadcast %277 : vector<24x1xf32> to vector<24x32xf32>
    %279 = arith.subf %275, %278 : vector<24x32xf32>
    %280 = math.exp %279 : vector<24x32xf32>
    %cst_189 = arith.constant dense<0.000000e+00> : vector<24xf32>
    %281 = vector.multi_reduction <add>, %280, %cst_189 [1] : vector<24x32xf32> to vector<24xf32>
    %282 = vector.shape_cast %281 : vector<24xf32> to vector<24x1xf32>
    %283 = tpu.reciprocal %282 {approx = true} : vector<24x1xf32> -> vector<24x1xf32>
    %284 = vector.broadcast %283 : vector<24x1xf32> to vector<24x32xf32>
    %285 = arith.mulf %280, %284 : vector<24x32xf32>
    %286 = arith.truncf %285 : vector<24x32xf32> to vector<24x32xbf16>
    %287 = arith.truncf %272 : vector<32x8xf32> to vector<32x8xbf16>
    %cst_190 = arith.constant dense<0.000000e+00> : vector<24x8xf32>
    %288 = tpu.matmul %286, %287, %cst_190 {dimension_numbers = #tpu.dot_dimension_numbers<[1], [0], [0], [1], [0, 0, 1, 1], [], []>} : vector<24x32xbf16>, vector<32x8xbf16>, vector<24x8xf32> -> vector<24x8xf32>
    %c0_191 = arith.constant 0 : index
    %c14 = arith.constant 14 : index
    %c0_192 = arith.constant 0 : index
    %c0_193 = arith.constant 0 : index
    %289 = vector.load %arg6[%c0_191, %c14, %c0_192, %c0_193] : memref<2x24x32x8xbf16, #tpu.memory_space<vmem>>, vector<1x1x32x8xbf16>
    %290 = vector.shape_cast %289 : vector<1x1x32x8xbf16> to vector<32x8xbf16>
    %c0_194 = arith.constant 0 : index
    %c18 = arith.constant 18 : index
    %c0_195 = arith.constant 0 : index
    %c0_196 = arith.constant 0 : index
    %291 = vector.load %arg6[%c0_194, %c18, %c0_195, %c0_196] : memref<2x24x32x8xbf16, #tpu.memory_space<vmem>>, vector<1x1x32x8xbf16>
    %292 = vector.shape_cast %291 : vector<1x1x32x8xbf16> to vector<32x8xbf16>
    %c0_197 = arith.constant 0 : index
    %c22 = arith.constant 22 : index
    %c0_198 = arith.constant 0 : index
    %c0_199 = arith.constant 0 : index
    %293 = vector.load %arg6[%c0_197, %c22, %c0_198, %c0_199] : memref<2x24x32x8xbf16, #tpu.memory_space<vmem>>, vector<1x1x32x8xbf16>
    %294 = vector.shape_cast %293 : vector<1x1x32x8xbf16> to vector<32x8xbf16>
    %cst_200 = arith.constant dense<0.000000e+00> : vector<24x8xf32>
    %295 = tpu.matmul %214, %290, %cst_200 {dimension_numbers = #tpu.dot_dimension_numbers<[1], [0], [0], [1], [0, 0, 1, 1], [], []>} : vector<24x32xbf16>, vector<32x8xbf16>, vector<24x8xf32> -> vector<24x8xf32>
    %c0_201 = arith.constant 0 : index
    %c14_202 = arith.constant 14 : index
    %c0_203 = arith.constant 0 : index
    %c0_204 = arith.constant 0 : index
    %296 = vector.load %arg7[%c0_201, %c14_202, %c0_203, %c0_204] : memref<2x24x1x8xf32, #tpu.memory_space<vmem>>, vector<1x1x1x8xf32>
    %297 = vector.shape_cast %296 : vector<1x1x1x8xf32> to vector<1x8xf32>
    %298 = vector.broadcast %297 : vector<1x8xf32> to vector<24x8xf32>
    %299 = arith.addf %295, %298 : vector<24x8xf32>
    %cst_205 = arith.constant dense<0.000000e+00> : vector<32x8xf32>
    %300 = tpu.matmul %5, %292, %cst_205 {dimension_numbers = #tpu.dot_dimension_numbers<[1], [0], [0], [1], [0, 0, 1, 1], [], []>} : vector<32x32xbf16>, vector<32x8xbf16>, vector<32x8xf32> -> vector<32x8xf32>
    %c0_206 = arith.constant 0 : index
    %c18_207 = arith.constant 18 : index
    %c0_208 = arith.constant 0 : index
    %c0_209 = arith.constant 0 : index
    %301 = vector.load %arg7[%c0_206, %c18_207, %c0_208, %c0_209] : memref<2x24x1x8xf32, #tpu.memory_space<vmem>>, vector<1x1x1x8xf32>
    %302 = vector.shape_cast %301 : vector<1x1x1x8xf32> to vector<1x8xf32>
    %303 = vector.broadcast %302 : vector<1x8xf32> to vector<32x8xf32>
    %304 = arith.addf %300, %303 : vector<32x8xf32>
    %cst_210 = arith.constant dense<0.000000e+00> : vector<32x8xf32>
    %305 = tpu.matmul %5, %294, %cst_210 {dimension_numbers = #tpu.dot_dimension_numbers<[1], [0], [0], [1], [0, 0, 1, 1], [], []>} : vector<32x32xbf16>, vector<32x8xbf16>, vector<32x8xf32> -> vector<32x8xf32>
    %c0_211 = arith.constant 0 : index
    %c22_212 = arith.constant 22 : index
    %c0_213 = arith.constant 0 : index
    %c0_214 = arith.constant 0 : index
    %306 = vector.load %arg7[%c0_211, %c22_212, %c0_213, %c0_214] : memref<2x24x1x8xf32, #tpu.memory_space<vmem>>, vector<1x1x1x8xf32>
    %307 = vector.shape_cast %306 : vector<1x1x1x8xf32> to vector<1x8xf32>
    %308 = vector.broadcast %307 : vector<1x8xf32> to vector<32x8xf32>
    %309 = arith.addf %305, %308 : vector<32x8xf32>
    %310 = arith.truncf %299 : vector<24x8xf32> to vector<24x8xbf16>
    %311 = arith.truncf %304 : vector<32x8xf32> to vector<32x8xbf16>
    %cst_215 = arith.constant dense<0.000000e+00> : vector<24x32xf32>
    %312 = tpu.matmul %310, %311, %cst_215 {dimension_numbers = #tpu.dot_dimension_numbers<[1], [1], [0], [0], [0, 0, 1, 0], [], []>} : vector<24x8xbf16>, vector<32x8xbf16>, vector<24x32xf32> -> vector<24x32xf32>
    %cst_216 = arith.constant dense<0xFF800000> : vector<24xf32>
    %313 = vector.multi_reduction <maximumf>, %312, %cst_216 [1] : vector<24x32xf32> to vector<24xf32>
    %314 = vector.shape_cast %313 : vector<24xf32> to vector<24x1xf32>
    %315 = vector.broadcast %314 : vector<24x1xf32> to vector<24x32xf32>
    %316 = arith.subf %312, %315 : vector<24x32xf32>
    %317 = math.exp %316 : vector<24x32xf32>
    %cst_217 = arith.constant dense<0.000000e+00> : vector<24xf32>
    %318 = vector.multi_reduction <add>, %317, %cst_217 [1] : vector<24x32xf32> to vector<24xf32>
    %319 = vector.shape_cast %318 : vector<24xf32> to vector<24x1xf32>
    %320 = tpu.reciprocal %319 {approx = true} : vector<24x1xf32> -> vector<24x1xf32>
    %321 = vector.broadcast %320 : vector<24x1xf32> to vector<24x32xf32>
    %322 = arith.mulf %317, %321 : vector<24x32xf32>
    %323 = arith.truncf %322 : vector<24x32xf32> to vector<24x32xbf16>
    %324 = arith.truncf %309 : vector<32x8xf32> to vector<32x8xbf16>
    %cst_218 = arith.constant dense<0.000000e+00> : vector<24x8xf32>
    %325 = tpu.matmul %323, %324, %cst_218 {dimension_numbers = #tpu.dot_dimension_numbers<[1], [0], [0], [1], [0, 0, 1, 1], [], []>} : vector<24x32xbf16>, vector<32x8xbf16>, vector<24x8xf32> -> vector<24x8xf32>
    %c0_219 = arith.constant 0 : index
    %c15 = arith.constant 15 : index
    %c0_220 = arith.constant 0 : index
    %c0_221 = arith.constant 0 : index
    %326 = vector.load %arg6[%c0_219, %c15, %c0_220, %c0_221] : memref<2x24x32x8xbf16, #tpu.memory_space<vmem>>, vector<1x1x32x8xbf16>
    %327 = vector.shape_cast %326 : vector<1x1x32x8xbf16> to vector<32x8xbf16>
    %c0_222 = arith.constant 0 : index
    %c19 = arith.constant 19 : index
    %c0_223 = arith.constant 0 : index
    %c0_224 = arith.constant 0 : index
    %328 = vector.load %arg6[%c0_222, %c19, %c0_223, %c0_224] : memref<2x24x32x8xbf16, #tpu.memory_space<vmem>>, vector<1x1x32x8xbf16>
    %329 = vector.shape_cast %328 : vector<1x1x32x8xbf16> to vector<32x8xbf16>
    %c0_225 = arith.constant 0 : index
    %c23 = arith.constant 23 : index
    %c0_226 = arith.constant 0 : index
    %c0_227 = arith.constant 0 : index
    %330 = vector.load %arg6[%c0_225, %c23, %c0_226, %c0_227] : memref<2x24x32x8xbf16, #tpu.memory_space<vmem>>, vector<1x1x32x8xbf16>
    %331 = vector.shape_cast %330 : vector<1x1x32x8xbf16> to vector<32x8xbf16>
    %cst_228 = arith.constant dense<0.000000e+00> : vector<24x8xf32>
    %332 = tpu.matmul %214, %327, %cst_228 {dimension_numbers = #tpu.dot_dimension_numbers<[1], [0], [0], [1], [0, 0, 1, 1], [], []>} : vector<24x32xbf16>, vector<32x8xbf16>, vector<24x8xf32> -> vector<24x8xf32>
    %c0_229 = arith.constant 0 : index
    %c15_230 = arith.constant 15 : index
    %c0_231 = arith.constant 0 : index
    %c0_232 = arith.constant 0 : index
    %333 = vector.load %arg7[%c0_229, %c15_230, %c0_231, %c0_232] : memref<2x24x1x8xf32, #tpu.memory_space<vmem>>, vector<1x1x1x8xf32>
    %334 = vector.shape_cast %333 : vector<1x1x1x8xf32> to vector<1x8xf32>
    %335 = vector.broadcast %334 : vector<1x8xf32> to vector<24x8xf32>
    %336 = arith.addf %332, %335 : vector<24x8xf32>
    %cst_233 = arith.constant dense<0.000000e+00> : vector<32x8xf32>
    %337 = tpu.matmul %5, %329, %cst_233 {dimension_numbers = #tpu.dot_dimension_numbers<[1], [0], [0], [1], [0, 0, 1, 1], [], []>} : vector<32x32xbf16>, vector<32x8xbf16>, vector<32x8xf32> -> vector<32x8xf32>
    %c0_234 = arith.constant 0 : index
    %c19_235 = arith.constant 19 : index
    %c0_236 = arith.constant 0 : index
    %c0_237 = arith.constant 0 : index
    %338 = vector.load %arg7[%c0_234, %c19_235, %c0_236, %c0_237] : memref<2x24x1x8xf32, #tpu.memory_space<vmem>>, vector<1x1x1x8xf32>
    %339 = vector.shape_cast %338 : vector<1x1x1x8xf32> to vector<1x8xf32>
    %340 = vector.broadcast %339 : vector<1x8xf32> to vector<32x8xf32>
    %341 = arith.addf %337, %340 : vector<32x8xf32>
    %cst_238 = arith.constant dense<0.000000e+00> : vector<32x8xf32>
    %342 = tpu.matmul %5, %331, %cst_238 {dimension_numbers = #tpu.dot_dimension_numbers<[1], [0], [0], [1], [0, 0, 1, 1], [], []>} : vector<32x32xbf16>, vector<32x8xbf16>, vector<32x8xf32> -> vector<32x8xf32>
    %c0_239 = arith.constant 0 : index
    %c23_240 = arith.constant 23 : index
    %c0_241 = arith.constant 0 : index
    %c0_242 = arith.constant 0 : index
    %343 = vector.load %arg7[%c0_239, %c23_240, %c0_241, %c0_242] : memref<2x24x1x8xf32, #tpu.memory_space<vmem>>, vector<1x1x1x8xf32>
    %344 = vector.shape_cast %343 : vector<1x1x1x8xf32> to vector<1x8xf32>
    %345 = vector.broadcast %344 : vector<1x8xf32> to vector<32x8xf32>
    %346 = arith.addf %342, %345 : vector<32x8xf32>
    %347 = arith.truncf %336 : vector<24x8xf32> to vector<24x8xbf16>
    %348 = arith.truncf %341 : vector<32x8xf32> to vector<32x8xbf16>
    %cst_243 = arith.constant dense<0.000000e+00> : vector<24x32xf32>
    %349 = tpu.matmul %347, %348, %cst_243 {dimension_numbers = #tpu.dot_dimension_numbers<[1], [1], [0], [0], [0, 0, 1, 0], [], []>} : vector<24x8xbf16>, vector<32x8xbf16>, vector<24x32xf32> -> vector<24x32xf32>
    %cst_244 = arith.constant dense<0xFF800000> : vector<24xf32>
    %350 = vector.multi_reduction <maximumf>, %349, %cst_244 [1] : vector<24x32xf32> to vector<24xf32>
    %351 = vector.shape_cast %350 : vector<24xf32> to vector<24x1xf32>
    %352 = vector.broadcast %351 : vector<24x1xf32> to vector<24x32xf32>
    %353 = arith.subf %349, %352 : vector<24x32xf32>
    %354 = math.exp %353 : vector<24x32xf32>
    %cst_245 = arith.constant dense<0.000000e+00> : vector<24xf32>
    %355 = vector.multi_reduction <add>, %354, %cst_245 [1] : vector<24x32xf32> to vector<24xf32>
    %356 = vector.shape_cast %355 : vector<24xf32> to vector<24x1xf32>
    %357 = tpu.reciprocal %356 {approx = true} : vector<24x1xf32> -> vector<24x1xf32>
    %358 = vector.broadcast %357 : vector<24x1xf32> to vector<24x32xf32>
    %359 = arith.mulf %354, %358 : vector<24x32xf32>
    %360 = arith.truncf %359 : vector<24x32xf32> to vector<24x32xbf16>
    %361 = arith.truncf %346 : vector<32x8xf32> to vector<32x8xbf16>
    %cst_246 = arith.constant dense<0.000000e+00> : vector<24x8xf32>
    %362 = tpu.matmul %360, %361, %cst_246 {dimension_numbers = #tpu.dot_dimension_numbers<[1], [0], [0], [1], [0, 0, 1, 1], [], []>} : vector<24x32xbf16>, vector<32x8xbf16>, vector<24x8xf32> -> vector<24x8xf32>
    %363 = tpu.concatenate %251, %288, %325, %362 in 1 : vector<24x8xf32>, vector<24x8xf32>, vector<24x8xf32>, vector<24x8xf32> -> vector<24x32xf32>
    %364 = arith.truncf %363 : vector<24x32xf32> to vector<24x32xbf16>
    %c0_247 = arith.constant 0 : index
    %c1_248 = arith.constant 1 : index
    %c0_249 = arith.constant 0 : index
    %c0_250 = arith.constant 0 : index
    %365 = vector.load %arg8[%c0_247, %c1_248, %c0_249, %c0_250] : memref<2x2x32x32xbf16, #tpu.memory_space<vmem>>, vector<1x1x32x32xbf16>
    %366 = vector.shape_cast %365 : vector<1x1x32x32xbf16> to vector<32x32xbf16>
    %cst_251 = arith.constant dense<0.000000e+00> : vector<24x32xf32>
    %367 = tpu.matmul %364, %366, %cst_251 {dimension_numbers = #tpu.dot_dimension_numbers<[1], [0], [0], [1], [0, 0, 1, 1], [], []>} : vector<24x32xbf16>, vector<32x32xbf16>, vector<24x32xf32> -> vector<24x32xf32>
    %368 = vector.extract_strided_slice %7 {offsets = [7, 0], sizes = [1, 32], strides = [1, 1]} : vector<10x128xf32> to vector<1x32xf32>
    %369 = vector.broadcast %368 : vector<1x32xf32> to vector<24x32xf32>
    %370 = arith.addf %367, %369 : vector<24x32xf32>
    %371 = arith.addf %189, %370 : vector<24x32xf32>
    %372 = vector.extract_strided_slice %7 {offsets = [2, 0], sizes = [1, 32], strides = [1, 1]} : vector<10x128xf32> to vector<1x32xf32>
    %373 = vector.extract_strided_slice %7 {offsets = [5, 0], sizes = [1, 32], strides = [1, 1]} : vector<10x128xf32> to vector<1x32xf32>
    %cst_252 = arith.constant dense<0.000000e+00> : vector<24xf32>
    %374 = vector.multi_reduction <add>, %371, %cst_252 [1] : vector<24x32xf32> to vector<24xf32>
    %375 = vector.shape_cast %374 : vector<24xf32> to vector<24x1xf32>
    %cst_253 = arith.constant 3.200000e+01 : f32
    %376 = vector.broadcast %cst_253 : f32 to vector<24x1xf32>
    %377 = arith.divf %375, %376 : vector<24x1xf32>
    %378 = vector.broadcast %377 : vector<24x1xf32> to vector<24x32xf32>
    %379 = arith.subf %371, %378 : vector<24x32xf32>
    %380 = arith.mulf %379, %379 : vector<24x32xf32>
    %cst_254 = arith.constant dense<0.000000e+00> : vector<24xf32>
    %381 = vector.multi_reduction <add>, %380, %cst_254 [1] : vector<24x32xf32> to vector<24xf32>
    %382 = vector.shape_cast %381 : vector<24xf32> to vector<24x1xf32>
    %cst_255 = arith.constant 3.200000e+01 : f32
    %383 = vector.broadcast %cst_255 : f32 to vector<24x1xf32>
    %384 = arith.divf %382, %383 : vector<24x1xf32>
    %385 = vector.broadcast %377 : vector<24x1xf32> to vector<24x32xf32>
    %386 = arith.subf %371, %385 : vector<24x32xf32>
    %cst_256 = arith.constant 9.99999974E-6 : f32
    %387 = vector.broadcast %cst_256 : f32 to vector<24x1xf32>
    %388 = arith.addf %384, %387 : vector<24x1xf32>
    %389 = math.rsqrt %388 : vector<24x1xf32>
    %390 = vector.broadcast %389 : vector<24x1xf32> to vector<24x32xf32>
    %391 = arith.mulf %386, %390 : vector<24x32xf32>
    %392 = vector.broadcast %372 : vector<1x32xf32> to vector<24x32xf32>
    %393 = arith.mulf %391, %392 : vector<24x32xf32>
    %394 = vector.broadcast %373 : vector<1x32xf32> to vector<24x32xf32>
    %395 = arith.addf %393, %394 : vector<24x32xf32>
    %396 = arith.truncf %395 : vector<24x32xf32> to vector<24x32xbf16>
    %c0_257 = arith.constant 0 : index
    %c0_258 = arith.constant 0 : index
    %c0_259 = arith.constant 0 : index
    %397 = vector.load %arg9[%c0_257, %c0_258, %c0_259] : memref<2x32x128xbf16, #tpu.memory_space<vmem>>, vector<1x32x128xbf16>
    %398 = vector.shape_cast %397 : vector<1x32x128xbf16> to vector<32x128xbf16>
    %cst_260 = arith.constant dense<0.000000e+00> : vector<24x128xf32>
    %399 = tpu.matmul %396, %398, %cst_260 {dimension_numbers = #tpu.dot_dimension_numbers<[1], [0], [0], [1], [0, 0, 1, 1], [], []>} : vector<24x32xbf16>, vector<32x128xbf16>, vector<24x128xf32> -> vector<24x128xf32>
    %400 = vector.extract_strided_slice %7 {offsets = [8, 0], sizes = [1, 128], strides = [1, 1]} : vector<10x128xf32> to vector<1x128xf32>
    %401 = vector.broadcast %400 : vector<1x128xf32> to vector<24x128xf32>
    %402 = arith.addf %399, %401 : vector<24x128xf32>
    %403 = arith.mulf %402, %402 : vector<24x128xf32>
    %404 = arith.mulf %402, %403 : vector<24x128xf32>
    %cst_261 = arith.constant 4.471500e-02 : f32
    %405 = vector.broadcast %cst_261 : f32 to vector<24x128xf32>
    %406 = arith.mulf %405, %404 : vector<24x128xf32>
    %407 = arith.addf %402, %406 : vector<24x128xf32>
    %cst_262 = arith.constant 0.797884583 : f32
    %408 = vector.broadcast %cst_262 : f32 to vector<24x128xf32>
    %409 = arith.mulf %408, %407 : vector<24x128xf32>
    %410 = math.tanh %409 : vector<24x128xf32>
    %cst_263 = arith.constant 1.000000e+00 : f32
    %411 = vector.broadcast %cst_263 : f32 to vector<24x128xf32>
    %412 = arith.addf %411, %410 : vector<24x128xf32>
    %cst_264 = arith.constant 5.000000e-01 : f32
    %413 = vector.broadcast %cst_264 : f32 to vector<24x128xf32>
    %414 = arith.mulf %413, %412 : vector<24x128xf32>
    %415 = arith.mulf %402, %414 : vector<24x128xf32>
    %416 = arith.truncf %415 : vector<24x128xf32> to vector<24x128xbf16>
    %c0_265 = arith.constant 0 : index
    %c0_266 = arith.constant 0 : index
    %c0_267 = arith.constant 0 : index
    %417 = vector.load %arg10[%c0_265, %c0_266, %c0_267] : memref<2x128x32xbf16, #tpu.memory_space<vmem>>, vector<1x128x32xbf16>
    %418 = vector.shape_cast %417 : vector<1x128x32xbf16> to vector<128x32xbf16>
    %cst_268 = arith.constant dense<0.000000e+00> : vector<24x32xf32>
    %419 = tpu.matmul %416, %418, %cst_268 {dimension_numbers = #tpu.dot_dimension_numbers<[1], [0], [0], [1], [0, 0, 1, 1], [], []>} : vector<24x128xbf16>, vector<128x32xbf16>, vector<24x32xf32> -> vector<24x32xf32>
    %420 = arith.addf %371, %419 : vector<24x32xf32>
    %421 = vector.extract_strided_slice %7 {offsets = [9, 0], sizes = [1, 32], strides = [1, 1]} : vector<10x128xf32> to vector<1x32xf32>
    %422 = vector.broadcast %421 : vector<1x32xf32> to vector<24x32xf32>
    %423 = arith.addf %420, %422 : vector<24x32xf32>
    %c1_269 = arith.constant 1 : index
    %c0_270 = arith.constant 0 : index
    %c0_271 = arith.constant 0 : index
    %424 = vector.load %arg11[%c1_269, %c0_270, %c0_271] : memref<2x10x128xf32, #tpu.memory_space<vmem>>, vector<1x10x128xf32>
    %425 = vector.shape_cast %424 : vector<1x10x128xf32> to vector<10x128xf32>
    %426 = vector.extract_strided_slice %425 {offsets = [0, 0], sizes = [1, 32], strides = [1, 1]} : vector<10x128xf32> to vector<1x32xf32>
    %427 = vector.extract_strided_slice %425 {offsets = [3, 0], sizes = [1, 32], strides = [1, 1]} : vector<10x128xf32> to vector<1x32xf32>
    %cst_272 = arith.constant dense<0.000000e+00> : vector<24xf32>
    %428 = vector.multi_reduction <add>, %423, %cst_272 [1] : vector<24x32xf32> to vector<24xf32>
    %429 = vector.shape_cast %428 : vector<24xf32> to vector<24x1xf32>
    %cst_273 = arith.constant 3.200000e+01 : f32
    %430 = vector.broadcast %cst_273 : f32 to vector<24x1xf32>
    %431 = arith.divf %429, %430 : vector<24x1xf32>
    %432 = vector.broadcast %431 : vector<24x1xf32> to vector<24x32xf32>
    %433 = arith.subf %423, %432 : vector<24x32xf32>
    %434 = arith.mulf %433, %433 : vector<24x32xf32>
    %cst_274 = arith.constant dense<0.000000e+00> : vector<24xf32>
    %435 = vector.multi_reduction <add>, %434, %cst_274 [1] : vector<24x32xf32> to vector<24xf32>
    %436 = vector.shape_cast %435 : vector<24xf32> to vector<24x1xf32>
    %cst_275 = arith.constant 3.200000e+01 : f32
    %437 = vector.broadcast %cst_275 : f32 to vector<24x1xf32>
    %438 = arith.divf %436, %437 : vector<24x1xf32>
    %439 = vector.broadcast %431 : vector<24x1xf32> to vector<24x32xf32>
    %440 = arith.subf %423, %439 : vector<24x32xf32>
    %cst_276 = arith.constant 9.99999974E-6 : f32
    %441 = vector.broadcast %cst_276 : f32 to vector<24x1xf32>
    %442 = arith.addf %438, %441 : vector<24x1xf32>
    %443 = math.rsqrt %442 : vector<24x1xf32>
    %444 = vector.broadcast %443 : vector<24x1xf32> to vector<24x32xf32>
    %445 = arith.mulf %440, %444 : vector<24x32xf32>
    %446 = vector.broadcast %426 : vector<1x32xf32> to vector<24x32xf32>
    %447 = arith.mulf %445, %446 : vector<24x32xf32>
    %448 = vector.broadcast %427 : vector<1x32xf32> to vector<24x32xf32>
    %449 = arith.addf %447, %448 : vector<24x32xf32>
    %450 = arith.truncf %449 : vector<24x32xf32> to vector<24x32xbf16>
    %c1_277 = arith.constant 1 : index
    %c0_278 = arith.constant 0 : index
    %c0_279 = arith.constant 0 : index
    %c0_280 = arith.constant 0 : index
    %451 = vector.load %arg6[%c1_277, %c0_278, %c0_279, %c0_280] : memref<2x24x32x8xbf16, #tpu.memory_space<vmem>>, vector<1x1x32x8xbf16>
    %452 = vector.shape_cast %451 : vector<1x1x32x8xbf16> to vector<32x8xbf16>
    %c1_281 = arith.constant 1 : index
    %c4_282 = arith.constant 4 : index
    %c0_283 = arith.constant 0 : index
    %c0_284 = arith.constant 0 : index
    %453 = vector.load %arg6[%c1_281, %c4_282, %c0_283, %c0_284] : memref<2x24x32x8xbf16, #tpu.memory_space<vmem>>, vector<1x1x32x8xbf16>
    %454 = vector.shape_cast %453 : vector<1x1x32x8xbf16> to vector<32x8xbf16>
    %c1_285 = arith.constant 1 : index
    %c8_286 = arith.constant 8 : index
    %c0_287 = arith.constant 0 : index
    %c0_288 = arith.constant 0 : index
    %455 = vector.load %arg6[%c1_285, %c8_286, %c0_287, %c0_288] : memref<2x24x32x8xbf16, #tpu.memory_space<vmem>>, vector<1x1x32x8xbf16>
    %456 = vector.shape_cast %455 : vector<1x1x32x8xbf16> to vector<32x8xbf16>
    %cst_289 = arith.constant dense<0.000000e+00> : vector<24x8xf32>
    %457 = tpu.matmul %450, %452, %cst_289 {dimension_numbers = #tpu.dot_dimension_numbers<[1], [0], [0], [1], [0, 0, 1, 1], [], []>} : vector<24x32xbf16>, vector<32x8xbf16>, vector<24x8xf32> -> vector<24x8xf32>
    %c1_290 = arith.constant 1 : index
    %c0_291 = arith.constant 0 : index
    %c0_292 = arith.constant 0 : index
    %c0_293 = arith.constant 0 : index
    %458 = vector.load %arg7[%c1_290, %c0_291, %c0_292, %c0_293] : memref<2x24x1x8xf32, #tpu.memory_space<vmem>>, vector<1x1x1x8xf32>
    %459 = vector.shape_cast %458 : vector<1x1x1x8xf32> to vector<1x8xf32>
    %460 = vector.broadcast %459 : vector<1x8xf32> to vector<24x8xf32>
    %461 = arith.addf %457, %460 : vector<24x8xf32>
    %cst_294 = arith.constant dense<0.000000e+00> : vector<24x8xf32>
    %462 = tpu.matmul %450, %454, %cst_294 {dimension_numbers = #tpu.dot_dimension_numbers<[1], [0], [0], [1], [0, 0, 1, 1], [], []>} : vector<24x32xbf16>, vector<32x8xbf16>, vector<24x8xf32> -> vector<24x8xf32>
    %c1_295 = arith.constant 1 : index
    %c4_296 = arith.constant 4 : index
    %c0_297 = arith.constant 0 : index
    %c0_298 = arith.constant 0 : index
    %463 = vector.load %arg7[%c1_295, %c4_296, %c0_297, %c0_298] : memref<2x24x1x8xf32, #tpu.memory_space<vmem>>, vector<1x1x1x8xf32>
    %464 = vector.shape_cast %463 : vector<1x1x1x8xf32> to vector<1x8xf32>
    %465 = vector.broadcast %464 : vector<1x8xf32> to vector<24x8xf32>
    %466 = arith.addf %462, %465 : vector<24x8xf32>
    %cst_299 = arith.constant dense<0.000000e+00> : vector<24x8xf32>
    %467 = tpu.matmul %450, %456, %cst_299 {dimension_numbers = #tpu.dot_dimension_numbers<[1], [0], [0], [1], [0, 0, 1, 1], [], []>} : vector<24x32xbf16>, vector<32x8xbf16>, vector<24x8xf32> -> vector<24x8xf32>
    %c1_300 = arith.constant 1 : index
    %c8_301 = arith.constant 8 : index
    %c0_302 = arith.constant 0 : index
    %c0_303 = arith.constant 0 : index
    %468 = vector.load %arg7[%c1_300, %c8_301, %c0_302, %c0_303] : memref<2x24x1x8xf32, #tpu.memory_space<vmem>>, vector<1x1x1x8xf32>
    %469 = vector.shape_cast %468 : vector<1x1x1x8xf32> to vector<1x8xf32>
    %470 = vector.broadcast %469 : vector<1x8xf32> to vector<24x8xf32>
    %471 = arith.addf %467, %470 : vector<24x8xf32>
    %472 = arith.truncf %461 : vector<24x8xf32> to vector<24x8xbf16>
    %473 = arith.truncf %466 : vector<24x8xf32> to vector<24x8xbf16>
    %cst_304 = arith.constant dense<0.000000e+00> : vector<24x24xf32>
    %474 = tpu.matmul %472, %473, %cst_304 {dimension_numbers = #tpu.dot_dimension_numbers<[1], [1], [0], [0], [0, 0, 1, 0], [], []>} : vector<24x8xbf16>, vector<24x8xbf16>, vector<24x24xf32> -> vector<24x24xf32>
    %cst_305 = arith.constant dense<0xFF800000> : vector<24xf32>
    %475 = vector.multi_reduction <maximumf>, %474, %cst_305 [1] : vector<24x24xf32> to vector<24xf32>
    %476 = vector.shape_cast %475 : vector<24xf32> to vector<24x1xf32>
    %477 = vector.broadcast %476 : vector<24x1xf32> to vector<24x24xf32>
    %478 = arith.subf %474, %477 : vector<24x24xf32>
    %479 = math.exp %478 : vector<24x24xf32>
    %cst_306 = arith.constant dense<0.000000e+00> : vector<24xf32>
    %480 = vector.multi_reduction <add>, %479, %cst_306 [1] : vector<24x24xf32> to vector<24xf32>
    %481 = vector.shape_cast %480 : vector<24xf32> to vector<24x1xf32>
    %482 = tpu.reciprocal %481 {approx = true} : vector<24x1xf32> -> vector<24x1xf32>
    %483 = vector.broadcast %482 : vector<24x1xf32> to vector<24x24xf32>
    %484 = arith.mulf %479, %483 : vector<24x24xf32>
    %485 = arith.truncf %484 : vector<24x24xf32> to vector<24x24xbf16>
    %486 = arith.truncf %471 : vector<24x8xf32> to vector<24x8xbf16>
    %cst_307 = arith.constant dense<0.000000e+00> : vector<24x8xf32>
    %487 = tpu.matmul %485, %486, %cst_307 {dimension_numbers = #tpu.dot_dimension_numbers<[1], [0], [0], [1], [0, 0, 1, 1], [], []>} : vector<24x24xbf16>, vector<24x8xbf16>, vector<24x8xf32> -> vector<24x8xf32>
    %c1_308 = arith.constant 1 : index
    %c1_309 = arith.constant 1 : index
    %c0_310 = arith.constant 0 : index
    %c0_311 = arith.constant 0 : index
    %488 = vector.load %arg6[%c1_308, %c1_309, %c0_310, %c0_311] : memref<2x24x32x8xbf16, #tpu.memory_space<vmem>>, vector<1x1x32x8xbf16>
    %489 = vector.shape_cast %488 : vector<1x1x32x8xbf16> to vector<32x8xbf16>
    %c1_312 = arith.constant 1 : index
    %c5_313 = arith.constant 5 : index
    %c0_314 = arith.constant 0 : index
    %c0_315 = arith.constant 0 : index
    %490 = vector.load %arg6[%c1_312, %c5_313, %c0_314, %c0_315] : memref<2x24x32x8xbf16, #tpu.memory_space<vmem>>, vector<1x1x32x8xbf16>
    %491 = vector.shape_cast %490 : vector<1x1x32x8xbf16> to vector<32x8xbf16>
    %c1_316 = arith.constant 1 : index
    %c9_317 = arith.constant 9 : index
    %c0_318 = arith.constant 0 : index
    %c0_319 = arith.constant 0 : index
    %492 = vector.load %arg6[%c1_316, %c9_317, %c0_318, %c0_319] : memref<2x24x32x8xbf16, #tpu.memory_space<vmem>>, vector<1x1x32x8xbf16>
    %493 = vector.shape_cast %492 : vector<1x1x32x8xbf16> to vector<32x8xbf16>
    %cst_320 = arith.constant dense<0.000000e+00> : vector<24x8xf32>
    %494 = tpu.matmul %450, %489, %cst_320 {dimension_numbers = #tpu.dot_dimension_numbers<[1], [0], [0], [1], [0, 0, 1, 1], [], []>} : vector<24x32xbf16>, vector<32x8xbf16>, vector<24x8xf32> -> vector<24x8xf32>
    %c1_321 = arith.constant 1 : index
    %c1_322 = arith.constant 1 : index
    %c0_323 = arith.constant 0 : index
    %c0_324 = arith.constant 0 : index
    %495 = vector.load %arg7[%c1_321, %c1_322, %c0_323, %c0_324] : memref<2x24x1x8xf32, #tpu.memory_space<vmem>>, vector<1x1x1x8xf32>
    %496 = vector.shape_cast %495 : vector<1x1x1x8xf32> to vector<1x8xf32>
    %497 = vector.broadcast %496 : vector<1x8xf32> to vector<24x8xf32>
    %498 = arith.addf %494, %497 : vector<24x8xf32>
    %cst_325 = arith.constant dense<0.000000e+00> : vector<24x8xf32>
    %499 = tpu.matmul %450, %491, %cst_325 {dimension_numbers = #tpu.dot_dimension_numbers<[1], [0], [0], [1], [0, 0, 1, 1], [], []>} : vector<24x32xbf16>, vector<32x8xbf16>, vector<24x8xf32> -> vector<24x8xf32>
    %c1_326 = arith.constant 1 : index
    %c5_327 = arith.constant 5 : index
    %c0_328 = arith.constant 0 : index
    %c0_329 = arith.constant 0 : index
    %500 = vector.load %arg7[%c1_326, %c5_327, %c0_328, %c0_329] : memref<2x24x1x8xf32, #tpu.memory_space<vmem>>, vector<1x1x1x8xf32>
    %501 = vector.shape_cast %500 : vector<1x1x1x8xf32> to vector<1x8xf32>
    %502 = vector.broadcast %501 : vector<1x8xf32> to vector<24x8xf32>
    %503 = arith.addf %499, %502 : vector<24x8xf32>
    %cst_330 = arith.constant dense<0.000000e+00> : vector<24x8xf32>
    %504 = tpu.matmul %450, %493, %cst_330 {dimension_numbers = #tpu.dot_dimension_numbers<[1], [0], [0], [1], [0, 0, 1, 1], [], []>} : vector<24x32xbf16>, vector<32x8xbf16>, vector<24x8xf32> -> vector<24x8xf32>
    %c1_331 = arith.constant 1 : index
    %c9_332 = arith.constant 9 : index
    %c0_333 = arith.constant 0 : index
    %c0_334 = arith.constant 0 : index
    %505 = vector.load %arg7[%c1_331, %c9_332, %c0_333, %c0_334] : memref<2x24x1x8xf32, #tpu.memory_space<vmem>>, vector<1x1x1x8xf32>
    %506 = vector.shape_cast %505 : vector<1x1x1x8xf32> to vector<1x8xf32>
    %507 = vector.broadcast %506 : vector<1x8xf32> to vector<24x8xf32>
    %508 = arith.addf %504, %507 : vector<24x8xf32>
    %509 = arith.truncf %498 : vector<24x8xf32> to vector<24x8xbf16>
    %510 = arith.truncf %503 : vector<24x8xf32> to vector<24x8xbf16>
    %cst_335 = arith.constant dense<0.000000e+00> : vector<24x24xf32>
    %511 = tpu.matmul %509, %510, %cst_335 {dimension_numbers = #tpu.dot_dimension_numbers<[1], [1], [0], [0], [0, 0, 1, 0], [], []>} : vector<24x8xbf16>, vector<24x8xbf16>, vector<24x24xf32> -> vector<24x24xf32>
    %cst_336 = arith.constant dense<0xFF800000> : vector<24xf32>
    %512 = vector.multi_reduction <maximumf>, %511, %cst_336 [1] : vector<24x24xf32> to vector<24xf32>
    %513 = vector.shape_cast %512 : vector<24xf32> to vector<24x1xf32>
    %514 = vector.broadcast %513 : vector<24x1xf32> to vector<24x24xf32>
    %515 = arith.subf %511, %514 : vector<24x24xf32>
    %516 = math.exp %515 : vector<24x24xf32>
    %cst_337 = arith.constant dense<0.000000e+00> : vector<24xf32>
    %517 = vector.multi_reduction <add>, %516, %cst_337 [1] : vector<24x24xf32> to vector<24xf32>
    %518 = vector.shape_cast %517 : vector<24xf32> to vector<24x1xf32>
    %519 = tpu.reciprocal %518 {approx = true} : vector<24x1xf32> -> vector<24x1xf32>
    %520 = vector.broadcast %519 : vector<24x1xf32> to vector<24x24xf32>
    %521 = arith.mulf %516, %520 : vector<24x24xf32>
    %522 = arith.truncf %521 : vector<24x24xf32> to vector<24x24xbf16>
    %523 = arith.truncf %508 : vector<24x8xf32> to vector<24x8xbf16>
    %cst_338 = arith.constant dense<0.000000e+00> : vector<24x8xf32>
    %524 = tpu.matmul %522, %523, %cst_338 {dimension_numbers = #tpu.dot_dimension_numbers<[1], [0], [0], [1], [0, 0, 1, 1], [], []>} : vector<24x24xbf16>, vector<24x8xbf16>, vector<24x8xf32> -> vector<24x8xf32>
    %c1_339 = arith.constant 1 : index
    %c2_340 = arith.constant 2 : index
    %c0_341 = arith.constant 0 : index
    %c0_342 = arith.constant 0 : index
    %525 = vector.load %arg6[%c1_339, %c2_340, %c0_341, %c0_342] : memref<2x24x32x8xbf16, #tpu.memory_space<vmem>>, vector<1x1x32x8xbf16>
    %526 = vector.shape_cast %525 : vector<1x1x32x8xbf16> to vector<32x8xbf16>
    %c1_343 = arith.constant 1 : index
    %c6_344 = arith.constant 6 : index
    %c0_345 = arith.constant 0 : index
    %c0_346 = arith.constant 0 : index
    %527 = vector.load %arg6[%c1_343, %c6_344, %c0_345, %c0_346] : memref<2x24x32x8xbf16, #tpu.memory_space<vmem>>, vector<1x1x32x8xbf16>
    %528 = vector.shape_cast %527 : vector<1x1x32x8xbf16> to vector<32x8xbf16>
    %c1_347 = arith.constant 1 : index
    %c10_348 = arith.constant 10 : index
    %c0_349 = arith.constant 0 : index
    %c0_350 = arith.constant 0 : index
    %529 = vector.load %arg6[%c1_347, %c10_348, %c0_349, %c0_350] : memref<2x24x32x8xbf16, #tpu.memory_space<vmem>>, vector<1x1x32x8xbf16>
    %530 = vector.shape_cast %529 : vector<1x1x32x8xbf16> to vector<32x8xbf16>
    %cst_351 = arith.constant dense<0.000000e+00> : vector<24x8xf32>
    %531 = tpu.matmul %450, %526, %cst_351 {dimension_numbers = #tpu.dot_dimension_numbers<[1], [0], [0], [1], [0, 0, 1, 1], [], []>} : vector<24x32xbf16>, vector<32x8xbf16>, vector<24x8xf32> -> vector<24x8xf32>
    %c1_352 = arith.constant 1 : index
    %c2_353 = arith.constant 2 : index
    %c0_354 = arith.constant 0 : index
    %c0_355 = arith.constant 0 : index
    %532 = vector.load %arg7[%c1_352, %c2_353, %c0_354, %c0_355] : memref<2x24x1x8xf32, #tpu.memory_space<vmem>>, vector<1x1x1x8xf32>
    %533 = vector.shape_cast %532 : vector<1x1x1x8xf32> to vector<1x8xf32>
    %534 = vector.broadcast %533 : vector<1x8xf32> to vector<24x8xf32>
    %535 = arith.addf %531, %534 : vector<24x8xf32>
    %cst_356 = arith.constant dense<0.000000e+00> : vector<24x8xf32>
    %536 = tpu.matmul %450, %528, %cst_356 {dimension_numbers = #tpu.dot_dimension_numbers<[1], [0], [0], [1], [0, 0, 1, 1], [], []>} : vector<24x32xbf16>, vector<32x8xbf16>, vector<24x8xf32> -> vector<24x8xf32>
    %c1_357 = arith.constant 1 : index
    %c6_358 = arith.constant 6 : index
    %c0_359 = arith.constant 0 : index
    %c0_360 = arith.constant 0 : index
    %537 = vector.load %arg7[%c1_357, %c6_358, %c0_359, %c0_360] : memref<2x24x1x8xf32, #tpu.memory_space<vmem>>, vector<1x1x1x8xf32>
    %538 = vector.shape_cast %537 : vector<1x1x1x8xf32> to vector<1x8xf32>
    %539 = vector.broadcast %538 : vector<1x8xf32> to vector<24x8xf32>
    %540 = arith.addf %536, %539 : vector<24x8xf32>
    %cst_361 = arith.constant dense<0.000000e+00> : vector<24x8xf32>
    %541 = tpu.matmul %450, %530, %cst_361 {dimension_numbers = #tpu.dot_dimension_numbers<[1], [0], [0], [1], [0, 0, 1, 1], [], []>} : vector<24x32xbf16>, vector<32x8xbf16>, vector<24x8xf32> -> vector<24x8xf32>
    %c1_362 = arith.constant 1 : index
    %c10_363 = arith.constant 10 : index
    %c0_364 = arith.constant 0 : index
    %c0_365 = arith.constant 0 : index
    %542 = vector.load %arg7[%c1_362, %c10_363, %c0_364, %c0_365] : memref<2x24x1x8xf32, #tpu.memory_space<vmem>>, vector<1x1x1x8xf32>
    %543 = vector.shape_cast %542 : vector<1x1x1x8xf32> to vector<1x8xf32>
    %544 = vector.broadcast %543 : vector<1x8xf32> to vector<24x8xf32>
    %545 = arith.addf %541, %544 : vector<24x8xf32>
    %546 = arith.truncf %535 : vector<24x8xf32> to vector<24x8xbf16>
    %547 = arith.truncf %540 : vector<24x8xf32> to vector<24x8xbf16>
    %cst_366 = arith.constant dense<0.000000e+00> : vector<24x24xf32>
    %548 = tpu.matmul %546, %547, %cst_366 {dimension_numbers = #tpu.dot_dimension_numbers<[1], [1], [0], [0], [0, 0, 1, 0], [], []>} : vector<24x8xbf16>, vector<24x8xbf16>, vector<24x24xf32> -> vector<24x24xf32>
    %cst_367 = arith.constant dense<0xFF800000> : vector<24xf32>
    %549 = vector.multi_reduction <maximumf>, %548, %cst_367 [1] : vector<24x24xf32> to vector<24xf32>
    %550 = vector.shape_cast %549 : vector<24xf32> to vector<24x1xf32>
    %551 = vector.broadcast %550 : vector<24x1xf32> to vector<24x24xf32>
    %552 = arith.subf %548, %551 : vector<24x24xf32>
    %553 = math.exp %552 : vector<24x24xf32>
    %cst_368 = arith.constant dense<0.000000e+00> : vector<24xf32>
    %554 = vector.multi_reduction <add>, %553, %cst_368 [1] : vector<24x24xf32> to vector<24xf32>
    %555 = vector.shape_cast %554 : vector<24xf32> to vector<24x1xf32>
    %556 = tpu.reciprocal %555 {approx = true} : vector<24x1xf32> -> vector<24x1xf32>
    %557 = vector.broadcast %556 : vector<24x1xf32> to vector<24x24xf32>
    %558 = arith.mulf %553, %557 : vector<24x24xf32>
    %559 = arith.truncf %558 : vector<24x24xf32> to vector<24x24xbf16>
    %560 = arith.truncf %545 : vector<24x8xf32> to vector<24x8xbf16>
    %cst_369 = arith.constant dense<0.000000e+00> : vector<24x8xf32>
    %561 = tpu.matmul %559, %560, %cst_369 {dimension_numbers = #tpu.dot_dimension_numbers<[1], [0], [0], [1], [0, 0, 1, 1], [], []>} : vector<24x24xbf16>, vector<24x8xbf16>, vector<24x8xf32> -> vector<24x8xf32>
    %c1_370 = arith.constant 1 : index
    %c3_371 = arith.constant 3 : index
    %c0_372 = arith.constant 0 : index
    %c0_373 = arith.constant 0 : index
    %562 = vector.load %arg6[%c1_370, %c3_371, %c0_372, %c0_373] : memref<2x24x32x8xbf16, #tpu.memory_space<vmem>>, vector<1x1x32x8xbf16>
    %563 = vector.shape_cast %562 : vector<1x1x32x8xbf16> to vector<32x8xbf16>
    %c1_374 = arith.constant 1 : index
    %c7_375 = arith.constant 7 : index
    %c0_376 = arith.constant 0 : index
    %c0_377 = arith.constant 0 : index
    %564 = vector.load %arg6[%c1_374, %c7_375, %c0_376, %c0_377] : memref<2x24x32x8xbf16, #tpu.memory_space<vmem>>, vector<1x1x32x8xbf16>
    %565 = vector.shape_cast %564 : vector<1x1x32x8xbf16> to vector<32x8xbf16>
    %c1_378 = arith.constant 1 : index
    %c11_379 = arith.constant 11 : index
    %c0_380 = arith.constant 0 : index
    %c0_381 = arith.constant 0 : index
    %566 = vector.load %arg6[%c1_378, %c11_379, %c0_380, %c0_381] : memref<2x24x32x8xbf16, #tpu.memory_space<vmem>>, vector<1x1x32x8xbf16>
    %567 = vector.shape_cast %566 : vector<1x1x32x8xbf16> to vector<32x8xbf16>
    %cst_382 = arith.constant dense<0.000000e+00> : vector<24x8xf32>
    %568 = tpu.matmul %450, %563, %cst_382 {dimension_numbers = #tpu.dot_dimension_numbers<[1], [0], [0], [1], [0, 0, 1, 1], [], []>} : vector<24x32xbf16>, vector<32x8xbf16>, vector<24x8xf32> -> vector<24x8xf32>
    %c1_383 = arith.constant 1 : index
    %c3_384 = arith.constant 3 : index
    %c0_385 = arith.constant 0 : index
    %c0_386 = arith.constant 0 : index
    %569 = vector.load %arg7[%c1_383, %c3_384, %c0_385, %c0_386] : memref<2x24x1x8xf32, #tpu.memory_space<vmem>>, vector<1x1x1x8xf32>
    %570 = vector.shape_cast %569 : vector<1x1x1x8xf32> to vector<1x8xf32>
    %571 = vector.broadcast %570 : vector<1x8xf32> to vector<24x8xf32>
    %572 = arith.addf %568, %571 : vector<24x8xf32>
    %cst_387 = arith.constant dense<0.000000e+00> : vector<24x8xf32>
    %573 = tpu.matmul %450, %565, %cst_387 {dimension_numbers = #tpu.dot_dimension_numbers<[1], [0], [0], [1], [0, 0, 1, 1], [], []>} : vector<24x32xbf16>, vector<32x8xbf16>, vector<24x8xf32> -> vector<24x8xf32>
    %c1_388 = arith.constant 1 : index
    %c7_389 = arith.constant 7 : index
    %c0_390 = arith.constant 0 : index
    %c0_391 = arith.constant 0 : index
    %574 = vector.load %arg7[%c1_388, %c7_389, %c0_390, %c0_391] : memref<2x24x1x8xf32, #tpu.memory_space<vmem>>, vector<1x1x1x8xf32>
    %575 = vector.shape_cast %574 : vector<1x1x1x8xf32> to vector<1x8xf32>
    %576 = vector.broadcast %575 : vector<1x8xf32> to vector<24x8xf32>
    %577 = arith.addf %573, %576 : vector<24x8xf32>
    %cst_392 = arith.constant dense<0.000000e+00> : vector<24x8xf32>
    %578 = tpu.matmul %450, %567, %cst_392 {dimension_numbers = #tpu.dot_dimension_numbers<[1], [0], [0], [1], [0, 0, 1, 1], [], []>} : vector<24x32xbf16>, vector<32x8xbf16>, vector<24x8xf32> -> vector<24x8xf32>
    %c1_393 = arith.constant 1 : index
    %c11_394 = arith.constant 11 : index
    %c0_395 = arith.constant 0 : index
    %c0_396 = arith.constant 0 : index
    %579 = vector.load %arg7[%c1_393, %c11_394, %c0_395, %c0_396] : memref<2x24x1x8xf32, #tpu.memory_space<vmem>>, vector<1x1x1x8xf32>
    %580 = vector.shape_cast %579 : vector<1x1x1x8xf32> to vector<1x8xf32>
    %581 = vector.broadcast %580 : vector<1x8xf32> to vector<24x8xf32>
    %582 = arith.addf %578, %581 : vector<24x8xf32>
    %583 = arith.truncf %572 : vector<24x8xf32> to vector<24x8xbf16>
    %584 = arith.truncf %577 : vector<24x8xf32> to vector<24x8xbf16>
    %cst_397 = arith.constant dense<0.000000e+00> : vector<24x24xf32>
    %585 = tpu.matmul %583, %584, %cst_397 {dimension_numbers = #tpu.dot_dimension_numbers<[1], [1], [0], [0], [0, 0, 1, 0], [], []>} : vector<24x8xbf16>, vector<24x8xbf16>, vector<24x24xf32> -> vector<24x24xf32>
    %cst_398 = arith.constant dense<0xFF800000> : vector<24xf32>
    %586 = vector.multi_reduction <maximumf>, %585, %cst_398 [1] : vector<24x24xf32> to vector<24xf32>
    %587 = vector.shape_cast %586 : vector<24xf32> to vector<24x1xf32>
    %588 = vector.broadcast %587 : vector<24x1xf32> to vector<24x24xf32>
    %589 = arith.subf %585, %588 : vector<24x24xf32>
    %590 = math.exp %589 : vector<24x24xf32>
    %cst_399 = arith.constant dense<0.000000e+00> : vector<24xf32>
    %591 = vector.multi_reduction <add>, %590, %cst_399 [1] : vector<24x24xf32> to vector<24xf32>
    %592 = vector.shape_cast %591 : vector<24xf32> to vector<24x1xf32>
    %593 = tpu.reciprocal %592 {approx = true} : vector<24x1xf32> -> vector<24x1xf32>
    %594 = vector.broadcast %593 : vector<24x1xf32> to vector<24x24xf32>
    %595 = arith.mulf %590, %594 : vector<24x24xf32>
    %596 = arith.truncf %595 : vector<24x24xf32> to vector<24x24xbf16>
    %597 = arith.truncf %582 : vector<24x8xf32> to vector<24x8xbf16>
    %cst_400 = arith.constant dense<0.000000e+00> : vector<24x8xf32>
    %598 = tpu.matmul %596, %597, %cst_400 {dimension_numbers = #tpu.dot_dimension_numbers<[1], [0], [0], [1], [0, 0, 1, 1], [], []>} : vector<24x24xbf16>, vector<24x8xbf16>, vector<24x8xf32> -> vector<24x8xf32>
    %599 = tpu.concatenate %487, %524, %561, %598 in 1 : vector<24x8xf32>, vector<24x8xf32>, vector<24x8xf32>, vector<24x8xf32> -> vector<24x32xf32>
    %600 = arith.truncf %599 : vector<24x32xf32> to vector<24x32xbf16>
    %c1_401 = arith.constant 1 : index
    %c0_402 = arith.constant 0 : index
    %c0_403 = arith.constant 0 : index
    %c0_404 = arith.constant 0 : index
    %601 = vector.load %arg8[%c1_401, %c0_402, %c0_403, %c0_404] : memref<2x2x32x32xbf16, #tpu.memory_space<vmem>>, vector<1x1x32x32xbf16>
    %602 = vector.shape_cast %601 : vector<1x1x32x32xbf16> to vector<32x32xbf16>
    %cst_405 = arith.constant dense<0.000000e+00> : vector<24x32xf32>
    %603 = tpu.matmul %600, %602, %cst_405 {dimension_numbers = #tpu.dot_dimension_numbers<[1], [0], [0], [1], [0, 0, 1, 1], [], []>} : vector<24x32xbf16>, vector<32x32xbf16>, vector<24x32xf32> -> vector<24x32xf32>
    %604 = vector.extract_strided_slice %425 {offsets = [6, 0], sizes = [1, 32], strides = [1, 1]} : vector<10x128xf32> to vector<1x32xf32>
    %605 = vector.broadcast %604 : vector<1x32xf32> to vector<24x32xf32>
    %606 = arith.addf %603, %605 : vector<24x32xf32>
    %607 = arith.addf %423, %606 : vector<24x32xf32>
    %608 = vector.extract_strided_slice %425 {offsets = [1, 0], sizes = [1, 32], strides = [1, 1]} : vector<10x128xf32> to vector<1x32xf32>
    %609 = vector.extract_strided_slice %425 {offsets = [4, 0], sizes = [1, 32], strides = [1, 1]} : vector<10x128xf32> to vector<1x32xf32>
    %cst_406 = arith.constant dense<0.000000e+00> : vector<24xf32>
    %610 = vector.multi_reduction <add>, %607, %cst_406 [1] : vector<24x32xf32> to vector<24xf32>
    %611 = vector.shape_cast %610 : vector<24xf32> to vector<24x1xf32>
    %cst_407 = arith.constant 3.200000e+01 : f32
    %612 = vector.broadcast %cst_407 : f32 to vector<24x1xf32>
    %613 = arith.divf %611, %612 : vector<24x1xf32>
    %614 = vector.broadcast %613 : vector<24x1xf32> to vector<24x32xf32>
    %615 = arith.subf %607, %614 : vector<24x32xf32>
    %616 = arith.mulf %615, %615 : vector<24x32xf32>
    %cst_408 = arith.constant dense<0.000000e+00> : vector<24xf32>
    %617 = vector.multi_reduction <add>, %616, %cst_408 [1] : vector<24x32xf32> to vector<24xf32>
    %618 = vector.shape_cast %617 : vector<24xf32> to vector<24x1xf32>
    %cst_409 = arith.constant 3.200000e+01 : f32
    %619 = vector.broadcast %cst_409 : f32 to vector<24x1xf32>
    %620 = arith.divf %618, %619 : vector<24x1xf32>
    %621 = vector.broadcast %613 : vector<24x1xf32> to vector<24x32xf32>
    %622 = arith.subf %607, %621 : vector<24x32xf32>
    %cst_410 = arith.constant 9.99999974E-6 : f32
    %623 = vector.broadcast %cst_410 : f32 to vector<24x1xf32>
    %624 = arith.addf %620, %623 : vector<24x1xf32>
    %625 = math.rsqrt %624 : vector<24x1xf32>
    %626 = vector.broadcast %625 : vector<24x1xf32> to vector<24x32xf32>
    %627 = arith.mulf %622, %626 : vector<24x32xf32>
    %628 = vector.broadcast %608 : vector<1x32xf32> to vector<24x32xf32>
    %629 = arith.mulf %627, %628 : vector<24x32xf32>
    %630 = vector.broadcast %609 : vector<1x32xf32> to vector<24x32xf32>
    %631 = arith.addf %629, %630 : vector<24x32xf32>
    %632 = arith.truncf %631 : vector<24x32xf32> to vector<24x32xbf16>
    %c1_411 = arith.constant 1 : index
    %c12_412 = arith.constant 12 : index
    %c0_413 = arith.constant 0 : index
    %c0_414 = arith.constant 0 : index
    %633 = vector.load %arg6[%c1_411, %c12_412, %c0_413, %c0_414] : memref<2x24x32x8xbf16, #tpu.memory_space<vmem>>, vector<1x1x32x8xbf16>
    %634 = vector.shape_cast %633 : vector<1x1x32x8xbf16> to vector<32x8xbf16>
    %c1_415 = arith.constant 1 : index
    %c16_416 = arith.constant 16 : index
    %c0_417 = arith.constant 0 : index
    %c0_418 = arith.constant 0 : index
    %635 = vector.load %arg6[%c1_415, %c16_416, %c0_417, %c0_418] : memref<2x24x32x8xbf16, #tpu.memory_space<vmem>>, vector<1x1x32x8xbf16>
    %636 = vector.shape_cast %635 : vector<1x1x32x8xbf16> to vector<32x8xbf16>
    %c1_419 = arith.constant 1 : index
    %c20_420 = arith.constant 20 : index
    %c0_421 = arith.constant 0 : index
    %c0_422 = arith.constant 0 : index
    %637 = vector.load %arg6[%c1_419, %c20_420, %c0_421, %c0_422] : memref<2x24x32x8xbf16, #tpu.memory_space<vmem>>, vector<1x1x32x8xbf16>
    %638 = vector.shape_cast %637 : vector<1x1x32x8xbf16> to vector<32x8xbf16>
    %cst_423 = arith.constant dense<0.000000e+00> : vector<24x8xf32>
    %639 = tpu.matmul %632, %634, %cst_423 {dimension_numbers = #tpu.dot_dimension_numbers<[1], [0], [0], [1], [0, 0, 1, 1], [], []>} : vector<24x32xbf16>, vector<32x8xbf16>, vector<24x8xf32> -> vector<24x8xf32>
    %c1_424 = arith.constant 1 : index
    %c12_425 = arith.constant 12 : index
    %c0_426 = arith.constant 0 : index
    %c0_427 = arith.constant 0 : index
    %640 = vector.load %arg7[%c1_424, %c12_425, %c0_426, %c0_427] : memref<2x24x1x8xf32, #tpu.memory_space<vmem>>, vector<1x1x1x8xf32>
    %641 = vector.shape_cast %640 : vector<1x1x1x8xf32> to vector<1x8xf32>
    %642 = vector.broadcast %641 : vector<1x8xf32> to vector<24x8xf32>
    %643 = arith.addf %639, %642 : vector<24x8xf32>
    %cst_428 = arith.constant dense<0.000000e+00> : vector<32x8xf32>
    %644 = tpu.matmul %5, %636, %cst_428 {dimension_numbers = #tpu.dot_dimension_numbers<[1], [0], [0], [1], [0, 0, 1, 1], [], []>} : vector<32x32xbf16>, vector<32x8xbf16>, vector<32x8xf32> -> vector<32x8xf32>
    %c1_429 = arith.constant 1 : index
    %c16_430 = arith.constant 16 : index
    %c0_431 = arith.constant 0 : index
    %c0_432 = arith.constant 0 : index
    %645 = vector.load %arg7[%c1_429, %c16_430, %c0_431, %c0_432] : memref<2x24x1x8xf32, #tpu.memory_space<vmem>>, vector<1x1x1x8xf32>
    %646 = vector.shape_cast %645 : vector<1x1x1x8xf32> to vector<1x8xf32>
    %647 = vector.broadcast %646 : vector<1x8xf32> to vector<32x8xf32>
    %648 = arith.addf %644, %647 : vector<32x8xf32>
    %cst_433 = arith.constant dense<0.000000e+00> : vector<32x8xf32>
    %649 = tpu.matmul %5, %638, %cst_433 {dimension_numbers = #tpu.dot_dimension_numbers<[1], [0], [0], [1], [0, 0, 1, 1], [], []>} : vector<32x32xbf16>, vector<32x8xbf16>, vector<32x8xf32> -> vector<32x8xf32>
    %c1_434 = arith.constant 1 : index
    %c20_435 = arith.constant 20 : index
    %c0_436 = arith.constant 0 : index
    %c0_437 = arith.constant 0 : index
    %650 = vector.load %arg7[%c1_434, %c20_435, %c0_436, %c0_437] : memref<2x24x1x8xf32, #tpu.memory_space<vmem>>, vector<1x1x1x8xf32>
    %651 = vector.shape_cast %650 : vector<1x1x1x8xf32> to vector<1x8xf32>
    %652 = vector.broadcast %651 : vector<1x8xf32> to vector<32x8xf32>
    %653 = arith.addf %649, %652 : vector<32x8xf32>
    %654 = arith.truncf %643 : vector<24x8xf32> to vector<24x8xbf16>
    %655 = arith.truncf %648 : vector<32x8xf32> to vector<32x8xbf16>
    %cst_438 = arith.constant dense<0.000000e+00> : vector<24x32xf32>
    %656 = tpu.matmul %654, %655, %cst_438 {dimension_numbers = #tpu.dot_dimension_numbers<[1], [1], [0], [0], [0, 0, 1, 0], [], []>} : vector<24x8xbf16>, vector<32x8xbf16>, vector<24x32xf32> -> vector<24x32xf32>
    %cst_439 = arith.constant dense<0xFF800000> : vector<24xf32>
    %657 = vector.multi_reduction <maximumf>, %656, %cst_439 [1] : vector<24x32xf32> to vector<24xf32>
    %658 = vector.shape_cast %657 : vector<24xf32> to vector<24x1xf32>
    %659 = vector.broadcast %658 : vector<24x1xf32> to vector<24x32xf32>
    %660 = arith.subf %656, %659 : vector<24x32xf32>
    %661 = math.exp %660 : vector<24x32xf32>
    %cst_440 = arith.constant dense<0.000000e+00> : vector<24xf32>
    %662 = vector.multi_reduction <add>, %661, %cst_440 [1] : vector<24x32xf32> to vector<24xf32>
    %663 = vector.shape_cast %662 : vector<24xf32> to vector<24x1xf32>
    %664 = tpu.reciprocal %663 {approx = true} : vector<24x1xf32> -> vector<24x1xf32>
    %665 = vector.broadcast %664 : vector<24x1xf32> to vector<24x32xf32>
    %666 = arith.mulf %661, %665 : vector<24x32xf32>
    %667 = arith.truncf %666 : vector<24x32xf32> to vector<24x32xbf16>
    %668 = arith.truncf %653 : vector<32x8xf32> to vector<32x8xbf16>
    %cst_441 = arith.constant dense<0.000000e+00> : vector<24x8xf32>
    %669 = tpu.matmul %667, %668, %cst_441 {dimension_numbers = #tpu.dot_dimension_numbers<[1], [0], [0], [1], [0, 0, 1, 1], [], []>} : vector<24x32xbf16>, vector<32x8xbf16>, vector<24x8xf32> -> vector<24x8xf32>
    %c1_442 = arith.constant 1 : index
    %c13_443 = arith.constant 13 : index
    %c0_444 = arith.constant 0 : index
    %c0_445 = arith.constant 0 : index
    %670 = vector.load %arg6[%c1_442, %c13_443, %c0_444, %c0_445] : memref<2x24x32x8xbf16, #tpu.memory_space<vmem>>, vector<1x1x32x8xbf16>
    %671 = vector.shape_cast %670 : vector<1x1x32x8xbf16> to vector<32x8xbf16>
    %c1_446 = arith.constant 1 : index
    %c17_447 = arith.constant 17 : index
    %c0_448 = arith.constant 0 : index
    %c0_449 = arith.constant 0 : index
    %672 = vector.load %arg6[%c1_446, %c17_447, %c0_448, %c0_449] : memref<2x24x32x8xbf16, #tpu.memory_space<vmem>>, vector<1x1x32x8xbf16>
    %673 = vector.shape_cast %672 : vector<1x1x32x8xbf16> to vector<32x8xbf16>
    %c1_450 = arith.constant 1 : index
    %c21_451 = arith.constant 21 : index
    %c0_452 = arith.constant 0 : index
    %c0_453 = arith.constant 0 : index
    %674 = vector.load %arg6[%c1_450, %c21_451, %c0_452, %c0_453] : memref<2x24x32x8xbf16, #tpu.memory_space<vmem>>, vector<1x1x32x8xbf16>
    %675 = vector.shape_cast %674 : vector<1x1x32x8xbf16> to vector<32x8xbf16>
    %cst_454 = arith.constant dense<0.000000e+00> : vector<24x8xf32>
    %676 = tpu.matmul %632, %671, %cst_454 {dimension_numbers = #tpu.dot_dimension_numbers<[1], [0], [0], [1], [0, 0, 1, 1], [], []>} : vector<24x32xbf16>, vector<32x8xbf16>, vector<24x8xf32> -> vector<24x8xf32>
    %c1_455 = arith.constant 1 : index
    %c13_456 = arith.constant 13 : index
    %c0_457 = arith.constant 0 : index
    %c0_458 = arith.constant 0 : index
    %677 = vector.load %arg7[%c1_455, %c13_456, %c0_457, %c0_458] : memref<2x24x1x8xf32, #tpu.memory_space<vmem>>, vector<1x1x1x8xf32>
    %678 = vector.shape_cast %677 : vector<1x1x1x8xf32> to vector<1x8xf32>
    %679 = vector.broadcast %678 : vector<1x8xf32> to vector<24x8xf32>
    %680 = arith.addf %676, %679 : vector<24x8xf32>
    %cst_459 = arith.constant dense<0.000000e+00> : vector<32x8xf32>
    %681 = tpu.matmul %5, %673, %cst_459 {dimension_numbers = #tpu.dot_dimension_numbers<[1], [0], [0], [1], [0, 0, 1, 1], [], []>} : vector<32x32xbf16>, vector<32x8xbf16>, vector<32x8xf32> -> vector<32x8xf32>
    %c1_460 = arith.constant 1 : index
    %c17_461 = arith.constant 17 : index
    %c0_462 = arith.constant 0 : index
    %c0_463 = arith.constant 0 : index
    %682 = vector.load %arg7[%c1_460, %c17_461, %c0_462, %c0_463] : memref<2x24x1x8xf32, #tpu.memory_space<vmem>>, vector<1x1x1x8xf32>
    %683 = vector.shape_cast %682 : vector<1x1x1x8xf32> to vector<1x8xf32>
    %684 = vector.broadcast %683 : vector<1x8xf32> to vector<32x8xf32>
    %685 = arith.addf %681, %684 : vector<32x8xf32>
    %cst_464 = arith.constant dense<0.000000e+00> : vector<32x8xf32>
    %686 = tpu.matmul %5, %675, %cst_464 {dimension_numbers = #tpu.dot_dimension_numbers<[1], [0], [0], [1], [0, 0, 1, 1], [], []>} : vector<32x32xbf16>, vector<32x8xbf16>, vector<32x8xf32> -> vector<32x8xf32>
    %c1_465 = arith.constant 1 : index
    %c21_466 = arith.constant 21 : index
    %c0_467 = arith.constant 0 : index
    %c0_468 = arith.constant 0 : index
    %687 = vector.load %arg7[%c1_465, %c21_466, %c0_467, %c0_468] : memref<2x24x1x8xf32, #tpu.memory_space<vmem>>, vector<1x1x1x8xf32>
    %688 = vector.shape_cast %687 : vector<1x1x1x8xf32> to vector<1x8xf32>
    %689 = vector.broadcast %688 : vector<1x8xf32> to vector<32x8xf32>
    %690 = arith.addf %686, %689 : vector<32x8xf32>
    %691 = arith.truncf %680 : vector<24x8xf32> to vector<24x8xbf16>
    %692 = arith.truncf %685 : vector<32x8xf32> to vector<32x8xbf16>
    %cst_469 = arith.constant dense<0.000000e+00> : vector<24x32xf32>
    %693 = tpu.matmul %691, %692, %cst_469 {dimension_numbers = #tpu.dot_dimension_numbers<[1], [1], [0], [0], [0, 0, 1, 0], [], []>} : vector<24x8xbf16>, vector<32x8xbf16>, vector<24x32xf32> -> vector<24x32xf32>
    %cst_470 = arith.constant dense<0xFF800000> : vector<24xf32>
    %694 = vector.multi_reduction <maximumf>, %693, %cst_470 [1] : vector<24x32xf32> to vector<24xf32>
    %695 = vector.shape_cast %694 : vector<24xf32> to vector<24x1xf32>
    %696 = vector.broadcast %695 : vector<24x1xf32> to vector<24x32xf32>
    %697 = arith.subf %693, %696 : vector<24x32xf32>
    %698 = math.exp %697 : vector<24x32xf32>
    %cst_471 = arith.constant dense<0.000000e+00> : vector<24xf32>
    %699 = vector.multi_reduction <add>, %698, %cst_471 [1] : vector<24x32xf32> to vector<24xf32>
    %700 = vector.shape_cast %699 : vector<24xf32> to vector<24x1xf32>
    %701 = tpu.reciprocal %700 {approx = true} : vector<24x1xf32> -> vector<24x1xf32>
    %702 = vector.broadcast %701 : vector<24x1xf32> to vector<24x32xf32>
    %703 = arith.mulf %698, %702 : vector<24x32xf32>
    %704 = arith.truncf %703 : vector<24x32xf32> to vector<24x32xbf16>
    %705 = arith.truncf %690 : vector<32x8xf32> to vector<32x8xbf16>
    %cst_472 = arith.constant dense<0.000000e+00> : vector<24x8xf32>
    %706 = tpu.matmul %704, %705, %cst_472 {dimension_numbers = #tpu.dot_dimension_numbers<[1], [0], [0], [1], [0, 0, 1, 1], [], []>} : vector<24x32xbf16>, vector<32x8xbf16>, vector<24x8xf32> -> vector<24x8xf32>
    %c1_473 = arith.constant 1 : index
    %c14_474 = arith.constant 14 : index
    %c0_475 = arith.constant 0 : index
    %c0_476 = arith.constant 0 : index
    %707 = vector.load %arg6[%c1_473, %c14_474, %c0_475, %c0_476] : memref<2x24x32x8xbf16, #tpu.memory_space<vmem>>, vector<1x1x32x8xbf16>
    %708 = vector.shape_cast %707 : vector<1x1x32x8xbf16> to vector<32x8xbf16>
    %c1_477 = arith.constant 1 : index
    %c18_478 = arith.constant 18 : index
    %c0_479 = arith.constant 0 : index
    %c0_480 = arith.constant 0 : index
    %709 = vector.load %arg6[%c1_477, %c18_478, %c0_479, %c0_480] : memref<2x24x32x8xbf16, #tpu.memory_space<vmem>>, vector<1x1x32x8xbf16>
    %710 = vector.shape_cast %709 : vector<1x1x32x8xbf16> to vector<32x8xbf16>
    %c1_481 = arith.constant 1 : index
    %c22_482 = arith.constant 22 : index
    %c0_483 = arith.constant 0 : index
    %c0_484 = arith.constant 0 : index
    %711 = vector.load %arg6[%c1_481, %c22_482, %c0_483, %c0_484] : memref<2x24x32x8xbf16, #tpu.memory_space<vmem>>, vector<1x1x32x8xbf16>
    %712 = vector.shape_cast %711 : vector<1x1x32x8xbf16> to vector<32x8xbf16>
    %cst_485 = arith.constant dense<0.000000e+00> : vector<24x8xf32>
    %713 = tpu.matmul %632, %708, %cst_485 {dimension_numbers = #tpu.dot_dimension_numbers<[1], [0], [0], [1], [0, 0, 1, 1], [], []>} : vector<24x32xbf16>, vector<32x8xbf16>, vector<24x8xf32> -> vector<24x8xf32>
    %c1_486 = arith.constant 1 : index
    %c14_487 = arith.constant 14 : index
    %c0_488 = arith.constant 0 : index
    %c0_489 = arith.constant 0 : index
    %714 = vector.load %arg7[%c1_486, %c14_487, %c0_488, %c0_489] : memref<2x24x1x8xf32, #tpu.memory_space<vmem>>, vector<1x1x1x8xf32>
    %715 = vector.shape_cast %714 : vector<1x1x1x8xf32> to vector<1x8xf32>
    %716 = vector.broadcast %715 : vector<1x8xf32> to vector<24x8xf32>
    %717 = arith.addf %713, %716 : vector<24x8xf32>
    %cst_490 = arith.constant dense<0.000000e+00> : vector<32x8xf32>
    %718 = tpu.matmul %5, %710, %cst_490 {dimension_numbers = #tpu.dot_dimension_numbers<[1], [0], [0], [1], [0, 0, 1, 1], [], []>} : vector<32x32xbf16>, vector<32x8xbf16>, vector<32x8xf32> -> vector<32x8xf32>
    %c1_491 = arith.constant 1 : index
    %c18_492 = arith.constant 18 : index
    %c0_493 = arith.constant 0 : index
    %c0_494 = arith.constant 0 : index
    %719 = vector.load %arg7[%c1_491, %c18_492, %c0_493, %c0_494] : memref<2x24x1x8xf32, #tpu.memory_space<vmem>>, vector<1x1x1x8xf32>
    %720 = vector.shape_cast %719 : vector<1x1x1x8xf32> to vector<1x8xf32>
    %721 = vector.broadcast %720 : vector<1x8xf32> to vector<32x8xf32>
    %722 = arith.addf %718, %721 : vector<32x8xf32>
    %cst_495 = arith.constant dense<0.000000e+00> : vector<32x8xf32>
    %723 = tpu.matmul %5, %712, %cst_495 {dimension_numbers = #tpu.dot_dimension_numbers<[1], [0], [0], [1], [0, 0, 1, 1], [], []>} : vector<32x32xbf16>, vector<32x8xbf16>, vector<32x8xf32> -> vector<32x8xf32>
    %c1_496 = arith.constant 1 : index
    %c22_497 = arith.constant 22 : index
    %c0_498 = arith.constant 0 : index
    %c0_499 = arith.constant 0 : index
    %724 = vector.load %arg7[%c1_496, %c22_497, %c0_498, %c0_499] : memref<2x24x1x8xf32, #tpu.memory_space<vmem>>, vector<1x1x1x8xf32>
    %725 = vector.shape_cast %724 : vector<1x1x1x8xf32> to vector<1x8xf32>
    %726 = vector.broadcast %725 : vector<1x8xf32> to vector<32x8xf32>
    %727 = arith.addf %723, %726 : vector<32x8xf32>
    %728 = arith.truncf %717 : vector<24x8xf32> to vector<24x8xbf16>
    %729 = arith.truncf %722 : vector<32x8xf32> to vector<32x8xbf16>
    %cst_500 = arith.constant dense<0.000000e+00> : vector<24x32xf32>
    %730 = tpu.matmul %728, %729, %cst_500 {dimension_numbers = #tpu.dot_dimension_numbers<[1], [1], [0], [0], [0, 0, 1, 0], [], []>} : vector<24x8xbf16>, vector<32x8xbf16>, vector<24x32xf32> -> vector<24x32xf32>
    %cst_501 = arith.constant dense<0xFF800000> : vector<24xf32>
    %731 = vector.multi_reduction <maximumf>, %730, %cst_501 [1] : vector<24x32xf32> to vector<24xf32>
    %732 = vector.shape_cast %731 : vector<24xf32> to vector<24x1xf32>
    %733 = vector.broadcast %732 : vector<24x1xf32> to vector<24x32xf32>
    %734 = arith.subf %730, %733 : vector<24x32xf32>
    %735 = math.exp %734 : vector<24x32xf32>
    %cst_502 = arith.constant dense<0.000000e+00> : vector<24xf32>
    %736 = vector.multi_reduction <add>, %735, %cst_502 [1] : vector<24x32xf32> to vector<24xf32>
    %737 = vector.shape_cast %736 : vector<24xf32> to vector<24x1xf32>
    %738 = tpu.reciprocal %737 {approx = true} : vector<24x1xf32> -> vector<24x1xf32>
    %739 = vector.broadcast %738 : vector<24x1xf32> to vector<24x32xf32>
    %740 = arith.mulf %735, %739 : vector<24x32xf32>
    %741 = arith.truncf %740 : vector<24x32xf32> to vector<24x32xbf16>
    %742 = arith.truncf %727 : vector<32x8xf32> to vector<32x8xbf16>
    %cst_503 = arith.constant dense<0.000000e+00> : vector<24x8xf32>
    %743 = tpu.matmul %741, %742, %cst_503 {dimension_numbers = #tpu.dot_dimension_numbers<[1], [0], [0], [1], [0, 0, 1, 1], [], []>} : vector<24x32xbf16>, vector<32x8xbf16>, vector<24x8xf32> -> vector<24x8xf32>
    %c1_504 = arith.constant 1 : index
    %c15_505 = arith.constant 15 : index
    %c0_506 = arith.constant 0 : index
    %c0_507 = arith.constant 0 : index
    %744 = vector.load %arg6[%c1_504, %c15_505, %c0_506, %c0_507] : memref<2x24x32x8xbf16, #tpu.memory_space<vmem>>, vector<1x1x32x8xbf16>
    %745 = vector.shape_cast %744 : vector<1x1x32x8xbf16> to vector<32x8xbf16>
    %c1_508 = arith.constant 1 : index
    %c19_509 = arith.constant 19 : index
    %c0_510 = arith.constant 0 : index
    %c0_511 = arith.constant 0 : index
    %746 = vector.load %arg6[%c1_508, %c19_509, %c0_510, %c0_511] : memref<2x24x32x8xbf16, #tpu.memory_space<vmem>>, vector<1x1x32x8xbf16>
    %747 = vector.shape_cast %746 : vector<1x1x32x8xbf16> to vector<32x8xbf16>
    %c1_512 = arith.constant 1 : index
    %c23_513 = arith.constant 23 : index
    %c0_514 = arith.constant 0 : index
    %c0_515 = arith.constant 0 : index
    %748 = vector.load %arg6[%c1_512, %c23_513, %c0_514, %c0_515] : memref<2x24x32x8xbf16, #tpu.memory_space<vmem>>, vector<1x1x32x8xbf16>
    %749 = vector.shape_cast %748 : vector<1x1x32x8xbf16> to vector<32x8xbf16>
    %cst_516 = arith.constant dense<0.000000e+00> : vector<24x8xf32>
    %750 = tpu.matmul %632, %745, %cst_516 {dimension_numbers = #tpu.dot_dimension_numbers<[1], [0], [0], [1], [0, 0, 1, 1], [], []>} : vector<24x32xbf16>, vector<32x8xbf16>, vector<24x8xf32> -> vector<24x8xf32>
    %c1_517 = arith.constant 1 : index
    %c15_518 = arith.constant 15 : index
    %c0_519 = arith.constant 0 : index
    %c0_520 = arith.constant 0 : index
    %751 = vector.load %arg7[%c1_517, %c15_518, %c0_519, %c0_520] : memref<2x24x1x8xf32, #tpu.memory_space<vmem>>, vector<1x1x1x8xf32>
    %752 = vector.shape_cast %751 : vector<1x1x1x8xf32> to vector<1x8xf32>
    %753 = vector.broadcast %752 : vector<1x8xf32> to vector<24x8xf32>
    %754 = arith.addf %750, %753 : vector<24x8xf32>
    %cst_521 = arith.constant dense<0.000000e+00> : vector<32x8xf32>
    %755 = tpu.matmul %5, %747, %cst_521 {dimension_numbers = #tpu.dot_dimension_numbers<[1], [0], [0], [1], [0, 0, 1, 1], [], []>} : vector<32x32xbf16>, vector<32x8xbf16>, vector<32x8xf32> -> vector<32x8xf32>
    %c1_522 = arith.constant 1 : index
    %c19_523 = arith.constant 19 : index
    %c0_524 = arith.constant 0 : index
    %c0_525 = arith.constant 0 : index
    %756 = vector.load %arg7[%c1_522, %c19_523, %c0_524, %c0_525] : memref<2x24x1x8xf32, #tpu.memory_space<vmem>>, vector<1x1x1x8xf32>
    %757 = vector.shape_cast %756 : vector<1x1x1x8xf32> to vector<1x8xf32>
    %758 = vector.broadcast %757 : vector<1x8xf32> to vector<32x8xf32>
    %759 = arith.addf %755, %758 : vector<32x8xf32>
    %cst_526 = arith.constant dense<0.000000e+00> : vector<32x8xf32>
    %760 = tpu.matmul %5, %749, %cst_526 {dimension_numbers = #tpu.dot_dimension_numbers<[1], [0], [0], [1], [0, 0, 1, 1], [], []>} : vector<32x32xbf16>, vector<32x8xbf16>, vector<32x8xf32> -> vector<32x8xf32>
    %c1_527 = arith.constant 1 : index
    %c23_528 = arith.constant 23 : index
    %c0_529 = arith.constant 0 : index
    %c0_530 = arith.constant 0 : index
    %761 = vector.load %arg7[%c1_527, %c23_528, %c0_529, %c0_530] : memref<2x24x1x8xf32, #tpu.memory_space<vmem>>, vector<1x1x1x8xf32>
    %762 = vector.shape_cast %761 : vector<1x1x1x8xf32> to vector<1x8xf32>
    %763 = vector.broadcast %762 : vector<1x8xf32> to vector<32x8xf32>
    %764 = arith.addf %760, %763 : vector<32x8xf32>
    %765 = arith.truncf %754 : vector<24x8xf32> to vector<24x8xbf16>
    %766 = arith.truncf %759 : vector<32x8xf32> to vector<32x8xbf16>
    %cst_531 = arith.constant dense<0.000000e+00> : vector<24x32xf32>
    %767 = tpu.matmul %765, %766, %cst_531 {dimension_numbers = #tpu.dot_dimension_numbers<[1], [1], [0], [0], [0, 0, 1, 0], [], []>} : vector<24x8xbf16>, vector<32x8xbf16>, vector<24x32xf32> -> vector<24x32xf32>
    %cst_532 = arith.constant dense<0xFF800000> : vector<24xf32>
    %768 = vector.multi_reduction <maximumf>, %767, %cst_532 [1] : vector<24x32xf32> to vector<24xf32>
    %769 = vector.shape_cast %768 : vector<24xf32> to vector<24x1xf32>
    %770 = vector.broadcast %769 : vector<24x1xf32> to vector<24x32xf32>
    %771 = arith.subf %767, %770 : vector<24x32xf32>
    %772 = math.exp %771 : vector<24x32xf32>
    %cst_533 = arith.constant dense<0.000000e+00> : vector<24xf32>
    %773 = vector.multi_reduction <add>, %772, %cst_533 [1] : vector<24x32xf32> to vector<24xf32>
    %774 = vector.shape_cast %773 : vector<24xf32> to vector<24x1xf32>
    %775 = tpu.reciprocal %774 {approx = true} : vector<24x1xf32> -> vector<24x1xf32>
    %776 = vector.broadcast %775 : vector<24x1xf32> to vector<24x32xf32>
    %777 = arith.mulf %772, %776 : vector<24x32xf32>
    %778 = arith.truncf %777 : vector<24x32xf32> to vector<24x32xbf16>
    %779 = arith.truncf %764 : vector<32x8xf32> to vector<32x8xbf16>
    %cst_534 = arith.constant dense<0.000000e+00> : vector<24x8xf32>
    %780 = tpu.matmul %778, %779, %cst_534 {dimension_numbers = #tpu.dot_dimension_numbers<[1], [0], [0], [1], [0, 0, 1, 1], [], []>} : vector<24x32xbf16>, vector<32x8xbf16>, vector<24x8xf32> -> vector<24x8xf32>
    %781 = tpu.concatenate %669, %706, %743, %780 in 1 : vector<24x8xf32>, vector<24x8xf32>, vector<24x8xf32>, vector<24x8xf32> -> vector<24x32xf32>
    %782 = arith.truncf %781 : vector<24x32xf32> to vector<24x32xbf16>
    %c1_535 = arith.constant 1 : index
    %c1_536 = arith.constant 1 : index
    %c0_537 = arith.constant 0 : index
    %c0_538 = arith.constant 0 : index
    %783 = vector.load %arg8[%c1_535, %c1_536, %c0_537, %c0_538] : memref<2x2x32x32xbf16, #tpu.memory_space<vmem>>, vector<1x1x32x32xbf16>
    %784 = vector.shape_cast %783 : vector<1x1x32x32xbf16> to vector<32x32xbf16>
    %cst_539 = arith.constant dense<0.000000e+00> : vector<24x32xf32>
    %785 = tpu.matmul %782, %784, %cst_539 {dimension_numbers = #tpu.dot_dimension_numbers<[1], [0], [0], [1], [0, 0, 1, 1], [], []>} : vector<24x32xbf16>, vector<32x32xbf16>, vector<24x32xf32> -> vector<24x32xf32>
    %786 = vector.extract_strided_slice %425 {offsets = [7, 0], sizes = [1, 32], strides = [1, 1]} : vector<10x128xf32> to vector<1x32xf32>
    %787 = vector.broadcast %786 : vector<1x32xf32> to vector<24x32xf32>
    %788 = arith.addf %785, %787 : vector<24x32xf32>
    %789 = arith.addf %607, %788 : vector<24x32xf32>
    %790 = vector.extract_strided_slice %425 {offsets = [2, 0], sizes = [1, 32], strides = [1, 1]} : vector<10x128xf32> to vector<1x32xf32>
    %791 = vector.extract_strided_slice %425 {offsets = [5, 0], sizes = [1, 32], strides = [1, 1]} : vector<10x128xf32> to vector<1x32xf32>
    %cst_540 = arith.constant dense<0.000000e+00> : vector<24xf32>
    %792 = vector.multi_reduction <add>, %789, %cst_540 [1] : vector<24x32xf32> to vector<24xf32>
    %793 = vector.shape_cast %792 : vector<24xf32> to vector<24x1xf32>
    %cst_541 = arith.constant 3.200000e+01 : f32
    %794 = vector.broadcast %cst_541 : f32 to vector<24x1xf32>
    %795 = arith.divf %793, %794 : vector<24x1xf32>
    %796 = vector.broadcast %795 : vector<24x1xf32> to vector<24x32xf32>
    %797 = arith.subf %789, %796 : vector<24x32xf32>
    %798 = arith.mulf %797, %797 : vector<24x32xf32>
    %cst_542 = arith.constant dense<0.000000e+00> : vector<24xf32>
    %799 = vector.multi_reduction <add>, %798, %cst_542 [1] : vector<24x32xf32> to vector<24xf32>
    %800 = vector.shape_cast %799 : vector<24xf32> to vector<24x1xf32>
    %cst_543 = arith.constant 3.200000e+01 : f32
    %801 = vector.broadcast %cst_543 : f32 to vector<24x1xf32>
    %802 = arith.divf %800, %801 : vector<24x1xf32>
    %803 = vector.broadcast %795 : vector<24x1xf32> to vector<24x32xf32>
    %804 = arith.subf %789, %803 : vector<24x32xf32>
    %cst_544 = arith.constant 9.99999974E-6 : f32
    %805 = vector.broadcast %cst_544 : f32 to vector<24x1xf32>
    %806 = arith.addf %802, %805 : vector<24x1xf32>
    %807 = math.rsqrt %806 : vector<24x1xf32>
    %808 = vector.broadcast %807 : vector<24x1xf32> to vector<24x32xf32>
    %809 = arith.mulf %804, %808 : vector<24x32xf32>
    %810 = vector.broadcast %790 : vector<1x32xf32> to vector<24x32xf32>
    %811 = arith.mulf %809, %810 : vector<24x32xf32>
    %812 = vector.broadcast %791 : vector<1x32xf32> to vector<24x32xf32>
    %813 = arith.addf %811, %812 : vector<24x32xf32>
    %814 = arith.truncf %813 : vector<24x32xf32> to vector<24x32xbf16>
    %c1_545 = arith.constant 1 : index
    %c0_546 = arith.constant 0 : index
    %c0_547 = arith.constant 0 : index
    %815 = vector.load %arg9[%c1_545, %c0_546, %c0_547] : memref<2x32x128xbf16, #tpu.memory_space<vmem>>, vector<1x32x128xbf16>
    %816 = vector.shape_cast %815 : vector<1x32x128xbf16> to vector<32x128xbf16>
    %cst_548 = arith.constant dense<0.000000e+00> : vector<24x128xf32>
    %817 = tpu.matmul %814, %816, %cst_548 {dimension_numbers = #tpu.dot_dimension_numbers<[1], [0], [0], [1], [0, 0, 1, 1], [], []>} : vector<24x32xbf16>, vector<32x128xbf16>, vector<24x128xf32> -> vector<24x128xf32>
    %818 = vector.extract_strided_slice %425 {offsets = [8, 0], sizes = [1, 128], strides = [1, 1]} : vector<10x128xf32> to vector<1x128xf32>
    %819 = vector.broadcast %818 : vector<1x128xf32> to vector<24x128xf32>
    %820 = arith.addf %817, %819 : vector<24x128xf32>
    %821 = arith.mulf %820, %820 : vector<24x128xf32>
    %822 = arith.mulf %820, %821 : vector<24x128xf32>
    %cst_549 = arith.constant 4.471500e-02 : f32
    %823 = vector.broadcast %cst_549 : f32 to vector<24x128xf32>
    %824 = arith.mulf %823, %822 : vector<24x128xf32>
    %825 = arith.addf %820, %824 : vector<24x128xf32>
    %cst_550 = arith.constant 0.797884583 : f32
    %826 = vector.broadcast %cst_550 : f32 to vector<24x128xf32>
    %827 = arith.mulf %826, %825 : vector<24x128xf32>
    %828 = math.tanh %827 : vector<24x128xf32>
    %cst_551 = arith.constant 1.000000e+00 : f32
    %829 = vector.broadcast %cst_551 : f32 to vector<24x128xf32>
    %830 = arith.addf %829, %828 : vector<24x128xf32>
    %cst_552 = arith.constant 5.000000e-01 : f32
    %831 = vector.broadcast %cst_552 : f32 to vector<24x128xf32>
    %832 = arith.mulf %831, %830 : vector<24x128xf32>
    %833 = arith.mulf %820, %832 : vector<24x128xf32>
    %834 = arith.truncf %833 : vector<24x128xf32> to vector<24x128xbf16>
    %c1_553 = arith.constant 1 : index
    %c0_554 = arith.constant 0 : index
    %c0_555 = arith.constant 0 : index
    %835 = vector.load %arg10[%c1_553, %c0_554, %c0_555] : memref<2x128x32xbf16, #tpu.memory_space<vmem>>, vector<1x128x32xbf16>
    %836 = vector.shape_cast %835 : vector<1x128x32xbf16> to vector<128x32xbf16>
    %cst_556 = arith.constant dense<0.000000e+00> : vector<24x32xf32>
    %837 = tpu.matmul %834, %836, %cst_556 {dimension_numbers = #tpu.dot_dimension_numbers<[1], [0], [0], [1], [0, 0, 1, 1], [], []>} : vector<24x128xbf16>, vector<128x32xbf16>, vector<24x32xf32> -> vector<24x32xf32>
    %838 = arith.addf %789, %837 : vector<24x32xf32>
    %839 = vector.extract_strided_slice %425 {offsets = [9, 0], sizes = [1, 32], strides = [1, 1]} : vector<10x128xf32> to vector<1x32xf32>
    %840 = vector.broadcast %839 : vector<1x32xf32> to vector<24x32xf32>
    %841 = arith.addf %838, %840 : vector<24x32xf32>
    %c0_557 = arith.constant 0 : index
    %c0_558 = arith.constant 0 : index
    %c0_559 = arith.constant 0 : index
    %842 = vector.load %arg16[%c0_557, %c0_558, %c0_559] : memref<1x24x32xf32, #tpu.memory_space<vmem>>, vector<1x24x32xf32>
    %843 = vector.shape_cast %842 : vector<1x24x32xf32> to vector<24x32xf32>
    %844 = vector.shape_cast %841 : vector<24x32xf32> to vector<1x24x32xf32>
    tpu.vector_store %arg16[%c0_557, %c0_558, %c0_559], %844 {strides = array<i32>} : memref<1x24x32xf32, #tpu.memory_space<vmem>>, vector<1x24x32xf32>,
    %c0_i32_560 = arith.constant 0 : i32
    %845 = arith.cmpi eq, %arg1, %c0_i32_560 : i32
    %846 = arith.extui %845 : i1 to i32
    %c0_i32_561 = arith.constant 0 : i32
    %847 = arith.cmpi ne, %846, %c0_i32_561 : i32
    scf.if %847 {
      %848 = vector.extract_strided_slice %841 {offsets = [16, 0], sizes = [8, 32], strides = [1, 1]} : vector<24x32xf32> to vector<8x32xf32>
      %c0_562 = arith.constant 0 : index
      %c0_563 = arith.constant 0 : index
      %849 = vector.load %arg12[%c0_562, %c0_563] : memref<2x8xf32, #tpu.memory_space<vmem>>, vector<2x8xf32>
      %cst_564 = arith.constant dense<0.000000e+00> : vector<2x32xf32>
      %850 = tpu.matmul %849, %848, %cst_564 {dimension_numbers = #tpu.dot_dimension_numbers<[1], [0], [0], [1], [0, 0, 1, 1], [], []>} : vector<2x8xf32>, vector<8x32xf32>, vector<2x32xf32> -> vector<2x32xf32>
      %c0_565 = arith.constant 0 : index
      %c0_566 = arith.constant 0 : index
      %851 = vector.load %arg13[%c0_565, %c0_566] : memref<2x32xf32, #tpu.memory_space<vmem>>, vector<1x32xf32>
      %c1_567 = arith.constant 1 : index
      %c0_568 = arith.constant 0 : index
      %852 = vector.load %arg13[%c1_567, %c0_568] : memref<2x32xf32, #tpu.memory_space<vmem>>, vector<1x32xf32>
      %cst_569 = arith.constant dense<0.000000e+00> : vector<2xf32>
      %853 = vector.multi_reduction <add>, %850, %cst_569 [1] : vector<2x32xf32> to vector<2xf32>
      %854 = vector.shape_cast %853 : vector<2xf32> to vector<2x1xf32>
      %cst_570 = arith.constant 3.200000e+01 : f32
      %855 = vector.broadcast %cst_570 : f32 to vector<2x1xf32>
      %856 = arith.divf %854, %855 : vector<2x1xf32>
      %857 = vector.broadcast %856 : vector<2x1xf32> to vector<2x32xf32>
      %858 = arith.subf %850, %857 : vector<2x32xf32>
      %859 = arith.mulf %858, %858 : vector<2x32xf32>
      %cst_571 = arith.constant dense<0.000000e+00> : vector<2xf32>
      %860 = vector.multi_reduction <add>, %859, %cst_571 [1] : vector<2x32xf32> to vector<2xf32>
      %861 = vector.shape_cast %860 : vector<2xf32> to vector<2x1xf32>
      %cst_572 = arith.constant 3.200000e+01 : f32
      %862 = vector.broadcast %cst_572 : f32 to vector<2x1xf32>
      %863 = arith.divf %861, %862 : vector<2x1xf32>
      %864 = vector.broadcast %856 : vector<2x1xf32> to vector<2x32xf32>
      %865 = arith.subf %850, %864 : vector<2x32xf32>
      %cst_573 = arith.constant 9.99999974E-6 : f32
      %866 = vector.broadcast %cst_573 : f32 to vector<2x1xf32>
      %867 = arith.addf %863, %866 : vector<2x1xf32>
      %868 = math.rsqrt %867 : vector<2x1xf32>
      %869 = vector.broadcast %868 : vector<2x1xf32> to vector<2x32xf32>
      %870 = arith.mulf %865, %869 : vector<2x32xf32>
      %871 = vector.broadcast %851 : vector<1x32xf32> to vector<2x32xf32>
      %872 = arith.mulf %870, %871 : vector<2x32xf32>
      %873 = vector.broadcast %852 : vector<1x32xf32> to vector<2x32xf32>
      %874 = arith.addf %872, %873 : vector<2x32xf32>
      %c0_574 = arith.constant 0 : index
      %c0_575 = arith.constant 0 : index
      %875 = vector.load %arg14[%c0_574, %c0_575] : memref<32x5xf32, #tpu.memory_space<vmem>>, vector<32x5xf32>
      %cst_576 = arith.constant dense<0.000000e+00> : vector<2x5xf32>
      %876 = tpu.matmul %874, %875, %cst_576 {dimension_numbers = #tpu.dot_dimension_numbers<[1], [0], [0], [1], [0, 0, 1, 1], [], []>} : vector<2x32xf32>, vector<32x5xf32>, vector<2x5xf32> -> vector<2x5xf32>
      %c0_577 = arith.constant 0 : index
      %c0_578 = arith.constant 0 : index
      %877 = vector.load %arg15[%c0_577, %c0_578] : memref<1x5xf32, #tpu.memory_space<vmem>>, vector<1x5xf32>
      %878 = vector.broadcast %877 : vector<1x5xf32> to vector<2x5xf32>
      %879 = arith.addf %876, %878 : vector<2x5xf32>
      %cst_579 = arith.constant dense<0xFF800000> : vector<2xf32>
      %880 = vector.multi_reduction <maximumf>, %879, %cst_579 [1] : vector<2x5xf32> to vector<2xf32>
      %881 = vector.shape_cast %880 : vector<2xf32> to vector<2x1xf32>
      %882 = vector.broadcast %881 : vector<2x1xf32> to vector<2x5xf32>
      %883 = arith.subf %879, %882 : vector<2x5xf32>
      %884 = math.exp %883 : vector<2x5xf32>
      %cst_580 = arith.constant dense<0.000000e+00> : vector<2xf32>
      %885 = vector.multi_reduction <add>, %884, %cst_580 [1] : vector<2x5xf32> to vector<2xf32>
      %886 = vector.shape_cast %885 : vector<2xf32> to vector<2x1xf32>
      %887 = vector.broadcast %886 : vector<2x1xf32> to vector<2x5xf32>
      %888 = arith.divf %884, %887 : vector<2x5xf32>
      %c0_581 = arith.constant 0 : index
      %c0_582 = arith.constant 0 : index
      %c0_583 = arith.constant 0 : index
      %889 = vector.load %arg17[%c0_581, %c0_582, %c0_583] : memref<1x2x5xf32, #tpu.memory_space<vmem>>, vector<1x2x5xf32>
      %890 = vector.shape_cast %889 : vector<1x2x5xf32> to vector<2x5xf32>
      %891 = vector.shape_cast %888 : vector<2x5xf32> to vector<1x2x5xf32>
      tpu.vector_store %arg17[%c0_581, %c0_582, %c0_583], %891 {strides = array<i32>} : memref<1x2x5xf32, #tpu.memory_space<vmem>>, vector<1x2x5xf32>,
    } else {
    }
    return
  }
  func.func @transform_0(%arg0: i32, %arg1: i32) -> (i32, i32, i32) {
    %c0_i32 = arith.constant 0 : i32
    %c0_i32_0 = arith.constant 0 : i32
    %c0_i32_1 = arith.constant 0 : i32
    return %arg0, %c0_i32, %c0_i32_0 : i32, i32, i32
  }
  func.func @transform_1(%arg0: i32, %arg1: i32) -> (i32, i32, i32) {
    %c0_i32 = arith.constant 0 : i32
    %c0_i32_0 = arith.constant 0 : i32
    %c0_i32_1 = arith.constant 0 : i32
    %c0_i32_2 = arith.constant 0 : i32
    return %c0_i32, %c0_i32_0, %c0_i32_1 : i32, i32, i32
  }
  func.func @transform_2(%arg0: i32, %arg1: i32) -> (i32, i32, i32) {
    %c0_i32 = arith.constant 0 : i32
    %c0_i32_0 = arith.constant 0 : i32
    %c0_i32_1 = arith.constant 0 : i32
    %c0_i32_2 = arith.constant 0 : i32
    return %c0_i32, %c0_i32_0, %c0_i32_1 : i32, i32, i32
  }
  func.func @transform_3(%arg0: i32, %arg1: i32) -> (i32, i32) {
    %c0_i32 = arith.constant 0 : i32
    %c0_i32_0 = arith.constant 0 : i32
    %c0_i32_1 = arith.constant 0 : i32
    return %c0_i32, %c0_i32_0 : i32, i32
  }
  func.func @transform_4(%arg0: i32, %arg1: i32) -> (i32, i32, i32, i32) {
    %c0_i32 = arith.constant 0 : i32
    %c0_i32_0 = arith.constant 0 : i32
    %c0_i32_1 = arith.constant 0 : i32
    %c0_i32_2 = arith.constant 0 : i32
    return %arg1, %c0_i32, %c0_i32_0, %c0_i32_1 : i32, i32, i32, i32
  }
  func.func @transform_5(%arg0: i32, %arg1: i32) -> (i32, i32, i32, i32) {
    %c0_i32 = arith.constant 0 : i32
    %c0_i32_0 = arith.constant 0 : i32
    %c0_i32_1 = arith.constant 0 : i32
    %c0_i32_2 = arith.constant 0 : i32
    return %arg1, %c0_i32, %c0_i32_0, %c0_i32_1 : i32, i32, i32, i32
  }
  func.func @transform_6(%arg0: i32, %arg1: i32) -> (i32, i32, i32, i32) {
    %c0_i32 = arith.constant 0 : i32
    %c0_i32_0 = arith.constant 0 : i32
    %c0_i32_1 = arith.constant 0 : i32
    %c0_i32_2 = arith.constant 0 : i32
    return %arg1, %c0_i32, %c0_i32_0, %c0_i32_1 : i32, i32, i32, i32
  }
  func.func @transform_7(%arg0: i32, %arg1: i32) -> (i32, i32, i32) {
    %c0_i32 = arith.constant 0 : i32
    %c0_i32_0 = arith.constant 0 : i32
    %c0_i32_1 = arith.constant 0 : i32
    return %arg1, %c0_i32, %c0_i32_0 : i32, i32, i32
  }
  func.func @transform_8(%arg0: i32, %arg1: i32) -> (i32, i32, i32) {
    %c0_i32 = arith.constant 0 : i32
    %c0_i32_0 = arith.constant 0 : i32
    %c0_i32_1 = arith.constant 0 : i32
    return %arg1, %c0_i32, %c0_i32_0 : i32, i32, i32
  }
  func.func @transform_9(%arg0: i32, %arg1: i32) -> (i32, i32, i32) {
    %c0_i32 = arith.constant 0 : i32
    %c0_i32_0 = arith.constant 0 : i32
    %c0_i32_1 = arith.constant 0 : i32
    return %arg1, %c0_i32, %c0_i32_0 : i32, i32, i32
  }
  func.func @transform_10(%arg0: i32, %arg1: i32) -> (i32, i32) {
    %c0_i32 = arith.constant 0 : i32
    %c0_i32_0 = arith.constant 0 : i32
    %c0_i32_1 = arith.constant 0 : i32
    return %c0_i32, %c0_i32_0 : i32, i32
  }
  func.func @transform_11(%arg0: i32, %arg1: i32) -> (i32, i32) {
    %c0_i32 = arith.constant 0 : i32
    %c0_i32_0 = arith.constant 0 : i32
    %c0_i32_1 = arith.constant 0 : i32
    return %c0_i32, %c0_i32_0 : i32, i32
  }
  func.func @transform_12(%arg0: i32, %arg1: i32) -> (i32, i32) {
    %c0_i32 = arith.constant 0 : i32
    %c0_i32_0 = arith.constant 0 : i32
    %c0_i32_1 = arith.constant 0 : i32
    return %c0_i32, %c0_i32_0 : i32, i32
  }
  func.func @transform_13(%arg0: i32, %arg1: i32) -> (i32, i32) {
    %c0_i32 = arith.constant 0 : i32
    %c0_i32_0 = arith.constant 0 : i32
    %c0_i32_1 = arith.constant 0 : i32
    return %c0_i32, %c0_i32_0 : i32, i32
  }
  func.func @transform_14(%arg0: i32, %arg1: i32) -> (i32, i32, i32) {
    %c0_i32 = arith.constant 0 : i32
    %c0_i32_0 = arith.constant 0 : i32
    %c0_i32_1 = arith.constant 0 : i32
    return %arg0, %c0_i32, %c0_i32_0 : i32, i32, i32
  }
  func.func @transform_15(%arg0: i32, %arg1: i32) -> (i32, i32, i32) {
    %c0_i32 = arith.constant 0 : i32
    %c0_i32_0 = arith.constant 0 : i32
    %c0_i32_1 = arith.constant 0 : i32
    return %arg0, %c0_i32, %c0_i32_0 : i32, i32, i32
  }
}

</mosaic_0001>

<llo_original>
// kernel: layer_estimator_forward.1
$region0: #{layer_estimator_forward.1}
  #allocation0 [shape = 'u32[]', space=smem, size = 0x4, offset = 0x4, fixed_abs, tag = 'smem constant byte address 0x4 - core index']
  #allocation1 [shape = 'u32[144,128]{1,0:T(1,128)}', space=vmem, size = 0x12000, scoped, tag = 'internal scratch']
  #allocation2 [shape = 'bf16[32,32]{1,0:T(16,128)(2,1)}', space=vmem, size = 0x2000, scoped, tag = 'scratch operand']
  %s0 = inlined_call_operand.vmem [shape: f32[2,32,32], index: 0, kind: input, shape index: {}]
  %s1 = inlined_call_operand.vmem [shape: f32[1,32,32], index: 1, kind: input, shape index: {}]
  %s2 = inlined_call_operand.vmem [shape: f32[1,24,32], index: 2, kind: input, shape index: {}]
  %s3 = inlined_call_operand.vmem [shape: f32[2,32], index: 3, kind: input, shape index: {}]
  %s4 = inlined_call_operand.vmem [shape: bf16[2,24,32,8], index: 4, kind: input, shape index: {}]
  %s5 = inlined_call_operand.vmem [shape: f32[2,24,1,8], index: 5, kind: input, shape index: {}]
  %s6 = inlined_call_operand.vmem [shape: bf16[2,2,32,32], index: 6, kind: input, shape index: {}]
  %s7 = inlined_call_operand.vmem [shape: bf16[2,32,128], index: 7, kind: input, shape index: {}]
  %s8 = inlined_call_operand.vmem [shape: bf16[2,128,32], index: 8, kind: input, shape index: {}]
  %s9 = inlined_call_operand.vmem [shape: f32[2,10,128], index: 9, kind: input, shape index: {}]
  %s10 = inlined_call_operand.vmem [shape: f32[2,8], index: 10, kind: input, shape index: {}]
  %s11 = inlined_call_operand.vmem [shape: f32[2,32], index: 11, kind: input, shape index: {}]
  %s12 = inlined_call_operand.vmem [shape: f32[32,5], index: 12, kind: input, shape index: {}]
  %s13 = inlined_call_operand.vmem [shape: f32[1,5], index: 13, kind: input, shape index: {}]
  %s14 = inlined_call_operand.vmem [shape: f32[2,24,32], index: 14, kind: output, shape index: {0}]
  %s15 = inlined_call_operand.hbm [shape: f32[2,2,5], index: 15, kind: output, shape index: {1}]
  %16 = xla_tuple %s14, %s15
  %s17 = sld [smem:[#allocation0]]
  $region105: #{layer_estimator_forward.1} parent=0
    _
  %s19 = ssub.s32 1, %s17
  %s20 = scalar_select 0, %s19, %s17
  $region1: #{layer_estimator_forward.1} parent=0
    #allocation3 [shape = 'u8[2048]{0}', space=vmem, size = 0x800, scoped, tag = 'output window, operand 1']
    #allocation4 [shape = 's32[2]{0}', space=sflag, size = 0x8, scoped, tag = 'scoped memory for layer_estimator_forward.1']
    %21 = vsyncpa [#allocation4], 0
    %s22 = scalar_lea.sflag [#allocation4], 1
    %23 = vsyncpa %s22, 0
    loop: start=0, step=1, limit=4
    $region2: #{layer_estimator_forward.1} parent=1 // loop_pre_header
      _
    $region3: #{layer_estimator_forward.1} parent=1 // loop_header
      %s25 = sphi 0, %s29
      %p26 = scmp.ge.s32.totalorder %s25, 4
      %s32 = sphi 0, %s44
      %s33 = sphi 0, %s40
      %s34 = sphi 0, %s32
      %s35 = sphi 0, %s33
      %s36 = sphi 0, %s34
      %s37 = sphi 0, %s35
      %s47 = sphi 0, %s49
      %s50 = sphi 0, %s47
      %s51 = sphi 0, %s50
      %s67 = sphi 0, %s51
      %s71 = sphi 0, %s71
      %s73 = sphi 0, %s71
      %s74 = sphi 0, %s73
      %s88 = sphi 0, %s74
      %s92 = sphi 0, %s92
      %s94 = sphi 0, %s92
      %s95 = sphi 0, %s94
      %s109 = sphi 0, %s95
      %s113 = sphi 0, %s113
      %s115 = sphi 0, %s113
      %s116 = sphi 0, %s115
      %s130 = sphi 0, %s116
      %s136 = sphi 0, %s138
      %s139 = sphi 0, %s136
      %s140 = sphi 0, %s139
      %s156 = sphi 0, %s140
      %s162 = sphi 0, %s164
      %s165 = sphi 0, %s162
      %s166 = sphi 0, %s165
      %s182 = sphi 0, %s166
      %s188 = sphi 0, %s190
      %s191 = sphi 0, %s188
      %s192 = sphi 0, %s191
      %s208 = sphi 0, %s192
      %s214 = sphi 0, %s216
      %s217 = sphi 0, %s214
      %s218 = sphi 0, %s217
      %s234 = sphi 0, %s218
      %s240 = sphi 0, %s242
      %s243 = sphi 0, %s240
      %s244 = sphi 0, %s243
      %s260 = sphi 0, %s244
      %s266 = sphi 0, %s268
      %s269 = sphi 0, %s266
      %s270 = sphi 0, %s269
      %s286 = sphi 0, %s270
      %s290 = sphi 0, %s290
      %s292 = sphi 0, %s290
      %s293 = sphi 0, %s292
      %s307 = sphi 0, %s293
      %s311 = sphi 0, %s311
      %s313 = sphi 0, %s311
      %s314 = sphi 0, %s313
      %s328 = sphi 0, %s314
      %s332 = sphi 0, %s332
      %s334 = sphi 0, %s332
      %s335 = sphi 0, %s334
      %s349 = sphi 0, %s335
      %s353 = sphi 0, %s353
      %s355 = sphi 0, %s353
      %s356 = sphi 0, %s355
      %s370 = sphi 0, %s356
      %s376 = sphi 0, %s378
      %s379 = sphi 0, %s376
      %s380 = sphi 0, %s379
      %s396 = sphi 0, %s380
      %s402 = sphi 0, %s404
      %s405 = sphi 0, %s402
      %s406 = sphi 0, %s405
      %s422 = sphi 0, %s406
    $region4: #{layer_estimator_forward.1} parent=1 // loop_header_branch
      %28 = sbr.rel (%p26) target = $region8
    $region5: #{layer_estimator_forward.1} parent=1 // loop_body
      %s30 = ssub.s32 %s25, 1
      %s31 = ssub.s32 %s25, 2
      %s38 = sadd.s32 1, %s33
      %p39 = scmp.ge.s32.totalorder %s38, 1
      %s40 = scalar_select %p39, 0, %s38
      %s41 = sadd.s32 1, %s32
      %s42 = scalar_select %p39, %s41, %s32
      %p43 = scmp.ge.s32.totalorder %s42, 2
      %s44 = scalar_select %p43, 0, %s42
      %s45 = ssub.s32 %s32, %s44
      %p46 = scmp.eq.s32.totalorder %s45, 0
      %s48 = sadd.s32 %s47, 1
      %s49 = scalar_select %p46, %s47, %s48
      %p52 = pneg %p46
      %p53 = scmp.eq.s32.totalorder %s25, 1
      %p54 = por %p52, %p53
      %p55 = scmp.ne.s32.totalorder %s47, %s50
      %p56 = scmp.eq.s32.totalorder %s25, 0
      %p57 = por %p55, %p56
      %p58 = scmp.ne.s32.totalorder %s47, %s50
      %p59 = scmp.eq.s32.totalorder %s30, 1
      %p60 = por %p58, %p59
      %p61 = scmp.ne.s32.totalorder %s50, %s51
      %p62 = scmp.eq.s32.totalorder %s30, 0
      %p63 = por %p61, %p62
      %p64 = scmp.ne.s32.totalorder %s50, %s51
      %p65 = scmp.eq.s32.totalorder %s31, 1
      %p66 = por %p64, %p65
      %p68 = scmp.ne.s32.totalorder %s51, %s67
      %p69 = scmp.eq.s32.totalorder %s31, 0
      %p70 = por %p68, %p69
      %s72 = sadd.s32 %s71, 1
      %p75 = scmp.eq.s32.totalorder %s25, 1
      %p76 = scmp.ne.s32.totalorder %s71, %s73
      %p77 = scmp.eq.s32.totalorder %s25, 0
      %p78 = por %p76, %p77
      %p79 = scmp.ne.s32.totalorder %s71, %s73
      %p80 = scmp.eq.s32.totalorder %s30, 1
      %p81 = por %p79, %p80
      %p82 = scmp.ne.s32.totalorder %s73, %s74
      %p83 = scmp.eq.s32.totalorder %s30, 0
      %p84 = por %p82, %p83
      %p85 = scmp.ne.s32.totalorder %s73, %s74
      %p86 = scmp.eq.s32.totalorder %s31, 1
      %p87 = por %p85, %p86
      %p89 = scmp.ne.s32.totalorder %s74, %s88
      %p90 = scmp.eq.s32.totalorder %s31, 0
      %p91 = por %p89, %p90
      %s93 = sadd.s32 %s92, 1
      %p96 = scmp.eq.s32.totalorder %s25, 1
      %p97 = scmp.ne.s32.totalorder %s92, %s94
      %p98 = scmp.eq.s32.totalorder %s25, 0
      %p99 = por %p97, %p98
      %p100 = scmp.ne.s32.totalorder %s92, %s94
      %p101 = scmp.eq.s32.totalorder %s30, 1
      %p102 = por %p100, %p101
      %p103 = scmp.ne.s32.totalorder %s94, %s95
      %p104 = scmp.eq.s32.totalorder %s30, 0
      %p105 = por %p103, %p104
      %p106 = scmp.ne.s32.totalorder %s94, %s95
      %p107 = scmp.eq.s32.totalorder %s31, 1
      %p108 = por %p106, %p107
      %p110 = scmp.ne.s32.totalorder %s95, %s109
      %p111 = scmp.eq.s32.totalorder %s31, 0
      %p112 = por %p110, %p111
      %s114 = sadd.s32 %s113, 1
      %p117 = scmp.eq.s32.totalorder %s25, 1
      %p118 = scmp.ne.s32.totalorder %s113, %s115
      %p119 = scmp.eq.s32.totalorder %s25, 0
      %p120 = por %p118, %p119
      %p121 = scmp.ne.s32.totalorder %s113, %s115
      %p122 = scmp.eq.s32.totalorder %s30, 1
      %p123 = por %p121, %p122
      %p124 = scmp.ne.s32.totalorder %s115, %s116
      %p125 = scmp.eq.s32.totalorder %s30, 0
      %p126 = por %p124, %p125
      %p127 = scmp.ne.s32.totalorder %s115, %s116
      %p128 = scmp.eq.s32.totalorder %s31, 1
      %p129 = por %p127, %p128
      %p131 = scmp.ne.s32.totalorder %s116, %s130
      %p132 = scmp.eq.s32.totalorder %s31, 0
      %p133 = por %p131, %p132
      %s134 = ssub.s32 %s33, %s40
      %p135 = scmp.eq.s32.totalorder %s134, 0
      %s137 = sadd.s32 %s136, 1
      %s138 = scalar_select %p135, %s136, %s137
      %p141 = pneg %p135
      %p142 = scmp.eq.s32.totalorder %s25, 1
      %p143 = por %p141, %p142
      %p144 = scmp.ne.s32.totalorder %s136, %s139
      %p145 = scmp.eq.s32.totalorder %s25, 0
      %p146 = por %p144, %p145
      %p147 = scmp.ne.s32.totalorder %s136, %s139
      %p148 = scmp.eq.s32.totalorder %s30, 1
      %p149 = por %p147, %p148
      %p150 = scmp.ne.s32.totalorder %s139, %s140
      %p151 = scmp.eq.s32.totalorder %s30, 0
      %p152 = por %p150, %p151
      %p153 = scmp.ne.s32.totalorder %s139, %s140
      %p154 = scmp.eq.s32.totalorder %s31, 1
      %p155 = por %p153, %p154
      %p157 = scmp.ne.s32.totalorder %s140, %s156
      %p158 = scmp.eq.s32.totalorder %s31, 0
      %p159 = por %p157, %p158
      %s160 = ssub.s32 %s33, %s40
      %p161 = scmp.eq.s32.totalorder %s160, 0
      %s163 = sadd.s32 %s162, 1
      %s164 = scalar_select %p161, %s162, %s163
      %p167 = pneg %p161
      %p168 = scmp.eq.s32.totalorder %s25, 1
      %p169 = por %p167, %p168
      %p170 = scmp.ne.s32.totalorder %s162, %s165
      %p171 = scmp.eq.s32.totalorder %s25, 0
      %p172 = por %p170, %p171
      %p173 = scmp.ne.s32.totalorder %s162, %s165
      %p174 = scmp.eq.s32.totalorder %s30, 1
      %p175 = por %p173, %p174
      %p176 = scmp.ne.s32.totalorder %s165, %s166
      %p177 = scmp.eq.s32.totalorder %s30, 0
      %p178 = por %p176, %p177
      %p179 = scmp.ne.s32.totalorder %s165, %s166
      %p180 = scmp.eq.s32.totalorder %s31, 1
      %p181 = por %p179, %p180
      %p183 = scmp.ne.s32.totalorder %s166, %s182
      %p184 = scmp.eq.s32.totalorder %s31, 0
      %p185 = por %p183, %p184
      %s186 = ssub.s32 %s33, %s40
      %p187 = scmp.eq.s32.totalorder %s186, 0
      %s189 = sadd.s32 %s188, 1
      %s190 = scalar_select %p187, %s188, %s189
      %p193 = pneg %p187
      %p194 = scmp.eq.s32.totalorder %s25, 1
      %p195 = por %p193, %p194
      %p196 = scmp.ne.s32.totalorder %s188, %s191
      %p197 = scmp.eq.s32.totalorder %s25, 0
      %p198 = por %p196, %p197
      %p199 = scmp.ne.s32.totalorder %s188, %s191
      %p200 = scmp.eq.s32.totalorder %s30, 1
      %p201 = por %p199, %p200
      %p202 = scmp.ne.s32.totalorder %s191, %s192
      %p203 = scmp.eq.s32.totalorder %s30, 0
      %p204 = por %p202, %p203
      %p205 = scmp.ne.s32.totalorder %s191, %s192
      %p206 = scmp.eq.s32.totalorder %s31, 1
      %p207 = por %p205, %p206
      %p209 = scmp.ne.s32.totalorder %s192, %s208
      %p210 = scmp.eq.s32.totalorder %s31, 0
      %p211 = por %p209, %p210
      %s212 = ssub.s32 %s33, %s40
      %p213 = scmp.eq.s32.totalorder %s212, 0
      %s215 = sadd.s32 %s214, 1
      %s216 = scalar_select %p213, %s214, %s215
      %p219 = pneg %p213
      %p220 = scmp.eq.s32.totalorder %s25, 1
      %p221 = por %p219, %p220
      %p222 = scmp.ne.s32.totalorder %s214, %s217
      %p223 = scmp.eq.s32.totalorder %s25, 0
      %p224 = por %p222, %p223
      %p225 = scmp.ne.s32.totalorder %s214, %s217
      %p226 = scmp.eq.s32.totalorder %s30, 1
      %p227 = por %p225, %p226
      %p228 = scmp.ne.s32.totalorder %s217, %s218
      %p229 = scmp.eq.s32.totalorder %s30, 0
      %p230 = por %p228, %p229
      %p231 = scmp.ne.s32.totalorder %s217, %s218
      %p232 = scmp.eq.s32.totalorder %s31, 1
      %p233 = por %p231, %p232
      %p235 = scmp.ne.s32.totalorder %s218, %s234
      %p236 = scmp.eq.s32.totalorder %s31, 0
      %p237 = por %p235, %p236
      %s238 = ssub.s32 %s33, %s40
      %p239 = scmp.eq.s32.totalorder %s238, 0
      %s241 = sadd.s32 %s240, 1
      %s242 = scalar_select %p239, %s240, %s241
      %p245 = pneg %p239
      %p246 = scmp.eq.s32.totalorder %s25, 1
      %p247 = por %p245, %p246
      %p248 = scmp.ne.s32.totalorder %s240, %s243
      %p249 = scmp.eq.s32.totalorder %s25, 0
      %p250 = por %p248, %p249
      %p251 = scmp.ne.s32.totalorder %s240, %s243
      %p252 = scmp.eq.s32.totalorder %s30, 1
      %p253 = por %p251, %p252
      %p254 = scmp.ne.s32.totalorder %s243, %s244
      %p255 = scmp.eq.s32.totalorder %s30, 0
      %p256 = por %p254, %p255
      %p257 = scmp.ne.s32.totalorder %s243, %s244
      %p258 = scmp.eq.s32.totalorder %s31, 1
      %p259 = por %p257, %p258
      %p261 = scmp.ne.s32.totalorder %s244, %s260
      %p262 = scmp.eq.s32.totalorder %s31, 0
      %p263 = por %p261, %p262
      %s264 = ssub.s32 %s33, %s40
      %p265 = scmp.eq.s32.totalorder %s264, 0
      %s267 = sadd.s32 %s266, 1
      %s268 = scalar_select %p265, %s266, %s267
      %p271 = pneg %p265
      %p272 = scmp.eq.s32.totalorder %s25, 1
      %p273 = por %p271, %p272
      %p274 = scmp.ne.s32.totalorder %s266, %s269
      %p275 = scmp.eq.s32.totalorder %s25, 0
      %p276 = por %p274, %p275
      %p277 = scmp.ne.s32.totalorder %s266, %s269
      %p278 = scmp.eq.s32.totalorder %s30, 1
      %p279 = por %p277, %p278
      %p280 = scmp.ne.s32.totalorder %s269, %s270
      %p281 = scmp.eq.s32.totalorder %s30, 0
      %p282 = por %p280, %p281
      %p283 = scmp.ne.s32.totalorder %s269, %s270
      %p284 = scmp.eq.s32.totalorder %s31, 1
      %p285 = por %p283, %p284
      %p287 = scmp.ne.s32.totalorder %s270, %s286
      %p288 = scmp.eq.s32.totalorder %s31, 0
      %p289 = por %p287, %p288
      %s291 = sadd.s32 %s290, 1
      %p294 = scmp.eq.s32.totalorder %s25, 1
      %p295 = scmp.ne.s32.totalorder %s290, %s292
      %p296 = scmp.eq.s32.totalorder %s25, 0
      %p297 = por %p295, %p296
      %p298 = scmp.ne.s32.totalorder %s290, %s292
      %p299 = scmp.eq.s32.totalorder %s30, 1
      %p300 = por %p298, %p299
      %p301 = scmp.ne.s32.totalorder %s292, %s293
      %p302 = scmp.eq.s32.totalorder %s30, 0
      %p303 = por %p301, %p302
      %p304 = scmp.ne.s32.totalorder %s292, %s293
      %p305 = scmp.eq.s32.totalorder %s31, 1
      %p306 = por %p304, %p305
      %p308 = scmp.ne.s32.totalorder %s293, %s307
      %p309 = scmp.eq.s32.totalorder %s31, 0
      %p310 = por %p308, %p309
      %s312 = sadd.s32 %s311, 1
      %p315 = scmp.eq.s32.totalorder %s25, 1
      %p316 = scmp.ne.s32.totalorder %s311, %s313
      %p317 = scmp.eq.s32.totalorder %s25, 0
      %p318 = por %p316, %p317
      %p319 = scmp.ne.s32.totalorder %s311, %s313
      %p320 = scmp.eq.s32.totalorder %s30, 1
      %p321 = por %p319, %p320
      %p322 = scmp.ne.s32.totalorder %s313, %s314
      %p323 = scmp.eq.s32.totalorder %s30, 0
      %p324 = por %p322, %p323
      %p325 = scmp.ne.s32.totalorder %s313, %s314
      %p326 = scmp.eq.s32.totalorder %s31, 1
      %p327 = por %p325, %p326
      %p329 = scmp.ne.s32.totalorder %s314, %s328
      %p330 = scmp.eq.s32.totalorder %s31, 0
      %p331 = por %p329, %p330
      %s333 = sadd.s32 %s332, 1
      %p336 = scmp.eq.s32.totalorder %s25, 1
      %p337 = scmp.ne.s32.totalorder %s332, %s334
      %p338 = scmp.eq.s32.totalorder %s25, 0
      %p339 = por %p337, %p338
      %p340 = scmp.ne.s32.totalorder %s332, %s334
      %p341 = scmp.eq.s32.totalorder %s30, 1
      %p342 = por %p340, %p341
      %p343 = scmp.ne.s32.totalorder %s334, %s335
      %p344 = scmp.eq.s32.totalorder %s30, 0
      %p345 = por %p343, %p344
      %p346 = scmp.ne.s32.totalorder %s334, %s335
      %p347 = scmp.eq.s32.totalorder %s31, 1
      %p348 = por %p346, %p347
      %p350 = scmp.ne.s32.totalorder %s335, %s349
      %p351 = scmp.eq.s32.totalorder %s31, 0
      %p352 = por %p350, %p351
      %s354 = sadd.s32 %s353, 1
      %p357 = scmp.eq.s32.totalorder %s25, 1
      %p358 = scmp.ne.s32.totalorder %s353, %s355
      %p359 = scmp.eq.s32.totalorder %s25, 0
      %p360 = por %p358, %p359
      %p361 = scmp.ne.s32.totalorder %s353, %s355
      %p362 = scmp.eq.s32.totalorder %s30, 1
      %p363 = por %p361, %p362
      %p364 = scmp.ne.s32.totalorder %s355, %s356
      %p365 = scmp.eq.s32.totalorder %s30, 0
      %p366 = por %p364, %p365
      %p367 = scmp.ne.s32.totalorder %s355, %s356
      %p368 = scmp.eq.s32.totalorder %s31, 1
      %p369 = por %p367, %p368
      %p371 = scmp.ne.s32.totalorder %s356, %s370
      %p372 = scmp.eq.s32.totalorder %s31, 0
      %p373 = por %p371, %p372
      %s374 = ssub.s32 %s32, %s44
      %p375 = scmp.eq.s32.totalorder %s374, 0
      %s377 = sadd.s32 %s376, 1
      %s378 = scalar_select %p375, %s376, %s377
      %p381 = pneg %p375
      %p382 = scmp.eq.s32.totalorder %s25, 1
      %p383 = por %p381, %p382
      %p384 = scmp.ne.s32.totalorder %s376, %s379
      %p385 = scmp.eq.s32.totalorder %s25, 0
      %p386 = por %p384, %p385
      %p387 = scmp.ne.s32.totalorder %s376, %s379
      %p388 = scmp.eq.s32.totalorder %s30, 1
      %p389 = por %p387, %p388
      %p390 = scmp.ne.s32.totalorder %s379, %s380
      %p391 = scmp.eq.s32.totalorder %s30, 0
      %p392 = por %p390, %p391
      %p393 = scmp.ne.s32.totalorder %s379, %s380
      %p394 = scmp.eq.s32.totalorder %s31, 1
      %p395 = por %p393, %p394
      %p397 = scmp.ne.s32.totalorder %s380, %s396
      %p398 = scmp.eq.s32.totalorder %s31, 0
      %p399 = por %p397, %p398
      %s400 = ssub.s32 %s32, %s44
      %p401 = scmp.eq.s32.totalorder %s400, 0
      %s403 = sadd.s32 %s402, 1
      %s404 = scalar_select %p401, %s402, %s403
      %p407 = pneg %p401
      %p408 = scmp.eq.s32.totalorder %s25, 1
      %p409 = por %p407, %p408
      %p410 = scmp.ne.s32.totalorder %s402, %s405
      %p411 = scmp.eq.s32.totalorder %s25, 0
      %p412 = por %p410, %p411
      %p413 = scmp.ne.s32.totalorder %s402, %s405
      %p414 = scmp.eq.s32.totalorder %s30, 1
      %p415 = por %p413, %p414
      %p416 = scmp.ne.s32.totalorder %s405, %s406
      %p417 = scmp.eq.s32.totalorder %s30, 0
      %p418 = por %p416, %p417
      %p419 = scmp.ne.s32.totalorder %s405, %s406
      %p420 = scmp.eq.s32.totalorder %s31, 1
      %p421 = por %p419, %p420
      %p423 = scmp.ne.s32.totalorder %s406, %s422
      %p424 = scmp.eq.s32.totalorder %s31, 0
      %p425 = por %p423, %p424
      %p426 = scmp.le.s32.totalorder 1, %s25
      %p427 = scmp.lt.s32.totalorder %s25, 3
      %p428 = pnand %p426, %p427
      %p429 = pneg %p428
      // Predicated region
      $region9: #{layer_estimator_forward.1} parent=5 // pred_check
        _
      $region10: #{layer_estimator_forward.1} parent=5 // pred_check_branch
        %431 = sbr.rel (%p428) target = $region12
      $region11: #{layer_estimator_forward.1} parent=5 // pred_region
        %s432 = ssub.s32 %s25, 1
        // Predicated region
        $region13: #{layer_estimator_forward.1} parent=11 // pred_check
          %p433 = pneg %p84
        $region14: #{layer_estimator_forward.1} parent=11 // pred_check_branch
          %435 = sbr.rel (%p433) target = $region16
        $region15: #{layer_estimator_forward.1} parent=11 // pred_region
          _
        $region16: #{layer_estimator_forward.1} parent=11 // pred_fallthru
          _
        // Predicated region
        $region17: #{layer_estimator_forward.1} parent=11 // pred_check
          %p436 = pneg %p105
        $region18: #{layer_estimator_forward.1} parent=11 // pred_check_branch
          %438 = sbr.rel (%p436) target = $region20
        $region19: #{layer_estimator_forward.1} parent=11 // pred_region
          _
        $region20: #{layer_estimator_forward.1} parent=11 // pred_fallthru
          _
        // Predicated region
        $region21: #{layer_estimator_forward.1} parent=11 // pred_check
          %p439 = pneg %p126
        $region22: #{layer_estimator_forward.1} parent=11 // pred_check_branch
          %441 = sbr.rel (%p439) target = $region24
        $region23: #{layer_estimator_forward.1} parent=11 // pred_region
          _
        $region24: #{layer_estimator_forward.1} parent=11 // pred_fallthru
          _
        // Predicated region
        $region25: #{layer_estimator_forward.1} parent=11 // pred_check
          %p442 = pneg %p152
        $region26: #{layer_estimator_forward.1} parent=11 // pred_check_branch
          %444 = sbr.rel (%p442) target = $region28
        $region27: #{layer_estimator_forward.1} parent=11 // pred_region
          %s445 = smul.u32 2, %s35
          %p446 = scmp.lt.s32.totalorder %s445, 1
          %s447 = scalar_select %p446, %s445, 1
          %s448 = smul.addr %s447, 96
          %s449 = smul.addr %s448, 4
          %s450 = scalar_lea.vmem %s4, %s449
          %s451 = smul.u32 2, %s35
        $region28: #{layer_estimator_forward.1} parent=11 // pred_fallthru
          _
        // Predicated region
        $region29: #{layer_estimator_forward.1} parent=11 // pred_check
          %p452 = pneg %p178
        $region30: #{layer_estimator_forward.1} parent=11 // pred_check_branch
          %454 = sbr.rel (%p452) target = $region32
        $region31: #{layer_estimator_forward.1} parent=11 // pred_region
          %s455 = smul.u32 2, %s35
          %p456 = scmp.lt.s32.totalorder %s455, 1
          %s457 = scalar_select %p456, %s455, 1
          %s458 = smul.addr %s457, 24
          %s459 = scalar_lea.vmem %s5, %s458
          %s460 = smul.u32 2, %s35
        $region32: #{layer_estimator_forward.1} parent=11 // pred_fallthru
          _
        // Predicated region
        $region33: #{layer_estimator_forward.1} parent=11 // pred_check
          %p461 = pneg %p204
        $region34: #{layer_estimator_forward.1} parent=11 // pred_check_branch
          %463 = sbr.rel (%p461) target = $region36
        $region35: #{layer_estimator_forward.1} parent=11 // pred_region
          %s464 = smul.u32 2, %s35
          %p465 = scmp.lt.s32.totalorder %s464, 1
          %s466 = scalar_select %p465, %s464, 1
          %s467 = smul.addr %s466, 8
          %s468 = smul.addr %s467, 4
          %s469 = scalar_lea.vmem %s6, %s468
          %s470 = smul.u32 2, %s35
        $region36: #{layer_estimator_forward.1} parent=11 // pred_fallthru
          _
        // Predicated region
        $region37: #{layer_estimator_forward.1} parent=11 // pred_check
          %p471 = pneg %p230
        $region38: #{layer_estimator_forward.1} parent=11 // pred_check_branch
          %473 = sbr.rel (%p471) target = $region40
        $region39: #{layer_estimator_forward.1} parent=11 // pred_region
          %s474 = smul.u32 2, %s35
          %p475 = scmp.lt.s32.totalorder %s474, 1
          %s476 = scalar_select %p475, %s474, 1
          %s477 = smul.addr %s476, 4
          %s478 = smul.addr %s477, 4
          %s479 = scalar_lea.vmem %s7, %s478
          %s480 = smul.u32 2, %s35
        $region40: #{layer_estimator_forward.1} parent=11 // pred_fallthru
          _
        // Predicated region
        $region41: #{layer_estimator_forward.1} parent=11 // pred_check
          %p481 = pneg %p256
        $region42: #{layer_estimator_forward.1} parent=11 // pred_check_branch
          %483 = sbr.rel (%p481) target = $region44
        $region43: #{layer_estimator_forward.1} parent=11 // pred_region
          %s484 = smul.u32 2, %s35
          %p485 = scmp.lt.s32.totalorder %s484, 1
          %s486 = scalar_select %p485, %s484, 1
          %s487 = smul.addr %s486, 16
          %s488 = smul.addr %s487, 4
          %s489 = scalar_lea.vmem %s8, %s488
          %s490 = smul.u32 2, %s35
        $region44: #{layer_estimator_forward.1} parent=11 // pred_fallthru
          _
        // Predicated region
        $region45: #{layer_estimator_forward.1} parent=11 // pred_check
          %p491 = pneg %p282
        $region46: #{layer_estimator_forward.1} parent=11 // pred_check_branch
          %493 = sbr.rel (%p491) target = $region48
        $region47: #{layer_estimator_forward.1} parent=11 // pred_region
          %s494 = smul.u32 2, %s35
          %p495 = scmp.lt.s32.totalorder %s494, 1
          %s496 = scalar_select %p495, %s494, 1
          %s497 = smul.addr %s496, 2
          %s498 = smul.addr %s497, 8
          %s499 = scalar_lea.vmem %s9, %s498
          %s500 = smul.u32 2, %s35
        $region48: #{layer_estimator_forward.1} parent=11 // pred_fallthru
          _
        // Predicated region
        $region49: #{layer_estimator_forward.1} parent=11 // pred_check
          %p501 = pneg %p303
        $region50: #{layer_estimator_forward.1} parent=11 // pred_check_branch
          %503 = sbr.rel (%p501) target = $region52
        $region51: #{layer_estimator_forward.1} parent=11 // pred_region
          _
        $region52: #{layer_estimator_forward.1} parent=11 // pred_fallthru
          _
        // Predicated region
        $region53: #{layer_estimator_forward.1} parent=11 // pred_check
          %p504 = pneg %p324
        $region54: #{layer_estimator_forward.1} parent=11 // pred_check_branch
          %506 = sbr.rel (%p504) target = $region56
        $region55: #{layer_estimator_forward.1} parent=11 // pred_region
          _
        $region56: #{layer_estimator_forward.1} parent=11 // pred_fallthru
          _
        // Predicated region
        $region57: #{layer_estimator_forward.1} parent=11 // pred_check
          %p507 = pneg %p345
        $region58: #{layer_estimator_forward.1} parent=11 // pred_check_branch
          %509 = sbr.rel (%p507) target = $region60
        $region59: #{layer_estimator_forward.1} parent=11 // pred_region
          _
        $region60: #{layer_estimator_forward.1} parent=11 // pred_fallthru
          _
        // Predicated region
        $region61: #{layer_estimator_forward.1} parent=11 // pred_check
          %p510 = pneg %p366
        $region62: #{layer_estimator_forward.1} parent=11 // pred_check_branch
          %512 = sbr.rel (%p510) target = $region64
        $region63: #{layer_estimator_forward.1} parent=11 // pred_region
          _
        $region64: #{layer_estimator_forward.1} parent=11 // pred_fallthru
          _
      $region12: #{layer_estimator_forward.1} parent=5 // pred_fallthru
        _
      %p513 = scmp.lt.s32.totalorder %s25, 2
      // Predicated region
      $region65: #{layer_estimator_forward.1} parent=5 // pred_check
        %p514 = pneg %p513
      $region66: #{layer_estimator_forward.1} parent=5 // pred_check_branch
        %516 = sbr.rel (%p514) target = $region68
      $region67: #{layer_estimator_forward.1} parent=5 // pred_region
        // Predicated region
        $region69: #{layer_estimator_forward.1} parent=67 // pred_check
          %p517 = pneg %p57
        $region70: #{layer_estimator_forward.1} parent=67 // pred_check_branch
          %519 = sbr.rel (%p517) target = $region72
        $region71: #{layer_estimator_forward.1} parent=67 // pred_region
          %p520 = scmp.lt.s32.totalorder %s32, 1
          %s521 = scalar_select %p520, %s32, 1
          %s522 = smul.addr %s521, 4
          %s523 = smul.addr %s522, 8
          %s524 = scalar_lea.vmem %s0, %s523
        $region72: #{layer_estimator_forward.1} parent=67 // pred_fallthru
          _
      $region68: #{layer_estimator_forward.1} parent=5 // pred_fallthru
        _
      %p525 = scmp.le.s32.totalorder 1, %s25
      %p526 = scmp.lt.s32.totalorder %s25, 3
      %p527 = pnand %p525, %p526
      %p528 = pneg %p527
      // Predicated region
      $region73: #{layer_estimator_forward.1} parent=5 // pred_check
        _
      $region74: #{layer_estimator_forward.1} parent=5 // pred_check_branch
        %530 = sbr.rel (%p527) target = $region76
      $region75: #{layer_estimator_forward.1} parent=5 // pred_region
        %s531 = ssub.s32 %s25, 1
        %p532 = scmp.lt.s32.totalorder %s34, 1
        %s533 = scalar_select %p532, %s34, 1
        %s534 = smul.addr %s533, 4
        %s535 = smul.addr %s534, 8
        %s536 = scalar_lea.vmem %s0, %s535
        %p537 = pneg %p63
        %p538 = pneg %p60
        %p539 = pneg %p84
        %p540 = pneg %p81
        %p541 = pneg %p105
        %p542 = pneg %p102
        %p543 = pneg %p126
        %p544 = pneg %p123
        %s545 = smul.u32 2, %s35
        %p546 = scmp.lt.s32.totalorder %s545, 1
        %s547 = scalar_select %p546, %s545, 1
        %s548 = smul.addr %s547, 96
        %s549 = smul.addr %s548, 4
        %s550 = scalar_lea.vmem %s4, %s549
        %p551 = pneg %p152
        %p552 = pneg %p149
        %s553 = smul.u32 2, %s35
        %p554 = scmp.lt.s32.totalorder %s553, 1
        %s555 = scalar_select %p554, %s553, 1
        %s556 = smul.addr %s555, 24
        %s557 = scalar_lea.vmem %s5, %s556
        %p558 = pneg %p178
        %p559 = pneg %p175
        %s560 = smul.u32 2, %s35
        %p561 = scmp.lt.s32.totalorder %s560, 1
        %s562 = scalar_select %p561, %s560, 1
        %s563 = smul.addr %s562, 8
        %s564 = smul.addr %s563, 4
        %s565 = scalar_lea.vmem %s6, %s564
        %p566 = pneg %p204
        %p567 = pneg %p201
        %s568 = smul.u32 2, %s35
        %p569 = scmp.lt.s32.totalorder %s568, 1
        %s570 = scalar_select %p569, %s568, 1
        %s571 = smul.addr %s570, 4
        %s572 = smul.addr %s571, 4
        %s573 = scalar_lea.vmem %s7, %s572
        %p574 = pneg %p230
        %p575 = pneg %p227
        %s576 = smul.u32 2, %s35
        %p577 = scmp.lt.s32.totalorder %s576, 1
        %s578 = scalar_select %p577, %s576, 1
        %s579 = smul.addr %s578, 16
        %s580 = smul.addr %s579, 4
        %s581 = scalar_lea.vmem %s8, %s580
        %p582 = pneg %p256
        %p583 = pneg %p253
        %s584 = smul.u32 2, %s35
        %p585 = scmp.lt.s32.totalorder %s584, 1
        %s586 = scalar_select %p585, %s584, 1
        %s587 = smul.addr %s586, 2
        %s588 = smul.addr %s587, 8
        %s589 = scalar_lea.vmem %s9, %s588
        %p590 = pneg %p282
        %p591 = pneg %p279
        %p592 = pneg %p303
        %p593 = pneg %p300
        %p594 = pneg %p324
        %p595 = pneg %p321
        %p596 = pneg %p345
        %p597 = pneg %p342
        %p598 = pneg %p366
        %p599 = pneg %p363
        %p600 = pneg %p392
        %p601 = pneg %p389
        %p602 = scmp.lt.s32.totalorder %s34, 1
        %s603 = scalar_select %p602, %s34, 1
        %s604 = smul.addr %s603, 3
        %s605 = smul.addr %s604, 8
        %s606 = scalar_lea.vmem %s14, %s605
        %p607 = pneg %p418
        %p608 = pneg %p415
        %s609 = sand.u32 %s405, 1
        %s610 = scalar_lea.sflag [#allocation4], %s609
        %s611 = sand.u32 %s405, 1
        %s612 = smul.addr %s611, 2
        %s613 = scalar_lea.vmem [#allocation3], %s612
        %p614 = scmp.lt.s32.totalorder %s34, 1
        %s615 = scalar_select %p614, %s34, 1
        %s616 = smul.addr %s615, 4
        %s617 = smul.addr %s616, 8
        %s618 = scalar_lea.vmem %s0, %s617
        %s619 = smul.u32 2, %s35
        %p620 = scmp.lt.s32.totalorder %s619, 1
        %s621 = scalar_select %p620, %s619, 1
        %s622 = smul.addr %s621, 96
        %s623 = smul.addr %s622, 4
        %s624 = scalar_lea.vmem %s4, %s623
        %s625 = smul.u32 2, %s35
        %s626 = smul.u32 2, %s35
        %p627 = scmp.lt.s32.totalorder %s626, 1
        %s628 = scalar_select %p627, %s626, 1
        %s629 = smul.addr %s628, 24
        %s630 = scalar_lea.vmem %s5, %s629
        %s631 = smul.u32 2, %s35
        %s632 = smul.u32 2, %s35
        %p633 = scmp.lt.s32.totalorder %s632, 1
        %s634 = scalar_select %p633, %s632, 1
        %s635 = smul.addr %s634, 8
        %s636 = smul.addr %s635, 4
        %s637 = scalar_lea.vmem %s6, %s636
        %s638 = smul.u32 2, %s35
        %s639 = smul.u32 2, %s35
        %p640 = scmp.lt.s32.totalorder %s639, 1
        %s641 = scalar_select %p640, %s639, 1
        %s642 = smul.addr %s641, 4
        %s643 = smul.addr %s642, 4
        %s644 = scalar_lea.vmem %s7, %s643
        %s645 = smul.u32 2, %s35
        %s646 = smul.u32 2, %s35
        %p647 = scmp.lt.s32.totalorder %s646, 1
        %s648 = scalar_select %p647, %s646, 1
        %s649 = smul.addr %s648, 16
        %s650 = smul.addr %s649, 4
        %s651 = scalar_lea.vmem %s8, %s650
        %s652 = smul.u32 2, %s35
        %s653 = smul.u32 2, %s35
        %p654 = scmp.lt.s32.totalorder %s653, 1
        %s655 = scalar_select %p654, %s653, 1
        %s656 = smul.addr %s655, 2
        %s657 = smul.addr %s656, 8
        %s658 = scalar_lea.vmem %s9, %s657
        %s659 = smul.u32 2, %s35
        %p660 = scmp.lt.s32.totalorder %s34, 1
        %s661 = scalar_select %p660, %s34, 1
        %s662 = smul.addr %s661, 3
        %s663 = smul.addr %s662, 8
        %s664 = scalar_lea.vmem %s14, %s663
        %p666 = scmp.eq.s32.totalorder %s35, 0
        // Predicated region
        $region77: #{layer_estimator_forward.1} parent=75 // pred_check
          %p667 = pneg %p666
        $region78: #{layer_estimator_forward.1} parent=75 // pred_check_branch
          %669 = sbr.rel (%p667) target = $region80
        $region79: #{layer_estimator_forward.1} parent=75 // pred_region
          %v670 = vld [vmem:[%s618] sm:$0xff]
          %v671 = vld [vmem:[%s618 + $0x8] sm:$0xff]
          %v672 = vld [vmem:[%s618 + $0x10] sm:$0xff]
          %v673 = vld [vmem:[%s618 + $0x18] sm:$0xff]
          %v674 = vld [vmem:[%s1] sm:$0xff]
          %v675 = vld [vmem:[%s1 + $0x8] sm:$0xff]
          %v676 = vld [vmem:[%s1 + $0x10] sm:$0xff]
          %v677 = vld [vmem:[%s1 + $0x18] sm:$0xff]
          %v678 = vadd.f32 %v670, %v674
          %v679 = vadd.f32 %v671, %v675
          %v680 = vadd.f32 %v672, %v676
          %v681 = vadd.f32 %v673, %v677
          %v682 = vld [vmem:[%s3] sm:$0x1]
          %v683 = vld [vmem:[%s3 + $0x1] sm:$0x1]
          %vm684 = vcmask 261120
          %v685 = vsel %vm684, %v678, 0.0
          %686 = vadd.xlane.f32.xlu0 %v685
          %v687 = vpop.xlane.xlu0 %686
          %v688 = vsel %vm684, %v679, 0.0
          %689 = vadd.xlane.f32.xlu0 %v688
          %v690 = vpop.xlane.xlu0 %689
          %v691 = vsel %vm684, %v680, 0.0
          %692 = vadd.xlane.f32.xlu0 %v691
          %v693 = vpop.xlane.xlu0 %692
          %v694 = vsel %vm684, %v681, 0.0
          %695 = vadd.xlane.f32.xlu0 %v694
          %v696 = vpop.xlane.xlu0 %695
          %v697 = vrcp.pop 32.0
          %v698 = vmul.f32 %v687, %v697
          %v699 = vmul.f32 %v690, %v697
          %v700 = vmul.f32 %v693, %v697
          %v701 = vmul.f32 %v696, %v697
          %v702 = vsub.f32 %v678, %v698
          %v703 = vsub.f32 %v679, %v699
          %v704 = vsub.f32 %v680, %v700
          %v705 = vsub.f32 %v681, %v701
          %v706 = vmul.f32 %v702, %v702
          %v707 = vmul.f32 %v703, %v703
          %v708 = vmul.f32 %v704, %v704
          %v709 = vmul.f32 %v705, %v705
          %v710 = vsel %vm684, %v706, 0.0
          %711 = vadd.xlane.f32.xlu0 %v710
          %v712 = vpop.xlane.xlu0 %711
          %v713 = vsel %vm684, %v707, 0.0
          %714 = vadd.xlane.f32.xlu0 %v713
          %v715 = vpop.xlane.xlu0 %714
          %v716 = vsel %vm684, %v708, 0.0
          %717 = vadd.xlane.f32.xlu0 %v716
          %v718 = vpop.xlane.xlu0 %717
          %v719 = vsel %vm684, %v709, 0.0
          %720 = vadd.xlane.f32.xlu0 %v719
          %v721 = vpop.xlane.xlu0 %720
          %v722 = vmul.f32 %v712, %v697
          %v723 = vmul.f32 %v715, %v697
          %v724 = vmul.f32 %v718, %v697
          %v725 = vmul.f32 %v721, %v697
          %v726 = vadd.f32 %v722, 1e-05
          %v727 = vadd.f32 %v723, 1e-05
          %v728 = vadd.f32 %v724, 1e-05
          %v729 = vadd.f32 %v725, 1e-05
          %v730 = vrsqrt.pop %v726
          %v731 = vrsqrt.pop %v727
          %v732 = vrsqrt.pop %v728
          %v733 = vrsqrt.pop %v729
          %v734 = vmul.f32 %v702, %v730
          %v735 = vmul.f32 %v703, %v731
          %v736 = vmul.f32 %v704, %v732
          %v737 = vmul.f32 %v705, %v733
          %v738 = vlaneseq
          %v739 = vshrl.u32 %v738, 7
          %v740 = vsub.s32 0, %v739
          %v741 = vrot.slane %v682, %v740
          %v742 = vmul.f32 %v734, %v741
          %v743 = vmul.f32 %v735, %v741
          %v744 = vmul.f32 %v736, %v741
          %v745 = vmul.f32 %v737, %v741
          %v746 = vlaneseq
          %v747 = vshrl.u32 %v746, 7
          %v748 = vsub.s32 0, %v747
          %v749 = vrot.slane %v683, %v748
          %v750 = vadd.f32 %v742, %v749
          %v751 = vadd.f32 %v743, %v749
          %v752 = vadd.f32 %v744, %v749
          %v753 = vadd.f32 %v745, %v749
          %v754 = vpack.c.bf16 %v751, %v750
          %v755 = vpack.c.bf16 %v753, %v752
          %756 = vst.msk [vmem:[#allocation2] sm:$0xff] %vm684, %v754
          %757 = vst.msk [vmem:[#allocation2 + $0x8] sm:$0xff] %vm684, %v755
          %v758 = vld [vmem:[%s2] sm:$0xff]
          %v759 = vld [vmem:[%s2 + $0x8] sm:$0xff]
          %v760 = vld [vmem:[%s2 + $0x10] sm:$0xff]
          %761 = vst.msk [vmem:[%s664] sm:$0xff] %vm684, %v758
          %762 = vst.msk [vmem:[%s664 + $0x8] sm:$0xff] %vm684, %v759
          %763 = vst.msk [vmem:[%s664 + $0x10] sm:$0xff] %vm684, %v760
        $region80: #{layer_estimator_forward.1} parent=75 // pred_fallthru
          _
        %v764 = vld [vmem:[%s664] sm:$0xff]
        %v765 = vld [vmem:[%s664 + $0x8] sm:$0xff]
        %v766 = vld [vmem:[%s664 + $0x10] sm:$0xff]
        %v767 = vld [vmem:[#allocation2] sm:$0xff]
        %v768 = vld [vmem:[#allocation2 + $0x8] sm:$0xff]
        %v769 = vld [vmem:[%s658] sm:$0xff]
        %v770 = vld [vmem:[%s658 + $0x8] sm:$0x3]
        %vm771 = vcmask 261120
        %v772 = vsel %vm771, %v764, 0.0
        %773 = vadd.xlane.f32.xlu0 %v772
        %v774 = vpop.xlane.xlu0 %773
        %v775 = vsel %vm771, %v765, 0.0
        %776 = vadd.xlane.f32.xlu0 %v775
        %v777 = vpop.xlane.xlu0 %776
        %v778 = vsel %vm771, %v766, 0.0
        %779 = vadd.xlane.f32.xlu0 %v778
        %v780 = vpop.xlane.xlu0 %779
        %v781 = vrcp.pop 32.0
        %v782 = vmul.f32 %v774, %v781
        %v783 = vmul.f32 %v777, %v781
        %v784 = vmul.f32 %v780, %v781
        %v785 = vsub.f32 %v764, %v782
        %v786 = vsub.f32 %v765, %v783
        %v787 = vsub.f32 %v766, %v784
        %v788 = vmul.f32 %v785, %v785
        %v789 = vmul.f32 %v786, %v786
        %v790 = vmul.f32 %v787, %v787
        %v791 = vsel %vm771, %v788, 0.0
        %792 = vadd.xlane.f32.xlu0 %v791
        %v793 = vpop.xlane.xlu0 %792
        %v794 = vsel %vm771, %v789, 0.0
        %795 = vadd.xlane.f32.xlu0 %v794
        %v796 = vpop.xlane.xlu0 %795
        %v797 = vsel %vm771, %v790, 0.0
        %798 = vadd.xlane.f32.xlu0 %v797
        %v799 = vpop.xlane.xlu0 %798
        %v800 = vmul.f32 %v793, %v781
        %v801 = vmul.f32 %v796, %v781
        %v802 = vmul.f32 %v799, %v781
        %v803 = vadd.f32 %v800, 1e-05
        %v804 = vadd.f32 %v801, 1e-05
        %v805 = vadd.f32 %v802, 1e-05
        %v806 = vrsqrt.pop %v803
        %v807 = vrsqrt.pop %v804
        %v808 = vrsqrt.pop %v805
        %v809 = vmul.f32 %v785, %v806
        %v810 = vmul.f32 %v786, %v807
        %v811 = vmul.f32 %v787, %v808
        %v812 = vlaneseq
        %v813 = vshrl.u32 %v812, 7
        %v814 = vsub.s32 0, %v813
        %v815 = vrot.slane %v769, %v814
        %v816 = vmul.f32 %v809, %v815
        %v817 = vmul.f32 %v810, %v815
        %v818 = vmul.f32 %v811, %v815
        %v819 = vlaneseq
        %v820 = vshrl.u32 %v819, 7
        %v821 = vsub.s32 3, %v820
        %v822 = vrot.slane %v769, %v821
        %v823 = vadd.f32 %v816, %v822
        %v824 = vadd.f32 %v817, %v822
        %v825 = vadd.f32 %v818, %v822
        %v826 = vpack.c.bf16 %v824, %v823
        %v827 = vpack.c.bf16 %v825, %v825
        %v828 = vld [vmem:[%s624] sm:$0xf]
        %v829 = vld [vmem:[%s624 + $0x4] sm:$0xf]
        %v830 = vld [vmem:[%s624 + $0x8] sm:$0xf]
        %v831 = vld [vmem:[%s624 + $0xc] sm:$0xf]
        %s832 = scalar_lea.vmem %s624, 64
        %v833 = vld [vmem:[%s832] sm:$0xf]
        %v834 = vld [vmem:[%s832 + $0x4] sm:$0xf]
        %v835 = vld [vmem:[%s832 + $0x8] sm:$0xf]
        %v836 = vld [vmem:[%s832 + $0xc] sm:$0xf]
        %s837 = scalar_lea.vmem %s624, 128
        %v838 = vld [vmem:[%s837] sm:$0xf]
        %v839 = vld [vmem:[%s837 + $0x4] sm:$0xf]
        %v840 = vld [vmem:[%s837 + $0x8] sm:$0xf]
        %v841 = vld [vmem:[%s837 + $0xc] sm:$0xf]
        %v842 = vld [vmem:[%s630] sm:$0x1]
        %v844 = vlaneseq
        %v845 = vshrl.u32 %v844, 7
        %v846 = vsub.s32 0, %v845
        %v847 = vrot.slane %v842, %v846
        %v853 = vunpack.c.l.b16 %v828
        %v854 = vunpack.c.l.b16 %v829
        %v855 = vunpack.c.l.b16 %v830
        %v856 = vunpack.c.l.b16 %v831
        %v857 = vpack.c.b16 %v854, %v853
        %v858 = vpack.c.b16 %v856, %v855
        %v862 = vsel %vm771, %v826, 0
        %v865 = vsel %vm771, %v827, 0
        %867 = vmatprep.subr.bf16.mxu0 0
        %868 = vmatpush1.bf16.msra.mxu0 %v857
        %869 = vmatprep.subr.bf16.mxu0 0
        %870 = vmatpush1.bf16.msra.mxu0 %v858
        %871 = vmatprep.subr.bf16.mxu0 0
        %872 = vmatpush1.bf16.msra.mxu0 0
        %873 = vmatprep.subr.bf16.mxu0 0
        %874 = vmatpush1.bf16.msra.mxu0 0
        %875 = vmatprep.subr.bf16.mxu0 0
        %876 = vmatpush1.bf16.msra.mxu0 0
        %877 = vmatprep.subr.bf16.mxu0 0
        %878 = vmatpush1.bf16.msra.mxu0 0
        %879 = vmatprep.subr.bf16.mxu0 0
        %880 = vmatpush1.bf16.msra.mxu0 0
        %881 = vmatprep.subr.bf16.mxu0 0
        %882 = vmatpush1.bf16.msra.mxu0 0
        %883 = vmatprep.subr.bf16.mxu0 0
        %884 = vmatpush1.bf16.msra.mxu0 0
        %885 = vmatprep.subr.bf16.mxu0 0
        %886 = vmatpush1.bf16.msra.mxu0 0
        %887 = vmatprep.subr.bf16.mxu0 0
        %888 = vmatpush1.bf16.msra.mxu0 0
        %889 = vmatprep.subr.bf16.mxu0 0
        %890 = vmatpush1.bf16.msra.mxu0 0
        %891 = vmatprep.subr.bf16.mxu0 0
        %892 = vmatpush1.bf16.msra.mxu0 0
        %893 = vmatprep.subr.bf16.mxu0 0
        %894 = vmatpush1.bf16.msra.mxu0 0
        %895 = vmatprep.subr.bf16.mxu0 0
        %896 = vmatpush1.bf16.msra.mxu0 0
        %897 = vmatprep.subr.bf16.mxu0 0
        %898 = vmatpush1.bf16.msra.mxu0 0
        %899 = vmatprep.mubr.bf16.mxu0 0
        %900 = vmatmul.mubr.bf16.gmra.mrb[0].mxu0 %v862
        %v901 = vpop.f32.mrb[0].mxu0
        %v902 = vadd.f32 %v847, %v901
        %v903 = vpop.f32.mrb[0].mxu0
        %v904 = vpop.f32.mrb[0].mxu0
        %v905 = vadd.f32 %v847, %v904
        %v906 = vpop.f32.mrb[0].mxu0
        %907 = vmatprep.mubr.bf16.mxu0 0
        %908 = vmatmul.mubr.bf16.gmra.mrb[0].mxu0 %v865
        %v909 = vpop.f32.mrb[0].mxu0
        %v910 = vadd.f32 %v847, %v909
        %v911 = vpop.f32.mrb[0].mxu0
        %v912 = vpop.f32.mrb[0].mxu0
        %v913 = vpop.f32.mrb[0].mxu0
        %914 = vdwg.mxu0
        %s915 = scalar_lea.vmem %s630, 4
        %v916 = vld [vmem:[%s915] sm:$0x1]
        %v918 = vlaneseq
        %v919 = vshrl.u32 %v918, 7
        %v920 = vsub.s32 0, %v919
        %v921 = vrot.slane %v916, %v920
        %v927 = vunpack.c.l.b16 %v833
        %v928 = vunpack.c.l.b16 %v834
        %v929 = vunpack.c.l.b16 %v835
        %v930 = vunpack.c.l.b16 %v836
        %v931 = vpack.c.b16 %v928, %v927
        %v932 = vpack.c.b16 %v930, %v929
        %935 = vmatprep.subr.bf16.mxu0 0
        %936 = vmatpush1.bf16.msra.mxu0 %v931
        %937 = vmatprep.subr.bf16.mxu0 0
        %938 = vmatpush1.bf16.msra.mxu0 %v932
        %939 = vmatprep.subr.bf16.mxu0 0
        %940 = vmatpush1.bf16.msra.mxu0 0
        %941 = vmatprep.subr.bf16.mxu0 0
        %942 = vmatpush1.bf16.msra.mxu0 0
        %943 = vmatprep.subr.bf16.mxu0 0
        %944 = vmatpush1.bf16.msra.mxu0 0
        %945 = vmatprep.subr.bf16.mxu0 0
        %946 = vmatpush1.bf16.msra.mxu0 0
        %947 = vmatprep.subr.bf16.mxu0 0
        %948 = vmatpush1.bf16.msra.mxu0 0
        %949 = vmatprep.subr.bf16.mxu0 0
        %950 = vmatpush1.bf16.msra.mxu0 0
        %951 = vmatprep.subr.bf16.mxu0 0
        %952 = vmatpush1.bf16.msra.mxu0 0
        %953 = vmatprep.subr.bf16.mxu0 0
        %954 = vmatpush1.bf16.msra.mxu0 0
        %955 = vmatprep.subr.bf16.mxu0 0
        %956 = vmatpush1.bf16.msra.mxu0 0
        %957 = vmatprep.subr.bf16.mxu0 0
        %958 = vmatpush1.bf16.msra.mxu0 0
        %959 = vmatprep.subr.bf16.mxu0 0
        %960 = vmatpush1.bf16.msra.mxu0 0
        %961 = vmatprep.subr.bf16.mxu0 0
        %962 = vmatpush1.bf16.msra.mxu0 0
        %963 = vmatprep.subr.bf16.mxu0 0
        %964 = vmatpush1.bf16.msra.mxu0 0
        %965 = vmatprep.subr.bf16.mxu0 0
        %966 = vmatpush1.bf16.msra.mxu0 0
        %967 = vmatprep.mubr.bf16.mxu0 0
        %968 = vmatmul.mubr.bf16.gmra.mrb[0].mxu0 %v862
        %v969 = vpop.f32.mrb[0].mxu0
        %v970 = vadd.f32 %v921, %v969
        %v971 = vpop.f32.mrb[0].mxu0
        %v972 = vpop.f32.mrb[0].mxu0
        %v973 = vadd.f32 %v921, %v972
        %v974 = vpop.f32.mrb[0].mxu0
        %975 = vmatprep.mubr.bf16.mxu0 0
        %976 = vmatmul.mubr.bf16.gmra.mrb[0].mxu0 %v865
        %v977 = vpop.f32.mrb[0].mxu0
        %v978 = vadd.f32 %v921, %v977
        %v979 = vpop.f32.mrb[0].mxu0
        %v980 = vpop.f32.mrb[0].mxu0
        %v981 = vpop.f32.mrb[0].mxu0
        %982 = vdwg.mxu0
        %s983 = scalar_lea.vmem %s630, 8
        %v984 = vld [vmem:[%s983] sm:$0x1]
        %v986 = vlaneseq
        %v987 = vshrl.u32 %v986, 7
        %v988 = vsub.s32 0, %v987
        %v989 = vrot.slane %v984, %v988
        %v995 = vunpack.c.l.b16 %v838
        %v996 = vunpack.c.l.b16 %v839
        %v997 = vunpack.c.l.b16 %v840
        %v998 = vunpack.c.l.b16 %v841
        %v999 = vpack.c.b16 %v996, %v995
        %v1000 = vpack.c.b16 %v998, %v997
        %1003 = vmatprep.subr.bf16.mxu0 0
        %1004 = vmatpush1.bf16.msra.mxu0 %v999
        %1005 = vmatprep.subr.bf16.mxu0 0
        %1006 = vmatpush1.bf16.msra.mxu0 %v1000
        %1007 = vmatprep.subr.bf16.mxu0 0
        %1008 = vmatpush1.bf16.msra.mxu0 0
        %1009 = vmatprep.subr.bf16.mxu0 0
        %1010 = vmatpush1.bf16.msra.mxu0 0
        %1011 = vmatprep.subr.bf16.mxu0 0
        %1012 = vmatpush1.bf16.msra.mxu0 0
        %1013 = vmatprep.subr.bf16.mxu0 0
        %1014 = vmatpush1.bf16.msra.mxu0 0
        %1015 = vmatprep.subr.bf16.mxu0 0
        %1016 = vmatpush1.bf16.msra.mxu0 0
        %1017 = vmatprep.subr.bf16.mxu0 0
        %1018 = vmatpush1.bf16.msra.mxu0 0
        %1019 = vmatprep.subr.bf16.mxu0 0
        %1020 = vmatpush1.bf16.msra.mxu0 0
        %1021 = vmatprep.subr.bf16.mxu0 0
        %1022 = vmatpush1.bf16.msra.mxu0 0
        %1023 = vmatprep.subr.bf16.mxu0 0
        %1024 = vmatpush1.bf16.msra.mxu0 0
        %1025 = vmatprep.subr.bf16.mxu0 0
        %1026 = vmatpush1.bf16.msra.mxu0 0
        %1027 = vmatprep.subr.bf16.mxu0 0
        %1028 = vmatpush1.bf16.msra.mxu0 0
        %1029 = vmatprep.subr.bf16.mxu0 0
        %1030 = vmatpush1.bf16.msra.mxu0 0
        %1031 = vmatprep.subr.bf16.mxu0 0
        %1032 = vmatpush1.bf16.msra.mxu0 0
        %1033 = vmatprep.subr.bf16.mxu0 0
        %1034 = vmatpush1.bf16.msra.mxu0 0
        %1035 = vmatprep.mubr.bf16.mxu0 0
        %1036 = vmatmul.mubr.bf16.gmra.mrb[0].mxu0 %v862
        %v1037 = vpop.f32.mrb[0].mxu0
        %v1038 = vadd.f32 %v989, %v1037
        %v1039 = vpop.f32.mrb[0].mxu0
        %v1040 = vpop.f32.mrb[0].mxu0
        %v1041 = vadd.f32 %v989, %v1040
        %v1042 = vpop.f32.mrb[0].mxu0
        %1043 = vmatprep.mubr.bf16.mxu0 0
        %1044 = vmatmul.mubr.bf16.gmra.mrb[0].mxu0 %v865
        %v1045 = vpop.f32.mrb[0].mxu0
        %v1046 = vadd.f32 %v989, %v1045
        %v1047 = vpop.f32.mrb[0].mxu0
        %v1048 = vpop.f32.mrb[0].mxu0
        %v1049 = vpop.f32.mrb[0].mxu0
        %1050 = vdwg.mxu0
        %v1051 = vpack.c.bf16 %v905, %v902
        %v1052 = vpack.c.bf16 %v910, %v910
        %v1053 = vpack.c.bf16 %v973, %v970
        %v1054 = vpack.c.bf16 %v978, %v978
        %vm1055 = vcmask 64512
        %v1057 = vsel %vm1055, %v1051, 0
        %v1060 = vsel %vm1055, %v1052, 0
        %v1063 = vsel %vm1055, %v1053, 0
        %v1066 = vsel %vm1055, %v1054, 0
        %1068 = vmatprep.subr.bf16.mxu0 0
        %1069 = vmatpush1.bf16.xpose.msra.mxu0 %v1063
        %1070 = vmatprep.subr.bf16.mxu0 0
        %1071 = vmatpush1.bf16.xpose.msra.mxu0 %v1066
        %1072 = vmatprep.subr.bf16.mxu0 0
        %1073 = vmatpush1.bf16.xpose.msra.mxu0 0
        %1074 = vmatprep.subr.bf16.mxu0 0
        %1075 = vmatpush1.bf16.xpose.msra.mxu0 0
        %1076 = vmatprep.subr.bf16.mxu0 0
        %1077 = vmatpush1.bf16.xpose.msra.mxu0 0
        %1078 = vmatprep.subr.bf16.mxu0 0
        %1079 = vmatpush1.bf16.xpose.msra.mxu0 0
        %1080 = vmatprep.subr.bf16.mxu0 0
        %1081 = vmatpush1.bf16.xpose.msra.mxu0 0
        %1082 = vmatprep.subr.bf16.mxu0 0
        %1083 = vmatpush1.bf16.xpose.msra.mxu0 0
        %1084 = vmatprep.subr.bf16.mxu0 0
        %1085 = vmatpush1.bf16.xpose.msra.mxu0 0
        %1086 = vmatprep.subr.bf16.mxu0 0
        %1087 = vmatpush1.bf16.xpose.msra.mxu0 0
        %1088 = vmatprep.subr.bf16.mxu0 0
        %1089 = vmatpush1.bf16.xpose.msra.mxu0 0
        %1090 = vmatprep.subr.bf16.mxu0 0
        %1091 = vmatpush1.bf16.xpose.msra.mxu0 0
        %1092 = vmatprep.subr.bf16.mxu0 0
        %1093 = vmatpush1.bf16.xpose.msra.mxu0 0
        %1094 = vmatprep.subr.bf16.mxu0 0
        %1095 = vmatpush1.bf16.xpose.msra.mxu0 0
        %1096 = vmatprep.subr.bf16.mxu0 0
        %1097 = vmatpush1.bf16.xpose.msra.mxu0 0
        %1098 = vmatprep.subr.bf16.mxu0 0
        %1099 = vmatpush1.bf16.xpose.msra.mxu0 0
        %1100 = vmatprep.mubr.bf16.mxu0 0
        %1101 = vmatmul.mubr.bf16.gmra.mrb[0].mxu0 %v1057
        %v1102 = vpop.f32.mrb[0].mxu0
        %v1103 = vadd.f32 0.0, %v1102
        %v1104 = vpop.f32.mrb[0].mxu0
        %v1105 = vpop.f32.mrb[0].mxu0
        %v1106 = vadd.f32 0.0, %v1105
        %v1107 = vpop.f32.mrb[0].mxu0
        %1108 = vmatprep.mubr.bf16.mxu0 0
        %1109 = vmatmul.mubr.bf16.gmra.mrb[0].mxu0 %v1060
        %v1110 = vpop.f32.mrb[0].mxu0
        %v1111 = vadd.f32 0.0, %v1110
        %v1112 = vpop.f32.mrb[0].mxu0
        %v1113 = vpop.f32.mrb[0].mxu0
        %v1114 = vpop.f32.mrb[0].mxu0
        %1115 = vdwg.mxu0
        %vm1116 = vcmask 195584
        %v1117 = vsel %vm1116, %v1103, -inf
        %1118 = vmax.xlane.f32.xlu0 %v1117
        %v1119 = vpop.xlane.xlu0 %1118
        %v1120 = vsel %vm1116, %v1106, -inf
        %1121 = vmax.xlane.f32.xlu0 %v1120
        %v1122 = vpop.xlane.xlu0 %1121
        %v1123 = vsel %vm1116, %v1111, -inf
        %1124 = vmax.xlane.f32.xlu0 %v1123
        %v1125 = vpop.xlane.xlu0 %1124
        %v1126 = vsub.f32 %v1103, %v1119
        %v1127 = vsub.f32 %v1106, %v1122
        %v1128 = vsub.f32 %v1111, %v1125
        %v1129 = vmul.f32 %v1126, 1.442695
        %v1130 = vpow.pop %v1129
        %v1131 = vmul.f32 %v1127, 1.442695
        %v1132 = vpow.pop %v1131
        %v1133 = vmul.f32 %v1128, 1.442695
        %v1134 = vpow.pop %v1133
        %v1135 = vsel %vm1116, %v1130, 0.0
        %1136 = vadd.xlane.f32.xlu0 %v1135
        %v1137 = vpop.xlane.xlu0 %1136
        %v1138 = vsel %vm1116, %v1132, 0.0
        %1139 = vadd.xlane.f32.xlu0 %v1138
        %v1140 = vpop.xlane.xlu0 %1139
        %v1141 = vsel %vm1116, %v1134, 0.0
        %1142 = vadd.xlane.f32.xlu0 %v1141
        %v1143 = vpop.xlane.xlu0 %1142
        %v1144 = vrcp.pop %v1137
        %v1145 = vrcp.pop %v1140
        %v1146 = vrcp.pop %v1143
        %v1147 = vmul.f32 %v1130, %v1144
        %v1148 = vmul.f32 %v1132, %v1145
        %v1149 = vmul.f32 %v1134, %v1146
        %v1150 = vpack.c.bf16 %v1148, %v1147
        %v1151 = vpack.c.bf16 %v1149, %v1149
        %v1152 = vpack.c.bf16 %v1041, %v1038
        %v1153 = vpack.c.bf16 %v1046, %v1046
        %v1155 = vsel %vm1116, %v1150, 0
        %v1158 = vsel %vm1116, %v1151, 0
        %vm1160 = vcmask 1043456
        %v1162 = vsel %vm1160, %v1153, 0
        %1164 = vmatprep.subr.bf16.mxu0 0
        %1165 = vmatpush1.bf16.msra.mxu0 %v1152
        %1166 = vmatprep.subr.bf16.mxu0 0
        %1167 = vmatpush1.bf16.msra.mxu0 %v1162
        %1168 = vmatprep.subr.bf16.mxu0 0
        %1169 = vmatpush1.bf16.msra.mxu0 0
        %1170 = vmatprep.subr.bf16.mxu0 0
        %1171 = vmatpush1.bf16.msra.mxu0 0
        %1172 = vmatprep.subr.bf16.mxu0 0
        %1173 = vmatpush1.bf16.msra.mxu0 0
        %1174 = vmatprep.subr.bf16.mxu0 0
        %1175 = vmatpush1.bf16.msra.mxu0 0
        %1176 = vmatprep.subr.bf16.mxu0 0
        %1177 = vmatpush1.bf16.msra.mxu0 0
        %1178 = vmatprep.subr.bf16.mxu0 0
        %1179 = vmatpush1.bf16.msra.mxu0 0
        %1180 = vmatprep.subr.bf16.mxu0 0
        %1181 = vmatpush1.bf16.msra.mxu0 0
        %1182 = vmatprep.subr.bf16.mxu0 0
        %1183 = vmatpush1.bf16.msra.mxu0 0
        %1184 = vmatprep.subr.bf16.mxu0 0
        %1185 = vmatpush1.bf16.msra.mxu0 0
        %1186 = vmatprep.subr.bf16.mxu0 0
        %1187 = vmatpush1.bf16.msra.mxu0 0
        %1188 = vmatprep.subr.bf16.mxu0 0
        %1189 = vmatpush1.bf16.msra.mxu0 0
        %1190 = vmatprep.subr.bf16.mxu0 0
        %1191 = vmatpush1.bf16.msra.mxu0 0
        %1192 = vmatprep.subr.bf16.mxu0 0
        %1193 = vmatpush1.bf16.msra.mxu0 0
        %1194 = vmatprep.subr.bf16.mxu0 0
        %1195 = vmatpush1.bf16.msra.mxu0 0
        %1196 = vmatprep.mubr.bf16.mxu0 0
        %1197 = vmatmul.mubr.bf16.gmra.mrb[0].mxu0 %v1155
        %v1198 = vpop.f32.mrb[0].mxu0
        %v1199 = vadd.f32 0.0, %v1198
        %v1200 = vpop.f32.mrb[0].mxu0
        %v1201 = vpop.f32.mrb[0].mxu0
        %v1202 = vadd.f32 0.0, %v1201
        %v1203 = vpop.f32.mrb[0].mxu0
        %1204 = vmatprep.mubr.bf16.mxu0 0
        %1205 = vmatmul.mubr.bf16.gmra.mrb[0].mxu0 %v1158
        %v1206 = vpop.f32.mrb[0].mxu0
        %v1207 = vadd.f32 0.0, %v1206
        %v1208 = vpop.f32.mrb[0].mxu0
        %v1209 = vpop.f32.mrb[0].mxu0
        %v1210 = vpop.f32.mrb[0].mxu0
        %1211 = vdwg.mxu0
        %s1212 = scalar_lea.vmem %s624, 16
        %v1213 = vld [vmem:[%s1212] sm:$0xf]
        %v1214 = vld [vmem:[%s1212 + $0x4] sm:$0xf]
        %v1215 = vld [vmem:[%s1212 + $0x8] sm:$0xf]
        %v1216 = vld [vmem:[%s1212 + $0xc] sm:$0xf]
        %s1217 = scalar_lea.vmem %s624, 80
        %v1218 = vld [vmem:[%s1217] sm:$0xf]
        %v1219 = vld [vmem:[%s1217 + $0x4] sm:$0xf]
        %v1220 = vld [vmem:[%s1217 + $0x8] sm:$0xf]
        %v1221 = vld [vmem:[%s1217 + $0xc] sm:$0xf]
        %s1222 = scalar_lea.vmem %s624, 144
        %v1223 = vld [vmem:[%s1222] sm:$0xf]
        %v1224 = vld [vmem:[%s1222 + $0x4] sm:$0xf]
        %v1225 = vld [vmem:[%s1222 + $0x8] sm:$0xf]
        %v1226 = vld [vmem:[%s1222 + $0xc] sm:$0xf]
        %s1227 = scalar_lea.vmem %s630, 1
        %v1228 = vld [vmem:[%s1227] sm:$0x1]
        %v1230 = vlaneseq
        %v1231 = vshrl.u32 %v1230, 7
        %v1232 = vsub.s32 0, %v1231
        %v1233 = vrot.slane %v1228, %v1232
        %v1239 = vunpack.c.l.b16 %v1213
        %v1240 = vunpack.c.l.b16 %v1214
        %v1241 = vunpack.c.l.b16 %v1215
        %v1242 = vunpack.c.l.b16 %v1216
        %v1243 = vpack.c.b16 %v1240, %v1239
        %v1244 = vpack.c.b16 %v1242, %v1241
        %1247 = vmatprep.subr.bf16.mxu0 0
        %1248 = vmatpush1.bf16.msra.mxu0 %v1243
        %1249 = vmatprep.subr.bf16.mxu0 0
        %1250 = vmatpush1.bf16.msra.mxu0 %v1244
        %1251 = vmatprep.subr.bf16.mxu0 0
        %1252 = vmatpush1.bf16.msra.mxu0 0
        %1253 = vmatprep.subr.bf16.mxu0 0
        %1254 = vmatpush1.bf16.msra.mxu0 0
        %1255 = vmatprep.subr.bf16.mxu0 0
        %1256 = vmatpush1.bf16.msra.mxu0 0
        %1257 = vmatprep.subr.bf16.mxu0 0
        %1258 = vmatpush1.bf16.msra.mxu0 0
        %1259 = vmatprep.subr.bf16.mxu0 0
        %1260 = vmatpush1.bf16.msra.mxu0 0
        %1261 = vmatprep.subr.bf16.mxu0 0
        %1262 = vmatpush1.bf16.msra.mxu0 0
        %1263 = vmatprep.subr.bf16.mxu0 0
        %1264 = vmatpush1.bf16.msra.mxu0 0
        %1265 = vmatprep.subr.bf16.mxu0 0
        %1266 = vmatpush1.bf16.msra.mxu0 0
        %1267 = vmatprep.subr.bf16.mxu0 0
        %1268 = vmatpush1.bf16.msra.mxu0 0
        %1269 = vmatprep.subr.bf16.mxu0 0
        %1270 = vmatpush1.bf16.msra.mxu0 0
        %1271 = vmatprep.subr.bf16.mxu0 0
        %1272 = vmatpush1.bf16.msra.mxu0 0
        %1273 = vmatprep.subr.bf16.mxu0 0
        %1274 = vmatpush1.bf16.msra.mxu0 0
        %1275 = vmatprep.subr.bf16.mxu0 0
        %1276 = vmatpush1.bf16.msra.mxu0 0
        %1277 = vmatprep.subr.bf16.mxu0 0
        %1278 = vmatpush1.bf16.msra.mxu0 0
        %1279 = vmatprep.mubr.bf16.mxu0 0
        %1280 = vmatmul.mubr.bf16.gmra.mrb[0].mxu0 %v862
        %v1281 = vpop.f32.mrb[0].mxu0
        %v1282 = vadd.f32 %v1233, %v1281
        %v1283 = vpop.f32.mrb[0].mxu0
        %v1284 = vpop.f32.mrb[0].mxu0
        %v1285 = vadd.f32 %v1233, %v1284
        %v1286 = vpop.f32.mrb[0].mxu0
        %1287 = vmatprep.mubr.bf16.mxu0 0
        %1288 = vmatmul.mubr.bf16.gmra.mrb[0].mxu0 %v865
        %v1289 = vpop.f32.mrb[0].mxu0
        %v1290 = vadd.f32 %v1233, %v1289
        %v1291 = vpop.f32.mrb[0].mxu0
        %v1292 = vpop.f32.mrb[0].mxu0
        %v1293 = vpop.f32.mrb[0].mxu0
        %1294 = vdwg.mxu0
        %s1295 = scalar_lea.vmem %s630, 5
        %v1296 = vld [vmem:[%s1295] sm:$0x1]
        %v1298 = vlaneseq
        %v1299 = vshrl.u32 %v1298, 7
        %v1300 = vsub.s32 0, %v1299
        %v1301 = vrot.slane %v1296, %v1300
        %v1307 = vunpack.c.l.b16 %v1218
        %v1308 = vunpack.c.l.b16 %v1219
        %v1309 = vunpack.c.l.b16 %v1220
        %v1310 = vunpack.c.l.b16 %v1221
        %v1311 = vpack.c.b16 %v1308, %v1307
        %v1312 = vpack.c.b16 %v1310, %v1309
        %1315 = vmatprep.subr.bf16.mxu0 0
        %1316 = vmatpush1.bf16.msra.mxu0 %v1311
        %1317 = vmatprep.subr.bf16.mxu0 0
        %1318 = vmatpush1.bf16.msra.mxu0 %v1312
        %1319 = vmatprep.subr.bf16.mxu0 0
        %1320 = vmatpush1.bf16.msra.mxu0 0
        %1321 = vmatprep.subr.bf16.mxu0 0
        %1322 = vmatpush1.bf16.msra.mxu0 0
        %1323 = vmatprep.subr.bf16.mxu0 0
        %1324 = vmatpush1.bf16.msra.mxu0 0
        %1325 = vmatprep.subr.bf16.mxu0 0
        %1326 = vmatpush1.bf16.msra.mxu0 0
        %1327 = vmatprep.subr.bf16.mxu0 0
        %1328 = vmatpush1.bf16.msra.mxu0 0
        %1329 = vmatprep.subr.bf16.mxu0 0
        %1330 = vmatpush1.bf16.msra.mxu0 0
        %1331 = vmatprep.subr.bf16.mxu0 0
        %1332 = vmatpush1.bf16.msra.mxu0 0
        %1333 = vmatprep.subr.bf16.mxu0 0
        %1334 = vmatpush1.bf16.msra.mxu0 0
        %1335 = vmatprep.subr.bf16.mxu0 0
        %1336 = vmatpush1.bf16.msra.mxu0 0
        %1337 = vmatprep.subr.bf16.mxu0 0
        %1338 = vmatpush1.bf16.msra.mxu0 0
        %1339 = vmatprep.subr.bf16.mxu0 0
        %1340 = vmatpush1.bf16.msra.mxu0 0
        %1341 = vmatprep.subr.bf16.mxu0 0
        %1342 = vmatpush1.bf16.msra.mxu0 0
        %1343 = vmatprep.subr.bf16.mxu0 0
        %1344 = vmatpush1.bf16.msra.mxu0 0
        %1345 = vmatprep.subr.bf16.mxu0 0
        %1346 = vmatpush1.bf16.msra.mxu0 0
        %1347 = vmatprep.mubr.bf16.mxu0 0
        %1348 = vmatmul.mubr.bf16.gmra.mrb[0].mxu0 %v862
        %v1349 = vpop.f32.mrb[0].mxu0
        %v1350 = vadd.f32 %v1301, %v1349
        %v1351 = vpop.f32.mrb[0].mxu0
        %v1352 = vpop.f32.mrb[0].mxu0
        %v1353 = vadd.f32 %v1301, %v1352
        %v1354 = vpop.f32.mrb[0].mxu0
        %1355 = vmatprep.mubr.bf16.mxu0 0
        %1356 = vmatmul.mubr.bf16.gmra.mrb[0].mxu0 %v865
        %v1357 = vpop.f32.mrb[0].mxu0
        %v1358 = vadd.f32 %v1301, %v1357
        %v1359 = vpop.f32.mrb[0].mxu0
        %v1360 = vpop.f32.mrb[0].mxu0
        %v1361 = vpop.f32.mrb[0].mxu0
        %1362 = vdwg.mxu0
        %s1363 = scalar_lea.vmem %s630, 9
        %v1364 = vld [vmem:[%s1363] sm:$0x1]
        %v1366 = vlaneseq
        %v1367 = vshrl.u32 %v1366, 7
        %v1368 = vsub.s32 0, %v1367
        %v1369 = vrot.slane %v1364, %v1368
        %v1375 = vunpack.c.l.b16 %v1223
        %v1376 = vunpack.c.l.b16 %v1224
        %v1377 = vunpack.c.l.b16 %v1225
        %v1378 = vunpack.c.l.b16 %v1226
        %v1379 = vpack.c.b16 %v1376, %v1375
        %v1380 = vpack.c.b16 %v1378, %v1377
        %1383 = vmatprep.subr.bf16.mxu0 0
        %1384 = vmatpush1.bf16.msra.mxu0 %v1379
        %1385 = vmatprep.subr.bf16.mxu0 0
        %1386 = vmatpush1.bf16.msra.mxu0 %v1380
        %1387 = vmatprep.subr.bf16.mxu0 0
        %1388 = vmatpush1.bf16.msra.mxu0 0
        %1389 = vmatprep.subr.bf16.mxu0 0
        %1390 = vmatpush1.bf16.msra.mxu0 0
        %1391 = vmatprep.subr.bf16.mxu0 0
        %1392 = vmatpush1.bf16.msra.mxu0 0
        %1393 = vmatprep.subr.bf16.mxu0 0
        %1394 = vmatpush1.bf16.msra.mxu0 0
        %1395 = vmatprep.subr.bf16.mxu0 0
        %1396 = vmatpush1.bf16.msra.mxu0 0
        %1397 = vmatprep.subr.bf16.mxu0 0
        %1398 = vmatpush1.bf16.msra.mxu0 0
        %1399 = vmatprep.subr.bf16.mxu0 0
        %1400 = vmatpush1.bf16.msra.mxu0 0
        %1401 = vmatprep.subr.bf16.mxu0 0
        %1402 = vmatpush1.bf16.msra.mxu0 0
        %1403 = vmatprep.subr.bf16.mxu0 0
        %1404 = vmatpush1.bf16.msra.mxu0 0
        %1405 = vmatprep.subr.bf16.mxu0 0
        %1406 = vmatpush1.bf16.msra.mxu0 0
        %1407 = vmatprep.subr.bf16.mxu0 0
        %1408 = vmatpush1.bf16.msra.mxu0 0
        %1409 = vmatprep.subr.bf16.mxu0 0
        %1410 = vmatpush1.bf16.msra.mxu0 0
        %1411 = vmatprep.subr.bf16.mxu0 0
        %1412 = vmatpush1.bf16.msra.mxu0 0
        %1413 = vmatprep.subr.bf16.mxu0 0
        %1414 = vmatpush1.bf16.msra.mxu0 0
        %1415 = vmatprep.mubr.bf16.mxu0 0
        %1416 = vmatmul.mubr.bf16.gmra.mrb[0].mxu0 %v862
        %v1417 = vpop.f32.mrb[0].mxu0
        %v1418 = vadd.f32 %v1369, %v1417
        %v1419 = vpop.f32.mrb[0].mxu0
        %v1420 = vpop.f32.mrb[0].mxu0
        %v1421 = vadd.f32 %v1369, %v1420
        %v1422 = vpop.f32.mrb[0].mxu0
        %1423 = vmatprep.mubr.bf16.mxu0 0
        %1424 = vmatmul.mubr.bf16.gmra.mrb[0].mxu0 %v865
        %v1425 = vpop.f32.mrb[0].mxu0
        %v1426 = vadd.f32 %v1369, %v1425
        %v1427 = vpop.f32.mrb[0].mxu0
        %v1428 = vpop.f32.mrb[0].mxu0
        %v1429 = vpop.f32.mrb[0].mxu0
        %1430 = vdwg.mxu0
        %v1431 = vpack.c.bf16 %v1285, %v1282
        %v1432 = vpack.c.bf16 %v1290, %v1290
        %v1433 = vpack.c.bf16 %v1353, %v1350
        %v1434 = vpack.c.bf16 %v1358, %v1358
        %v1436 = vsel %vm1055, %v1431, 0
        %v1439 = vsel %vm1055, %v1432, 0
        %v1442 = vsel %vm1055, %v1433, 0
        %v1445 = vsel %vm1055, %v1434, 0
        %1447 = vmatprep.subr.bf16.mxu0 0
        %1448 = vmatpush1.bf16.xpose.msra.mxu0 %v1442
        %1449 = vmatprep.subr.bf16.mxu0 0
        %1450 = vmatpush1.bf16.xpose.msra.mxu0 %v1445
        %1451 = vmatprep.subr.bf16.mxu0 0
        %1452 = vmatpush1.bf16.xpose.msra.mxu0 0
        %1453 = vmatprep.subr.bf16.mxu0 0
        %1454 = vmatpush1.bf16.xpose.msra.mxu0 0
        %1455 = vmatprep.subr.bf16.mxu0 0
        %1456 = vmatpush1.bf16.xpose.msra.mxu0 0
        %1457 = vmatprep.subr.bf16.mxu0 0
        %1458 = vmatpush1.bf16.xpose.msra.mxu0 0
        %1459 = vmatprep.subr.bf16.mxu0 0
        %1460 = vmatpush1.bf16.xpose.msra.mxu0 0
        %1461 = vmatprep.subr.bf16.mxu0 0
        %1462 = vmatpush1.bf16.xpose.msra.mxu0 0
        %1463 = vmatprep.subr.bf16.mxu0 0
        %1464 = vmatpush1.bf16.xpose.msra.mxu0 0
        %1465 = vmatprep.subr.bf16.mxu0 0
        %1466 = vmatpush1.bf16.xpose.msra.mxu0 0
        %1467 = vmatprep.subr.bf16.mxu0 0
        %1468 = vmatpush1.bf16.xpose.msra.mxu0 0
        %1469 = vmatprep.subr.bf16.mxu0 0
        %1470 = vmatpush1.bf16.xpose.msra.mxu0 0
        %1471 = vmatprep.subr.bf16.mxu0 0
        %1472 = vmatpush1.bf16.xpose.msra.mxu0 0
        %1473 = vmatprep.subr.bf16.mxu0 0
        %1474 = vmatpush1.bf16.xpose.msra.mxu0 0
        %1475 = vmatprep.subr.bf16.mxu0 0
        %1476 = vmatpush1.bf16.xpose.msra.mxu0 0
        %1477 = vmatprep.subr.bf16.mxu0 0
        %1478 = vmatpush1.bf16.xpose.msra.mxu0 0
        %1479 = vmatprep.mubr.bf16.mxu0 0
        %1480 = vmatmul.mubr.bf16.gmra.mrb[0].mxu0 %v1436
        %v1481 = vpop.f32.mrb[0].mxu0
        %v1482 = vadd.f32 0.0, %v1481
        %v1483 = vpop.f32.mrb[0].mxu0
        %v1484 = vpop.f32.mrb[0].mxu0
        %v1485 = vadd.f32 0.0, %v1484
        %v1486 = vpop.f32.mrb[0].mxu0
        %1487 = vmatprep.mubr.bf16.mxu0 0
        %1488 = vmatmul.mubr.bf16.gmra.mrb[0].mxu0 %v1439
        %v1489 = vpop.f32.mrb[0].mxu0
        %v1490 = vadd.f32 0.0, %v1489
        %v1491 = vpop.f32.mrb[0].mxu0
        %v1492 = vpop.f32.mrb[0].mxu0
        %v1493 = vpop.f32.mrb[0].mxu0
        %1494 = vdwg.mxu0
        %v1495 = vsel %vm1116, %v1482, -inf
        %1496 = vmax.xlane.f32.xlu0 %v1495
        %v1497 = vpop.xlane.xlu0 %1496
        %v1498 = vsel %vm1116, %v1485, -inf
        %1499 = vmax.xlane.f32.xlu0 %v1498
        %v1500 = vpop.xlane.xlu0 %1499
        %v1501 = vsel %vm1116, %v1490, -inf
        %1502 = vmax.xlane.f32.xlu0 %v1501
        %v1503 = vpop.xlane.xlu0 %1502
        %v1504 = vsub.f32 %v1482, %v1497
        %v1505 = vsub.f32 %v1485, %v1500
        %v1506 = vsub.f32 %v1490, %v1503
        %v1507 = vmul.f32 %v1504, 1.442695
        %v1508 = vpow.pop %v1507
        %v1509 = vmul.f32 %v1505, 1.442695
        %v1510 = vpow.pop %v1509
        %v1511 = vmul.f32 %v1506, 1.442695
        %v1512 = vpow.pop %v1511
        %v1513 = vsel %vm1116, %v1508, 0.0
        %1514 = vadd.xlane.f32.xlu0 %v1513
        %v1515 = vpop.xlane.xlu0 %1514
        %v1516 = vsel %vm1116, %v1510, 0.0
        %1517 = vadd.xlane.f32.xlu0 %v1516
        %v1518 = vpop.xlane.xlu0 %1517
        %v1519 = vsel %vm1116, %v1512, 0.0
        %1520 = vadd.xlane.f32.xlu0 %v1519
        %v1521 = vpop.xlane.xlu0 %1520
        %v1522 = vrcp.pop %v1515
        %v1523 = vrcp.pop %v1518
        %v1524 = vrcp.pop %v1521
        %v1525 = vmul.f32 %v1508, %v1522
        %v1526 = vmul.f32 %v1510, %v1523
        %v1527 = vmul.f32 %v1512, %v1524
        %v1528 = vpack.c.bf16 %v1526, %v1525
        %v1529 = vpack.c.bf16 %v1527, %v1527
        %v1530 = vpack.c.bf16 %v1421, %v1418
        %v1531 = vpack.c.bf16 %v1426, %v1426
        %v1533 = vsel %vm1116, %v1528, 0
        %v1536 = vsel %vm1116, %v1529, 0
        %v1539 = vsel %vm1160, %v1531, 0
        %1541 = vmatprep.subr.bf16.mxu0 0
        %1542 = vmatpush1.bf16.msra.mxu0 %v1530
        %1543 = vmatprep.subr.bf16.mxu0 0
        %1544 = vmatpush1.bf16.msra.mxu0 %v1539
        %1545 = vmatprep.subr.bf16.mxu0 0
        %1546 = vmatpush1.bf16.msra.mxu0 0
        %1547 = vmatprep.subr.bf16.mxu0 0
        %1548 = vmatpush1.bf16.msra.mxu0 0
        %1549 = vmatprep.subr.bf16.mxu0 0
        %1550 = vmatpush1.bf16.msra.mxu0 0
        %1551 = vmatprep.subr.bf16.mxu0 0
        %1552 = vmatpush1.bf16.msra.mxu0 0
        %1553 = vmatprep.subr.bf16.mxu0 0
        %1554 = vmatpush1.bf16.msra.mxu0 0
        %1555 = vmatprep.subr.bf16.mxu0 0
        %1556 = vmatpush1.bf16.msra.mxu0 0
        %1557 = vmatprep.subr.bf16.mxu0 0
        %1558 = vmatpush1.bf16.msra.mxu0 0
        %1559 = vmatprep.subr.bf16.mxu0 0
        %1560 = vmatpush1.bf16.msra.mxu0 0
        %1561 = vmatprep.subr.bf16.mxu0 0
        %1562 = vmatpush1.bf16.msra.mxu0 0
        %1563 = vmatprep.subr.bf16.mxu0 0
        %1564 = vmatpush1.bf16.msra.mxu0 0
        %1565 = vmatprep.subr.bf16.mxu0 0
        %1566 = vmatpush1.bf16.msra.mxu0 0
        %1567 = vmatprep.subr.bf16.mxu0 0
        %1568 = vmatpush1.bf16.msra.mxu0 0
        %1569 = vmatprep.subr.bf16.mxu0 0
        %1570 = vmatpush1.bf16.msra.mxu0 0
        %1571 = vmatprep.subr.bf16.mxu0 0
        %1572 = vmatpush1.bf16.msra.mxu0 0
        %1573 = vmatprep.mubr.bf16.mxu0 0
        %1574 = vmatmul.mubr.bf16.gmra.mrb[0].mxu0 %v1533
        %v1575 = vpop.f32.mrb[0].mxu0
        %v1576 = vadd.f32 0.0, %v1575
        %v1577 = vpop.f32.mrb[0].mxu0
        %v1578 = vpop.f32.mrb[0].mxu0
        %v1579 = vadd.f32 0.0, %v1578
        %v1580 = vpop.f32.mrb[0].mxu0
        %1581 = vmatprep.mubr.bf16.mxu0 0
        %1582 = vmatmul.mubr.bf16.gmra.mrb[0].mxu0 %v1536
        %v1583 = vpop.f32.mrb[0].mxu0
        %v1584 = vadd.f32 0.0, %v1583
        %v1585 = vpop.f32.mrb[0].mxu0
        %v1586 = vpop.f32.mrb[0].mxu0
        %v1587 = vpop.f32.mrb[0].mxu0
        %1588 = vdwg.mxu0
        %s1589 = scalar_lea.vmem %s624, 32
        %v1590 = vld [vmem:[%s1589] sm:$0xf]
        %v1591 = vld [vmem:[%s1589 + $0x4] sm:$0xf]
        %v1592 = vld [vmem:[%s1589 + $0x8] sm:$0xf]
        %v1593 = vld [vmem:[%s1589 + $0xc] sm:$0xf]
        %s1594 = scalar_lea.vmem %s624, 96
        %v1595 = vld [vmem:[%s1594] sm:$0xf]
        %v1596 = vld [vmem:[%s1594 + $0x4] sm:$0xf]
        %v1597 = vld [vmem:[%s1594 + $0x8] sm:$0xf]
        %v1598 = vld [vmem:[%s1594 + $0xc] sm:$0xf]
        %s1599 = scalar_lea.vmem %s624, 160
        %v1600 = vld [vmem:[%s1599] sm:$0xf]
        %v1601 = vld [vmem:[%s1599 + $0x4] sm:$0xf]
        %v1602 = vld [vmem:[%s1599 + $0x8] sm:$0xf]
        %v1603 = vld [vmem:[%s1599 + $0xc] sm:$0xf]
        %s1604 = scalar_lea.vmem %s630, 2
        %v1605 = vld [vmem:[%s1604] sm:$0x1]
        %v1607 = vlaneseq
        %v1608 = vshrl.u32 %v1607, 7
        %v1609 = vsub.s32 0, %v1608
        %v1610 = vrot.slane %v1605, %v1609
        %v1616 = vunpack.c.l.b16 %v1590
        %v1617 = vunpack.c.l.b16 %v1591
        %v1618 = vunpack.c.l.b16 %v1592
        %v1619 = vunpack.c.l.b16 %v1593
        %v1620 = vpack.c.b16 %v1617, %v1616
        %v1621 = vpack.c.b16 %v1619, %v1618
        %1624 = vmatprep.subr.bf16.mxu0 0
        %1625 = vmatpush1.bf16.msra.mxu0 %v1620
        %1626 = vmatprep.subr.bf16.mxu0 0
        %1627 = vmatpush1.bf16.msra.mxu0 %v1621
        %1628 = vmatprep.subr.bf16.mxu0 0
        %1629 = vmatpush1.bf16.msra.mxu0 0
        %1630 = vmatprep.subr.bf16.mxu0 0
        %1631 = vmatpush1.bf16.msra.mxu0 0
        %1632 = vmatprep.subr.bf16.mxu0 0
        %1633 = vmatpush1.bf16.msra.mxu0 0
        %1634 = vmatprep.subr.bf16.mxu0 0
        %1635 = vmatpush1.bf16.msra.mxu0 0
        %1636 = vmatprep.subr.bf16.mxu0 0
        %1637 = vmatpush1.bf16.msra.mxu0 0
        %1638 = vmatprep.subr.bf16.mxu0 0
        %1639 = vmatpush1.bf16.msra.mxu0 0
        %1640 = vmatprep.subr.bf16.mxu0 0
        %1641 = vmatpush1.bf16.msra.mxu0 0
        %1642 = vmatprep.subr.bf16.mxu0 0
        %1643 = vmatpush1.bf16.msra.mxu0 0
        %1644 = vmatprep.subr.bf16.mxu0 0
        %1645 = vmatpush1.bf16.msra.mxu0 0
        %1646 = vmatprep.subr.bf16.mxu0 0
        %1647 = vmatpush1.bf16.msra.mxu0 0
        %1648 = vmatprep.subr.bf16.mxu0 0
        %1649 = vmatpush1.bf16.msra.mxu0 0
        %1650 = vmatprep.subr.bf16.mxu0 0
        %1651 = vmatpush1.bf16.msra.mxu0 0
        %1652 = vmatprep.subr.bf16.mxu0 0
        %1653 = vmatpush1.bf16.msra.mxu0 0
        %1654 = vmatprep.subr.bf16.mxu0 0
        %1655 = vmatpush1.bf16.msra.mxu0 0
        %1656 = vmatprep.mubr.bf16.mxu0 0
        %1657 = vmatmul.mubr.bf16.gmra.mrb[0].mxu0 %v862
        %v1658 = vpop.f32.mrb[0].mxu0
        %v1659 = vadd.f32 %v1610, %v1658
        %v1660 = vpop.f32.mrb[0].mxu0
        %v1661 = vpop.f32.mrb[0].mxu0
        %v1662 = vadd.f32 %v1610, %v1661
        %v1663 = vpop.f32.mrb[0].mxu0
        %1664 = vmatprep.mubr.bf16.mxu0 0
        %1665 = vmatmul.mubr.bf16.gmra.mrb[0].mxu0 %v865
        %v1666 = vpop.f32.mrb[0].mxu0
        %v1667 = vadd.f32 %v1610, %v1666
        %v1668 = vpop.f32.mrb[0].mxu0
        %v1669 = vpop.f32.mrb[0].mxu0
        %v1670 = vpop.f32.mrb[0].mxu0
        %1671 = vdwg.mxu0
        %s1672 = scalar_lea.vmem %s630, 6
        %v1673 = vld [vmem:[%s1672] sm:$0x1]
        %v1675 = vlaneseq
        %v1676 = vshrl.u32 %v1675, 7
        %v1677 = vsub.s32 0, %v1676
        %v1678 = vrot.slane %v1673, %v1677
        %v1684 = vunpack.c.l.b16 %v1595
        %v1685 = vunpack.c.l.b16 %v1596
        %v1686 = vunpack.c.l.b16 %v1597
        %v1687 = vunpack.c.l.b16 %v1598
        %v1688 = vpack.c.b16 %v1685, %v1684
        %v1689 = vpack.c.b16 %v1687, %v1686
        %1692 = vmatprep.subr.bf16.mxu0 0
        %1693 = vmatpush1.bf16.msra.mxu0 %v1688
        %1694 = vmatprep.subr.bf16.mxu0 0
        %1695 = vmatpush1.bf16.msra.mxu0 %v1689
        %1696 = vmatprep.subr.bf16.mxu0 0
        %1697 = vmatpush1.bf16.msra.mxu0 0
        %1698 = vmatprep.subr.bf16.mxu0 0
        %1699 = vmatpush1.bf16.msra.mxu0 0
        %1700 = vmatprep.subr.bf16.mxu0 0
        %1701 = vmatpush1.bf16.msra.mxu0 0
        %1702 = vmatprep.subr.bf16.mxu0 0
        %1703 = vmatpush1.bf16.msra.mxu0 0
        %1704 = vmatprep.subr.bf16.mxu0 0
        %1705 = vmatpush1.bf16.msra.mxu0 0
        %1706 = vmatprep.subr.bf16.mxu0 0
        %1707 = vmatpush1.bf16.msra.mxu0 0
        %1708 = vmatprep.subr.bf16.mxu0 0
        %1709 = vmatpush1.bf16.msra.mxu0 0
        %1710 = vmatprep.subr.bf16.mxu0 0
        %1711 = vmatpush1.bf16.msra.mxu0 0
        %1712 = vmatprep.subr.bf16.mxu0 0
        %1713 = vmatpush1.bf16.msra.mxu0 0
        %1714 = vmatprep.subr.bf16.mxu0 0
        %1715 = vmatpush1.bf16.msra.mxu0 0
        %1716 = vmatprep.subr.bf16.mxu0 0
        %1717 = vmatpush1.bf16.msra.mxu0 0
        %1718 = vmatprep.subr.bf16.mxu0 0
        %1719 = vmatpush1.bf16.msra.mxu0 0
        %1720 = vmatprep.subr.bf16.mxu0 0
        %1721 = vmatpush1.bf16.msra.mxu0 0
        %1722 = vmatprep.subr.bf16.mxu0 0
        %1723 = vmatpush1.bf16.msra.mxu0 0
        %1724 = vmatprep.mubr.bf16.mxu0 0
        %1725 = vmatmul.mubr.bf16.gmra.mrb[0].mxu0 %v862
        %v1726 = vpop.f32.mrb[0].mxu0
        %v1727 = vadd.f32 %v1678, %v1726
        %v1728 = vpop.f32.mrb[0].mxu0
        %v1729 = vpop.f32.mrb[0].mxu0
        %v1730 = vadd.f32 %v1678, %v1729
        %v1731 = vpop.f32.mrb[0].mxu0
        %1732 = vmatprep.mubr.bf16.mxu0 0
        %1733 = vmatmul.mubr.bf16.gmra.mrb[0].mxu0 %v865
        %v1734 = vpop.f32.mrb[0].mxu0
        %v1735 = vadd.f32 %v1678, %v1734
        %v1736 = vpop.f32.mrb[0].mxu0
        %v1737 = vpop.f32.mrb[0].mxu0
        %v1738 = vpop.f32.mrb[0].mxu0
        %1739 = vdwg.mxu0
        %s1740 = scalar_lea.vmem %s630, 10
        %v1741 = vld [vmem:[%s1740] sm:$0x1]
        %v1743 = vlaneseq
        %v1744 = vshrl.u32 %v1743, 7
        %v1745 = vsub.s32 0, %v1744
        %v1746 = vrot.slane %v1741, %v1745
        %v1752 = vunpack.c.l.b16 %v1600
        %v1753 = vunpack.c.l.b16 %v1601
        %v1754 = vunpack.c.l.b16 %v1602
        %v1755 = vunpack.c.l.b16 %v1603
        %v1756 = vpack.c.b16 %v1753, %v1752
        %v1757 = vpack.c.b16 %v1755, %v1754
        %1760 = vmatprep.subr.bf16.mxu0 0
        %1761 = vmatpush1.bf16.msra.mxu0 %v1756
        %1762 = vmatprep.subr.bf16.mxu0 0
        %1763 = vmatpush1.bf16.msra.mxu0 %v1757
        %1764 = vmatprep.subr.bf16.mxu0 0
        %1765 = vmatpush1.bf16.msra.mxu0 0
        %1766 = vmatprep.subr.bf16.mxu0 0
        %1767 = vmatpush1.bf16.msra.mxu0 0
        %1768 = vmatprep.subr.bf16.mxu0 0
        %1769 = vmatpush1.bf16.msra.mxu0 0
        %1770 = vmatprep.subr.bf16.mxu0 0
        %1771 = vmatpush1.bf16.msra.mxu0 0
        %1772 = vmatprep.subr.bf16.mxu0 0
        %1773 = vmatpush1.bf16.msra.mxu0 0
        %1774 = vmatprep.subr.bf16.mxu0 0
        %1775 = vmatpush1.bf16.msra.mxu0 0
        %1776 = vmatprep.subr.bf16.mxu0 0
        %1777 = vmatpush1.bf16.msra.mxu0 0
        %1778 = vmatprep.subr.bf16.mxu0 0
        %1779 = vmatpush1.bf16.msra.mxu0 0
        %1780 = vmatprep.subr.bf16.mxu0 0
        %1781 = vmatpush1.bf16.msra.mxu0 0
        %1782 = vmatprep.subr.bf16.mxu0 0
        %1783 = vmatpush1.bf16.msra.mxu0 0
        %1784 = vmatprep.subr.bf16.mxu0 0
        %1785 = vmatpush1.bf16.msra.mxu0 0
        %1786 = vmatprep.subr.bf16.mxu0 0
        %1787 = vmatpush1.bf16.msra.mxu0 0
        %1788 = vmatprep.subr.bf16.mxu0 0
        %1789 = vmatpush1.bf16.msra.mxu0 0
        %1790 = vmatprep.subr.bf16.mxu0 0
        %1791 = vmatpush1.bf16.msra.mxu0 0
        %1792 = vmatprep.mubr.bf16.mxu0 0
        %1793 = vmatmul.mubr.bf16.gmra.mrb[0].mxu0 %v862
        %v1794 = vpop.f32.mrb[0].mxu0
        %v1795 = vadd.f32 %v1746, %v1794
        %v1796 = vpop.f32.mrb[0].mxu0
        %v1797 = vpop.f32.mrb[0].mxu0
        %v1798 = vadd.f32 %v1746, %v1797
        %v1799 = vpop.f32.mrb[0].mxu0
        %1800 = vmatprep.mubr.bf16.mxu0 0
        %1801 = vmatmul.mubr.bf16.gmra.mrb[0].mxu0 %v865
        %v1802 = vpop.f32.mrb[0].mxu0
        %v1803 = vadd.f32 %v1746, %v1802
        %v1804 = vpop.f32.mrb[0].mxu0
        %v1805 = vpop.f32.mrb[0].mxu0
        %v1806 = vpop.f32.mrb[0].mxu0
        %1807 = vdwg.mxu0
        %v1808 = vpack.c.bf16 %v1662, %v1659
        %v1809 = vpack.c.bf16 %v1667, %v1667
        %v1810 = vpack.c.bf16 %v1730, %v1727
        %v1811 = vpack.c.bf16 %v1735, %v1735
        %v1813 = vsel %vm1055, %v1808, 0
        %v1816 = vsel %vm1055, %v1809, 0
        %v1819 = vsel %vm1055, %v1810, 0
        %v1822 = vsel %vm1055, %v1811, 0
        %1824 = vmatprep.subr.bf16.mxu0 0
        %1825 = vmatpush1.bf16.xpose.msra.mxu0 %v1819
        %1826 = vmatprep.subr.bf16.mxu0 0
        %1827 = vmatpush1.bf16.xpose.msra.mxu0 %v1822
        %1828 = vmatprep.subr.bf16.mxu0 0
        %1829 = vmatpush1.bf16.xpose.msra.mxu0 0
        %1830 = vmatprep.subr.bf16.mxu0 0
        %1831 = vmatpush1.bf16.xpose.msra.mxu0 0
        %1832 = vmatprep.subr.bf16.mxu0 0
        %1833 = vmatpush1.bf16.xpose.msra.mxu0 0
        %1834 = vmatprep.subr.bf16.mxu0 0
        %1835 = vmatpush1.bf16.xpose.msra.mxu0 0
        %1836 = vmatprep.subr.bf16.mxu0 0
        %1837 = vmatpush1.bf16.xpose.msra.mxu0 0
        %1838 = vmatprep.subr.bf16.mxu0 0
        %1839 = vmatpush1.bf16.xpose.msra.mxu0 0
        %1840 = vmatprep.subr.bf16.mxu0 0
        %1841 = vmatpush1.bf16.xpose.msra.mxu0 0
        %1842 = vmatprep.subr.bf16.mxu0 0
        %1843 = vmatpush1.bf16.xpose.msra.mxu0 0
        %1844 = vmatprep.subr.bf16.mxu0 0
        %1845 = vmatpush1.bf16.xpose.msra.mxu0 0
        %1846 = vmatprep.subr.bf16.mxu0 0
        %1847 = vmatpush1.bf16.xpose.msra.mxu0 0
        %1848 = vmatprep.subr.bf16.mxu0 0
        %1849 = vmatpush1.bf16.xpose.msra.mxu0 0
        %1850 = vmatprep.subr.bf16.mxu0 0
        %1851 = vmatpush1.bf16.xpose.msra.mxu0 0
        %1852 = vmatprep.subr.bf16.mxu0 0
        %1853 = vmatpush1.bf16.xpose.msra.mxu0 0
        %1854 = vmatprep.subr.bf16.mxu0 0
        %1855 = vmatpush1.bf16.xpose.msra.mxu0 0
        %1856 = vmatprep.mubr.bf16.mxu0 0
        %1857 = vmatmul.mubr.bf16.gmra.mrb[0].mxu0 %v1813
        %v1858 = vpop.f32.mrb[0].mxu0
        %v1859 = vadd.f32 0.0, %v1858
        %v1860 = vpop.f32.mrb[0].mxu0
        %v1861 = vpop.f32.mrb[0].mxu0
        %v1862 = vadd.f32 0.0, %v1861
        %v1863 = vpop.f32.mrb[0].mxu0
        %1864 = vmatprep.mubr.bf16.mxu0 0
        %1865 = vmatmul.mubr.bf16.gmra.mrb[0].mxu0 %v1816
        %v1866 = vpop.f32.mrb[0].mxu0
        %v1867 = vadd.f32 0.0, %v1866
        %v1868 = vpop.f32.mrb[0].mxu0
        %v1869 = vpop.f32.mrb[0].mxu0
        %v1870 = vpop.f32.mrb[0].mxu0
        %1871 = vdwg.mxu0
        %v1872 = vsel %vm1116, %v1859, -inf
        %1873 = vmax.xlane.f32.xlu0 %v1872
        %v1874 = vpop.xlane.xlu0 %1873
        %v1875 = vsel %vm1116, %v1862, -inf
        %1876 = vmax.xlane.f32.xlu0 %v1875
        %v1877 = vpop.xlane.xlu0 %1876
        %v1878 = vsel %vm1116, %v1867, -inf
        %1879 = vmax.xlane.f32.xlu0 %v1878
        %v1880 = vpop.xlane.xlu0 %1879
        %v1881 = vsub.f32 %v1859, %v1874
        %v1882 = vsub.f32 %v1862, %v1877
        %v1883 = vsub.f32 %v1867, %v1880
        %v1884 = vmul.f32 %v1881, 1.442695
        %v1885 = vpow.pop %v1884
        %v1886 = vmul.f32 %v1882, 1.442695
        %v1887 = vpow.pop %v1886
        %v1888 = vmul.f32 %v1883, 1.442695
        %v1889 = vpow.pop %v1888
        %v1890 = vsel %vm1116, %v1885, 0.0
        %1891 = vadd.xlane.f32.xlu0 %v1890
        %v1892 = vpop.xlane.xlu0 %1891
        %v1893 = vsel %vm1116, %v1887, 0.0
        %1894 = vadd.xlane.f32.xlu0 %v1893
        %v1895 = vpop.xlane.xlu0 %1894
        %v1896 = vsel %vm1116, %v1889, 0.0
        %1897 = vadd.xlane.f32.xlu0 %v1896
        %v1898 = vpop.xlane.xlu0 %1897
        %v1899 = vrcp.pop %v1892
        %v1900 = vrcp.pop %v1895
        %v1901 = vrcp.pop %v1898
        %v1902 = vmul.f32 %v1885, %v1899
        %v1903 = vmul.f32 %v1887, %v1900
        %v1904 = vmul.f32 %v1889, %v1901
        %v1905 = vpack.c.bf16 %v1903, %v1902
        %v1906 = vpack.c.bf16 %v1904, %v1904
        %v1907 = vpack.c.bf16 %v1798, %v1795
        %v1908 = vpack.c.bf16 %v1803, %v1803
        %v1910 = vsel %vm1116, %v1905, 0
        %v1913 = vsel %vm1116, %v1906, 0
        %v1916 = vsel %vm1160, %v1908, 0
        %1918 = vmatprep.subr.bf16.mxu0 0
        %1919 = vmatpush1.bf16.msra.mxu0 %v1907
        %1920 = vmatprep.subr.bf16.mxu0 0
        %1921 = vmatpush1.bf16.msra.mxu0 %v1916
        %1922 = vmatprep.subr.bf16.mxu0 0
        %1923 = vmatpush1.bf16.msra.mxu0 0
        %1924 = vmatprep.subr.bf16.mxu0 0
        %1925 = vmatpush1.bf16.msra.mxu0 0
        %1926 = vmatprep.subr.bf16.mxu0 0
        %1927 = vmatpush1.bf16.msra.mxu0 0
        %1928 = vmatprep.subr.bf16.mxu0 0
        %1929 = vmatpush1.bf16.msra.mxu0 0
        %1930 = vmatprep.subr.bf16.mxu0 0
        %1931 = vmatpush1.bf16.msra.mxu0 0
        %1932 = vmatprep.subr.bf16.mxu0 0
        %1933 = vmatpush1.bf16.msra.mxu0 0
        %1934 = vmatprep.subr.bf16.mxu0 0
        %1935 = vmatpush1.bf16.msra.mxu0 0
        %1936 = vmatprep.subr.bf16.mxu0 0
        %1937 = vmatpush1.bf16.msra.mxu0 0
        %1938 = vmatprep.subr.bf16.mxu0 0
        %1939 = vmatpush1.bf16.msra.mxu0 0
        %1940 = vmatprep.subr.bf16.mxu0 0
        %1941 = vmatpush1.bf16.msra.mxu0 0
        %1942 = vmatprep.subr.bf16.mxu0 0
        %1943 = vmatpush1.bf16.msra.mxu0 0
        %1944 = vmatprep.subr.bf16.mxu0 0
        %1945 = vmatpush1.bf16.msra.mxu0 0
        %1946 = vmatprep.subr.bf16.mxu0 0
        %1947 = vmatpush1.bf16.msra.mxu0 0
        %1948 = vmatprep.subr.bf16.mxu0 0
        %1949 = vmatpush1.bf16.msra.mxu0 0
        %1950 = vmatprep.mubr.bf16.mxu0 0
        %1951 = vmatmul.mubr.bf16.gmra.mrb[0].mxu0 %v1910
        %v1952 = vpop.f32.mrb[0].mxu0
        %v1953 = vadd.f32 0.0, %v1952
        %v1954 = vpop.f32.mrb[0].mxu0
        %v1955 = vpop.f32.mrb[0].mxu0
        %v1956 = vadd.f32 0.0, %v1955
        %v1957 = vpop.f32.mrb[0].mxu0
        %1958 = vmatprep.mubr.bf16.mxu0 0
        %1959 = vmatmul.mubr.bf16.gmra.mrb[0].mxu0 %v1913
        %v1960 = vpop.f32.mrb[0].mxu0
        %v1961 = vadd.f32 0.0, %v1960
        %v1962 = vpop.f32.mrb[0].mxu0
        %v1963 = vpop.f32.mrb[0].mxu0
        %v1964 = vpop.f32.mrb[0].mxu0
        %1965 = vdwg.mxu0
        %s1966 = scalar_lea.vmem %s624, 48
        %v1967 = vld [vmem:[%s1966] sm:$0xf]
        %v1968 = vld [vmem:[%s1966 + $0x4] sm:$0xf]
        %v1969 = vld [vmem:[%s1966 + $0x8] sm:$0xf]
        %v1970 = vld [vmem:[%s1966 + $0xc] sm:$0xf]
        %s1971 = scalar_lea.vmem %s624, 112
        %v1972 = vld [vmem:[%s1971] sm:$0xf]
        %v1973 = vld [vmem:[%s1971 + $0x4] sm:$0xf]
        %v1974 = vld [vmem:[%s1971 + $0x8] sm:$0xf]
        %v1975 = vld [vmem:[%s1971 + $0xc] sm:$0xf]
        %s1976 = scalar_lea.vmem %s624, 176
        %v1977 = vld [vmem:[%s1976] sm:$0xf]
        %v1978 = vld [vmem:[%s1976 + $0x4] sm:$0xf]
        %v1979 = vld [vmem:[%s1976 + $0x8] sm:$0xf]
        %v1980 = vld [vmem:[%s1976 + $0xc] sm:$0xf]
        %s1981 = scalar_lea.vmem %s630, 3
        %v1982 = vld [vmem:[%s1981] sm:$0x1]
        %v1984 = vlaneseq
        %v1985 = vshrl.u32 %v1984, 7
        %v1986 = vsub.s32 0, %v1985
        %v1987 = vrot.slane %v1982, %v1986
        %v1993 = vunpack.c.l.b16 %v1967
        %v1994 = vunpack.c.l.b16 %v1968
        %v1995 = vunpack.c.l.b16 %v1969
        %v1996 = vunpack.c.l.b16 %v1970
        %v1997 = vpack.c.b16 %v1994, %v1993
        %v1998 = vpack.c.b16 %v1996, %v1995
        %2001 = vmatprep.subr.bf16.mxu0 0
        %2002 = vmatpush1.bf16.msra.mxu0 %v1997
        %2003 = vmatprep.subr.bf16.mxu0 0
        %2004 = vmatpush1.bf16.msra.mxu0 %v1998
        %2005 = vmatprep.subr.bf16.mxu0 0
        %2006 = vmatpush1.bf16.msra.mxu0 0
        %2007 = vmatprep.subr.bf16.mxu0 0
        %2008 = vmatpush1.bf16.msra.mxu0 0
        %2009 = vmatprep.subr.bf16.mxu0 0
        %2010 = vmatpush1.bf16.msra.mxu0 0
        %2011 = vmatprep.subr.bf16.mxu0 0
        %2012 = vmatpush1.bf16.msra.mxu0 0
        %2013 = vmatprep.subr.bf16.mxu0 0
        %2014 = vmatpush1.bf16.msra.mxu0 0
        %2015 = vmatprep.subr.bf16.mxu0 0
        %2016 = vmatpush1.bf16.msra.mxu0 0
        %2017 = vmatprep.subr.bf16.mxu0 0
        %2018 = vmatpush1.bf16.msra.mxu0 0
        %2019 = vmatprep.subr.bf16.mxu0 0
        %2020 = vmatpush1.bf16.msra.mxu0 0
        %2021 = vmatprep.subr.bf16.mxu0 0
        %2022 = vmatpush1.bf16.msra.mxu0 0
        %2023 = vmatprep.subr.bf16.mxu0 0
        %2024 = vmatpush1.bf16.msra.mxu0 0
        %2025 = vmatprep.subr.bf16.mxu0 0
        %2026 = vmatpush1.bf16.msra.mxu0 0
        %2027 = vmatprep.subr.bf16.mxu0 0
        %2028 = vmatpush1.bf16.msra.mxu0 0
        %2029 = vmatprep.subr.bf16.mxu0 0
        %2030 = vmatpush1.bf16.msra.mxu0 0
        %2031 = vmatprep.subr.bf16.mxu0 0
        %2032 = vmatpush1.bf16.msra.mxu0 0
        %2033 = vmatprep.mubr.bf16.mxu0 0
        %2034 = vmatmul.mubr.bf16.gmra.mrb[0].mxu0 %v862
        %v2035 = vpop.f32.mrb[0].mxu0
        %v2036 = vadd.f32 %v1987, %v2035
        %v2037 = vpop.f32.mrb[0].mxu0
        %v2038 = vpop.f32.mrb[0].mxu0
        %v2039 = vadd.f32 %v1987, %v2038
        %v2040 = vpop.f32.mrb[0].mxu0
        %2041 = vmatprep.mubr.bf16.mxu0 0
        %2042 = vmatmul.mubr.bf16.gmra.mrb[0].mxu0 %v865
        %v2043 = vpop.f32.mrb[0].mxu0
        %v2044 = vadd.f32 %v1987, %v2043
        %v2045 = vpop.f32.mrb[0].mxu0
        %v2046 = vpop.f32.mrb[0].mxu0
        %v2047 = vpop.f32.mrb[0].mxu0
        %2048 = vdwg.mxu0
        %s2049 = scalar_lea.vmem %s630, 7
        %v2050 = vld [vmem:[%s2049] sm:$0x1]
        %v2052 = vlaneseq
        %v2053 = vshrl.u32 %v2052, 7
        %v2054 = vsub.s32 0, %v2053
        %v2055 = vrot.slane %v2050, %v2054
        %v2061 = vunpack.c.l.b16 %v1972
        %v2062 = vunpack.c.l.b16 %v1973
        %v2063 = vunpack.c.l.b16 %v1974
        %v2064 = vunpack.c.l.b16 %v1975
        %v2065 = vpack.c.b16 %v2062, %v2061
        %v2066 = vpack.c.b16 %v2064, %v2063
        %2069 = vmatprep.subr.bf16.mxu0 0
        %2070 = vmatpush1.bf16.msra.mxu0 %v2065
        %2071 = vmatprep.subr.bf16.mxu0 0
        %2072 = vmatpush1.bf16.msra.mxu0 %v2066
        %2073 = vmatprep.subr.bf16.mxu0 0
        %2074 = vmatpush1.bf16.msra.mxu0 0
        %2075 = vmatprep.subr.bf16.mxu0 0
        %2076 = vmatpush1.bf16.msra.mxu0 0
        %2077 = vmatprep.subr.bf16.mxu0 0
        %2078 = vmatpush1.bf16.msra.mxu0 0
        %2079 = vmatprep.subr.bf16.mxu0 0
        %2080 = vmatpush1.bf16.msra.mxu0 0
        %2081 = vmatprep.subr.bf16.mxu0 0
        %2082 = vmatpush1.bf16.msra.mxu0 0
        %2083 = vmatprep.subr.bf16.mxu0 0
        %2084 = vmatpush1.bf16.msra.mxu0 0
        %2085 = vmatprep.subr.bf16.mxu0 0
        %2086 = vmatpush1.bf16.msra.mxu0 0
        %2087 = vmatprep.subr.bf16.mxu0 0
        %2088 = vmatpush1.bf16.msra.mxu0 0
        %2089 = vmatprep.subr.bf16.mxu0 0
        %2090 = vmatpush1.bf16.msra.mxu0 0
        %2091 = vmatprep.subr.bf16.mxu0 0
        %2092 = vmatpush1.bf16.msra.mxu0 0
        %2093 = vmatprep.subr.bf16.mxu0 0
        %2094 = vmatpush1.bf16.msra.mxu0 0
        %2095 = vmatprep.subr.bf16.mxu0 0
        %2096 = vmatpush1.bf16.msra.mxu0 0
        %2097 = vmatprep.subr.bf16.mxu0 0
        %2098 = vmatpush1.bf16.msra.mxu0 0
        %2099 = vmatprep.subr.bf16.mxu0 0
        %2100 = vmatpush1.bf16.msra.mxu0 0
        %2101 = vmatprep.mubr.bf16.mxu0 0
        %2102 = vmatmul.mubr.bf16.gmra.mrb[0].mxu0 %v862
        %v2103 = vpop.f32.mrb[0].mxu0
        %v2104 = vadd.f32 %v2055, %v2103
        %v2105 = vpop.f32.mrb[0].mxu0
        %v2106 = vpop.f32.mrb[0].mxu0
        %v2107 = vadd.f32 %v2055, %v2106
        %v2108 = vpop.f32.mrb[0].mxu0
        %2109 = vmatprep.mubr.bf16.mxu0 0
        %2110 = vmatmul.mubr.bf16.gmra.mrb[0].mxu0 %v865
        %v2111 = vpop.f32.mrb[0].mxu0
        %v2112 = vadd.f32 %v2055, %v2111
        %v2113 = vpop.f32.mrb[0].mxu0
        %v2114 = vpop.f32.mrb[0].mxu0
        %v2115 = vpop.f32.mrb[0].mxu0
        %2116 = vdwg.mxu0
        %s2117 = scalar_lea.vmem %s630, 11
        %v2118 = vld [vmem:[%s2117] sm:$0x1]
        %v2120 = vlaneseq
        %v2121 = vshrl.u32 %v2120, 7
        %v2122 = vsub.s32 0, %v2121
        %v2123 = vrot.slane %v2118, %v2122
        %v2129 = vunpack.c.l.b16 %v1977
        %v2130 = vunpack.c.l.b16 %v1978
        %v2131 = vunpack.c.l.b16 %v1979
        %v2132 = vunpack.c.l.b16 %v1980
        %v2133 = vpack.c.b16 %v2130, %v2129
        %v2134 = vpack.c.b16 %v2132, %v2131
        %2137 = vmatprep.subr.bf16.mxu0 0
        %2138 = vmatpush1.bf16.msra.mxu0 %v2133
        %2139 = vmatprep.subr.bf16.mxu0 0
        %2140 = vmatpush1.bf16.msra.mxu0 %v2134
        %2141 = vmatprep.subr.bf16.mxu0 0
        %2142 = vmatpush1.bf16.msra.mxu0 0
        %2143 = vmatprep.subr.bf16.mxu0 0
        %2144 = vmatpush1.bf16.msra.mxu0 0
        %2145 = vmatprep.subr.bf16.mxu0 0
        %2146 = vmatpush1.bf16.msra.mxu0 0
        %2147 = vmatprep.subr.bf16.mxu0 0
        %2148 = vmatpush1.bf16.msra.mxu0 0
        %2149 = vmatprep.subr.bf16.mxu0 0
        %2150 = vmatpush1.bf16.msra.mxu0 0
        %2151 = vmatprep.subr.bf16.mxu0 0
        %2152 = vmatpush1.bf16.msra.mxu0 0
        %2153 = vmatprep.subr.bf16.mxu0 0
        %2154 = vmatpush1.bf16.msra.mxu0 0
        %2155 = vmatprep.subr.bf16.mxu0 0
        %2156 = vmatpush1.bf16.msra.mxu0 0
        %2157 = vmatprep.subr.bf16.mxu0 0
        %2158 = vmatpush1.bf16.msra.mxu0 0
        %2159 = vmatprep.subr.bf16.mxu0 0
        %2160 = vmatpush1.bf16.msra.mxu0 0
        %2161 = vmatprep.subr.bf16.mxu0 0
        %2162 = vmatpush1.bf16.msra.mxu0 0
        %2163 = vmatprep.subr.bf16.mxu0 0
        %2164 = vmatpush1.bf16.msra.mxu0 0
        %2165 = vmatprep.subr.bf16.mxu0 0
        %2166 = vmatpush1.bf16.msra.mxu0 0
        %2167 = vmatprep.subr.bf16.mxu0 0
        %2168 = vmatpush1.bf16.msra.mxu0 0
        %2169 = vmatprep.mubr.bf16.mxu0 0
        %2170 = vmatmul.mubr.bf16.gmra.mrb[0].mxu0 %v862
        %v2171 = vpop.f32.mrb[0].mxu0
        %v2172 = vadd.f32 %v2123, %v2171
        %v2173 = vpop.f32.mrb[0].mxu0
        %v2174 = vpop.f32.mrb[0].mxu0
        %v2175 = vadd.f32 %v2123, %v2174
        %v2176 = vpop.f32.mrb[0].mxu0
        %2177 = vmatprep.mubr.bf16.mxu0 0
        %2178 = vmatmul.mubr.bf16.gmra.mrb[0].mxu0 %v865
        %v2179 = vpop.f32.mrb[0].mxu0
        %v2180 = vadd.f32 %v2123, %v2179
        %v2181 = vpop.f32.mrb[0].mxu0
        %v2182 = vpop.f32.mrb[0].mxu0
        %v2183 = vpop.f32.mrb[0].mxu0
        %2184 = vdwg.mxu0
        %v2185 = vpack.c.bf16 %v2039, %v2036
        %v2186 = vpack.c.bf16 %v2044, %v2044
        %v2187 = vpack.c.bf16 %v2107, %v2104
        %v2188 = vpack.c.bf16 %v2112, %v2112
        %v2190 = vsel %vm1055, %v2185, 0
        %v2193 = vsel %vm1055, %v2186, 0
        %v2196 = vsel %vm1055, %v2187, 0
        %v2199 = vsel %vm1055, %v2188, 0
        %2201 = vmatprep.subr.bf16.mxu0 0
        %2202 = vmatpush1.bf16.xpose.msra.mxu0 %v2196
        %2203 = vmatprep.subr.bf16.mxu0 0
        %2204 = vmatpush1.bf16.xpose.msra.mxu0 %v2199
        %2205 = vmatprep.subr.bf16.mxu0 0
        %2206 = vmatpush1.bf16.xpose.msra.mxu0 0
        %2207 = vmatprep.subr.bf16.mxu0 0
        %2208 = vmatpush1.bf16.xpose.msra.mxu0 0
        %2209 = vmatprep.subr.bf16.mxu0 0
        %2210 = vmatpush1.bf16.xpose.msra.mxu0 0
        %2211 = vmatprep.subr.bf16.mxu0 0
        %2212 = vmatpush1.bf16.xpose.msra.mxu0 0
        %2213 = vmatprep.subr.bf16.mxu0 0
        %2214 = vmatpush1.bf16.xpose.msra.mxu0 0
        %2215 = vmatprep.subr.bf16.mxu0 0
        %2216 = vmatpush1.bf16.xpose.msra.mxu0 0
        %2217 = vmatprep.subr.bf16.mxu0 0
        %2218 = vmatpush1.bf16.xpose.msra.mxu0 0
        %2219 = vmatprep.subr.bf16.mxu0 0
        %2220 = vmatpush1.bf16.xpose.msra.mxu0 0
        %2221 = vmatprep.subr.bf16.mxu0 0
        %2222 = vmatpush1.bf16.xpose.msra.mxu0 0
        %2223 = vmatprep.subr.bf16.mxu0 0
        %2224 = vmatpush1.bf16.xpose.msra.mxu0 0
        %2225 = vmatprep.subr.bf16.mxu0 0
        %2226 = vmatpush1.bf16.xpose.msra.mxu0 0
        %2227 = vmatprep.subr.bf16.mxu0 0
        %2228 = vmatpush1.bf16.xpose.msra.mxu0 0
        %2229 = vmatprep.subr.bf16.mxu0 0
        %2230 = vmatpush1.bf16.xpose.msra.mxu0 0
        %2231 = vmatprep.subr.bf16.mxu0 0
        %2232 = vmatpush1.bf16.xpose.msra.mxu0 0
        %2233 = vmatprep.mubr.bf16.mxu0 0
        %2234 = vmatmul.mubr.bf16.gmra.mrb[0].mxu0 %v2190
        %v2235 = vpop.f32.mrb[0].mxu0
        %v2236 = vadd.f32 0.0, %v2235
        %v2237 = vpop.f32.mrb[0].mxu0
        %v2238 = vpop.f32.mrb[0].mxu0
        %v2239 = vadd.f32 0.0, %v2238
        %v2240 = vpop.f32.mrb[0].mxu0
        %2241 = vmatprep.mubr.bf16.mxu0 0
        %2242 = vmatmul.mubr.bf16.gmra.mrb[0].mxu0 %v2193
        %v2243 = vpop.f32.mrb[0].mxu0
        %v2244 = vadd.f32 0.0, %v2243
        %v2245 = vpop.f32.mrb[0].mxu0
        %v2246 = vpop.f32.mrb[0].mxu0
        %v2247 = vpop.f32.mrb[0].mxu0
        %2248 = vdwg.mxu0
        %v2249 = vsel %vm1116, %v2236, -inf
        %2250 = vmax.xlane.f32.xlu0 %v2249
        %v2251 = vpop.xlane.xlu0 %2250
        %v2252 = vsel %vm1116, %v2239, -inf
        %2253 = vmax.xlane.f32.xlu0 %v2252
        %v2254 = vpop.xlane.xlu0 %2253
        %v2255 = vsel %vm1116, %v2244, -inf
        %2256 = vmax.xlane.f32.xlu0 %v2255
        %v2257 = vpop.xlane.xlu0 %2256
        %v2258 = vsub.f32 %v2236, %v2251
        %v2259 = vsub.f32 %v2239, %v2254
        %v2260 = vsub.f32 %v2244, %v2257
        %v2261 = vmul.f32 %v2258, 1.442695
        %v2262 = vpow.pop %v2261
        %v2263 = vmul.f32 %v2259, 1.442695
        %v2264 = vpow.pop %v2263
        %v2265 = vmul.f32 %v2260, 1.442695
        %v2266 = vpow.pop %v2265
        %v2267 = vsel %vm1116, %v2262, 0.0
        %2268 = vadd.xlane.f32.xlu0 %v2267
        %v2269 = vpop.xlane.xlu0 %2268
        %v2270 = vsel %vm1116, %v2264, 0.0
        %2271 = vadd.xlane.f32.xlu0 %v2270
        %v2272 = vpop.xlane.xlu0 %2271
        %v2273 = vsel %vm1116, %v2266, 0.0
        %2274 = vadd.xlane.f32.xlu0 %v2273
        %v2275 = vpop.xlane.xlu0 %2274
        %v2276 = vrcp.pop %v2269
        %v2277 = vrcp.pop %v2272
        %v2278 = vrcp.pop %v2275
        %v2279 = vmul.f32 %v2262, %v2276
        %v2280 = vmul.f32 %v2264, %v2277
        %v2281 = vmul.f32 %v2266, %v2278
        %v2282 = vpack.c.bf16 %v2280, %v2279
        %v2283 = vpack.c.bf16 %v2281, %v2281
        %v2284 = vpack.c.bf16 %v2175, %v2172
        %v2285 = vpack.c.bf16 %v2180, %v2180
        %v2287 = vsel %vm1116, %v2282, 0
        %v2290 = vsel %vm1116, %v2283, 0
        %v2293 = vsel %vm1160, %v2285, 0
        %2295 = vmatprep.subr.bf16.mxu0 0
        %2296 = vmatpush1.bf16.msra.mxu0 %v2284
        %2297 = vmatprep.subr.bf16.mxu0 0
        %2298 = vmatpush1.bf16.msra.mxu0 %v2293
        %2299 = vmatprep.subr.bf16.mxu0 0
        %2300 = vmatpush1.bf16.msra.mxu0 0
        %2301 = vmatprep.subr.bf16.mxu0 0
        %2302 = vmatpush1.bf16.msra.mxu0 0
        %2303 = vmatprep.subr.bf16.mxu0 0
        %2304 = vmatpush1.bf16.msra.mxu0 0
        %2305 = vmatprep.subr.bf16.mxu0 0
        %2306 = vmatpush1.bf16.msra.mxu0 0
        %2307 = vmatprep.subr.bf16.mxu0 0
        %2308 = vmatpush1.bf16.msra.mxu0 0
        %2309 = vmatprep.subr.bf16.mxu0 0
        %2310 = vmatpush1.bf16.msra.mxu0 0
        %2311 = vmatprep.subr.bf16.mxu0 0
        %2312 = vmatpush1.bf16.msra.mxu0 0
        %2313 = vmatprep.subr.bf16.mxu0 0
        %2314 = vmatpush1.bf16.msra.mxu0 0
        %2315 = vmatprep.subr.bf16.mxu0 0
        %2316 = vmatpush1.bf16.msra.mxu0 0
        %2317 = vmatprep.subr.bf16.mxu0 0
        %2318 = vmatpush1.bf16.msra.mxu0 0
        %2319 = vmatprep.subr.bf16.mxu0 0
        %2320 = vmatpush1.bf16.msra.mxu0 0
        %2321 = vmatprep.subr.bf16.mxu0 0
        %2322 = vmatpush1.bf16.msra.mxu0 0
        %2323 = vmatprep.subr.bf16.mxu0 0
        %2324 = vmatpush1.bf16.msra.mxu0 0
        %2325 = vmatprep.subr.bf16.mxu0 0
        %2326 = vmatpush1.bf16.msra.mxu0 0
        %2327 = vmatprep.mubr.bf16.mxu0 0
        %2328 = vmatmul.mubr.bf16.gmra.mrb[0].mxu0 %v2287
        %v2329 = vpop.f32.mrb[0].mxu0
        %v2330 = vadd.f32 0.0, %v2329
        %v2331 = vpop.f32.mrb[0].mxu0
        %v2332 = vpop.f32.mrb[0].mxu0
        %v2333 = vadd.f32 0.0, %v2332
        %v2334 = vpop.f32.mrb[0].mxu0
        %2335 = vmatprep.mubr.bf16.mxu0 0
        %2336 = vmatmul.mubr.bf16.gmra.mrb[0].mxu0 %v2290
        %v2337 = vpop.f32.mrb[0].mxu0
        %v2338 = vadd.f32 0.0, %v2337
        %v2339 = vpop.f32.mrb[0].mxu0
        %v2340 = vpop.f32.mrb[0].mxu0
        %v2341 = vpop.f32.mrb[0].mxu0
        %2342 = vdwg.mxu0
        %2346 = vrot.lane.b32.xlu0 %v1576, 8
        %v2347 = vpop.permute.xlu0 %2346
        %2348 = vrot.lane.b32.xlu0 %v1579, 8
        %v2349 = vpop.permute.xlu0 %2348
        %2350 = vrot.lane.b32.xlu0 %v1584, 8
        %v2351 = vpop.permute.xlu0 %2350
        %2358 = vrot.lane.b32.xlu0 %v1953, 16
        %v2359 = vpop.permute.xlu0 %2358
        %2360 = vrot.lane.b32.xlu0 %v1956, 16
        %v2361 = vpop.permute.xlu0 %2360
        %2362 = vrot.lane.b32.xlu0 %v1961, 16
        %v2363 = vpop.permute.xlu0 %2362
        %2370 = vrot.lane.b32.xlu0 %v2330, 24
        %v2371 = vpop.permute.xlu0 %2370
        %2372 = vrot.lane.b32.xlu0 %v2333, 24
        %v2373 = vpop.permute.xlu0 %2372
        %2374 = vrot.lane.b32.xlu0 %v2338, 24
        %v2375 = vpop.permute.xlu0 %2374
        %v2379 = vsel %vm1055, %v1199, %v2347
        %v2380 = vsel %vm1055, %v1202, %v2349
        %v2381 = vsel %vm1055, %v1207, %v2351
        %vm2382 = vcmask 130048
        %v2383 = vsel %vm2382, %v2379, %v2359
        %v2384 = vsel %vm2382, %v2380, %v2361
        %v2385 = vsel %vm2382, %v2381, %v2363
        %v2386 = vsel %vm1116, %v2383, %v2371
        %v2387 = vsel %vm1116, %v2384, %v2373
        %v2388 = vsel %vm1116, %v2385, %v2375
        %v2389 = vpack.c.bf16 %v2387, %v2386
        %v2390 = vpack.c.bf16 %v2388, %v2388
        %v2391 = vld [vmem:[%s637] sm:$0xf]
        %v2392 = vld [vmem:[%s637 + $0x4] sm:$0xf]
        %v2393 = vld [vmem:[%s637 + $0x8] sm:$0xf]
        %v2394 = vld [vmem:[%s637 + $0xc] sm:$0xf]
        %v2395 = vlaneseq
        %v2396 = vshrl.u32 %v2395, 7
        %v2397 = vsub.s32 6, %v2396
        %v2398 = vrot.slane %v769, %v2397
        %v2403 = vunpack.c.l.b16 %v2391
        %v2404 = vunpack.c.l.b16 %v2392
        %v2405 = vunpack.c.l.b16 %v2393
        %v2406 = vunpack.c.l.b16 %v2394
        %v2407 = vpack.c.b16 %v2404, %v2403
        %v2408 = vpack.c.b16 %v2406, %v2405
        %v2412 = vsel %vm771, %v2389, 0
        %v2415 = vsel %vm771, %v2390, 0
        %2417 = vmatprep.subr.bf16.mxu0 0
        %2418 = vmatpush1.bf16.msra.mxu0 %v2407
        %2419 = vmatprep.subr.bf16.mxu0 0
        %2420 = vmatpush1.bf16.msra.mxu0 %v2408
        %2421 = vmatprep.subr.bf16.mxu0 0
        %2422 = vmatpush1.bf16.msra.mxu0 0
        %2423 = vmatprep.subr.bf16.mxu0 0
        %2424 = vmatpush1.bf16.msra.mxu0 0
        %2425 = vmatprep.subr.bf16.mxu0 0
        %2426 = vmatpush1.bf16.msra.mxu0 0
        %2427 = vmatprep.subr.bf16.mxu0 0
        %2428 = vmatpush1.bf16.msra.mxu0 0
        %2429 = vmatprep.subr.bf16.mxu0 0
        %2430 = vmatpush1.bf16.msra.mxu0 0
        %2431 = vmatprep.subr.bf16.mxu0 0
        %2432 = vmatpush1.bf16.msra.mxu0 0
        %2433 = vmatprep.subr.bf16.mxu0 0
        %2434 = vmatpush1.bf16.msra.mxu0 0
        %2435 = vmatprep.subr.bf16.mxu0 0
        %2436 = vmatpush1.bf16.msra.mxu0 0
        %2437 = vmatprep.subr.bf16.mxu0 0
        %2438 = vmatpush1.bf16.msra.mxu0 0
        %2439 = vmatprep.subr.bf16.mxu0 0
        %2440 = vmatpush1.bf16.msra.mxu0 0
        %2441 = vmatprep.subr.bf16.mxu0 0
        %2442 = vmatpush1.bf16.msra.mxu0 0
        %2443 = vmatprep.subr.bf16.mxu0 0
        %2444 = vmatpush1.bf16.msra.mxu0 0
        %2445 = vmatprep.subr.bf16.mxu0 0
        %2446 = vmatpush1.bf16.msra.mxu0 0
        %2447 = vmatprep.subr.bf16.mxu0 0
        %2448 = vmatpush1.bf16.msra.mxu0 0
        %2449 = vmatprep.mubr.bf16.mxu0 0
        %2450 = vmatmul.mubr.bf16.gmra.mrb[0].mxu0 %v2412
        %v2451 = vpop.f32.mrb[0].mxu0
        %v2452 = vadd.f32 %v2398, %v2451
        %v2453 = vpop.f32.mrb[0].mxu0
        %v2454 = vpop.f32.mrb[0].mxu0
        %v2455 = vadd.f32 %v2398, %v2454
        %v2456 = vpop.f32.mrb[0].mxu0
        %2457 = vmatprep.mubr.bf16.mxu0 0
        %2458 = vmatmul.mubr.bf16.gmra.mrb[0].mxu0 %v2415
        %v2459 = vpop.f32.mrb[0].mxu0
        %v2460 = vadd.f32 %v2398, %v2459
        %v2461 = vpop.f32.mrb[0].mxu0
        %v2462 = vpop.f32.mrb[0].mxu0
        %v2463 = vpop.f32.mrb[0].mxu0
        %2464 = vdwg.mxu0
        %v2465 = vadd.f32 %v764, %v2452
        %v2466 = vadd.f32 %v765, %v2455
        %v2467 = vadd.f32 %v766, %v2460
        %v2468 = vsel %vm771, %v2465, 0.0
        %2469 = vadd.xlane.f32.xlu0 %v2468
        %v2470 = vpop.xlane.xlu0 %2469
        %v2471 = vsel %vm771, %v2466, 0.0
        %2472 = vadd.xlane.f32.xlu0 %v2471
        %v2473 = vpop.xlane.xlu0 %2472
        %v2474 = vsel %vm771, %v2467, 0.0
        %2475 = vadd.xlane.f32.xlu0 %v2474
        %v2476 = vpop.xlane.xlu0 %2475
        %v2477 = vmul.f32 %v2470, %v781
        %v2478 = vmul.f32 %v2473, %v781
        %v2479 = vmul.f32 %v2476, %v781
        %v2480 = vsub.f32 %v2465, %v2477
        %v2481 = vsub.f32 %v2466, %v2478
        %v2482 = vsub.f32 %v2467, %v2479
        %v2483 = vmul.f32 %v2480, %v2480
        %v2484 = vmul.f32 %v2481, %v2481
        %v2485 = vmul.f32 %v2482, %v2482
        %v2486 = vsel %vm771, %v2483, 0.0
        %2487 = vadd.xlane.f32.xlu0 %v2486
        %v2488 = vpop.xlane.xlu0 %2487
        %v2489 = vsel %vm771, %v2484, 0.0
        %2490 = vadd.xlane.f32.xlu0 %v2489
        %v2491 = vpop.xlane.xlu0 %2490
        %v2492 = vsel %vm771, %v2485, 0.0
        %2493 = vadd.xlane.f32.xlu0 %v2492
        %v2494 = vpop.xlane.xlu0 %2493
        %v2495 = vmul.f32 %v2488, %v781
        %v2496 = vmul.f32 %v2491, %v781
        %v2497 = vmul.f32 %v2494, %v781
        %v2498 = vadd.f32 %v2495, 1e-05
        %v2499 = vadd.f32 %v2496, 1e-05
        %v2500 = vadd.f32 %v2497, 1e-05
        %v2501 = vrsqrt.pop %v2498
        %v2502 = vrsqrt.pop %v2499
        %v2503 = vrsqrt.pop %v2500
        %v2504 = vmul.f32 %v2480, %v2501
        %v2505 = vmul.f32 %v2481, %v2502
        %v2506 = vmul.f32 %v2482, %v2503
        %v2507 = vlaneseq
        %v2508 = vshrl.u32 %v2507, 7
        %v2509 = vsub.s32 1, %v2508
        %v2510 = vrot.slane %v769, %v2509
        %v2511 = vmul.f32 %v2504, %v2510
        %v2512 = vmul.f32 %v2505, %v2510
        %v2513 = vmul.f32 %v2506, %v2510
        %v2514 = vlaneseq
        %v2515 = vshrl.u32 %v2514, 7
        %v2516 = vsub.s32 4, %v2515
        %v2517 = vrot.slane %v769, %v2516
        %v2518 = vadd.f32 %v2511, %v2517
        %v2519 = vadd.f32 %v2512, %v2517
        %v2520 = vadd.f32 %v2513, %v2517
        %v2521 = vpack.c.bf16 %v2519, %v2518
        %v2522 = vpack.c.bf16 %v2520, %v2520
        %s2523 = scalar_lea.vmem %s624, 192
        %v2524 = vld [vmem:[%s2523] sm:$0xf]
        %v2525 = vld [vmem:[%s2523 + $0x4] sm:$0xf]
        %v2526 = vld [vmem:[%s2523 + $0x8] sm:$0xf]
        %v2527 = vld [vmem:[%s2523 + $0xc] sm:$0xf]
        %s2528 = scalar_lea.vmem %s624, 256
        %v2529 = vld [vmem:[%s2528] sm:$0xf]
        %v2530 = vld [vmem:[%s2528 + $0x4] sm:$0xf]
        %v2531 = vld [vmem:[%s2528 + $0x8] sm:$0xf]
        %v2532 = vld [vmem:[%s2528 + $0xc] sm:$0xf]
        %s2533 = scalar_lea.vmem %s624, 320
        %v2534 = vld [vmem:[%s2533] sm:$0xf]
        %v2535 = vld [vmem:[%s2533 + $0x4] sm:$0xf]
        %v2536 = vld [vmem:[%s2533 + $0x8] sm:$0xf]
        %v2537 = vld [vmem:[%s2533 + $0xc] sm:$0xf]
        %s2538 = scalar_lea.vmem %s630, 12
        %v2539 = vld [vmem:[%s2538] sm:$0x1]
        %v2541 = vlaneseq
        %v2542 = vshrl.u32 %v2541, 7
        %v2543 = vsub.s32 0, %v2542
        %v2544 = vrot.slane %v2539, %v2543
        %v2550 = vunpack.c.l.b16 %v2524
        %v2551 = vunpack.c.l.b16 %v2525
        %v2552 = vunpack.c.l.b16 %v2526
        %v2553 = vunpack.c.l.b16 %v2527
        %v2554 = vpack.c.b16 %v2551, %v2550
        %v2555 = vpack.c.b16 %v2553, %v2552
        %v2559 = vsel %vm771, %v2521, 0
        %v2562 = vsel %vm771, %v2522, 0
        %2564 = vmatprep.subr.bf16.mxu0 0
        %2565 = vmatpush1.bf16.msra.mxu0 %v2554
        %2566 = vmatprep.subr.bf16.mxu0 0
        %2567 = vmatpush1.bf16.msra.mxu0 %v2555
        %2568 = vmatprep.subr.bf16.mxu0 0
        %2569 = vmatpush1.bf16.msra.mxu0 0
        %2570 = vmatprep.subr.bf16.mxu0 0
        %2571 = vmatpush1.bf16.msra.mxu0 0
        %2572 = vmatprep.subr.bf16.mxu0 0
        %2573 = vmatpush1.bf16.msra.mxu0 0
        %2574 = vmatprep.subr.bf16.mxu0 0
        %2575 = vmatpush1.bf16.msra.mxu0 0
        %2576 = vmatprep.subr.bf16.mxu0 0
        %2577 = vmatpush1.bf16.msra.mxu0 0
        %2578 = vmatprep.subr.bf16.mxu0 0
        %2579 = vmatpush1.bf16.msra.mxu0 0
        %2580 = vmatprep.subr.bf16.mxu0 0
        %2581 = vmatpush1.bf16.msra.mxu0 0
        %2582 = vmatprep.subr.bf16.mxu0 0
        %2583 = vmatpush1.bf16.msra.mxu0 0
        %2584 = vmatprep.subr.bf16.mxu0 0
        %2585 = vmatpush1.bf16.msra.mxu0 0
        %2586 = vmatprep.subr.bf16.mxu0 0
        %2587 = vmatpush1.bf16.msra.mxu0 0
        %2588 = vmatprep.subr.bf16.mxu0 0
        %2589 = vmatpush1.bf16.msra.mxu0 0
        %2590 = vmatprep.subr.bf16.mxu0 0
        %2591 = vmatpush1.bf16.msra.mxu0 0
        %2592 = vmatprep.subr.bf16.mxu0 0
        %2593 = vmatpush1.bf16.msra.mxu0 0
        %2594 = vmatprep.subr.bf16.mxu0 0
        %2595 = vmatpush1.bf16.msra.mxu0 0
        %2596 = vmatprep.mubr.bf16.mxu0 0
        %2597 = vmatmul.mubr.bf16.gmra.mrb[0].mxu0 %v2559
        %v2598 = vpop.f32.mrb[0].mxu0
        %v2599 = vadd.f32 %v2544, %v2598
        %v2600 = vpop.f32.mrb[0].mxu0
        %v2601 = vpop.f32.mrb[0].mxu0
        %v2602 = vadd.f32 %v2544, %v2601
        %v2603 = vpop.f32.mrb[0].mxu0
        %2604 = vmatprep.mubr.bf16.mxu0 0
        %2605 = vmatmul.mubr.bf16.gmra.mrb[0].mxu0 %v2562
        %v2606 = vpop.f32.mrb[0].mxu0
        %v2607 = vadd.f32 %v2544, %v2606
        %v2608 = vpop.f32.mrb[0].mxu0
        %v2609 = vpop.f32.mrb[0].mxu0
        %v2610 = vpop.f32.mrb[0].mxu0
        %2611 = vdwg.mxu0
        %s2612 = scalar_lea.vmem %s630, 16
        %v2613 = vld [vmem:[%s2612] sm:$0x1]
        %v2615 = vlaneseq
        %v2616 = vshrl.u32 %v2615, 7
        %v2617 = vsub.s32 0, %v2616
        %v2618 = vrot.slane %v2613, %v2617
        %v2624 = vunpack.c.l.b16 %v2529
        %v2625 = vunpack.c.l.b16 %v2530
        %v2626 = vunpack.c.l.b16 %v2531
        %v2627 = vunpack.c.l.b16 %v2532
        %v2628 = vpack.c.b16 %v2625, %v2624
        %v2629 = vpack.c.b16 %v2627, %v2626
        %v2633 = vsel %vm771, %v767, 0
        %v2636 = vsel %vm771, %v768, 0
        %2638 = vmatprep.subr.bf16.mxu0 0
        %2639 = vmatpush1.bf16.msra.mxu0 %v2628
        %2640 = vmatprep.subr.bf16.mxu0 0
        %2641 = vmatpush1.bf16.msra.mxu0 %v2629
        %2642 = vmatprep.subr.bf16.mxu0 0
        %2643 = vmatpush1.bf16.msra.mxu0 0
        %2644 = vmatprep.subr.bf16.mxu0 0
        %2645 = vmatpush1.bf16.msra.mxu0 0
        %2646 = vmatprep.subr.bf16.mxu0 0
        %2647 = vmatpush1.bf16.msra.mxu0 0
        %2648 = vmatprep.subr.bf16.mxu0 0
        %2649 = vmatpush1.bf16.msra.mxu0 0
        %2650 = vmatprep.subr.bf16.mxu0 0
        %2651 = vmatpush1.bf16.msra.mxu0 0
        %2652 = vmatprep.subr.bf16.mxu0 0
        %2653 = vmatpush1.bf16.msra.mxu0 0
        %2654 = vmatprep.subr.bf16.mxu0 0
        %2655 = vmatpush1.bf16.msra.mxu0 0
        %2656 = vmatprep.subr.bf16.mxu0 0
        %2657 = vmatpush1.bf16.msra.mxu0 0
        %2658 = vmatprep.subr.bf16.mxu0 0
        %2659 = vmatpush1.bf16.msra.mxu0 0
        %2660 = vmatprep.subr.bf16.mxu0 0
        %2661 = vmatpush1.bf16.msra.mxu0 0
        %2662 = vmatprep.subr.bf16.mxu0 0
        %2663 = vmatpush1.bf16.msra.mxu0 0
        %2664 = vmatprep.subr.bf16.mxu0 0
        %2665 = vmatpush1.bf16.msra.mxu0 0
        %2666 = vmatprep.subr.bf16.mxu0 0
        %2667 = vmatpush1.bf16.msra.mxu0 0
        %2668 = vmatprep.subr.bf16.mxu0 0
        %2669 = vmatpush1.bf16.msra.mxu0 0
        %2670 = vmatprep.mubr.bf16.mxu0 0
        %2671 = vmatmul.mubr.bf16.gmra.mrb[0].mxu0 %v2633
        %v2672 = vpop.f32.mrb[0].mxu0
        %v2673 = vadd.f32 %v2618, %v2672
        %v2674 = vpop.f32.mrb[0].mxu0
        %v2675 = vpop.f32.mrb[0].mxu0
        %v2676 = vadd.f32 %v2618, %v2675
        %v2677 = vpop.f32.mrb[0].mxu0
        %2678 = vmatprep.mubr.bf16.mxu0 0
        %2679 = vmatmul.mubr.bf16.gmra.mrb[0].mxu0 %v2636
        %v2680 = vpop.f32.mrb[0].mxu0
        %v2681 = vadd.f32 %v2618, %v2680
        %v2682 = vpop.f32.mrb[0].mxu0
        %v2683 = vpop.f32.mrb[0].mxu0
        %v2684 = vadd.f32 %v2618, %v2683
        %v2685 = vpop.f32.mrb[0].mxu0
        %2686 = vdwg.mxu0
        %s2687 = scalar_lea.vmem %s630, 20
        %v2688 = vld [vmem:[%s2687] sm:$0x1]
        %v2690 = vlaneseq
        %v2691 = vshrl.u32 %v2690, 7
        %v2692 = vsub.s32 0, %v2691
        %v2693 = vrot.slane %v2688, %v2692
        %v2699 = vunpack.c.l.b16 %v2534
        %v2700 = vunpack.c.l.b16 %v2535
        %v2701 = vunpack.c.l.b16 %v2536
        %v2702 = vunpack.c.l.b16 %v2537
        %v2703 = vpack.c.b16 %v2700, %v2699
        %v2704 = vpack.c.b16 %v2702, %v2701
        %2707 = vmatprep.subr.bf16.mxu0 0
        %2708 = vmatpush1.bf16.msra.mxu0 %v2703
        %2709 = vmatprep.subr.bf16.mxu0 0
        %2710 = vmatpush1.bf16.msra.mxu0 %v2704
        %2711 = vmatprep.subr.bf16.mxu0 0
        %2712 = vmatpush1.bf16.msra.mxu0 0
        %2713 = vmatprep.subr.bf16.mxu0 0
        %2714 = vmatpush1.bf16.msra.mxu0 0
        %2715 = vmatprep.subr.bf16.mxu0 0
        %2716 = vmatpush1.bf16.msra.mxu0 0
        %2717 = vmatprep.subr.bf16.mxu0 0
        %2718 = vmatpush1.bf16.msra.mxu0 0
        %2719 = vmatprep.subr.bf16.mxu0 0
        %2720 = vmatpush1.bf16.msra.mxu0 0
        %2721 = vmatprep.subr.bf16.mxu0 0
        %2722 = vmatpush1.bf16.msra.mxu0 0
        %2723 = vmatprep.subr.bf16.mxu0 0
        %2724 = vmatpush1.bf16.msra.mxu0 0
        %2725 = vmatprep.subr.bf16.mxu0 0
        %2726 = vmatpush1.bf16.msra.mxu0 0
        %2727 = vmatprep.subr.bf16.mxu0 0
        %2728 = vmatpush1.bf16.msra.mxu0 0
        %2729 = vmatprep.subr.bf16.mxu0 0
        %2730 = vmatpush1.bf16.msra.mxu0 0
        %2731 = vmatprep.subr.bf16.mxu0 0
        %2732 = vmatpush1.bf16.msra.mxu0 0
        %2733 = vmatprep.subr.bf16.mxu0 0
        %2734 = vmatpush1.bf16.msra.mxu0 0
        %2735 = vmatprep.subr.bf16.mxu0 0
        %2736 = vmatpush1.bf16.msra.mxu0 0
        %2737 = vmatprep.subr.bf16.mxu0 0
        %2738 = vmatpush1.bf16.msra.mxu0 0
        %2739 = vmatprep.mubr.bf16.mxu0 0
        %2740 = vmatmul.mubr.bf16.gmra.mrb[0].mxu0 %v2633
        %v2741 = vpop.f32.mrb[0].mxu0
        %v2742 = vadd.f32 %v2693, %v2741
        %v2743 = vpop.f32.mrb[0].mxu0
        %v2744 = vpop.f32.mrb[0].mxu0
        %v2745 = vadd.f32 %v2693, %v2744
        %v2746 = vpop.f32.mrb[0].mxu0
        %2747 = vmatprep.mubr.bf16.mxu0 0
        %2748 = vmatmul.mubr.bf16.gmra.mrb[0].mxu0 %v2636
        %v2749 = vpop.f32.mrb[0].mxu0
        %v2750 = vadd.f32 %v2693, %v2749
        %v2751 = vpop.f32.mrb[0].mxu0
        %v2752 = vpop.f32.mrb[0].mxu0
        %v2753 = vadd.f32 %v2693, %v2752
        %v2754 = vpop.f32.mrb[0].mxu0
        %2755 = vdwg.mxu0
        %v2756 = vpack.c.bf16 %v2602, %v2599
        %v2757 = vpack.c.bf16 %v2607, %v2607
        %v2758 = vpack.c.bf16 %v2676, %v2673
        %v2759 = vpack.c.bf16 %v2684, %v2681
        %v2761 = vsel %vm1055, %v2756, 0
        %v2764 = vsel %vm1055, %v2757, 0
        %v2767 = vsel %vm1055, %v2758, 0
        %v2770 = vsel %vm1055, %v2759, 0
        %2772 = vmatprep.subr.bf16.mxu0 0
        %2773 = vmatpush1.bf16.xpose.msra.mxu0 %v2767
        %2774 = vmatprep.subr.bf16.mxu0 0
        %2775 = vmatpush1.bf16.xpose.msra.mxu0 %v2770
        %2776 = vmatprep.subr.bf16.mxu0 0
        %2777 = vmatpush1.bf16.xpose.msra.mxu0 0
        %2778 = vmatprep.subr.bf16.mxu0 0
        %2779 = vmatpush1.bf16.xpose.msra.mxu0 0
        %2780 = vmatprep.subr.bf16.mxu0 0
        %2781 = vmatpush1.bf16.xpose.msra.mxu0 0
        %2782 = vmatprep.subr.bf16.mxu0 0
        %2783 = vmatpush1.bf16.xpose.msra.mxu0 0
        %2784 = vmatprep.subr.bf16.mxu0 0
        %2785 = vmatpush1.bf16.xpose.msra.mxu0 0
        %2786 = vmatprep.subr.bf16.mxu0 0
        %2787 = vmatpush1.bf16.xpose.msra.mxu0 0
        %2788 = vmatprep.subr.bf16.mxu0 0
        %2789 = vmatpush1.bf16.xpose.msra.mxu0 0
        %2790 = vmatprep.subr.bf16.mxu0 0
        %2791 = vmatpush1.bf16.xpose.msra.mxu0 0
        %2792 = vmatprep.subr.bf16.mxu0 0
        %2793 = vmatpush1.bf16.xpose.msra.mxu0 0
        %2794 = vmatprep.subr.bf16.mxu0 0
        %2795 = vmatpush1.bf16.xpose.msra.mxu0 0
        %2796 = vmatprep.subr.bf16.mxu0 0
        %2797 = vmatpush1.bf16.xpose.msra.mxu0 0
        %2798 = vmatprep.subr.bf16.mxu0 0
        %2799 = vmatpush1.bf16.xpose.msra.mxu0 0
        %2800 = vmatprep.subr.bf16.mxu0 0
        %2801 = vmatpush1.bf16.xpose.msra.mxu0 0
        %2802 = vmatprep.subr.bf16.mxu0 0
        %2803 = vmatpush1.bf16.xpose.msra.mxu0 0
        %2804 = vmatprep.mubr.bf16.mxu0 0
        %2805 = vmatmul.mubr.bf16.gmra.mrb[0].mxu0 %v2761
        %v2806 = vpop.f32.mrb[0].mxu0
        %v2807 = vadd.f32 0.0, %v2806
        %v2808 = vpop.f32.mrb[0].mxu0
        %v2809 = vpop.f32.mrb[0].mxu0
        %v2810 = vadd.f32 0.0, %v2809
        %v2811 = vpop.f32.mrb[0].mxu0
        %2812 = vmatprep.mubr.bf16.mxu0 0
        %2813 = vmatmul.mubr.bf16.gmra.mrb[0].mxu0 %v2764
        %v2814 = vpop.f32.mrb[0].mxu0
        %v2815 = vadd.f32 0.0, %v2814
        %v2816 = vpop.f32.mrb[0].mxu0
        %v2817 = vpop.f32.mrb[0].mxu0
        %v2818 = vpop.f32.mrb[0].mxu0
        %2819 = vdwg.mxu0
        %v2820 = vsel %vm771, %v2807, -inf
        %2821 = vmax.xlane.f32.xlu0 %v2820
        %v2822 = vpop.xlane.xlu0 %2821
        %v2823 = vsel %vm771, %v2810, -inf
        %2824 = vmax.xlane.f32.xlu0 %v2823
        %v2825 = vpop.xlane.xlu0 %2824
        %v2826 = vsel %vm771, %v2815, -inf
        %2827 = vmax.xlane.f32.xlu0 %v2826
        %v2828 = vpop.xlane.xlu0 %2827
        %v2829 = vsub.f32 %v2807, %v2822
        %v2830 = vsub.f32 %v2810, %v2825
        %v2831 = vsub.f32 %v2815, %v2828
        %v2832 = vmul.f32 %v2829, 1.442695
        %v2833 = vpow.pop %v2832
        %v2834 = vmul.f32 %v2830, 1.442695
        %v2835 = vpow.pop %v2834
        %v2836 = vmul.f32 %v2831, 1.442695
        %v2837 = vpow.pop %v2836
        %v2838 = vsel %vm771, %v2833, 0.0
        %2839 = vadd.xlane.f32.xlu0 %v2838
        %v2840 = vpop.xlane.xlu0 %2839
        %v2841 = vsel %vm771, %v2835, 0.0
        %2842 = vadd.xlane.f32.xlu0 %v2841
        %v2843 = vpop.xlane.xlu0 %2842
        %v2844 = vsel %vm771, %v2837, 0.0
        %2845 = vadd.xlane.f32.xlu0 %v2844
        %v2846 = vpop.xlane.xlu0 %2845
        %v2847 = vrcp.pop %v2840
        %v2848 = vrcp.pop %v2843
        %v2849 = vrcp.pop %v2846
        %v2850 = vmul.f32 %v2833, %v2847
        %v2851 = vmul.f32 %v2835, %v2848
        %v2852 = vmul.f32 %v2837, %v2849
        %v2853 = vpack.c.bf16 %v2851, %v2850
        %v2854 = vpack.c.bf16 %v2852, %v2852
        %v2855 = vpack.c.bf16 %v2745, %v2742
        %v2856 = vpack.c.bf16 %v2753, %v2750
        %v2858 = vsel %vm771, %v2853, 0
        %v2861 = vsel %vm771, %v2854, 0
        %2863 = vmatprep.subr.bf16.mxu0 0
        %2864 = vmatpush1.bf16.msra.mxu0 %v2855
        %2865 = vmatprep.subr.bf16.mxu0 0
        %2866 = vmatpush1.bf16.msra.mxu0 %v2856
        %2867 = vmatprep.subr.bf16.mxu0 0
        %2868 = vmatpush1.bf16.msra.mxu0 0
        %2869 = vmatprep.subr.bf16.mxu0 0
        %2870 = vmatpush1.bf16.msra.mxu0 0
        %2871 = vmatprep.subr.bf16.mxu0 0
        %2872 = vmatpush1.bf16.msra.mxu0 0
        %2873 = vmatprep.subr.bf16.mxu0 0
        %2874 = vmatpush1.bf16.msra.mxu0 0
        %2875 = vmatprep.subr.bf16.mxu0 0
        %2876 = vmatpush1.bf16.msra.mxu0 0
        %2877 = vmatprep.subr.bf16.mxu0 0
        %2878 = vmatpush1.bf16.msra.mxu0 0
        %2879 = vmatprep.subr.bf16.mxu0 0
        %2880 = vmatpush1.bf16.msra.mxu0 0
        %2881 = vmatprep.subr.bf16.mxu0 0
        %2882 = vmatpush1.bf16.msra.mxu0 0
        %2883 = vmatprep.subr.bf16.mxu0 0
        %2884 = vmatpush1.bf16.msra.mxu0 0
        %2885 = vmatprep.subr.bf16.mxu0 0
        %2886 = vmatpush1.bf16.msra.mxu0 0
        %2887 = vmatprep.subr.bf16.mxu0 0
        %2888 = vmatpush1.bf16.msra.mxu0 0
        %2889 = vmatprep.subr.bf16.mxu0 0
        %2890 = vmatpush1.bf16.msra.mxu0 0
        %2891 = vmatprep.subr.bf16.mxu0 0
        %2892 = vmatpush1.bf16.msra.mxu0 0
        %2893 = vmatprep.subr.bf16.mxu0 0
        %2894 = vmatpush1.bf16.msra.mxu0 0
        %2895 = vmatprep.mubr.bf16.mxu0 0
        %2896 = vmatmul.mubr.bf16.gmra.mrb[0].mxu0 %v2858
        %v2897 = vpop.f32.mrb[0].mxu0
        %v2898 = vadd.f32 0.0, %v2897
        %v2899 = vpop.f32.mrb[0].mxu0
        %v2900 = vpop.f32.mrb[0].mxu0
        %v2901 = vadd.f32 0.0, %v2900
        %v2902 = vpop.f32.mrb[0].mxu0
        %2903 = vmatprep.mubr.bf16.mxu0 0
        %2904 = vmatmul.mubr.bf16.gmra.mrb[0].mxu0 %v2861
        %v2905 = vpop.f32.mrb[0].mxu0
        %v2906 = vadd.f32 0.0, %v2905
        %v2907 = vpop.f32.mrb[0].mxu0
        %v2908 = vpop.f32.mrb[0].mxu0
        %v2909 = vpop.f32.mrb[0].mxu0
        %2910 = vdwg.mxu0
        %s2911 = scalar_lea.vmem %s624, 208
        %v2912 = vld [vmem:[%s2911] sm:$0xf]
        %v2913 = vld [vmem:[%s2911 + $0x4] sm:$0xf]
        %v2914 = vld [vmem:[%s2911 + $0x8] sm:$0xf]
        %v2915 = vld [vmem:[%s2911 + $0xc] sm:$0xf]
        %s2916 = scalar_lea.vmem %s624, 272
        %v2917 = vld [vmem:[%s2916] sm:$0xf]
        %v2918 = vld [vmem:[%s2916 + $0x4] sm:$0xf]
        %v2919 = vld [vmem:[%s2916 + $0x8] sm:$0xf]
        %v2920 = vld [vmem:[%s2916 + $0xc] sm:$0xf]
        %s2921 = scalar_lea.vmem %s624, 336
        %v2922 = vld [vmem:[%s2921] sm:$0xf]
        %v2923 = vld [vmem:[%s2921 + $0x4] sm:$0xf]
        %v2924 = vld [vmem:[%s2921 + $0x8] sm:$0xf]
        %v2925 = vld [vmem:[%s2921 + $0xc] sm:$0xf]
        %s2926 = scalar_lea.vmem %s630, 13
        %v2927 = vld [vmem:[%s2926] sm:$0x1]
        %v2929 = vlaneseq
        %v2930 = vshrl.u32 %v2929, 7
        %v2931 = vsub.s32 0, %v2930
        %v2932 = vrot.slane %v2927, %v2931
        %v2938 = vunpack.c.l.b16 %v2912
        %v2939 = vunpack.c.l.b16 %v2913
        %v2940 = vunpack.c.l.b16 %v2914
        %v2941 = vunpack.c.l.b16 %v2915
        %v2942 = vpack.c.b16 %v2939, %v2938
        %v2943 = vpack.c.b16 %v2941, %v2940
        %2946 = vmatprep.subr.bf16.mxu0 0
        %2947 = vmatpush1.bf16.msra.mxu0 %v2942
        %2948 = vmatprep.subr.bf16.mxu0 0
        %2949 = vmatpush1.bf16.msra.mxu0 %v2943
        %2950 = vmatprep.subr.bf16.mxu0 0
        %2951 = vmatpush1.bf16.msra.mxu0 0
        %2952 = vmatprep.subr.bf16.mxu0 0
        %2953 = vmatpush1.bf16.msra.mxu0 0
        %2954 = vmatprep.subr.bf16.mxu0 0
        %2955 = vmatpush1.bf16.msra.mxu0 0
        %2956 = vmatprep.subr.bf16.mxu0 0
        %2957 = vmatpush1.bf16.msra.mxu0 0
        %2958 = vmatprep.subr.bf16.mxu0 0
        %2959 = vmatpush1.bf16.msra.mxu0 0
        %2960 = vmatprep.subr.bf16.mxu0 0
        %2961 = vmatpush1.bf16.msra.mxu0 0
        %2962 = vmatprep.subr.bf16.mxu0 0
        %2963 = vmatpush1.bf16.msra.mxu0 0
        %2964 = vmatprep.subr.bf16.mxu0 0
        %2965 = vmatpush1.bf16.msra.mxu0 0
        %2966 = vmatprep.subr.bf16.mxu0 0
        %2967 = vmatpush1.bf16.msra.mxu0 0
        %2968 = vmatprep.subr.bf16.mxu0 0
        %2969 = vmatpush1.bf16.msra.mxu0 0
        %2970 = vmatprep.subr.bf16.mxu0 0
        %2971 = vmatpush1.bf16.msra.mxu0 0
        %2972 = vmatprep.subr.bf16.mxu0 0
        %2973 = vmatpush1.bf16.msra.mxu0 0
        %2974 = vmatprep.subr.bf16.mxu0 0
        %2975 = vmatpush1.bf16.msra.mxu0 0
        %2976 = vmatprep.subr.bf16.mxu0 0
        %2977 = vmatpush1.bf16.msra.mxu0 0
        %2978 = vmatprep.mubr.bf16.mxu0 0
        %2979 = vmatmul.mubr.bf16.gmra.mrb[0].mxu0 %v2559
        %v2980 = vpop.f32.mrb[0].mxu0
        %v2981 = vadd.f32 %v2932, %v2980
        %v2982 = vpop.f32.mrb[0].mxu0
        %v2983 = vpop.f32.mrb[0].mxu0
        %v2984 = vadd.f32 %v2932, %v2983
        %v2985 = vpop.f32.mrb[0].mxu0
        %2986 = vmatprep.mubr.bf16.mxu0 0
        %2987 = vmatmul.mubr.bf16.gmra.mrb[0].mxu0 %v2562
        %v2988 = vpop.f32.mrb[0].mxu0
        %v2989 = vadd.f32 %v2932, %v2988
        %v2990 = vpop.f32.mrb[0].mxu0
        %v2991 = vpop.f32.mrb[0].mxu0
        %v2992 = vpop.f32.mrb[0].mxu0
        %2993 = vdwg.mxu0
        %s2994 = scalar_lea.vmem %s630, 17
        %v2995 = vld [vmem:[%s2994] sm:$0x1]
        %v2997 = vlaneseq
        %v2998 = vshrl.u32 %v2997, 7
        %v2999 = vsub.s32 0, %v2998
        %v3000 = vrot.slane %v2995, %v2999
        %v3006 = vunpack.c.l.b16 %v2917
        %v3007 = vunpack.c.l.b16 %v2918
        %v3008 = vunpack.c.l.b16 %v2919
        %v3009 = vunpack.c.l.b16 %v2920
        %v3010 = vpack.c.b16 %v3007, %v3006
        %v3011 = vpack.c.b16 %v3009, %v3008
        %3014 = vmatprep.subr.bf16.mxu0 0
        %3015 = vmatpush1.bf16.msra.mxu0 %v3010
        %3016 = vmatprep.subr.bf16.mxu0 0
        %3017 = vmatpush1.bf16.msra.mxu0 %v3011
        %3018 = vmatprep.subr.bf16.mxu0 0
        %3019 = vmatpush1.bf16.msra.mxu0 0
        %3020 = vmatprep.subr.bf16.mxu0 0
        %3021 = vmatpush1.bf16.msra.mxu0 0
        %3022 = vmatprep.subr.bf16.mxu0 0
        %3023 = vmatpush1.bf16.msra.mxu0 0
        %3024 = vmatprep.subr.bf16.mxu0 0
        %3025 = vmatpush1.bf16.msra.mxu0 0
        %3026 = vmatprep.subr.bf16.mxu0 0
        %3027 = vmatpush1.bf16.msra.mxu0 0
        %3028 = vmatprep.subr.bf16.mxu0 0
        %3029 = vmatpush1.bf16.msra.mxu0 0
        %3030 = vmatprep.subr.bf16.mxu0 0
        %3031 = vmatpush1.bf16.msra.mxu0 0
        %3032 = vmatprep.subr.bf16.mxu0 0
        %3033 = vmatpush1.bf16.msra.mxu0 0
        %3034 = vmatprep.subr.bf16.mxu0 0
        %3035 = vmatpush1.bf16.msra.mxu0 0
        %3036 = vmatprep.subr.bf16.mxu0 0
        %3037 = vmatpush1.bf16.msra.mxu0 0
        %3038 = vmatprep.subr.bf16.mxu0 0
        %3039 = vmatpush1.bf16.msra.mxu0 0
        %3040 = vmatprep.subr.bf16.mxu0 0
        %3041 = vmatpush1.bf16.msra.mxu0 0
        %3042 = vmatprep.subr.bf16.mxu0 0
        %3043 = vmatpush1.bf16.msra.mxu0 0
        %3044 = vmatprep.subr.bf16.mxu0 0
        %3045 = vmatpush1.bf16.msra.mxu0 0
        %3046 = vmatprep.mubr.bf16.mxu0 0
        %3047 = vmatmul.mubr.bf16.gmra.mrb[0].mxu0 %v2633
        %v3048 = vpop.f32.mrb[0].mxu0
        %v3049 = vadd.f32 %v3000, %v3048
        %v3050 = vpop.f32.mrb[0].mxu0
        %v3051 = vpop.f32.mrb[0].mxu0
        %v3052 = vadd.f32 %v3000, %v3051
        %v3053 = vpop.f32.mrb[0].mxu0
        %3054 = vmatprep.mubr.bf16.mxu0 0
        %3055 = vmatmul.mubr.bf16.gmra.mrb[0].mxu0 %v2636
        %v3056 = vpop.f32.mrb[0].mxu0
        %v3057 = vadd.f32 %v3000, %v3056
        %v3058 = vpop.f32.mrb[0].mxu0
        %v3059 = vpop.f32.mrb[0].mxu0
        %v3060 = vadd.f32 %v3000, %v3059
        %v3061 = vpop.f32.mrb[0].mxu0
        %3062 = vdwg.mxu0
        %s3063 = scalar_lea.vmem %s630, 21
        %v3064 = vld [vmem:[%s3063] sm:$0x1]
        %v3066 = vlaneseq
        %v3067 = vshrl.u32 %v3066, 7
        %v3068 = vsub.s32 0, %v3067
        %v3069 = vrot.slane %v3064, %v3068
        %v3075 = vunpack.c.l.b16 %v2922
        %v3076 = vunpack.c.l.b16 %v2923
        %v3077 = vunpack.c.l.b16 %v2924
        %v3078 = vunpack.c.l.b16 %v2925
        %v3079 = vpack.c.b16 %v3076, %v3075
        %v3080 = vpack.c.b16 %v3078, %v3077
        %3083 = vmatprep.subr.bf16.mxu0 0
        %3084 = vmatpush1.bf16.msra.mxu0 %v3079
        %3085 = vmatprep.subr.bf16.mxu0 0
        %3086 = vmatpush1.bf16.msra.mxu0 %v3080
        %3087 = vmatprep.subr.bf16.mxu0 0
        %3088 = vmatpush1.bf16.msra.mxu0 0
        %3089 = vmatprep.subr.bf16.mxu0 0
        %3090 = vmatpush1.bf16.msra.mxu0 0
        %3091 = vmatprep.subr.bf16.mxu0 0
        %3092 = vmatpush1.bf16.msra.mxu0 0
        %3093 = vmatprep.subr.bf16.mxu0 0
        %3094 = vmatpush1.bf16.msra.mxu0 0
        %3095 = vmatprep.subr.bf16.mxu0 0
        %3096 = vmatpush1.bf16.msra.mxu0 0
        %3097 = vmatprep.subr.bf16.mxu0 0
        %3098 = vmatpush1.bf16.msra.mxu0 0
        %3099 = vmatprep.subr.bf16.mxu0 0
        %3100 = vmatpush1.bf16.msra.mxu0 0
        %3101 = vmatprep.subr.bf16.mxu0 0
        %3102 = vmatpush1.bf16.msra.mxu0 0
        %3103 = vmatprep.subr.bf16.mxu0 0
        %3104 = vmatpush1.bf16.msra.mxu0 0
        %3105 = vmatprep.subr.bf16.mxu0 0
        %3106 = vmatpush1.bf16.msra.mxu0 0
        %3107 = vmatprep.subr.bf16.mxu0 0
        %3108 = vmatpush1.bf16.msra.mxu0 0
        %3109 = vmatprep.subr.bf16.mxu0 0
        %3110 = vmatpush1.bf16.msra.mxu0 0
        %3111 = vmatprep.subr.bf16.mxu0 0
        %3112 = vmatpush1.bf16.msra.mxu0 0
        %3113 = vmatprep.subr.bf16.mxu0 0
        %3114 = vmatpush1.bf16.msra.mxu0 0
        %3115 = vmatprep.mubr.bf16.mxu0 0
        %3116 = vmatmul.mubr.bf16.gmra.mrb[0].mxu0 %v2633
        %v3117 = vpop.f32.mrb[0].mxu0
        %v3118 = vadd.f32 %v3069, %v3117
        %v3119 = vpop.f32.mrb[0].mxu0
        %v3120 = vpop.f32.mrb[0].mxu0
        %v3121 = vadd.f32 %v3069, %v3120
        %v3122 = vpop.f32.mrb[0].mxu0
        %3123 = vmatprep.mubr.bf16.mxu0 0
        %3124 = vmatmul.mubr.bf16.gmra.mrb[0].mxu0 %v2636
        %v3125 = vpop.f32.mrb[0].mxu0
        %v3126 = vadd.f32 %v3069, %v3125
        %v3127 = vpop.f32.mrb[0].mxu0
        %v3128 = vpop.f32.mrb[0].mxu0
        %v3129 = vadd.f32 %v3069, %v3128
        %v3130 = vpop.f32.mrb[0].mxu0
        %3131 = vdwg.mxu0
        %v3132 = vpack.c.bf16 %v2984, %v2981
        %v3133 = vpack.c.bf16 %v2989, %v2989
        %v3134 = vpack.c.bf16 %v3052, %v3049
        %v3135 = vpack.c.bf16 %v3060, %v3057
        %v3137 = vsel %vm1055, %v3132, 0
        %v3140 = vsel %vm1055, %v3133, 0
        %v3143 = vsel %vm1055, %v3134, 0
        %v3146 = vsel %vm1055, %v3135, 0
        %3148 = vmatprep.subr.bf16.mxu0 0
        %3149 = vmatpush1.bf16.xpose.msra.mxu0 %v3143
        %3150 = vmatprep.subr.bf16.mxu0 0
        %3151 = vmatpush1.bf16.xpose.msra.mxu0 %v3146
        %3152 = vmatprep.subr.bf16.mxu0 0
        %3153 = vmatpush1.bf16.xpose.msra.mxu0 0
        %3154 = vmatprep.subr.bf16.mxu0 0
        %3155 = vmatpush1.bf16.xpose.msra.mxu0 0
        %3156 = vmatprep.subr.bf16.mxu0 0
        %3157 = vmatpush1.bf16.xpose.msra.mxu0 0
        %3158 = vmatprep.subr.bf16.mxu0 0
        %3159 = vmatpush1.bf16.xpose.msra.mxu0 0
        %3160 = vmatprep.subr.bf16.mxu0 0
        %3161 = vmatpush1.bf16.xpose.msra.mxu0 0
        %3162 = vmatprep.subr.bf16.mxu0 0
        %3163 = vmatpush1.bf16.xpose.msra.mxu0 0
        %3164 = vmatprep.subr.bf16.mxu0 0
        %3165 = vmatpush1.bf16.xpose.msra.mxu0 0
        %3166 = vmatprep.subr.bf16.mxu0 0
        %3167 = vmatpush1.bf16.xpose.msra.mxu0 0
        %3168 = vmatprep.subr.bf16.mxu0 0
        %3169 = vmatpush1.bf16.xpose.msra.mxu0 0
        %3170 = vmatprep.subr.bf16.mxu0 0
        %3171 = vmatpush1.bf16.xpose.msra.mxu0 0
        %3172 = vmatprep.subr.bf16.mxu0 0
        %3173 = vmatpush1.bf16.xpose.msra.mxu0 0
        %3174 = vmatprep.subr.bf16.mxu0 0
        %3175 = vmatpush1.bf16.xpose.msra.mxu0 0
        %3176 = vmatprep.subr.bf16.mxu0 0
        %3177 = vmatpush1.bf16.xpose.msra.mxu0 0
        %3178 = vmatprep.subr.bf16.mxu0 0
        %3179 = vmatpush1.bf16.xpose.msra.mxu0 0
        %3180 = vmatprep.mubr.bf16.mxu0 0
        %3181 = vmatmul.mubr.bf16.gmra.mrb[0].mxu0 %v3137
        %v3182 = vpop.f32.mrb[0].mxu0
        %v3183 = vadd.f32 0.0, %v3182
        %v3184 = vpop.f32.mrb[0].mxu0
        %v3185 = vpop.f32.mrb[0].mxu0
        %v3186 = vadd.f32 0.0, %v3185
        %v3187 = vpop.f32.mrb[0].mxu0
        %3188 = vmatprep.mubr.bf16.mxu0 0
        %3189 = vmatmul.mubr.bf16.gmra.mrb[0].mxu0 %v3140
        %v3190 = vpop.f32.mrb[0].mxu0
        %v3191 = vadd.f32 0.0, %v3190
        %v3192 = vpop.f32.mrb[0].mxu0
        %v3193 = vpop.f32.mrb[0].mxu0
        %v3194 = vpop.f32.mrb[0].mxu0
        %3195 = vdwg.mxu0
        %v3196 = vsel %vm771, %v3183, -inf
        %3197 = vmax.xlane.f32.xlu0 %v3196
        %v3198 = vpop.xlane.xlu0 %3197
        %v3199 = vsel %vm771, %v3186, -inf
        %3200 = vmax.xlane.f32.xlu0 %v3199
        %v3201 = vpop.xlane.xlu0 %3200
        %v3202 = vsel %vm771, %v3191, -inf
        %3203 = vmax.xlane.f32.xlu0 %v3202
        %v3204 = vpop.xlane.xlu0 %3203
        %v3205 = vsub.f32 %v3183, %v3198
        %v3206 = vsub.f32 %v3186, %v3201
        %v3207 = vsub.f32 %v3191, %v3204
        %v3208 = vmul.f32 %v3205, 1.442695
        %v3209 = vpow.pop %v3208
        %v3210 = vmul.f32 %v3206, 1.442695
        %v3211 = vpow.pop %v3210
        %v3212 = vmul.f32 %v3207, 1.442695
        %v3213 = vpow.pop %v3212
        %v3214 = vsel %vm771, %v3209, 0.0
        %3215 = vadd.xlane.f32.xlu0 %v3214
        %v3216 = vpop.xlane.xlu0 %3215
        %v3217 = vsel %vm771, %v3211, 0.0
        %3218 = vadd.xlane.f32.xlu0 %v3217
        %v3219 = vpop.xlane.xlu0 %3218
        %v3220 = vsel %vm771, %v3213, 0.0
        %3221 = vadd.xlane.f32.xlu0 %v3220
        %v3222 = vpop.xlane.xlu0 %3221
        %v3223 = vrcp.pop %v3216
        %v3224 = vrcp.pop %v3219
        %v3225 = vrcp.pop %v3222
        %v3226 = vmul.f32 %v3209, %v3223
        %v3227 = vmul.f32 %v3211, %v3224
        %v3228 = vmul.f32 %v3213, %v3225
        %v3229 = vpack.c.bf16 %v3227, %v3226
        %v3230 = vpack.c.bf16 %v3228, %v3228
        %v3231 = vpack.c.bf16 %v3121, %v3118
        %v3232 = vpack.c.bf16 %v3129, %v3126
        %v3234 = vsel %vm771, %v3229, 0
        %v3237 = vsel %vm771, %v3230, 0
        %3239 = vmatprep.subr.bf16.mxu0 0
        %3240 = vmatpush1.bf16.msra.mxu0 %v3231
        %3241 = vmatprep.subr.bf16.mxu0 0
        %3242 = vmatpush1.bf16.msra.mxu0 %v3232
        %3243 = vmatprep.subr.bf16.mxu0 0
        %3244 = vmatpush1.bf16.msra.mxu0 0
        %3245 = vmatprep.subr.bf16.mxu0 0
        %3246 = vmatpush1.bf16.msra.mxu0 0
        %3247 = vmatprep.subr.bf16.mxu0 0
        %3248 = vmatpush1.bf16.msra.mxu0 0
        %3249 = vmatprep.subr.bf16.mxu0 0
        %3250 = vmatpush1.bf16.msra.mxu0 0
        %3251 = vmatprep.subr.bf16.mxu0 0
        %3252 = vmatpush1.bf16.msra.mxu0 0
        %3253 = vmatprep.subr.bf16.mxu0 0
        %3254 = vmatpush1.bf16.msra.mxu0 0
        %3255 = vmatprep.subr.bf16.mxu0 0
        %3256 = vmatpush1.bf16.msra.mxu0 0
        %3257 = vmatprep.subr.bf16.mxu0 0
        %3258 = vmatpush1.bf16.msra.mxu0 0
        %3259 = vmatprep.subr.bf16.mxu0 0
        %3260 = vmatpush1.bf16.msra.mxu0 0
        %3261 = vmatprep.subr.bf16.mxu0 0
        %3262 = vmatpush1.bf16.msra.mxu0 0
        %3263 = vmatprep.subr.bf16.mxu0 0
        %3264 = vmatpush1.bf16.msra.mxu0 0
        %3265 = vmatprep.subr.bf16.mxu0 0
        %3266 = vmatpush1.bf16.msra.mxu0 0
        %3267 = vmatprep.subr.bf16.mxu0 0
        %3268 = vmatpush1.bf16.msra.mxu0 0
        %3269 = vmatprep.subr.bf16.mxu0 0
        %3270 = vmatpush1.bf16.msra.mxu0 0
        %3271 = vmatprep.mubr.bf16.mxu0 0
        %3272 = vmatmul.mubr.bf16.gmra.mrb[0].mxu0 %v3234
        %v3273 = vpop.f32.mrb[0].mxu0
        %v3274 = vadd.f32 0.0, %v3273
        %v3275 = vpop.f32.mrb[0].mxu0
        %v3276 = vpop.f32.mrb[0].mxu0
        %v3277 = vadd.f32 0.0, %v3276
        %v3278 = vpop.f32.mrb[0].mxu0
        %3279 = vmatprep.mubr.bf16.mxu0 0
        %3280 = vmatmul.mubr.bf16.gmra.mrb[0].mxu0 %v3237
        %v3281 = vpop.f32.mrb[0].mxu0
        %v3282 = vadd.f32 0.0, %v3281
        %v3283 = vpop.f32.mrb[0].mxu0
        %v3284 = vpop.f32.mrb[0].mxu0
        %v3285 = vpop.f32.mrb[0].mxu0
        %3286 = vdwg.mxu0
        %s3287 = scalar_lea.vmem %s624, 224
        %v3288 = vld [vmem:[%s3287] sm:$0xf]
        %v3289 = vld [vmem:[%s3287 + $0x4] sm:$0xf]
        %v3290 = vld [vmem:[%s3287 + $0x8] sm:$0xf]
        %v3291 = vld [vmem:[%s3287 + $0xc] sm:$0xf]
        %s3292 = scalar_lea.vmem %s624, 288
        %v3293 = vld [vmem:[%s3292] sm:$0xf]
        %v3294 = vld [vmem:[%s3292 + $0x4] sm:$0xf]
        %v3295 = vld [vmem:[%s3292 + $0x8] sm:$0xf]
        %v3296 = vld [vmem:[%s3292 + $0xc] sm:$0xf]
        %s3297 = scalar_lea.vmem %s624, 352
        %v3298 = vld [vmem:[%s3297] sm:$0xf]
        %v3299 = vld [vmem:[%s3297 + $0x4] sm:$0xf]
        %v3300 = vld [vmem:[%s3297 + $0x8] sm:$0xf]
        %v3301 = vld [vmem:[%s3297 + $0xc] sm:$0xf]
        %s3302 = scalar_lea.vmem %s630, 14
        %v3303 = vld [vmem:[%s3302] sm:$0x1]
        %v3305 = vlaneseq
        %v3306 = vshrl.u32 %v3305, 7
        %v3307 = vsub.s32 0, %v3306
        %v3308 = vrot.slane %v3303, %v3307
        %v3314 = vunpack.c.l.b16 %v3288
        %v3315 = vunpack.c.l.b16 %v3289
        %v3316 = vunpack.c.l.b16 %v3290
        %v3317 = vunpack.c.l.b16 %v3291
        %v3318 = vpack.c.b16 %v3315, %v3314
        %v3319 = vpack.c.b16 %v3317, %v3316
        %3322 = vmatprep.subr.bf16.mxu0 0
        %3323 = vmatpush1.bf16.msra.mxu0 %v3318
        %3324 = vmatprep.subr.bf16.mxu0 0
        %3325 = vmatpush1.bf16.msra.mxu0 %v3319
        %3326 = vmatprep.subr.bf16.mxu0 0
        %3327 = vmatpush1.bf16.msra.mxu0 0
        %3328 = vmatprep.subr.bf16.mxu0 0
        %3329 = vmatpush1.bf16.msra.mxu0 0
        %3330 = vmatprep.subr.bf16.mxu0 0
        %3331 = vmatpush1.bf16.msra.mxu0 0
        %3332 = vmatprep.subr.bf16.mxu0 0
        %3333 = vmatpush1.bf16.msra.mxu0 0
        %3334 = vmatprep.subr.bf16.mxu0 0
        %3335 = vmatpush1.bf16.msra.mxu0 0
        %3336 = vmatprep.subr.bf16.mxu0 0
        %3337 = vmatpush1.bf16.msra.mxu0 0
        %3338 = vmatprep.subr.bf16.mxu0 0
        %3339 = vmatpush1.bf16.msra.mxu0 0
        %3340 = vmatprep.subr.bf16.mxu0 0
        %3341 = vmatpush1.bf16.msra.mxu0 0
        %3342 = vmatprep.subr.bf16.mxu0 0
        %3343 = vmatpush1.bf16.msra.mxu0 0
        %3344 = vmatprep.subr.bf16.mxu0 0
        %3345 = vmatpush1.bf16.msra.mxu0 0
        %3346 = vmatprep.subr.bf16.mxu0 0
        %3347 = vmatpush1.bf16.msra.mxu0 0
        %3348 = vmatprep.subr.bf16.mxu0 0
        %3349 = vmatpush1.bf16.msra.mxu0 0
        %3350 = vmatprep.subr.bf16.mxu0 0
        %3351 = vmatpush1.bf16.msra.mxu0 0
        %3352 = vmatprep.subr.bf16.mxu0 0
        %3353 = vmatpush1.bf16.msra.mxu0 0
        %3354 = vmatprep.mubr.bf16.mxu0 0
        %3355 = vmatmul.mubr.bf16.gmra.mrb[0].mxu0 %v2559
        %v3356 = vpop.f32.mrb[0].mxu0
        %v3357 = vadd.f32 %v3308, %v3356
        %v3358 = vpop.f32.mrb[0].mxu0
        %v3359 = vpop.f32.mrb[0].mxu0
        %v3360 = vadd.f32 %v3308, %v3359
        %v3361 = vpop.f32.mrb[0].mxu0
        %3362 = vmatprep.mubr.bf16.mxu0 0
        %3363 = vmatmul.mubr.bf16.gmra.mrb[0].mxu0 %v2562
        %v3364 = vpop.f32.mrb[0].mxu0
        %v3365 = vadd.f32 %v3308, %v3364
        %v3366 = vpop.f32.mrb[0].mxu0
        %v3367 = vpop.f32.mrb[0].mxu0
        %v3368 = vpop.f32.mrb[0].mxu0
        %3369 = vdwg.mxu0
        %s3370 = scalar_lea.vmem %s630, 18
        %v3371 = vld [vmem:[%s3370] sm:$0x1]
        %v3373 = vlaneseq
        %v3374 = vshrl.u32 %v3373, 7
        %v3375 = vsub.s32 0, %v3374
        %v3376 = vrot.slane %v3371, %v3375
        %v3382 = vunpack.c.l.b16 %v3293
        %v3383 = vunpack.c.l.b16 %v3294
        %v3384 = vunpack.c.l.b16 %v3295
        %v3385 = vunpack.c.l.b16 %v3296
        %v3386 = vpack.c.b16 %v3383, %v3382
        %v3387 = vpack.c.b16 %v3385, %v3384
        %3390 = vmatprep.subr.bf16.mxu0 0
        %3391 = vmatpush1.bf16.msra.mxu0 %v3386
        %3392 = vmatprep.subr.bf16.mxu0 0
        %3393 = vmatpush1.bf16.msra.mxu0 %v3387
        %3394 = vmatprep.subr.bf16.mxu0 0
        %3395 = vmatpush1.bf16.msra.mxu0 0
        %3396 = vmatprep.subr.bf16.mxu0 0
        %3397 = vmatpush1.bf16.msra.mxu0 0
        %3398 = vmatprep.subr.bf16.mxu0 0
        %3399 = vmatpush1.bf16.msra.mxu0 0
        %3400 = vmatprep.subr.bf16.mxu0 0
        %3401 = vmatpush1.bf16.msra.mxu0 0
        %3402 = vmatprep.subr.bf16.mxu0 0
        %3403 = vmatpush1.bf16.msra.mxu0 0
        %3404 = vmatprep.subr.bf16.mxu0 0
        %3405 = vmatpush1.bf16.msra.mxu0 0
        %3406 = vmatprep.subr.bf16.mxu0 0
        %3407 = vmatpush1.bf16.msra.mxu0 0
        %3408 = vmatprep.subr.bf16.mxu0 0
        %3409 = vmatpush1.bf16.msra.mxu0 0
        %3410 = vmatprep.subr.bf16.mxu0 0
        %3411 = vmatpush1.bf16.msra.mxu0 0
        %3412 = vmatprep.subr.bf16.mxu0 0
        %3413 = vmatpush1.bf16.msra.mxu0 0
        %3414 = vmatprep.subr.bf16.mxu0 0
        %3415 = vmatpush1.bf16.msra.mxu0 0
        %3416 = vmatprep.subr.bf16.mxu0 0
        %3417 = vmatpush1.bf16.msra.mxu0 0
        %3418 = vmatprep.subr.bf16.mxu0 0
        %3419 = vmatpush1.bf16.msra.mxu0 0
        %3420 = vmatprep.subr.bf16.mxu0 0
        %3421 = vmatpush1.bf16.msra.mxu0 0
        %3422 = vmatprep.mubr.bf16.mxu0 0
        %3423 = vmatmul.mubr.bf16.gmra.mrb[0].mxu0 %v2633
        %v3424 = vpop.f32.mrb[0].mxu0
        %v3425 = vadd.f32 %v3376, %v3424
        %v3426 = vpop.f32.mrb[0].mxu0
        %v3427 = vpop.f32.mrb[0].mxu0
        %v3428 = vadd.f32 %v3376, %v3427
        %v3429 = vpop.f32.mrb[0].mxu0
        %3430 = vmatprep.mubr.bf16.mxu0 0
        %3431 = vmatmul.mubr.bf16.gmra.mrb[0].mxu0 %v2636
        %v3432 = vpop.f32.mrb[0].mxu0
        %v3433 = vadd.f32 %v3376, %v3432
        %v3434 = vpop.f32.mrb[0].mxu0
        %v3435 = vpop.f32.mrb[0].mxu0
        %v3436 = vadd.f32 %v3376, %v3435
        %v3437 = vpop.f32.mrb[0].mxu0
        %3438 = vdwg.mxu0
        %s3439 = scalar_lea.vmem %s630, 22
        %v3440 = vld [vmem:[%s3439] sm:$0x1]
        %v3442 = vlaneseq
        %v3443 = vshrl.u32 %v3442, 7
        %v3444 = vsub.s32 0, %v3443
        %v3445 = vrot.slane %v3440, %v3444
        %v3451 = vunpack.c.l.b16 %v3298
        %v3452 = vunpack.c.l.b16 %v3299
        %v3453 = vunpack.c.l.b16 %v3300
        %v3454 = vunpack.c.l.b16 %v3301
        %v3455 = vpack.c.b16 %v3452, %v3451
        %v3456 = vpack.c.b16 %v3454, %v3453
        %3459 = vmatprep.subr.bf16.mxu0 0
        %3460 = vmatpush1.bf16.msra.mxu0 %v3455
        %3461 = vmatprep.subr.bf16.mxu0 0
        %3462 = vmatpush1.bf16.msra.mxu0 %v3456
        %3463 = vmatprep.subr.bf16.mxu0 0
        %3464 = vmatpush1.bf16.msra.mxu0 0
        %3465 = vmatprep.subr.bf16.mxu0 0
        %3466 = vmatpush1.bf16.msra.mxu0 0
        %3467 = vmatprep.subr.bf16.mxu0 0
        %3468 = vmatpush1.bf16.msra.mxu0 0
        %3469 = vmatprep.subr.bf16.mxu0 0
        %3470 = vmatpush1.bf16.msra.mxu0 0
        %3471 = vmatprep.subr.bf16.mxu0 0
        %3472 = vmatpush1.bf16.msra.mxu0 0
        %3473 = vmatprep.subr.bf16.mxu0 0
        %3474 = vmatpush1.bf16.msra.mxu0 0
        %3475 = vmatprep.subr.bf16.mxu0 0
        %3476 = vmatpush1.bf16.msra.mxu0 0
        %3477 = vmatprep.subr.bf16.mxu0 0
        %3478 = vmatpush1.bf16.msra.mxu0 0
        %3479 = vmatprep.subr.bf16.mxu0 0
        %3480 = vmatpush1.bf16.msra.mxu0 0
        %3481 = vmatprep.subr.bf16.mxu0 0
        %3482 = vmatpush1.bf16.msra.mxu0 0
        %3483 = vmatprep.subr.bf16.mxu0 0
        %3484 = vmatpush1.bf16.msra.mxu0 0
        %3485 = vmatprep.subr.bf16.mxu0 0
        %3486 = vmatpush1.bf16.msra.mxu0 0
        %3487 = vmatprep.subr.bf16.mxu0 0
        %3488 = vmatpush1.bf16.msra.mxu0 0
        %3489 = vmatprep.subr.bf16.mxu0 0
        %3490 = vmatpush1.bf16.msra.mxu0 0
        %3491 = vmatprep.mubr.bf16.mxu0 0
        %3492 = vmatmul.mubr.bf16.gmra.mrb[0].mxu0 %v2633
        %v3493 = vpop.f32.mrb[0].mxu0
        %v3494 = vadd.f32 %v3445, %v3493
        %v3495 = vpop.f32.mrb[0].mxu0
        %v3496 = vpop.f32.mrb[0].mxu0
        %v3497 = vadd.f32 %v3445, %v3496
        %v3498 = vpop.f32.mrb[0].mxu0
        %3499 = vmatprep.mubr.bf16.mxu0 0
        %3500 = vmatmul.mubr.bf16.gmra.mrb[0].mxu0 %v2636
        %v3501 = vpop.f32.mrb[0].mxu0
        %v3502 = vadd.f32 %v3445, %v3501
        %v3503 = vpop.f32.mrb[0].mxu0
        %v3504 = vpop.f32.mrb[0].mxu0
        %v3505 = vadd.f32 %v3445, %v3504
        %v3506 = vpop.f32.mrb[0].mxu0
        %3507 = vdwg.mxu0
        %v3508 = vpack.c.bf16 %v3360, %v3357
        %v3509 = vpack.c.bf16 %v3365, %v3365
        %v3510 = vpack.c.bf16 %v3428, %v3425
        %v3511 = vpack.c.bf16 %v3436, %v3433
        %v3513 = vsel %vm1055, %v3508, 0
        %v3516 = vsel %vm1055, %v3509, 0
        %v3519 = vsel %vm1055, %v3510, 0
        %v3522 = vsel %vm1055, %v3511, 0
        %3524 = vmatprep.subr.bf16.mxu0 0
        %3525 = vmatpush1.bf16.xpose.msra.mxu0 %v3519
        %3526 = vmatprep.subr.bf16.mxu0 0
        %3527 = vmatpush1.bf16.xpose.msra.mxu0 %v3522
        %3528 = vmatprep.subr.bf16.mxu0 0
        %3529 = vmatpush1.bf16.xpose.msra.mxu0 0
        %3530 = vmatprep.subr.bf16.mxu0 0
        %3531 = vmatpush1.bf16.xpose.msra.mxu0 0
        %3532 = vmatprep.subr.bf16.mxu0 0
        %3533 = vmatpush1.bf16.xpose.msra.mxu0 0
        %3534 = vmatprep.subr.bf16.mxu0 0
        %3535 = vmatpush1.bf16.xpose.msra.mxu0 0
        %3536 = vmatprep.subr.bf16.mxu0 0
        %3537 = vmatpush1.bf16.xpose.msra.mxu0 0
        %3538 = vmatprep.subr.bf16.mxu0 0
        %3539 = vmatpush1.bf16.xpose.msra.mxu0 0
        %3540 = vmatprep.subr.bf16.mxu0 0
        %3541 = vmatpush1.bf16.xpose.msra.mxu0 0
        %3542 = vmatprep.subr.bf16.mxu0 0
        %3543 = vmatpush1.bf16.xpose.msra.mxu0 0
        %3544 = vmatprep.subr.bf16.mxu0 0
        %3545 = vmatpush1.bf16.xpose.msra.mxu0 0
        %3546 = vmatprep.subr.bf16.mxu0 0
        %3547 = vmatpush1.bf16.xpose.msra.mxu0 0
        %3548 = vmatprep.subr.bf16.mxu0 0
        %3549 = vmatpush1.bf16.xpose.msra.mxu0 0
        %3550 = vmatprep.subr.bf16.mxu0 0
        %3551 = vmatpush1.bf16.xpose.msra.mxu0 0
        %3552 = vmatprep.subr.bf16.mxu0 0
        %3553 = vmatpush1.bf16.xpose.msra.mxu0 0
        %3554 = vmatprep.subr.bf16.mxu0 0
        %3555 = vmatpush1.bf16.xpose.msra.mxu0 0
        %3556 = vmatprep.mubr.bf16.mxu0 0
        %3557 = vmatmul.mubr.bf16.gmra.mrb[0].mxu0 %v3513
        %v3558 = vpop.f32.mrb[0].mxu0
        %v3559 = vadd.f32 0.0, %v3558
        %v3560 = vpop.f32.mrb[0].mxu0
        %v3561 = vpop.f32.mrb[0].mxu0
        %v3562 = vadd.f32 0.0, %v3561
        %v3563 = vpop.f32.mrb[0].mxu0
        %3564 = vmatprep.mubr.bf16.mxu0 0
        %3565 = vmatmul.mubr.bf16.gmra.mrb[0].mxu0 %v3516
        %v3566 = vpop.f32.mrb[0].mxu0
        %v3567 = vadd.f32 0.0, %v3566
        %v3568 = vpop.f32.mrb[0].mxu0
        %v3569 = vpop.f32.mrb[0].mxu0
        %v3570 = vpop.f32.mrb[0].mxu0
        %3571 = vdwg.mxu0
        %v3572 = vsel %vm771, %v3559, -inf
        %3573 = vmax.xlane.f32.xlu0 %v3572
        %v3574 = vpop.xlane.xlu0 %3573
        %v3575 = vsel %vm771, %v3562, -inf
        %3576 = vmax.xlane.f32.xlu0 %v3575
        %v3577 = vpop.xlane.xlu0 %3576
        %v3578 = vsel %vm771, %v3567, -inf
        %3579 = vmax.xlane.f32.xlu0 %v3578
        %v3580 = vpop.xlane.xlu0 %3579
        %v3581 = vsub.f32 %v3559, %v3574
        %v3582 = vsub.f32 %v3562, %v3577
        %v3583 = vsub.f32 %v3567, %v3580
        %v3584 = vmul.f32 %v3581, 1.442695
        %v3585 = vpow.pop %v3584
        %v3586 = vmul.f32 %v3582, 1.442695
        %v3587 = vpow.pop %v3586
        %v3588 = vmul.f32 %v3583, 1.442695
        %v3589 = vpow.pop %v3588
        %v3590 = vsel %vm771, %v3585, 0.0
        %3591 = vadd.xlane.f32.xlu0 %v3590
        %v3592 = vpop.xlane.xlu0 %3591
        %v3593 = vsel %vm771, %v3587, 0.0
        %3594 = vadd.xlane.f32.xlu0 %v3593
        %v3595 = vpop.xlane.xlu0 %3594
        %v3596 = vsel %vm771, %v3589, 0.0
        %3597 = vadd.xlane.f32.xlu0 %v3596
        %v3598 = vpop.xlane.xlu0 %3597
        %v3599 = vrcp.pop %v3592
        %v3600 = vrcp.pop %v3595
        %v3601 = vrcp.pop %v3598
        %v3602 = vmul.f32 %v3585, %v3599
        %v3603 = vmul.f32 %v3587, %v3600
        %v3604 = vmul.f32 %v3589, %v3601
        %v3605 = vpack.c.bf16 %v3603, %v3602
        %v3606 = vpack.c.bf16 %v3604, %v3604
        %v3607 = vpack.c.bf16 %v3497, %v3494
        %v3608 = vpack.c.bf16 %v3505, %v3502
        %v3610 = vsel %vm771, %v3605, 0
        %v3613 = vsel %vm771, %v3606, 0
        %3615 = vmatprep.subr.bf16.mxu0 0
        %3616 = vmatpush1.bf16.msra.mxu0 %v3607
        %3617 = vmatprep.subr.bf16.mxu0 0
        %3618 = vmatpush1.bf16.msra.mxu0 %v3608
        %3619 = vmatprep.subr.bf16.mxu0 0
        %3620 = vmatpush1.bf16.msra.mxu0 0
        %3621 = vmatprep.subr.bf16.mxu0 0
        %3622 = vmatpush1.bf16.msra.mxu0 0
        %3623 = vmatprep.subr.bf16.mxu0 0
        %3624 = vmatpush1.bf16.msra.mxu0 0
        %3625 = vmatprep.subr.bf16.mxu0 0
        %3626 = vmatpush1.bf16.msra.mxu0 0
        %3627 = vmatprep.subr.bf16.mxu0 0
        %3628 = vmatpush1.bf16.msra.mxu0 0
        %3629 = vmatprep.subr.bf16.mxu0 0
        %3630 = vmatpush1.bf16.msra.mxu0 0
        %3631 = vmatprep.subr.bf16.mxu0 0
        %3632 = vmatpush1.bf16.msra.mxu0 0
        %3633 = vmatprep.subr.bf16.mxu0 0
        %3634 = vmatpush1.bf16.msra.mxu0 0
        %3635 = vmatprep.subr.bf16.mxu0 0
        %3636 = vmatpush1.bf16.msra.mxu0 0
        %3637 = vmatprep.subr.bf16.mxu0 0
        %3638 = vmatpush1.bf16.msra.mxu0 0
        %3639 = vmatprep.subr.bf16.mxu0 0
        %3640 = vmatpush1.bf16.msra.mxu0 0
        %3641 = vmatprep.subr.bf16.mxu0 0
        %3642 = vmatpush1.bf16.msra.mxu0 0
        %3643 = vmatprep.subr.bf16.mxu0 0
        %3644 = vmatpush1.bf16.msra.mxu0 0
        %3645 = vmatprep.subr.bf16.mxu0 0
        %3646 = vmatpush1.bf16.msra.mxu0 0
        %3647 = vmatprep.mubr.bf16.mxu0 0
        %3648 = vmatmul.mubr.bf16.gmra.mrb[0].mxu0 %v3610
        %v3649 = vpop.f32.mrb[0].mxu0
        %v3650 = vadd.f32 0.0, %v3649
        %v3651 = vpop.f32.mrb[0].mxu0
        %v3652 = vpop.f32.mrb[0].mxu0
        %v3653 = vadd.f32 0.0, %v3652
        %v3654 = vpop.f32.mrb[0].mxu0
        %3655 = vmatprep.mubr.bf16.mxu0 0
        %3656 = vmatmul.mubr.bf16.gmra.mrb[0].mxu0 %v3613
        %v3657 = vpop.f32.mrb[0].mxu0
        %v3658 = vadd.f32 0.0, %v3657
        %v3659 = vpop.f32.mrb[0].mxu0
        %v3660 = vpop.f32.mrb[0].mxu0
        %v3661 = vpop.f32.mrb[0].mxu0
        %3662 = vdwg.mxu0
        %s3663 = scalar_lea.vmem %s624, 240
        %v3664 = vld [vmem:[%s3663] sm:$0xf]
        %v3665 = vld [vmem:[%s3663 + $0x4] sm:$0xf]
        %v3666 = vld [vmem:[%s3663 + $0x8] sm:$0xf]
        %v3667 = vld [vmem:[%s3663 + $0xc] sm:$0xf]
        %s3668 = scalar_lea.vmem %s624, 304
        %v3669 = vld [vmem:[%s3668] sm:$0xf]
        %v3670 = vld [vmem:[%s3668 + $0x4] sm:$0xf]
        %v3671 = vld [vmem:[%s3668 + $0x8] sm:$0xf]
        %v3672 = vld [vmem:[%s3668 + $0xc] sm:$0xf]
        %s3673 = scalar_lea.vmem %s624, 368
        %v3674 = vld [vmem:[%s3673] sm:$0xf]
        %v3675 = vld [vmem:[%s3673 + $0x4] sm:$0xf]
        %v3676 = vld [vmem:[%s3673 + $0x8] sm:$0xf]
        %v3677 = vld [vmem:[%s3673 + $0xc] sm:$0xf]
        %s3678 = scalar_lea.vmem %s630, 15
        %v3679 = vld [vmem:[%s3678] sm:$0x1]
        %v3681 = vlaneseq
        %v3682 = vshrl.u32 %v3681, 7
        %v3683 = vsub.s32 0, %v3682
        %v3684 = vrot.slane %v3679, %v3683
        %v3690 = vunpack.c.l.b16 %v3664
        %v3691 = vunpack.c.l.b16 %v3665
        %v3692 = vunpack.c.l.b16 %v3666
        %v3693 = vunpack.c.l.b16 %v3667
        %v3694 = vpack.c.b16 %v3691, %v3690
        %v3695 = vpack.c.b16 %v3693, %v3692
        %3698 = vmatprep.subr.bf16.mxu0 0
        %3699 = vmatpush1.bf16.msra.mxu0 %v3694
        %3700 = vmatprep.subr.bf16.mxu0 0
        %3701 = vmatpush1.bf16.msra.mxu0 %v3695
        %3702 = vmatprep.subr.bf16.mxu0 0
        %3703 = vmatpush1.bf16.msra.mxu0 0
        %3704 = vmatprep.subr.bf16.mxu0 0
        %3705 = vmatpush1.bf16.msra.mxu0 0
        %3706 = vmatprep.subr.bf16.mxu0 0
        %3707 = vmatpush1.bf16.msra.mxu0 0
        %3708 = vmatprep.subr.bf16.mxu0 0
        %3709 = vmatpush1.bf16.msra.mxu0 0
        %3710 = vmatprep.subr.bf16.mxu0 0
        %3711 = vmatpush1.bf16.msra.mxu0 0
        %3712 = vmatprep.subr.bf16.mxu0 0
        %3713 = vmatpush1.bf16.msra.mxu0 0
        %3714 = vmatprep.subr.bf16.mxu0 0
        %3715 = vmatpush1.bf16.msra.mxu0 0
        %3716 = vmatprep.subr.bf16.mxu0 0
        %3717 = vmatpush1.bf16.msra.mxu0 0
        %3718 = vmatprep.subr.bf16.mxu0 0
        %3719 = vmatpush1.bf16.msra.mxu0 0
        %3720 = vmatprep.subr.bf16.mxu0 0
        %3721 = vmatpush1.bf16.msra.mxu0 0
        %3722 = vmatprep.subr.bf16.mxu0 0
        %3723 = vmatpush1.bf16.msra.mxu0 0
        %3724 = vmatprep.subr.bf16.mxu0 0
        %3725 = vmatpush1.bf16.msra.mxu0 0
        %3726 = vmatprep.subr.bf16.mxu0 0
        %3727 = vmatpush1.bf16.msra.mxu0 0
        %3728 = vmatprep.subr.bf16.mxu0 0
        %3729 = vmatpush1.bf16.msra.mxu0 0
        %3730 = vmatprep.mubr.bf16.mxu0 0
        %3731 = vmatmul.mubr.bf16.gmra.mrb[0].mxu0 %v2559
        %v3732 = vpop.f32.mrb[0].mxu0
        %v3733 = vadd.f32 %v3684, %v3732
        %v3734 = vpop.f32.mrb[0].mxu0
        %v3735 = vpop.f32.mrb[0].mxu0
        %v3736 = vadd.f32 %v3684, %v3735
        %v3737 = vpop.f32.mrb[0].mxu0
        %3738 = vmatprep.mubr.bf16.mxu0 0
        %3739 = vmatmul.mubr.bf16.gmra.mrb[0].mxu0 %v2562
        %v3740 = vpop.f32.mrb[0].mxu0
        %v3741 = vadd.f32 %v3684, %v3740
        %v3742 = vpop.f32.mrb[0].mxu0
        %v3743 = vpop.f32.mrb[0].mxu0
        %v3744 = vpop.f32.mrb[0].mxu0
        %3745 = vdwg.mxu0
        %s3746 = scalar_lea.vmem %s630, 19
        %v3747 = vld [vmem:[%s3746] sm:$0x1]
        %v3749 = vlaneseq
        %v3750 = vshrl.u32 %v3749, 7
        %v3751 = vsub.s32 0, %v3750
        %v3752 = vrot.slane %v3747, %v3751
        %v3758 = vunpack.c.l.b16 %v3669
        %v3759 = vunpack.c.l.b16 %v3670
        %v3760 = vunpack.c.l.b16 %v3671
        %v3761 = vunpack.c.l.b16 %v3672
        %v3762 = vpack.c.b16 %v3759, %v3758
        %v3763 = vpack.c.b16 %v3761, %v3760
        %3766 = vmatprep.subr.bf16.mxu0 0
        %3767 = vmatpush1.bf16.msra.mxu0 %v3762
        %3768 = vmatprep.subr.bf16.mxu0 0
        %3769 = vmatpush1.bf16.msra.mxu0 %v3763
        %3770 = vmatprep.subr.bf16.mxu0 0
        %3771 = vmatpush1.bf16.msra.mxu0 0
        %3772 = vmatprep.subr.bf16.mxu0 0
        %3773 = vmatpush1.bf16.msra.mxu0 0
        %3774 = vmatprep.subr.bf16.mxu0 0
        %3775 = vmatpush1.bf16.msra.mxu0 0
        %3776 = vmatprep.subr.bf16.mxu0 0
        %3777 = vmatpush1.bf16.msra.mxu0 0
        %3778 = vmatprep.subr.bf16.mxu0 0
        %3779 = vmatpush1.bf16.msra.mxu0 0
        %3780 = vmatprep.subr.bf16.mxu0 0
        %3781 = vmatpush1.bf16.msra.mxu0 0
        %3782 = vmatprep.subr.bf16.mxu0 0
        %3783 = vmatpush1.bf16.msra.mxu0 0
        %3784 = vmatprep.subr.bf16.mxu0 0
        %3785 = vmatpush1.bf16.msra.mxu0 0
        %3786 = vmatprep.subr.bf16.mxu0 0
        %3787 = vmatpush1.bf16.msra.mxu0 0
        %3788 = vmatprep.subr.bf16.mxu0 0
        %3789 = vmatpush1.bf16.msra.mxu0 0
        %3790 = vmatprep.subr.bf16.mxu0 0
        %3791 = vmatpush1.bf16.msra.mxu0 0
        %3792 = vmatprep.subr.bf16.mxu0 0
        %3793 = vmatpush1.bf16.msra.mxu0 0
        %3794 = vmatprep.subr.bf16.mxu0 0
        %3795 = vmatpush1.bf16.msra.mxu0 0
        %3796 = vmatprep.subr.bf16.mxu0 0
        %3797 = vmatpush1.bf16.msra.mxu0 0
        %3798 = vmatprep.mubr.bf16.mxu0 0
        %3799 = vmatmul.mubr.bf16.gmra.mrb[0].mxu0 %v2633
        %v3800 = vpop.f32.mrb[0].mxu0
        %v3801 = vadd.f32 %v3752, %v3800
        %v3802 = vpop.f32.mrb[0].mxu0
        %v3803 = vpop.f32.mrb[0].mxu0
        %v3804 = vadd.f32 %v3752, %v3803
        %v3805 = vpop.f32.mrb[0].mxu0
        %3806 = vmatprep.mubr.bf16.mxu0 0
        %3807 = vmatmul.mubr.bf16.gmra.mrb[0].mxu0 %v2636
        %v3808 = vpop.f32.mrb[0].mxu0
        %v3809 = vadd.f32 %v3752, %v3808
        %v3810 = vpop.f32.mrb[0].mxu0
        %v3811 = vpop.f32.mrb[0].mxu0
        %v3812 = vadd.f32 %v3752, %v3811
        %v3813 = vpop.f32.mrb[0].mxu0
        %3814 = vdwg.mxu0
        %s3815 = scalar_lea.vmem %s630, 23
        %v3816 = vld [vmem:[%s3815] sm:$0x1]
        %v3818 = vlaneseq
        %v3819 = vshrl.u32 %v3818, 7
        %v3820 = vsub.s32 0, %v3819
        %v3821 = vrot.slane %v3816, %v3820
        %v3827 = vunpack.c.l.b16 %v3674
        %v3828 = vunpack.c.l.b16 %v3675
        %v3829 = vunpack.c.l.b16 %v3676
        %v3830 = vunpack.c.l.b16 %v3677
        %v3831 = vpack.c.b16 %v3828, %v3827
        %v3832 = vpack.c.b16 %v3830, %v3829
        %3835 = vmatprep.subr.bf16.mxu0 0
        %3836 = vmatpush1.bf16.msra.mxu0 %v3831
        %3837 = vmatprep.subr.bf16.mxu0 0
        %3838 = vmatpush1.bf16.msra.mxu0 %v3832
        %3839 = vmatprep.subr.bf16.mxu0 0
        %3840 = vmatpush1.bf16.msra.mxu0 0
        %3841 = vmatprep.subr.bf16.mxu0 0
        %3842 = vmatpush1.bf16.msra.mxu0 0
        %3843 = vmatprep.subr.bf16.mxu0 0
        %3844 = vmatpush1.bf16.msra.mxu0 0
        %3845 = vmatprep.subr.bf16.mxu0 0
        %3846 = vmatpush1.bf16.msra.mxu0 0
        %3847 = vmatprep.subr.bf16.mxu0 0
        %3848 = vmatpush1.bf16.msra.mxu0 0
        %3849 = vmatprep.subr.bf16.mxu0 0
        %3850 = vmatpush1.bf16.msra.mxu0 0
        %3851 = vmatprep.subr.bf16.mxu0 0
        %3852 = vmatpush1.bf16.msra.mxu0 0
        %3853 = vmatprep.subr.bf16.mxu0 0
        %3854 = vmatpush1.bf16.msra.mxu0 0
        %3855 = vmatprep.subr.bf16.mxu0 0
        %3856 = vmatpush1.bf16.msra.mxu0 0
        %3857 = vmatprep.subr.bf16.mxu0 0
        %3858 = vmatpush1.bf16.msra.mxu0 0
        %3859 = vmatprep.subr.bf16.mxu0 0
        %3860 = vmatpush1.bf16.msra.mxu0 0
        %3861 = vmatprep.subr.bf16.mxu0 0
        %3862 = vmatpush1.bf16.msra.mxu0 0
        %3863 = vmatprep.subr.bf16.mxu0 0
        %3864 = vmatpush1.bf16.msra.mxu0 0
        %3865 = vmatprep.subr.bf16.mxu0 0
        %3866 = vmatpush1.bf16.msra.mxu0 0
        %3867 = vmatprep.mubr.bf16.mxu0 0
        %3868 = vmatmul.mubr.bf16.gmra.mrb[0].mxu0 %v2633
        %v3869 = vpop.f32.mrb[0].mxu0
        %v3870 = vadd.f32 %v3821, %v3869
        %v3871 = vpop.f32.mrb[0].mxu0
        %v3872 = vpop.f32.mrb[0].mxu0
        %v3873 = vadd.f32 %v3821, %v3872
        %v3874 = vpop.f32.mrb[0].mxu0
        %3875 = vmatprep.mubr.bf16.mxu0 0
        %3876 = vmatmul.mubr.bf16.gmra.mrb[0].mxu0 %v2636
        %v3877 = vpop.f32.mrb[0].mxu0
        %v3878 = vadd.f32 %v3821, %v3877
        %v3879 = vpop.f32.mrb[0].mxu0
        %v3880 = vpop.f32.mrb[0].mxu0
        %v3881 = vadd.f32 %v3821, %v3880
        %v3882 = vpop.f32.mrb[0].mxu0
        %3883 = vdwg.mxu0
        %v3884 = vpack.c.bf16 %v3736, %v3733
        %v3885 = vpack.c.bf16 %v3741, %v3741
        %v3886 = vpack.c.bf16 %v3804, %v3801
        %v3887 = vpack.c.bf16 %v3812, %v3809
        %v3889 = vsel %vm1055, %v3884, 0
        %v3892 = vsel %vm1055, %v3885, 0
        %v3895 = vsel %vm1055, %v3886, 0
        %v3898 = vsel %vm1055, %v3887, 0
        %3900 = vmatprep.subr.bf16.mxu0 0
        %3901 = vmatpush1.bf16.xpose.msra.mxu0 %v3895
        %3902 = vmatprep.subr.bf16.mxu0 0
        %3903 = vmatpush1.bf16.xpose.msra.mxu0 %v3898
        %3904 = vmatprep.subr.bf16.mxu0 0
        %3905 = vmatpush1.bf16.xpose.msra.mxu0 0
        %3906 = vmatprep.subr.bf16.mxu0 0
        %3907 = vmatpush1.bf16.xpose.msra.mxu0 0
        %3908 = vmatprep.subr.bf16.mxu0 0
        %3909 = vmatpush1.bf16.xpose.msra.mxu0 0
        %3910 = vmatprep.subr.bf16.mxu0 0
        %3911 = vmatpush1.bf16.xpose.msra.mxu0 0
        %3912 = vmatprep.subr.bf16.mxu0 0
        %3913 = vmatpush1.bf16.xpose.msra.mxu0 0
        %3914 = vmatprep.subr.bf16.mxu0 0
        %3915 = vmatpush1.bf16.xpose.msra.mxu0 0
        %3916 = vmatprep.subr.bf16.mxu0 0
        %3917 = vmatpush1.bf16.xpose.msra.mxu0 0
        %3918 = vmatprep.subr.bf16.mxu0 0
        %3919 = vmatpush1.bf16.xpose.msra.mxu0 0
        %3920 = vmatprep.subr.bf16.mxu0 0
        %3921 = vmatpush1.bf16.xpose.msra.mxu0 0
        %3922 = vmatprep.subr.bf16.mxu0 0
        %3923 = vmatpush1.bf16.xpose.msra.mxu0 0
        %3924 = vmatprep.subr.bf16.mxu0 0
        %3925 = vmatpush1.bf16.xpose.msra.mxu0 0
        %3926 = vmatprep.subr.bf16.mxu0 0
        %3927 = vmatpush1.bf16.xpose.msra.mxu0 0
        %3928 = vmatprep.subr.bf16.mxu0 0
        %3929 = vmatpush1.bf16.xpose.msra.mxu0 0
        %3930 = vmatprep.subr.bf16.mxu0 0
        %3931 = vmatpush1.bf16.xpose.msra.mxu0 0
        %3932 = vmatprep.mubr.bf16.mxu0 0
        %3933 = vmatmul.mubr.bf16.gmra.mrb[0].mxu0 %v3889
        %v3934 = vpop.f32.mrb[0].mxu0
        %v3935 = vadd.f32 0.0, %v3934
        %v3936 = vpop.f32.mrb[0].mxu0
        %v3937 = vpop.f32.mrb[0].mxu0
        %v3938 = vadd.f32 0.0, %v3937
        %v3939 = vpop.f32.mrb[0].mxu0
        %3940 = vmatprep.mubr.bf16.mxu0 0
        %3941 = vmatmul.mubr.bf16.gmra.mrb[0].mxu0 %v3892
        %v3942 = vpop.f32.mrb[0].mxu0
        %v3943 = vadd.f32 0.0, %v3942
        %v3944 = vpop.f32.mrb[0].mxu0
        %v3945 = vpop.f32.mrb[0].mxu0
        %v3946 = vpop.f32.mrb[0].mxu0
        %3947 = vdwg.mxu0
        %v3948 = vsel %vm771, %v3935, -inf
        %3949 = vmax.xlane.f32.xlu0 %v3948
        %v3950 = vpop.xlane.xlu0 %3949
        %v3951 = vsel %vm771, %v3938, -inf
        %3952 = vmax.xlane.f32.xlu0 %v3951
        %v3953 = vpop.xlane.xlu0 %3952
        %v3954 = vsel %vm771, %v3943, -inf
        %3955 = vmax.xlane.f32.xlu0 %v3954
        %v3956 = vpop.xlane.xlu0 %3955
        %v3957 = vsub.f32 %v3935, %v3950
        %v3958 = vsub.f32 %v3938, %v3953
        %v3959 = vsub.f32 %v3943, %v3956
        %v3960 = vmul.f32 %v3957, 1.442695
        %v3961 = vpow.pop %v3960
        %v3962 = vmul.f32 %v3958, 1.442695
        %v3963 = vpow.pop %v3962
        %v3964 = vmul.f32 %v3959, 1.442695
        %v3965 = vpow.pop %v3964
        %v3966 = vsel %vm771, %v3961, 0.0
        %3967 = vadd.xlane.f32.xlu0 %v3966
        %v3968 = vpop.xlane.xlu0 %3967
        %v3969 = vsel %vm771, %v3963, 0.0
        %3970 = vadd.xlane.f32.xlu0 %v3969
        %v3971 = vpop.xlane.xlu0 %3970
        %v3972 = vsel %vm771, %v3965, 0.0
        %3973 = vadd.xlane.f32.xlu0 %v3972
        %v3974 = vpop.xlane.xlu0 %3973
        %v3975 = vrcp.pop %v3968
        %v3976 = vrcp.pop %v3971
        %v3977 = vrcp.pop %v3974
        %v3978 = vmul.f32 %v3961, %v3975
        %v3979 = vmul.f32 %v3963, %v3976
        %v3980 = vmul.f32 %v3965, %v3977
        %v3981 = vpack.c.bf16 %v3979, %v3978
        %v3982 = vpack.c.bf16 %v3980, %v3980
        %v3983 = vpack.c.bf16 %v3873, %v3870
        %v3984 = vpack.c.bf16 %v3881, %v3878
        %v3986 = vsel %vm771, %v3981, 0
        %v3989 = vsel %vm771, %v3982, 0
        %3991 = vmatprep.subr.bf16.mxu0 0
        %3992 = vmatpush1.bf16.msra.mxu0 %v3983
        %3993 = vmatprep.subr.bf16.mxu0 0
        %3994 = vmatpush1.bf16.msra.mxu0 %v3984
        %3995 = vmatprep.subr.bf16.mxu0 0
        %3996 = vmatpush1.bf16.msra.mxu0 0
        %3997 = vmatprep.subr.bf16.mxu0 0
        %3998 = vmatpush1.bf16.msra.mxu0 0
        %3999 = vmatprep.subr.bf16.mxu0 0
        %4000 = vmatpush1.bf16.msra.mxu0 0
        %4001 = vmatprep.subr.bf16.mxu0 0
        %4002 = vmatpush1.bf16.msra.mxu0 0
        %4003 = vmatprep.subr.bf16.mxu0 0
        %4004 = vmatpush1.bf16.msra.mxu0 0
        %4005 = vmatprep.subr.bf16.mxu0 0
        %4006 = vmatpush1.bf16.msra.mxu0 0
        %4007 = vmatprep.subr.bf16.mxu0 0
        %4008 = vmatpush1.bf16.msra.mxu0 0
        %4009 = vmatprep.subr.bf16.mxu0 0
        %4010 = vmatpush1.bf16.msra.mxu0 0
        %4011 = vmatprep.subr.bf16.mxu0 0
        %4012 = vmatpush1.bf16.msra.mxu0 0
        %4013 = vmatprep.subr.bf16.mxu0 0
        %4014 = vmatpush1.bf16.msra.mxu0 0
        %4015 = vmatprep.subr.bf16.mxu0 0
        %4016 = vmatpush1.bf16.msra.mxu0 0
        %4017 = vmatprep.subr.bf16.mxu0 0
        %4018 = vmatpush1.bf16.msra.mxu0 0
        %4019 = vmatprep.subr.bf16.mxu0 0
        %4020 = vmatpush1.bf16.msra.mxu0 0
        %4021 = vmatprep.subr.bf16.mxu0 0
        %4022 = vmatpush1.bf16.msra.mxu0 0
        %4023 = vmatprep.mubr.bf16.mxu0 0
        %4024 = vmatmul.mubr.bf16.gmra.mrb[0].mxu0 %v3986
        %v4025 = vpop.f32.mrb[0].mxu0
        %v4026 = vadd.f32 0.0, %v4025
        %v4027 = vpop.f32.mrb[0].mxu0
        %v4028 = vpop.f32.mrb[0].mxu0
        %v4029 = vadd.f32 0.0, %v4028
        %v4030 = vpop.f32.mrb[0].mxu0
        %4031 = vmatprep.mubr.bf16.mxu0 0
        %4032 = vmatmul.mubr.bf16.gmra.mrb[0].mxu0 %v3989
        %v4033 = vpop.f32.mrb[0].mxu0
        %v4034 = vadd.f32 0.0, %v4033
        %v4035 = vpop.f32.mrb[0].mxu0
        %v4036 = vpop.f32.mrb[0].mxu0
        %v4037 = vpop.f32.mrb[0].mxu0
        %4038 = vdwg.mxu0
        %4042 = vrot.lane.b32.xlu0 %v3274, 8
        %v4043 = vpop.permute.xlu0 %4042
        %4044 = vrot.lane.b32.xlu0 %v3277, 8
        %v4045 = vpop.permute.xlu0 %4044
        %4046 = vrot.lane.b32.xlu0 %v3282, 8
        %v4047 = vpop.permute.xlu0 %4046
        %4054 = vrot.lane.b32.xlu0 %v3650, 16
        %v4055 = vpop.permute.xlu0 %4054
        %4056 = vrot.lane.b32.xlu0 %v3653, 16
        %v4057 = vpop.permute.xlu0 %4056
        %4058 = vrot.lane.b32.xlu0 %v3658, 16
        %v4059 = vpop.permute.xlu0 %4058
        %4066 = vrot.lane.b32.xlu0 %v4026, 24
        %v4067 = vpop.permute.xlu0 %4066
        %4068 = vrot.lane.b32.xlu0 %v4029, 24
        %v4069 = vpop.permute.xlu0 %4068
        %4070 = vrot.lane.b32.xlu0 %v4034, 24
        %v4071 = vpop.permute.xlu0 %4070
        %v4075 = vsel %vm1055, %v2898, %v4043
        %v4076 = vsel %vm1055, %v2901, %v4045
        %v4077 = vsel %vm1055, %v2906, %v4047
        %v4078 = vsel %vm2382, %v4075, %v4055
        %v4079 = vsel %vm2382, %v4076, %v4057
        %v4080 = vsel %vm2382, %v4077, %v4059
        %v4081 = vsel %vm1116, %v4078, %v4067
        %v4082 = vsel %vm1116, %v4079, %v4069
        %v4083 = vsel %vm1116, %v4080, %v4071
        %v4084 = vpack.c.bf16 %v4082, %v4081
        %v4085 = vpack.c.bf16 %v4083, %v4083
        %s4086 = scalar_lea.vmem %s637, 16
        %v4087 = vld [vmem:[%s4086] sm:$0xf]
        %v4088 = vld [vmem:[%s4086 + $0x4] sm:$0xf]
        %v4089 = vld [vmem:[%s4086 + $0x8] sm:$0xf]
        %v4090 = vld [vmem:[%s4086 + $0xc] sm:$0xf]
        %v4091 = vlaneseq
        %v4092 = vshrl.u32 %v4091, 7
        %v4093 = vsub.s32 7, %v4092
        %v4094 = vrot.slane %v769, %v4093
        %v4099 = vunpack.c.l.b16 %v4087
        %v4100 = vunpack.c.l.b16 %v4088
        %v4101 = vunpack.c.l.b16 %v4089
        %v4102 = vunpack.c.l.b16 %v4090
        %v4103 = vpack.c.b16 %v4100, %v4099
        %v4104 = vpack.c.b16 %v4102, %v4101
        %v4108 = vsel %vm771, %v4084, 0
        %v4111 = vsel %vm771, %v4085, 0
        %4113 = vmatprep.subr.bf16.mxu0 0
        %4114 = vmatpush1.bf16.msra.mxu0 %v4103
        %4115 = vmatprep.subr.bf16.mxu0 0
        %4116 = vmatpush1.bf16.msra.mxu0 %v4104
        %4117 = vmatprep.subr.bf16.mxu0 0
        %4118 = vmatpush1.bf16.msra.mxu0 0
        %4119 = vmatprep.subr.bf16.mxu0 0
        %4120 = vmatpush1.bf16.msra.mxu0 0
        %4121 = vmatprep.subr.bf16.mxu0 0
        %4122 = vmatpush1.bf16.msra.mxu0 0
        %4123 = vmatprep.subr.bf16.mxu0 0
        %4124 = vmatpush1.bf16.msra.mxu0 0
        %4125 = vmatprep.subr.bf16.mxu0 0
        %4126 = vmatpush1.bf16.msra.mxu0 0
        %4127 = vmatprep.subr.bf16.mxu0 0
        %4128 = vmatpush1.bf16.msra.mxu0 0
        %4129 = vmatprep.subr.bf16.mxu0 0
        %4130 = vmatpush1.bf16.msra.mxu0 0
        %4131 = vmatprep.subr.bf16.mxu0 0
        %4132 = vmatpush1.bf16.msra.mxu0 0
        %4133 = vmatprep.subr.bf16.mxu0 0
        %4134 = vmatpush1.bf16.msra.mxu0 0
        %4135 = vmatprep.subr.bf16.mxu0 0
        %4136 = vmatpush1.bf16.msra.mxu0 0
        %4137 = vmatprep.subr.bf16.mxu0 0
        %4138 = vmatpush1.bf16.msra.mxu0 0
        %4139 = vmatprep.subr.bf16.mxu0 0
        %4140 = vmatpush1.bf16.msra.mxu0 0
        %4141 = vmatprep.subr.bf16.mxu0 0
        %4142 = vmatpush1.bf16.msra.mxu0 0
        %4143 = vmatprep.subr.bf16.mxu0 0
        %4144 = vmatpush1.bf16.msra.mxu0 0
        %4145 = vmatprep.mubr.bf16.mxu0 0
        %4146 = vmatmul.mubr.bf16.gmra.mrb[0].mxu0 %v4108
        %v4147 = vpop.f32.mrb[0].mxu0
        %v4148 = vadd.f32 %v4094, %v4147
        %v4149 = vpop.f32.mrb[0].mxu0
        %v4150 = vpop.f32.mrb[0].mxu0
        %v4151 = vadd.f32 %v4094, %v4150
        %v4152 = vpop.f32.mrb[0].mxu0
        %4153 = vmatprep.mubr.bf16.mxu0 0
        %4154 = vmatmul.mubr.bf16.gmra.mrb[0].mxu0 %v4111
        %v4155 = vpop.f32.mrb[0].mxu0
        %v4156 = vadd.f32 %v4094, %v4155
        %v4157 = vpop.f32.mrb[0].mxu0
        %v4158 = vpop.f32.mrb[0].mxu0
        %v4159 = vpop.f32.mrb[0].mxu0
        %4160 = vdwg.mxu0
        %v4161 = vadd.f32 %v2465, %v4148
        %v4162 = vadd.f32 %v2466, %v4151
        %v4163 = vadd.f32 %v2467, %v4156
        %v4164 = vsel %vm771, %v4161, 0.0
        %4165 = vadd.xlane.f32.xlu0 %v4164
        %v4166 = vpop.xlane.xlu0 %4165
        %v4167 = vsel %vm771, %v4162, 0.0
        %4168 = vadd.xlane.f32.xlu0 %v4167
        %v4169 = vpop.xlane.xlu0 %4168
        %v4170 = vsel %vm771, %v4163, 0.0
        %4171 = vadd.xlane.f32.xlu0 %v4170
        %v4172 = vpop.xlane.xlu0 %4171
        %v4173 = vmul.f32 %v4166, %v781
        %v4174 = vmul.f32 %v4169, %v781
        %v4175 = vmul.f32 %v4172, %v781
        %v4176 = vsub.f32 %v4161, %v4173
        %v4177 = vsub.f32 %v4162, %v4174
        %v4178 = vsub.f32 %v4163, %v4175
        %v4179 = vmul.f32 %v4176, %v4176
        %v4180 = vmul.f32 %v4177, %v4177
        %v4181 = vmul.f32 %v4178, %v4178
        %v4182 = vsel %vm771, %v4179, 0.0
        %4183 = vadd.xlane.f32.xlu0 %v4182
        %v4184 = vpop.xlane.xlu0 %4183
        %v4185 = vsel %vm771, %v4180, 0.0
        %4186 = vadd.xlane.f32.xlu0 %v4185
        %v4187 = vpop.xlane.xlu0 %4186
        %v4188 = vsel %vm771, %v4181, 0.0
        %4189 = vadd.xlane.f32.xlu0 %v4188
        %v4190 = vpop.xlane.xlu0 %4189
        %v4191 = vmul.f32 %v4184, %v781
        %v4192 = vmul.f32 %v4187, %v781
        %v4193 = vmul.f32 %v4190, %v781
        %v4194 = vadd.f32 %v4191, 1e-05
        %v4195 = vadd.f32 %v4192, 1e-05
        %v4196 = vadd.f32 %v4193, 1e-05
        %v4197 = vrsqrt.pop %v4194
        %v4198 = vrsqrt.pop %v4195
        %v4199 = vrsqrt.pop %v4196
        %v4200 = vmul.f32 %v4176, %v4197
        %v4201 = vmul.f32 %v4177, %v4198
        %v4202 = vmul.f32 %v4178, %v4199
        %v4203 = vlaneseq
        %v4204 = vshrl.u32 %v4203, 7
        %v4205 = vsub.s32 2, %v4204
        %v4206 = vrot.slane %v769, %v4205
        %v4207 = vmul.f32 %v4200, %v4206
        %v4208 = vmul.f32 %v4201, %v4206
        %v4209 = vmul.f32 %v4202, %v4206
        %v4210 = vlaneseq
        %v4211 = vshrl.u32 %v4210, 7
        %v4212 = vsub.s32 5, %v4211
        %v4213 = vrot.slane %v769, %v4212
        %v4214 = vadd.f32 %v4207, %v4213
        %v4215 = vadd.f32 %v4208, %v4213
        %v4216 = vadd.f32 %v4209, %v4213
        %v4217 = vpack.c.bf16 %v4215, %v4214
        %v4218 = vpack.c.bf16 %v4216, %v4216
        %v4219 = vld [vmem:[%s644] sm:$0xf]
        %v4220 = vld [vmem:[%s644 + $0x4] sm:$0xf]
        %v4221 = vld [vmem:[%s644 + $0x8] sm:$0xf]
        %v4222 = vld [vmem:[%s644 + $0xc] sm:$0xf]
        %v4223 = vlaneseq
        %v4224 = vshrl.u32 %v4223, 7
        %v4225 = vsub.s32 0, %v4224
        %v4226 = vrot.slane %v770, %v4225
        %v4231 = vunpack.c.l.b16 %v4219
        %v4232 = vunpack.c.l.b16 %v4220
        %v4233 = vunpack.c.l.b16 %v4221
        %v4234 = vunpack.c.l.b16 %v4222
        %v4235 = vpack.c.b16 %v4232, %v4231
        %v4236 = vpack.c.b16 %v4234, %v4233
        %v4240 = vsel %vm771, %v4217, 0
        %v4243 = vsel %vm771, %v4218, 0
        %4245 = vmatprep.subr.bf16.mxu0 0
        %4246 = vmatpush1.bf16.msra.mxu0 %v4235
        %4247 = vmatprep.subr.bf16.mxu0 0
        %4248 = vmatpush1.bf16.msra.mxu0 %v4236
        %4249 = vmatprep.subr.bf16.mxu0 0
        %4250 = vmatpush1.bf16.msra.mxu0 0
        %4251 = vmatprep.subr.bf16.mxu0 0
        %4252 = vmatpush1.bf16.msra.mxu0 0
        %4253 = vmatprep.subr.bf16.mxu0 0
        %4254 = vmatpush1.bf16.msra.mxu0 0
        %4255 = vmatprep.subr.bf16.mxu0 0
        %4256 = vmatpush1.bf16.msra.mxu0 0
        %4257 = vmatprep.subr.bf16.mxu0 0
        %4258 = vmatpush1.bf16.msra.mxu0 0
        %4259 = vmatprep.subr.bf16.mxu0 0
        %4260 = vmatpush1.bf16.msra.mxu0 0
        %4261 = vmatprep.subr.bf16.mxu0 0
        %4262 = vmatpush1.bf16.msra.mxu0 0
        %4263 = vmatprep.subr.bf16.mxu0 0
        %4264 = vmatpush1.bf16.msra.mxu0 0
        %4265 = vmatprep.subr.bf16.mxu0 0
        %4266 = vmatpush1.bf16.msra.mxu0 0
        %4267 = vmatprep.subr.bf16.mxu0 0
        %4268 = vmatpush1.bf16.msra.mxu0 0
        %4269 = vmatprep.subr.bf16.mxu0 0
        %4270 = vmatpush1.bf16.msra.mxu0 0
        %4271 = vmatprep.subr.bf16.mxu0 0
        %4272 = vmatpush1.bf16.msra.mxu0 0
        %4273 = vmatprep.subr.bf16.mxu0 0
        %4274 = vmatpush1.bf16.msra.mxu0 0
        %4275 = vmatprep.subr.bf16.mxu0 0
        %4276 = vmatpush1.bf16.msra.mxu0 0
        %4277 = vmatprep.mubr.bf16.mxu0 0
        %4278 = vmatmul.mubr.bf16.gmra.mrb[0].mxu0 %v4240
        %v4279 = vpop.f32.mrb[0].mxu0
        %v4280 = vadd.f32 %v4226, %v4279
        %v4281 = vpop.f32.mrb[0].mxu0
        %v4282 = vpop.f32.mrb[0].mxu0
        %v4283 = vadd.f32 %v4226, %v4282
        %v4284 = vpop.f32.mrb[0].mxu0
        %4285 = vmatprep.mubr.bf16.mxu0 0
        %4286 = vmatmul.mubr.bf16.gmra.mrb[0].mxu0 %v4243
        %v4287 = vpop.f32.mrb[0].mxu0
        %v4288 = vadd.f32 %v4226, %v4287
        %v4289 = vpop.f32.mrb[0].mxu0
        %v4290 = vpop.f32.mrb[0].mxu0
        %v4291 = vpop.f32.mrb[0].mxu0
        %4292 = vdwg.mxu0
        %v4293 = vmul.f32 %v4280, %v4280
        %v4294 = vmul.f32 %v4283, %v4283
        %v4295 = vmul.f32 %v4288, %v4288
        %v4296 = vmul.f32 %v4280, %v4293
        %v4297 = vmul.f32 %v4283, %v4294
        %v4298 = vmul.f32 %v4288, %v4295
        %v4299 = vmul.f32 %v4296, 0.044715
        %v4300 = vmul.f32 %v4297, 0.044715
        %v4301 = vmul.f32 %v4298, 0.044715
        %v4302 = vadd.f32 %v4280, %v4299
        %v4303 = vadd.f32 %v4283, %v4300
        %v4304 = vadd.f32 %v4288, %v4301
        %v4305 = vmul.f32 %v4302, 0.7978846
        %v4306 = vmul.f32 %v4303, 0.7978846
        %v4307 = vmul.f32 %v4304, 0.7978846
        %v4308 = vtanh.pop %v4305
        %v4309 = vtanh.pop %v4306
        %v4310 = vtanh.pop %v4307
        %v4311 = vadd.f32 %v4308, 1.0
        %v4312 = vadd.f32 %v4309, 1.0
        %v4313 = vadd.f32 %v4310, 1.0
        %v4314 = vmul.f32 %v4311, 0.5
        %v4315 = vmul.f32 %v4312, 0.5
        %v4316 = vmul.f32 %v4313, 0.5
        %v4317 = vmul.f32 %v4280, %v4314
        %v4318 = vmul.f32 %v4283, %v4315
        %v4319 = vmul.f32 %v4288, %v4316
        %v4320 = vpack.c.bf16 %v4318, %v4317
        %v4321 = vpack.c.bf16 %v4319, %v4319
        %v4322 = vld [vmem:[%s651] sm:$0xf]
        %v4323 = vld [vmem:[%s651 + $0x4] sm:$0xf]
        %v4324 = vld [vmem:[%s651 + $0x8] sm:$0xf]
        %v4325 = vld [vmem:[%s651 + $0xc] sm:$0xf]
        %v4326 = vld [vmem:[%s651 + $0x10] sm:$0xf]
        %v4327 = vld [vmem:[%s651 + $0x14] sm:$0xf]
        %v4328 = vld [vmem:[%s651 + $0x18] sm:$0xf]
        %v4329 = vld [vmem:[%s651 + $0x1c] sm:$0xf]
        %v4330 = vld [vmem:[%s651 + $0x20] sm:$0xf]
        %v4331 = vld [vmem:[%s651 + $0x24] sm:$0xf]
        %v4332 = vld [vmem:[%s651 + $0x28] sm:$0xf]
        %v4333 = vld [vmem:[%s651 + $0x2c] sm:$0xf]
        %v4334 = vld [vmem:[%s651 + $0x30] sm:$0xf]
        %v4335 = vld [vmem:[%s651 + $0x34] sm:$0xf]
        %v4336 = vld [vmem:[%s651 + $0x38] sm:$0xf]
        %v4337 = vld [vmem:[%s651 + $0x3c] sm:$0xf]
        %v4354 = vunpack.c.l.b16 %v4322
        %v4355 = vunpack.c.l.b16 %v4323
        %v4356 = vunpack.c.l.b16 %v4324
        %v4357 = vunpack.c.l.b16 %v4325
        %v4358 = vunpack.c.l.b16 %v4326
        %v4359 = vunpack.c.l.b16 %v4327
        %v4360 = vunpack.c.l.b16 %v4328
        %v4361 = vunpack.c.l.b16 %v4329
        %v4362 = vunpack.c.l.b16 %v4330
        %v4363 = vunpack.c.l.b16 %v4331
        %v4364 = vunpack.c.l.b16 %v4332
        %v4365 = vunpack.c.l.b16 %v4333
        %v4366 = vunpack.c.l.b16 %v4334
        %v4367 = vunpack.c.l.b16 %v4335
        %v4368 = vunpack.c.l.b16 %v4336
        %v4369 = vunpack.c.l.b16 %v4337
        %v4370 = vpack.c.b16 %v4355, %v4354
        %v4371 = vpack.c.b16 %v4357, %v4356
        %v4372 = vpack.c.b16 %v4359, %v4358
        %v4373 = vpack.c.b16 %v4361, %v4360
        %v4374 = vpack.c.b16 %v4363, %v4362
        %v4375 = vpack.c.b16 %v4365, %v4364
        %v4376 = vpack.c.b16 %v4367, %v4366
        %v4377 = vpack.c.b16 %v4369, %v4368
        %4386 = vmatprep.subr.bf16.mxu0 0
        %4387 = vmatpush1.bf16.msra.mxu0 %v4370
        %4388 = vmatprep.subr.bf16.mxu0 0
        %4389 = vmatpush1.bf16.msra.mxu0 %v4371
        %4390 = vmatprep.subr.bf16.mxu0 0
        %4391 = vmatpush1.bf16.msra.mxu0 %v4372
        %4392 = vmatprep.subr.bf16.mxu0 0
        %4393 = vmatpush1.bf16.msra.mxu0 %v4373
        %4394 = vmatprep.subr.bf16.mxu0 0
        %4395 = vmatpush1.bf16.msra.mxu0 %v4374
        %4396 = vmatprep.subr.bf16.mxu0 0
        %4397 = vmatpush1.bf16.msra.mxu0 %v4375
        %4398 = vmatprep.subr.bf16.mxu0 0
        %4399 = vmatpush1.bf16.msra.mxu0 %v4376
        %4400 = vmatprep.subr.bf16.mxu0 0
        %4401 = vmatpush1.bf16.msra.mxu0 %v4377
        %4402 = vmatprep.subr.bf16.mxu0 0
        %4403 = vmatpush1.bf16.msra.mxu0 0
        %4404 = vmatprep.subr.bf16.mxu0 0
        %4405 = vmatpush1.bf16.msra.mxu0 0
        %4406 = vmatprep.subr.bf16.mxu0 0
        %4407 = vmatpush1.bf16.msra.mxu0 0
        %4408 = vmatprep.subr.bf16.mxu0 0
        %4409 = vmatpush1.bf16.msra.mxu0 0
        %4410 = vmatprep.subr.bf16.mxu0 0
        %4411 = vmatpush1.bf16.msra.mxu0 0
        %4412 = vmatprep.subr.bf16.mxu0 0
        %4413 = vmatpush1.bf16.msra.mxu0 0
        %4414 = vmatprep.subr.bf16.mxu0 0
        %4415 = vmatpush1.bf16.msra.mxu0 0
        %4416 = vmatprep.subr.bf16.mxu0 0
        %4417 = vmatpush1.bf16.msra.mxu0 0
        %4418 = vmatprep.mubr.bf16.mxu0 0
        %4419 = vmatmul.mubr.bf16.gmra.mrb[0].mxu0 %v4320
        %v4420 = vpop.f32.mrb[0].mxu0
        %v4421 = vadd.f32 0.0, %v4420
        %v4422 = vpop.f32.mrb[0].mxu0
        %v4423 = vpop.f32.mrb[0].mxu0
        %v4424 = vadd.f32 0.0, %v4423
        %v4425 = vpop.f32.mrb[0].mxu0
        %4426 = vmatprep.mubr.bf16.mxu0 0
        %4427 = vmatmul.mubr.bf16.gmra.mrb[0].mxu0 %v4321
        %v4428 = vpop.f32.mrb[0].mxu0
        %v4429 = vadd.f32 0.0, %v4428
        %v4430 = vpop.f32.mrb[0].mxu0
        %v4431 = vpop.f32.mrb[0].mxu0
        %v4432 = vpop.f32.mrb[0].mxu0
        %4433 = vdwg.mxu0
        %v4434 = vadd.f32 %v4161, %v4421
        %v4435 = vadd.f32 %v4162, %v4424
        %v4436 = vadd.f32 %v4163, %v4429
        %v4437 = vlaneseq
        %v4438 = vshrl.u32 %v4437, 7
        %v4439 = vsub.s32 1, %v4438
        %v4440 = vrot.slane %v770, %v4439
        %v4441 = vadd.f32 %v4434, %v4440
        %v4442 = vadd.f32 %v4435, %v4440
        %v4443 = vadd.f32 %v4436, %v4440
        %s4444 = scalar_lea.vmem %s658, 16
        %v4445 = vld [vmem:[%s4444] sm:$0xff]
        %v4446 = vld [vmem:[%s4444 + $0x8] sm:$0x3]
        %v4447 = vsel %vm771, %v4441, 0.0
        %4448 = vadd.xlane.f32.xlu0 %v4447
        %v4449 = vpop.xlane.xlu0 %4448
        %v4450 = vsel %vm771, %v4442, 0.0
        %4451 = vadd.xlane.f32.xlu0 %v4450
        %v4452 = vpop.xlane.xlu0 %4451
        %v4453 = vsel %vm771, %v4443, 0.0
        %4454 = vadd.xlane.f32.xlu0 %v4453
        %v4455 = vpop.xlane.xlu0 %4454
        %v4456 = vmul.f32 %v4449, %v781
        %v4457 = vmul.f32 %v4452, %v781
        %v4458 = vmul.f32 %v4455, %v781
        %v4459 = vsub.f32 %v4441, %v4456
        %v4460 = vsub.f32 %v4442, %v4457
        %v4461 = vsub.f32 %v4443, %v4458
        %v4462 = vmul.f32 %v4459, %v4459
        %v4463 = vmul.f32 %v4460, %v4460
        %v4464 = vmul.f32 %v4461, %v4461
        %v4465 = vsel %vm771, %v4462, 0.0
        %4466 = vadd.xlane.f32.xlu0 %v4465
        %v4467 = vpop.xlane.xlu0 %4466
        %v4468 = vsel %vm771, %v4463, 0.0
        %4469 = vadd.xlane.f32.xlu0 %v4468
        %v4470 = vpop.xlane.xlu0 %4469
        %v4471 = vsel %vm771, %v4464, 0.0
        %4472 = vadd.xlane.f32.xlu0 %v4471
        %v4473 = vpop.xlane.xlu0 %4472
        %v4474 = vmul.f32 %v4467, %v781
        %v4475 = vmul.f32 %v4470, %v781
        %v4476 = vmul.f32 %v4473, %v781
        %v4477 = vadd.f32 %v4474, 1e-05
        %v4478 = vadd.f32 %v4475, 1e-05
        %v4479 = vadd.f32 %v4476, 1e-05
        %v4480 = vrsqrt.pop %v4477
        %v4481 = vrsqrt.pop %v4478
        %v4482 = vrsqrt.pop %v4479
        %v4483 = vmul.f32 %v4459, %v4480
        %v4484 = vmul.f32 %v4460, %v4481
        %v4485 = vmul.f32 %v4461, %v4482
        %v4486 = vlaneseq
        %v4487 = vshrl.u32 %v4486, 7
        %v4488 = vsub.s32 0, %v4487
        %v4489 = vrot.slane %v4445, %v4488
        %v4490 = vmul.f32 %v4483, %v4489
        %v4491 = vmul.f32 %v4484, %v4489
        %v4492 = vmul.f32 %v4485, %v4489
        %v4493 = vlaneseq
        %v4494 = vshrl.u32 %v4493, 7
        %v4495 = vsub.s32 3, %v4494
        %v4496 = vrot.slane %v4445, %v4495
        %v4497 = vadd.f32 %v4490, %v4496
        %v4498 = vadd.f32 %v4491, %v4496
        %v4499 = vadd.f32 %v4492, %v4496
        %v4500 = vpack.c.bf16 %v4498, %v4497
        %v4501 = vpack.c.bf16 %v4499, %v4499
        %s4502 = scalar_lea.vmem %s624, 384
        %v4503 = vld [vmem:[%s4502] sm:$0xf]
        %v4504 = vld [vmem:[%s4502 + $0x4] sm:$0xf]
        %v4505 = vld [vmem:[%s4502 + $0x8] sm:$0xf]
        %v4506 = vld [vmem:[%s4502 + $0xc] sm:$0xf]
        %s4507 = scalar_lea.vmem %s624, 448
        %v4508 = vld [vmem:[%s4507] sm:$0xf]
        %v4509 = vld [vmem:[%s4507 + $0x4] sm:$0xf]
        %v4510 = vld [vmem:[%s4507 + $0x8] sm:$0xf]
        %v4511 = vld [vmem:[%s4507 + $0xc] sm:$0xf]
        %s4512 = scalar_lea.vmem %s624, 512
        %v4513 = vld [vmem:[%s4512] sm:$0xf]
        %v4514 = vld [vmem:[%s4512 + $0x4] sm:$0xf]
        %v4515 = vld [vmem:[%s4512 + $0x8] sm:$0xf]
        %v4516 = vld [vmem:[%s4512 + $0xc] sm:$0xf]
        %s4517 = scalar_lea.vmem %s630, 24
        %v4518 = vld [vmem:[%s4517] sm:$0x1]
        %v4520 = vlaneseq
        %v4521 = vshrl.u32 %v4520, 7
        %v4522 = vsub.s32 0, %v4521
        %v4523 = vrot.slane %v4518, %v4522
        %v4529 = vunpack.c.l.b16 %v4503
        %v4530 = vunpack.c.l.b16 %v4504
        %v4531 = vunpack.c.l.b16 %v4505
        %v4532 = vunpack.c.l.b16 %v4506
        %v4533 = vpack.c.b16 %v4530, %v4529
        %v4534 = vpack.c.b16 %v4532, %v4531
        %v4538 = vsel %vm771, %v4500, 0
        %v4541 = vsel %vm771, %v4501, 0
        %4543 = vmatprep.subr.bf16.mxu0 0
        %4544 = vmatpush1.bf16.msra.mxu0 %v4533
        %4545 = vmatprep.subr.bf16.mxu0 0
        %4546 = vmatpush1.bf16.msra.mxu0 %v4534
        %4547 = vmatprep.subr.bf16.mxu0 0
        %4548 = vmatpush1.bf16.msra.mxu0 0
        %4549 = vmatprep.subr.bf16.mxu0 0
        %4550 = vmatpush1.bf16.msra.mxu0 0
        %4551 = vmatprep.subr.bf16.mxu0 0
        %4552 = vmatpush1.bf16.msra.mxu0 0
        %4553 = vmatprep.subr.bf16.mxu0 0
        %4554 = vmatpush1.bf16.msra.mxu0 0
        %4555 = vmatprep.subr.bf16.mxu0 0
        %4556 = vmatpush1.bf16.msra.mxu0 0
        %4557 = vmatprep.subr.bf16.mxu0 0
        %4558 = vmatpush1.bf16.msra.mxu0 0
        %4559 = vmatprep.subr.bf16.mxu0 0
        %4560 = vmatpush1.bf16.msra.mxu0 0
        %4561 = vmatprep.subr.bf16.mxu0 0
        %4562 = vmatpush1.bf16.msra.mxu0 0
        %4563 = vmatprep.subr.bf16.mxu0 0
        %4564 = vmatpush1.bf16.msra.mxu0 0
        %4565 = vmatprep.subr.bf16.mxu0 0
        %4566 = vmatpush1.bf16.msra.mxu0 0
        %4567 = vmatprep.subr.bf16.mxu0 0
        %4568 = vmatpush1.bf16.msra.mxu0 0
        %4569 = vmatprep.subr.bf16.mxu0 0
        %4570 = vmatpush1.bf16.msra.mxu0 0
        %4571 = vmatprep.subr.bf16.mxu0 0
        %4572 = vmatpush1.bf16.msra.mxu0 0
        %4573 = vmatprep.subr.bf16.mxu0 0
        %4574 = vmatpush1.bf16.msra.mxu0 0
        %4575 = vmatprep.mubr.bf16.mxu0 0
        %4576 = vmatmul.mubr.bf16.gmra.mrb[0].mxu0 %v4538
        %v4577 = vpop.f32.mrb[0].mxu0
        %v4578 = vadd.f32 %v4523, %v4577
        %v4579 = vpop.f32.mrb[0].mxu0
        %v4580 = vpop.f32.mrb[0].mxu0
        %v4581 = vadd.f32 %v4523, %v4580
        %v4582 = vpop.f32.mrb[0].mxu0
        %4583 = vmatprep.mubr.bf16.mxu0 0
        %4584 = vmatmul.mubr.bf16.gmra.mrb[0].mxu0 %v4541
        %v4585 = vpop.f32.mrb[0].mxu0
        %v4586 = vadd.f32 %v4523, %v4585
        %v4587 = vpop.f32.mrb[0].mxu0
        %v4588 = vpop.f32.mrb[0].mxu0
        %v4589 = vpop.f32.mrb[0].mxu0
        %4590 = vdwg.mxu0
        %s4591 = scalar_lea.vmem %s630, 28
        %v4592 = vld [vmem:[%s4591] sm:$0x1]
        %v4594 = vlaneseq
        %v4595 = vshrl.u32 %v4594, 7
        %v4596 = vsub.s32 0, %v4595
        %v4597 = vrot.slane %v4592, %v4596
        %v4603 = vunpack.c.l.b16 %v4508
        %v4604 = vunpack.c.l.b16 %v4509
        %v4605 = vunpack.c.l.b16 %v4510
        %v4606 = vunpack.c.l.b16 %v4511
        %v4607 = vpack.c.b16 %v4604, %v4603
        %v4608 = vpack.c.b16 %v4606, %v4605
        %4611 = vmatprep.subr.bf16.mxu0 0
        %4612 = vmatpush1.bf16.msra.mxu0 %v4607
        %4613 = vmatprep.subr.bf16.mxu0 0
        %4614 = vmatpush1.bf16.msra.mxu0 %v4608
        %4615 = vmatprep.subr.bf16.mxu0 0
        %4616 = vmatpush1.bf16.msra.mxu0 0
        %4617 = vmatprep.subr.bf16.mxu0 0
        %4618 = vmatpush1.bf16.msra.mxu0 0
        %4619 = vmatprep.subr.bf16.mxu0 0
        %4620 = vmatpush1.bf16.msra.mxu0 0
        %4621 = vmatprep.subr.bf16.mxu0 0
        %4622 = vmatpush1.bf16.msra.mxu0 0
        %4623 = vmatprep.subr.bf16.mxu0 0
        %4624 = vmatpush1.bf16.msra.mxu0 0
        %4625 = vmatprep.subr.bf16.mxu0 0
        %4626 = vmatpush1.bf16.msra.mxu0 0
        %4627 = vmatprep.subr.bf16.mxu0 0
        %4628 = vmatpush1.bf16.msra.mxu0 0
        %4629 = vmatprep.subr.bf16.mxu0 0
        %4630 = vmatpush1.bf16.msra.mxu0 0
        %4631 = vmatprep.subr.bf16.mxu0 0
        %4632 = vmatpush1.bf16.msra.mxu0 0
        %4633 = vmatprep.subr.bf16.mxu0 0
        %4634 = vmatpush1.bf16.msra.mxu0 0
        %4635 = vmatprep.subr.bf16.mxu0 0
        %4636 = vmatpush1.bf16.msra.mxu0 0
        %4637 = vmatprep.subr.bf16.mxu0 0
        %4638 = vmatpush1.bf16.msra.mxu0 0
        %4639 = vmatprep.subr.bf16.mxu0 0
        %4640 = vmatpush1.bf16.msra.mxu0 0
        %4641 = vmatprep.subr.bf16.mxu0 0
        %4642 = vmatpush1.bf16.msra.mxu0 0
        %4643 = vmatprep.mubr.bf16.mxu0 0
        %4644 = vmatmul.mubr.bf16.gmra.mrb[0].mxu0 %v4538
        %v4645 = vpop.f32.mrb[0].mxu0
        %v4646 = vadd.f32 %v4597, %v4645
        %v4647 = vpop.f32.mrb[0].mxu0
        %v4648 = vpop.f32.mrb[0].mxu0
        %v4649 = vadd.f32 %v4597, %v4648
        %v4650 = vpop.f32.mrb[0].mxu0
        %4651 = vmatprep.mubr.bf16.mxu0 0
        %4652 = vmatmul.mubr.bf16.gmra.mrb[0].mxu0 %v4541
        %v4653 = vpop.f32.mrb[0].mxu0
        %v4654 = vadd.f32 %v4597, %v4653
        %v4655 = vpop.f32.mrb[0].mxu0
        %v4656 = vpop.f32.mrb[0].mxu0
        %v4657 = vpop.f32.mrb[0].mxu0
        %4658 = vdwg.mxu0
        %s4659 = scalar_lea.vmem %s630, 32
        %v4660 = vld [vmem:[%s4659] sm:$0x1]
        %v4662 = vlaneseq
        %v4663 = vshrl.u32 %v4662, 7
        %v4664 = vsub.s32 0, %v4663
        %v4665 = vrot.slane %v4660, %v4664
        %v4671 = vunpack.c.l.b16 %v4513
        %v4672 = vunpack.c.l.b16 %v4514
        %v4673 = vunpack.c.l.b16 %v4515
        %v4674 = vunpack.c.l.b16 %v4516
        %v4675 = vpack.c.b16 %v4672, %v4671
        %v4676 = vpack.c.b16 %v4674, %v4673
        %4679 = vmatprep.subr.bf16.mxu0 0
        %4680 = vmatpush1.bf16.msra.mxu0 %v4675
        %4681 = vmatprep.subr.bf16.mxu0 0
        %4682 = vmatpush1.bf16.msra.mxu0 %v4676
        %4683 = vmatprep.subr.bf16.mxu0 0
        %4684 = vmatpush1.bf16.msra.mxu0 0
        %4685 = vmatprep.subr.bf16.mxu0 0
        %4686 = vmatpush1.bf16.msra.mxu0 0
        %4687 = vmatprep.subr.bf16.mxu0 0
        %4688 = vmatpush1.bf16.msra.mxu0 0
        %4689 = vmatprep.subr.bf16.mxu0 0
        %4690 = vmatpush1.bf16.msra.mxu0 0
        %4691 = vmatprep.subr.bf16.mxu0 0
        %4692 = vmatpush1.bf16.msra.mxu0 0
        %4693 = vmatprep.subr.bf16.mxu0 0
        %4694 = vmatpush1.bf16.msra.mxu0 0
        %4695 = vmatprep.subr.bf16.mxu0 0
        %4696 = vmatpush1.bf16.msra.mxu0 0
        %4697 = vmatprep.subr.bf16.mxu0 0
        %4698 = vmatpush1.bf16.msra.mxu0 0
        %4699 = vmatprep.subr.bf16.mxu0 0
        %4700 = vmatpush1.bf16.msra.mxu0 0
        %4701 = vmatprep.subr.bf16.mxu0 0
        %4702 = vmatpush1.bf16.msra.mxu0 0
        %4703 = vmatprep.subr.bf16.mxu0 0
        %4704 = vmatpush1.bf16.msra.mxu0 0
        %4705 = vmatprep.subr.bf16.mxu0 0
        %4706 = vmatpush1.bf16.msra.mxu0 0
        %4707 = vmatprep.subr.bf16.mxu0 0
        %4708 = vmatpush1.bf16.msra.mxu0 0
        %4709 = vmatprep.subr.bf16.mxu0 0
        %4710 = vmatpush1.bf16.msra.mxu0 0
        %4711 = vmatprep.mubr.bf16.mxu0 0
        %4712 = vmatmul.mubr.bf16.gmra.mrb[0].mxu0 %v4538
        %v4713 = vpop.f32.mrb[0].mxu0
        %v4714 = vadd.f32 %v4665, %v4713
        %v4715 = vpop.f32.mrb[0].mxu0
        %v4716 = vpop.f32.mrb[0].mxu0
        %v4717 = vadd.f32 %v4665, %v4716
        %v4718 = vpop.f32.mrb[0].mxu0
        %4719 = vmatprep.mubr.bf16.mxu0 0
        %4720 = vmatmul.mubr.bf16.gmra.mrb[0].mxu0 %v4541
        %v4721 = vpop.f32.mrb[0].mxu0
        %v4722 = vadd.f32 %v4665, %v4721
        %v4723 = vpop.f32.mrb[0].mxu0
        %v4724 = vpop.f32.mrb[0].mxu0
        %v4725 = vpop.f32.mrb[0].mxu0
        %4726 = vdwg.mxu0
        %v4727 = vpack.c.bf16 %v4581, %v4578
        %v4728 = vpack.c.bf16 %v4586, %v4586
        %v4729 = vpack.c.bf16 %v4649, %v4646
        %v4730 = vpack.c.bf16 %v4654, %v4654
        %v4732 = vsel %vm1055, %v4727, 0
        %v4735 = vsel %vm1055, %v4728, 0
        %v4738 = vsel %vm1055, %v4729, 0
        %v4741 = vsel %vm1055, %v4730, 0
        %4743 = vmatprep.subr.bf16.mxu0 0
        %4744 = vmatpush1.bf16.xpose.msra.mxu0 %v4738
        %4745 = vmatprep.subr.bf16.mxu0 0
        %4746 = vmatpush1.bf16.xpose.msra.mxu0 %v4741
        %4747 = vmatprep.subr.bf16.mxu0 0
        %4748 = vmatpush1.bf16.xpose.msra.mxu0 0
        %4749 = vmatprep.subr.bf16.mxu0 0
        %4750 = vmatpush1.bf16.xpose.msra.mxu0 0
        %4751 = vmatprep.subr.bf16.mxu0 0
        %4752 = vmatpush1.bf16.xpose.msra.mxu0 0
        %4753 = vmatprep.subr.bf16.mxu0 0
        %4754 = vmatpush1.bf16.xpose.msra.mxu0 0
        %4755 = vmatprep.subr.bf16.mxu0 0
        %4756 = vmatpush1.bf16.xpose.msra.mxu0 0
        %4757 = vmatprep.subr.bf16.mxu0 0
        %4758 = vmatpush1.bf16.xpose.msra.mxu0 0
        %4759 = vmatprep.subr.bf16.mxu0 0
        %4760 = vmatpush1.bf16.xpose.msra.mxu0 0
        %4761 = vmatprep.subr.bf16.mxu0 0
        %4762 = vmatpush1.bf16.xpose.msra.mxu0 0
        %4763 = vmatprep.subr.bf16.mxu0 0
        %4764 = vmatpush1.bf16.xpose.msra.mxu0 0
        %4765 = vmatprep.subr.bf16.mxu0 0
        %4766 = vmatpush1.bf16.xpose.msra.mxu0 0
        %4767 = vmatprep.subr.bf16.mxu0 0
        %4768 = vmatpush1.bf16.xpose.msra.mxu0 0
        %4769 = vmatprep.subr.bf16.mxu0 0
        %4770 = vmatpush1.bf16.xpose.msra.mxu0 0
        %4771 = vmatprep.subr.bf16.mxu0 0
        %4772 = vmatpush1.bf16.xpose.msra.mxu0 0
        %4773 = vmatprep.subr.bf16.mxu0 0
        %4774 = vmatpush1.bf16.xpose.msra.mxu0 0
        %4775 = vmatprep.mubr.bf16.mxu0 0
        %4776 = vmatmul.mubr.bf16.gmra.mrb[0].mxu0 %v4732
        %v4777 = vpop.f32.mrb[0].mxu0
        %v4778 = vadd.f32 0.0, %v4777
        %v4779 = vpop.f32.mrb[0].mxu0
        %v4780 = vpop.f32.mrb[0].mxu0
        %v4781 = vadd.f32 0.0, %v4780
        %v4782 = vpop.f32.mrb[0].mxu0
        %4783 = vmatprep.mubr.bf16.mxu0 0
        %4784 = vmatmul.mubr.bf16.gmra.mrb[0].mxu0 %v4735
        %v4785 = vpop.f32.mrb[0].mxu0
        %v4786 = vadd.f32 0.0, %v4785
        %v4787 = vpop.f32.mrb[0].mxu0
        %v4788 = vpop.f32.mrb[0].mxu0
        %v4789 = vpop.f32.mrb[0].mxu0
        %4790 = vdwg.mxu0
        %v4791 = vsel %vm1116, %v4778, -inf
        %4792 = vmax.xlane.f32.xlu0 %v4791
        %v4793 = vpop.xlane.xlu0 %4792
        %v4794 = vsel %vm1116, %v4781, -inf
        %4795 = vmax.xlane.f32.xlu0 %v4794
        %v4796 = vpop.xlane.xlu0 %4795
        %v4797 = vsel %vm1116, %v4786, -inf
        %4798 = vmax.xlane.f32.xlu0 %v4797
        %v4799 = vpop.xlane.xlu0 %4798
        %v4800 = vsub.f32 %v4778, %v4793
        %v4801 = vsub.f32 %v4781, %v4796
        %v4802 = vsub.f32 %v4786, %v4799
        %v4803 = vmul.f32 %v4800, 1.442695
        %v4804 = vpow.pop %v4803
        %v4805 = vmul.f32 %v4801, 1.442695
        %v4806 = vpow.pop %v4805
        %v4807 = vmul.f32 %v4802, 1.442695
        %v4808 = vpow.pop %v4807
        %v4809 = vsel %vm1116, %v4804, 0.0
        %4810 = vadd.xlane.f32.xlu0 %v4809
        %v4811 = vpop.xlane.xlu0 %4810
        %v4812 = vsel %vm1116, %v4806, 0.0
        %4813 = vadd.xlane.f32.xlu0 %v4812
        %v4814 = vpop.xlane.xlu0 %4813
        %v4815 = vsel %vm1116, %v4808, 0.0
        %4816 = vadd.xlane.f32.xlu0 %v4815
        %v4817 = vpop.xlane.xlu0 %4816
        %v4818 = vrcp.pop %v4811
        %v4819 = vrcp.pop %v4814
        %v4820 = vrcp.pop %v4817
        %v4821 = vmul.f32 %v4804, %v4818
        %v4822 = vmul.f32 %v4806, %v4819
        %v4823 = vmul.f32 %v4808, %v4820
        %v4824 = vpack.c.bf16 %v4822, %v4821
        %v4825 = vpack.c.bf16 %v4823, %v4823
        %v4826 = vpack.c.bf16 %v4717, %v4714
        %v4827 = vpack.c.bf16 %v4722, %v4722
        %v4829 = vsel %vm1116, %v4824, 0
        %v4832 = vsel %vm1116, %v4825, 0
        %v4835 = vsel %vm1160, %v4827, 0
        %4837 = vmatprep.subr.bf16.mxu0 0
        %4838 = vmatpush1.bf16.msra.mxu0 %v4826
        %4839 = vmatprep.subr.bf16.mxu0 0
        %4840 = vmatpush1.bf16.msra.mxu0 %v4835
        %4841 = vmatprep.subr.bf16.mxu0 0
        %4842 = vmatpush1.bf16.msra.mxu0 0
        %4843 = vmatprep.subr.bf16.mxu0 0
        %4844 = vmatpush1.bf16.msra.mxu0 0
        %4845 = vmatprep.subr.bf16.mxu0 0
        %4846 = vmatpush1.bf16.msra.mxu0 0
        %4847 = vmatprep.subr.bf16.mxu0 0
        %4848 = vmatpush1.bf16.msra.mxu0 0
        %4849 = vmatprep.subr.bf16.mxu0 0
        %4850 = vmatpush1.bf16.msra.mxu0 0
        %4851 = vmatprep.subr.bf16.mxu0 0
        %4852 = vmatpush1.bf16.msra.mxu0 0
        %4853 = vmatprep.subr.bf16.mxu0 0
        %4854 = vmatpush1.bf16.msra.mxu0 0
        %4855 = vmatprep.subr.bf16.mxu0 0
        %4856 = vmatpush1.bf16.msra.mxu0 0
        %4857 = vmatprep.subr.bf16.mxu0 0
        %4858 = vmatpush1.bf16.msra.mxu0 0
        %4859 = vmatprep.subr.bf16.mxu0 0
        %4860 = vmatpush1.bf16.msra.mxu0 0
        %4861 = vmatprep.subr.bf16.mxu0 0
        %4862 = vmatpush1.bf16.msra.mxu0 0
        %4863 = vmatprep.subr.bf16.mxu0 0
        %4864 = vmatpush1.bf16.msra.mxu0 0
        %4865 = vmatprep.subr.bf16.mxu0 0
        %4866 = vmatpush1.bf16.msra.mxu0 0
        %4867 = vmatprep.subr.bf16.mxu0 0
        %4868 = vmatpush1.bf16.msra.mxu0 0
        %4869 = vmatprep.mubr.bf16.mxu0 0
        %4870 = vmatmul.mubr.bf16.gmra.mrb[0].mxu0 %v4829
        %v4871 = vpop.f32.mrb[0].mxu0
        %v4872 = vadd.f32 0.0, %v4871
        %v4873 = vpop.f32.mrb[0].mxu0
        %v4874 = vpop.f32.mrb[0].mxu0
        %v4875 = vadd.f32 0.0, %v4874
        %v4876 = vpop.f32.mrb[0].mxu0
        %4877 = vmatprep.mubr.bf16.mxu0 0
        %4878 = vmatmul.mubr.bf16.gmra.mrb[0].mxu0 %v4832
        %v4879 = vpop.f32.mrb[0].mxu0
        %v4880 = vadd.f32 0.0, %v4879
        %v4881 = vpop.f32.mrb[0].mxu0
        %v4882 = vpop.f32.mrb[0].mxu0
        %v4883 = vpop.f32.mrb[0].mxu0
        %4884 = vdwg.mxu0
        %s4885 = scalar_lea.vmem %s624, 400
        %v4886 = vld [vmem:[%s4885] sm:$0xf]
        %v4887 = vld [vmem:[%s4885 + $0x4] sm:$0xf]
        %v4888 = vld [vmem:[%s4885 + $0x8] sm:$0xf]
        %v4889 = vld [vmem:[%s4885 + $0xc] sm:$0xf]
        %s4890 = scalar_lea.vmem %s624, 464
        %v4891 = vld [vmem:[%s4890] sm:$0xf]
        %v4892 = vld [vmem:[%s4890 + $0x4] sm:$0xf]
        %v4893 = vld [vmem:[%s4890 + $0x8] sm:$0xf]
        %v4894 = vld [vmem:[%s4890 + $0xc] sm:$0xf]
        %s4895 = scalar_lea.vmem %s624, 528
        %v4896 = vld [vmem:[%s4895] sm:$0xf]
        %v4897 = vld [vmem:[%s4895 + $0x4] sm:$0xf]
        %v4898 = vld [vmem:[%s4895 + $0x8] sm:$0xf]
        %v4899 = vld [vmem:[%s4895 + $0xc] sm:$0xf]
        %s4900 = scalar_lea.vmem %s630, 25
        %v4901 = vld [vmem:[%s4900] sm:$0x1]
        %v4903 = vlaneseq
        %v4904 = vshrl.u32 %v4903, 7
        %v4905 = vsub.s32 0, %v4904
        %v4906 = vrot.slane %v4901, %v4905
        %v4912 = vunpack.c.l.b16 %v4886
        %v4913 = vunpack.c.l.b16 %v4887
        %v4914 = vunpack.c.l.b16 %v4888
        %v4915 = vunpack.c.l.b16 %v4889
        %v4916 = vpack.c.b16 %v4913, %v4912
        %v4917 = vpack.c.b16 %v4915, %v4914
        %4920 = vmatprep.subr.bf16.mxu0 0
        %4921 = vmatpush1.bf16.msra.mxu0 %v4916
        %4922 = vmatprep.subr.bf16.mxu0 0
        %4923 = vmatpush1.bf16.msra.mxu0 %v4917
        %4924 = vmatprep.subr.bf16.mxu0 0
        %4925 = vmatpush1.bf16.msra.mxu0 0
        %4926 = vmatprep.subr.bf16.mxu0 0
        %4927 = vmatpush1.bf16.msra.mxu0 0
        %4928 = vmatprep.subr.bf16.mxu0 0
        %4929 = vmatpush1.bf16.msra.mxu0 0
        %4930 = vmatprep.subr.bf16.mxu0 0
        %4931 = vmatpush1.bf16.msra.mxu0 0
        %4932 = vmatprep.subr.bf16.mxu0 0
        %4933 = vmatpush1.bf16.msra.mxu0 0
        %4934 = vmatprep.subr.bf16.mxu0 0
        %4935 = vmatpush1.bf16.msra.mxu0 0
        %4936 = vmatprep.subr.bf16.mxu0 0
        %4937 = vmatpush1.bf16.msra.mxu0 0
        %4938 = vmatprep.subr.bf16.mxu0 0
        %4939 = vmatpush1.bf16.msra.mxu0 0
        %4940 = vmatprep.subr.bf16.mxu0 0
        %4941 = vmatpush1.bf16.msra.mxu0 0
        %4942 = vmatprep.subr.bf16.mxu0 0
        %4943 = vmatpush1.bf16.msra.mxu0 0
        %4944 = vmatprep.subr.bf16.mxu0 0
        %4945 = vmatpush1.bf16.msra.mxu0 0
        %4946 = vmatprep.subr.bf16.mxu0 0
        %4947 = vmatpush1.bf16.msra.mxu0 0
        %4948 = vmatprep.subr.bf16.mxu0 0
        %4949 = vmatpush1.bf16.msra.mxu0 0
        %4950 = vmatprep.subr.bf16.mxu0 0
        %4951 = vmatpush1.bf16.msra.mxu0 0
        %4952 = vmatprep.mubr.bf16.mxu0 0
        %4953 = vmatmul.mubr.bf16.gmra.mrb[0].mxu0 %v4538
        %v4954 = vpop.f32.mrb[0].mxu0
        %v4955 = vadd.f32 %v4906, %v4954
        %v4956 = vpop.f32.mrb[0].mxu0
        %v4957 = vpop.f32.mrb[0].mxu0
        %v4958 = vadd.f32 %v4906, %v4957
        %v4959 = vpop.f32.mrb[0].mxu0
        %4960 = vmatprep.mubr.bf16.mxu0 0
        %4961 = vmatmul.mubr.bf16.gmra.mrb[0].mxu0 %v4541
        %v4962 = vpop.f32.mrb[0].mxu0
        %v4963 = vadd.f32 %v4906, %v4962
        %v4964 = vpop.f32.mrb[0].mxu0
        %v4965 = vpop.f32.mrb[0].mxu0
        %v4966 = vpop.f32.mrb[0].mxu0
        %4967 = vdwg.mxu0
        %s4968 = scalar_lea.vmem %s630, 29
        %v4969 = vld [vmem:[%s4968] sm:$0x1]
        %v4971 = vlaneseq
        %v4972 = vshrl.u32 %v4971, 7
        %v4973 = vsub.s32 0, %v4972
        %v4974 = vrot.slane %v4969, %v4973
        %v4980 = vunpack.c.l.b16 %v4891
        %v4981 = vunpack.c.l.b16 %v4892
        %v4982 = vunpack.c.l.b16 %v4893
        %v4983 = vunpack.c.l.b16 %v4894
        %v4984 = vpack.c.b16 %v4981, %v4980
        %v4985 = vpack.c.b16 %v4983, %v4982
        %4988 = vmatprep.subr.bf16.mxu0 0
        %4989 = vmatpush1.bf16.msra.mxu0 %v4984
        %4990 = vmatprep.subr.bf16.mxu0 0
        %4991 = vmatpush1.bf16.msra.mxu0 %v4985
        %4992 = vmatprep.subr.bf16.mxu0 0
        %4993 = vmatpush1.bf16.msra.mxu0 0
        %4994 = vmatprep.subr.bf16.mxu0 0
        %4995 = vmatpush1.bf16.msra.mxu0 0
        %4996 = vmatprep.subr.bf16.mxu0 0
        %4997 = vmatpush1.bf16.msra.mxu0 0
        %4998 = vmatprep.subr.bf16.mxu0 0
        %4999 = vmatpush1.bf16.msra.mxu0 0
        %5000 = vmatprep.subr.bf16.mxu0 0
        %5001 = vmatpush1.bf16.msra.mxu0 0
        %5002 = vmatprep.subr.bf16.mxu0 0
        %5003 = vmatpush1.bf16.msra.mxu0 0
        %5004 = vmatprep.subr.bf16.mxu0 0
        %5005 = vmatpush1.bf16.msra.mxu0 0
        %5006 = vmatprep.subr.bf16.mxu0 0
        %5007 = vmatpush1.bf16.msra.mxu0 0
        %5008 = vmatprep.subr.bf16.mxu0 0
        %5009 = vmatpush1.bf16.msra.mxu0 0
        %5010 = vmatprep.subr.bf16.mxu0 0
        %5011 = vmatpush1.bf16.msra.mxu0 0
        %5012 = vmatprep.subr.bf16.mxu0 0
        %5013 = vmatpush1.bf16.msra.mxu0 0
        %5014 = vmatprep.subr.bf16.mxu0 0
        %5015 = vmatpush1.bf16.msra.mxu0 0
        %5016 = vmatprep.subr.bf16.mxu0 0
        %5017 = vmatpush1.bf16.msra.mxu0 0
        %5018 = vmatprep.subr.bf16.mxu0 0
        %5019 = vmatpush1.bf16.msra.mxu0 0
        %5020 = vmatprep.mubr.bf16.mxu0 0
        %5021 = vmatmul.mubr.bf16.gmra.mrb[0].mxu0 %v4538
        %v5022 = vpop.f32.mrb[0].mxu0
        %v5023 = vadd.f32 %v4974, %v5022
        %v5024 = vpop.f32.mrb[0].mxu0
        %v5025 = vpop.f32.mrb[0].mxu0
        %v5026 = vadd.f32 %v4974, %v5025
        %v5027 = vpop.f32.mrb[0].mxu0
        %5028 = vmatprep.mubr.bf16.mxu0 0
        %5029 = vmatmul.mubr.bf16.gmra.mrb[0].mxu0 %v4541
        %v5030 = vpop.f32.mrb[0].mxu0
        %v5031 = vadd.f32 %v4974, %v5030
        %v5032 = vpop.f32.mrb[0].mxu0
        %v5033 = vpop.f32.mrb[0].mxu0
        %v5034 = vpop.f32.mrb[0].mxu0
        %5035 = vdwg.mxu0
        %s5036 = scalar_lea.vmem %s630, 33
        %v5037 = vld [vmem:[%s5036] sm:$0x1]
        %v5039 = vlaneseq
        %v5040 = vshrl.u32 %v5039, 7
        %v5041 = vsub.s32 0, %v5040
        %v5042 = vrot.slane %v5037, %v5041
        %v5048 = vunpack.c.l.b16 %v4896
        %v5049 = vunpack.c.l.b16 %v4897
        %v5050 = vunpack.c.l.b16 %v4898
        %v5051 = vunpack.c.l.b16 %v4899
        %v5052 = vpack.c.b16 %v5049, %v5048
        %v5053 = vpack.c.b16 %v5051, %v5050
        %5056 = vmatprep.subr.bf16.mxu0 0
        %5057 = vmatpush1.bf16.msra.mxu0 %v5052
        %5058 = vmatprep.subr.bf16.mxu0 0
        %5059 = vmatpush1.bf16.msra.mxu0 %v5053
        %5060 = vmatprep.subr.bf16.mxu0 0
        %5061 = vmatpush1.bf16.msra.mxu0 0
        %5062 = vmatprep.subr.bf16.mxu0 0
        %5063 = vmatpush1.bf16.msra.mxu0 0
        %5064 = vmatprep.subr.bf16.mxu0 0
        %5065 = vmatpush1.bf16.msra.mxu0 0
        %5066 = vmatprep.subr.bf16.mxu0 0
        %5067 = vmatpush1.bf16.msra.mxu0 0
        %5068 = vmatprep.subr.bf16.mxu0 0
        %5069 = vmatpush1.bf16.msra.mxu0 0
        %5070 = vmatprep.subr.bf16.mxu0 0
        %5071 = vmatpush1.bf16.msra.mxu0 0
        %5072 = vmatprep.subr.bf16.mxu0 0
        %5073 = vmatpush1.bf16.msra.mxu0 0
        %5074 = vmatprep.subr.bf16.mxu0 0
        %5075 = vmatpush1.bf16.msra.mxu0 0
        %5076 = vmatprep.subr.bf16.mxu0 0
        %5077 = vmatpush1.bf16.msra.mxu0 0
        %5078 = vmatprep.subr.bf16.mxu0 0
        %5079 = vmatpush1.bf16.msra.mxu0 0
        %5080 = vmatprep.subr.bf16.mxu0 0
        %5081 = vmatpush1.bf16.msra.mxu0 0
        %5082 = vmatprep.subr.bf16.mxu0 0
        %5083 = vmatpush1.bf16.msra.mxu0 0
        %5084 = vmatprep.subr.bf16.mxu0 0
        %5085 = vmatpush1.bf16.msra.mxu0 0
        %5086 = vmatprep.subr.bf16.mxu0 0
        %5087 = vmatpush1.bf16.msra.mxu0 0
        %5088 = vmatprep.mubr.bf16.mxu0 0
        %5089 = vmatmul.mubr.bf16.gmra.mrb[0].mxu0 %v4538
        %v5090 = vpop.f32.mrb[0].mxu0
        %v5091 = vadd.f32 %v5042, %v5090
        %v5092 = vpop.f32.mrb[0].mxu0
        %v5093 = vpop.f32.mrb[0].mxu0
        %v5094 = vadd.f32 %v5042, %v5093
        %v5095 = vpop.f32.mrb[0].mxu0
        %5096 = vmatprep.mubr.bf16.mxu0 0
        %5097 = vmatmul.mubr.bf16.gmra.mrb[0].mxu0 %v4541
        %v5098 = vpop.f32.mrb[0].mxu0
        %v5099 = vadd.f32 %v5042, %v5098
        %v5100 = vpop.f32.mrb[0].mxu0
        %v5101 = vpop.f32.mrb[0].mxu0
        %v5102 = vpop.f32.mrb[0].mxu0
        %5103 = vdwg.mxu0
        %v5104 = vpack.c.bf16 %v4958, %v4955
        %v5105 = vpack.c.bf16 %v4963, %v4963
        %v5106 = vpack.c.bf16 %v5026, %v5023
        %v5107 = vpack.c.bf16 %v5031, %v5031
        %v5109 = vsel %vm1055, %v5104, 0
        %v5112 = vsel %vm1055, %v5105, 0
        %v5115 = vsel %vm1055, %v5106, 0
        %v5118 = vsel %vm1055, %v5107, 0
        %5120 = vmatprep.subr.bf16.mxu0 0
        %5121 = vmatpush1.bf16.xpose.msra.mxu0 %v5115
        %5122 = vmatprep.subr.bf16.mxu0 0
        %5123 = vmatpush1.bf16.xpose.msra.mxu0 %v5118
        %5124 = vmatprep.subr.bf16.mxu0 0
        %5125 = vmatpush1.bf16.xpose.msra.mxu0 0
        %5126 = vmatprep.subr.bf16.mxu0 0
        %5127 = vmatpush1.bf16.xpose.msra.mxu0 0
        %5128 = vmatprep.subr.bf16.mxu0 0
        %5129 = vmatpush1.bf16.xpose.msra.mxu0 0
        %5130 = vmatprep.subr.bf16.mxu0 0
        %5131 = vmatpush1.bf16.xpose.msra.mxu0 0
        %5132 = vmatprep.subr.bf16.mxu0 0
        %5133 = vmatpush1.bf16.xpose.msra.mxu0 0
        %5134 = vmatprep.subr.bf16.mxu0 0
        %5135 = vmatpush1.bf16.xpose.msra.mxu0 0
        %5136 = vmatprep.subr.bf16.mxu0 0
        %5137 = vmatpush1.bf16.xpose.msra.mxu0 0
        %5138 = vmatprep.subr.bf16.mxu0 0
        %5139 = vmatpush1.bf16.xpose.msra.mxu0 0
        %5140 = vmatprep.subr.bf16.mxu0 0
        %5141 = vmatpush1.bf16.xpose.msra.mxu0 0
        %5142 = vmatprep.subr.bf16.mxu0 0
        %5143 = vmatpush1.bf16.xpose.msra.mxu0 0
        %5144 = vmatprep.subr.bf16.mxu0 0
        %5145 = vmatpush1.bf16.xpose.msra.mxu0 0
        %5146 = vmatprep.subr.bf16.mxu0 0
        %5147 = vmatpush1.bf16.xpose.msra.mxu0 0
        %5148 = vmatprep.subr.bf16.mxu0 0
        %5149 = vmatpush1.bf16.xpose.msra.mxu0 0
        %5150 = vmatprep.subr.bf16.mxu0 0
        %5151 = vmatpush1.bf16.xpose.msra.mxu0 0
        %5152 = vmatprep.mubr.bf16.mxu0 0
        %5153 = vmatmul.mubr.bf16.gmra.mrb[0].mxu0 %v5109
        %v5154 = vpop.f32.mrb[0].mxu0
        %v5155 = vadd.f32 0.0, %v5154
        %v5156 = vpop.f32.mrb[0].mxu0
        %v5157 = vpop.f32.mrb[0].mxu0
        %v5158 = vadd.f32 0.0, %v5157
        %v5159 = vpop.f32.mrb[0].mxu0
        %5160 = vmatprep.mubr.bf16.mxu0 0
        %5161 = vmatmul.mubr.bf16.gmra.mrb[0].mxu0 %v5112
        %v5162 = vpop.f32.mrb[0].mxu0
        %v5163 = vadd.f32 0.0, %v5162
        %v5164 = vpop.f32.mrb[0].mxu0
        %v5165 = vpop.f32.mrb[0].mxu0
        %v5166 = vpop.f32.mrb[0].mxu0
        %5167 = vdwg.mxu0
        %v5168 = vsel %vm1116, %v5155, -inf
        %5169 = vmax.xlane.f32.xlu0 %v5168
        %v5170 = vpop.xlane.xlu0 %5169
        %v5171 = vsel %vm1116, %v5158, -inf
        %5172 = vmax.xlane.f32.xlu0 %v5171
        %v5173 = vpop.xlane.xlu0 %5172
        %v5174 = vsel %vm1116, %v5163, -inf
        %5175 = vmax.xlane.f32.xlu0 %v5174
        %v5176 = vpop.xlane.xlu0 %5175
        %v5177 = vsub.f32 %v5155, %v5170
        %v5178 = vsub.f32 %v5158, %v5173
        %v5179 = vsub.f32 %v5163, %v5176
        %v5180 = vmul.f32 %v5177, 1.442695
        %v5181 = vpow.pop %v5180
        %v5182 = vmul.f32 %v5178, 1.442695
        %v5183 = vpow.pop %v5182
        %v5184 = vmul.f32 %v5179, 1.442695
        %v5185 = vpow.pop %v5184
        %v5186 = vsel %vm1116, %v5181, 0.0
        %5187 = vadd.xlane.f32.xlu0 %v5186
        %v5188 = vpop.xlane.xlu0 %5187
        %v5189 = vsel %vm1116, %v5183, 0.0
        %5190 = vadd.xlane.f32.xlu0 %v5189
        %v5191 = vpop.xlane.xlu0 %5190
        %v5192 = vsel %vm1116, %v5185, 0.0
        %5193 = vadd.xlane.f32.xlu0 %v5192
        %v5194 = vpop.xlane.xlu0 %5193
        %v5195 = vrcp.pop %v5188
        %v5196 = vrcp.pop %v5191
        %v5197 = vrcp.pop %v5194
        %v5198 = vmul.f32 %v5181, %v5195
        %v5199 = vmul.f32 %v5183, %v5196
        %v5200 = vmul.f32 %v5185, %v5197
        %v5201 = vpack.c.bf16 %v5199, %v5198
        %v5202 = vpack.c.bf16 %v5200, %v5200
        %v5203 = vpack.c.bf16 %v5094, %v5091
        %v5204 = vpack.c.bf16 %v5099, %v5099
        %v5206 = vsel %vm1116, %v5201, 0
        %v5209 = vsel %vm1116, %v5202, 0
        %v5212 = vsel %vm1160, %v5204, 0
        %5214 = vmatprep.subr.bf16.mxu0 0
        %5215 = vmatpush1.bf16.msra.mxu0 %v5203
        %5216 = vmatprep.subr.bf16.mxu0 0
        %5217 = vmatpush1.bf16.msra.mxu0 %v5212
        %5218 = vmatprep.subr.bf16.mxu0 0
        %5219 = vmatpush1.bf16.msra.mxu0 0
        %5220 = vmatprep.subr.bf16.mxu0 0
        %5221 = vmatpush1.bf16.msra.mxu0 0
        %5222 = vmatprep.subr.bf16.mxu0 0
        %5223 = vmatpush1.bf16.msra.mxu0 0
        %5224 = vmatprep.subr.bf16.mxu0 0
        %5225 = vmatpush1.bf16.msra.mxu0 0
        %5226 = vmatprep.subr.bf16.mxu0 0
        %5227 = vmatpush1.bf16.msra.mxu0 0
        %5228 = vmatprep.subr.bf16.mxu0 0
        %5229 = vmatpush1.bf16.msra.mxu0 0
        %5230 = vmatprep.subr.bf16.mxu0 0
        %5231 = vmatpush1.bf16.msra.mxu0 0
        %5232 = vmatprep.subr.bf16.mxu0 0
        %5233 = vmatpush1.bf16.msra.mxu0 0
        %5234 = vmatprep.subr.bf16.mxu0 0
        %5235 = vmatpush1.bf16.msra.mxu0 0
        %5236 = vmatprep.subr.bf16.mxu0 0
        %5237 = vmatpush1.bf16.msra.mxu0 0
        %5238 = vmatprep.subr.bf16.mxu0 0
        %5239 = vmatpush1.bf16.msra.mxu0 0
        %5240 = vmatprep.subr.bf16.mxu0 0
        %5241 = vmatpush1.bf16.msra.mxu0 0
        %5242 = vmatprep.subr.bf16.mxu0 0
        %5243 = vmatpush1.bf16.msra.mxu0 0
        %5244 = vmatprep.subr.bf16.mxu0 0
        %5245 = vmatpush1.bf16.msra.mxu0 0
        %5246 = vmatprep.mubr.bf16.mxu0 0
        %5247 = vmatmul.mubr.bf16.gmra.mrb[0].mxu0 %v5206
        %v5248 = vpop.f32.mrb[0].mxu0
        %v5249 = vadd.f32 0.0, %v5248
        %v5250 = vpop.f32.mrb[0].mxu0
        %v5251 = vpop.f32.mrb[0].mxu0
        %v5252 = vadd.f32 0.0, %v5251
        %v5253 = vpop.f32.mrb[0].mxu0
        %5254 = vmatprep.mubr.bf16.mxu0 0
        %5255 = vmatmul.mubr.bf16.gmra.mrb[0].mxu0 %v5209
        %v5256 = vpop.f32.mrb[0].mxu0
        %v5257 = vadd.f32 0.0, %v5256
        %v5258 = vpop.f32.mrb[0].mxu0
        %v5259 = vpop.f32.mrb[0].mxu0
        %v5260 = vpop.f32.mrb[0].mxu0
        %5261 = vdwg.mxu0
        %s5262 = scalar_lea.vmem %s624, 416
        %v5263 = vld [vmem:[%s5262] sm:$0xf]
        %v5264 = vld [vmem:[%s5262 + $0x4] sm:$0xf]
        %v5265 = vld [vmem:[%s5262 + $0x8] sm:$0xf]
        %v5266 = vld [vmem:[%s5262 + $0xc] sm:$0xf]
        %s5267 = scalar_lea.vmem %s624, 480
        %v5268 = vld [vmem:[%s5267] sm:$0xf]
        %v5269 = vld [vmem:[%s5267 + $0x4] sm:$0xf]
        %v5270 = vld [vmem:[%s5267 + $0x8] sm:$0xf]
        %v5271 = vld [vmem:[%s5267 + $0xc] sm:$0xf]
        %s5272 = scalar_lea.vmem %s624, 544
        %v5273 = vld [vmem:[%s5272] sm:$0xf]
        %v5274 = vld [vmem:[%s5272 + $0x4] sm:$0xf]
        %v5275 = vld [vmem:[%s5272 + $0x8] sm:$0xf]
        %v5276 = vld [vmem:[%s5272 + $0xc] sm:$0xf]
        %s5277 = scalar_lea.vmem %s630, 26
        %v5278 = vld [vmem:[%s5277] sm:$0x1]
        %v5280 = vlaneseq
        %v5281 = vshrl.u32 %v5280, 7
        %v5282 = vsub.s32 0, %v5281
        %v5283 = vrot.slane %v5278, %v5282
        %v5289 = vunpack.c.l.b16 %v5263
        %v5290 = vunpack.c.l.b16 %v5264
        %v5291 = vunpack.c.l.b16 %v5265
        %v5292 = vunpack.c.l.b16 %v5266
        %v5293 = vpack.c.b16 %v5290, %v5289
        %v5294 = vpack.c.b16 %v5292, %v5291
        %5297 = vmatprep.subr.bf16.mxu0 0
        %5298 = vmatpush1.bf16.msra.mxu0 %v5293
        %5299 = vmatprep.subr.bf16.mxu0 0
        %5300 = vmatpush1.bf16.msra.mxu0 %v5294
        %5301 = vmatprep.subr.bf16.mxu0 0
        %5302 = vmatpush1.bf16.msra.mxu0 0
        %5303 = vmatprep.subr.bf16.mxu0 0
        %5304 = vmatpush1.bf16.msra.mxu0 0
        %5305 = vmatprep.subr.bf16.mxu0 0
        %5306 = vmatpush1.bf16.msra.mxu0 0
        %5307 = vmatprep.subr.bf16.mxu0 0
        %5308 = vmatpush1.bf16.msra.mxu0 0
        %5309 = vmatprep.subr.bf16.mxu0 0
        %5310 = vmatpush1.bf16.msra.mxu0 0
        %5311 = vmatprep.subr.bf16.mxu0 0
        %5312 = vmatpush1.bf16.msra.mxu0 0
        %5313 = vmatprep.subr.bf16.mxu0 0
        %5314 = vmatpush1.bf16.msra.mxu0 0
        %5315 = vmatprep.subr.bf16.mxu0 0
        %5316 = vmatpush1.bf16.msra.mxu0 0
        %5317 = vmatprep.subr.bf16.mxu0 0
        %5318 = vmatpush1.bf16.msra.mxu0 0
        %5319 = vmatprep.subr.bf16.mxu0 0
        %5320 = vmatpush1.bf16.msra.mxu0 0
        %5321 = vmatprep.subr.bf16.mxu0 0
        %5322 = vmatpush1.bf16.msra.mxu0 0
        %5323 = vmatprep.subr.bf16.mxu0 0
        %5324 = vmatpush1.bf16.msra.mxu0 0
        %5325 = vmatprep.subr.bf16.mxu0 0
        %5326 = vmatpush1.bf16.msra.mxu0 0
        %5327 = vmatprep.subr.bf16.mxu0 0
        %5328 = vmatpush1.bf16.msra.mxu0 0
        %5329 = vmatprep.mubr.bf16.mxu0 0
        %5330 = vmatmul.mubr.bf16.gmra.mrb[0].mxu0 %v4538
        %v5331 = vpop.f32.mrb[0].mxu0
        %v5332 = vadd.f32 %v5283, %v5331
        %v5333 = vpop.f32.mrb[0].mxu0
        %v5334 = vpop.f32.mrb[0].mxu0
        %v5335 = vadd.f32 %v5283, %v5334
        %v5336 = vpop.f32.mrb[0].mxu0
        %5337 = vmatprep.mubr.bf16.mxu0 0
        %5338 = vmatmul.mubr.bf16.gmra.mrb[0].mxu0 %v4541
        %v5339 = vpop.f32.mrb[0].mxu0
        %v5340 = vadd.f32 %v5283, %v5339
        %v5341 = vpop.f32.mrb[0].mxu0
        %v5342 = vpop.f32.mrb[0].mxu0
        %v5343 = vpop.f32.mrb[0].mxu0
        %5344 = vdwg.mxu0
        %s5345 = scalar_lea.vmem %s630, 30
        %v5346 = vld [vmem:[%s5345] sm:$0x1]
        %v5348 = vlaneseq
        %v5349 = vshrl.u32 %v5348, 7
        %v5350 = vsub.s32 0, %v5349
        %v5351 = vrot.slane %v5346, %v5350
        %v5357 = vunpack.c.l.b16 %v5268
        %v5358 = vunpack.c.l.b16 %v5269
        %v5359 = vunpack.c.l.b16 %v5270
        %v5360 = vunpack.c.l.b16 %v5271
        %v5361 = vpack.c.b16 %v5358, %v5357
        %v5362 = vpack.c.b16 %v5360, %v5359
        %5365 = vmatprep.subr.bf16.mxu0 0
        %5366 = vmatpush1.bf16.msra.mxu0 %v5361
        %5367 = vmatprep.subr.bf16.mxu0 0
        %5368 = vmatpush1.bf16.msra.mxu0 %v5362
        %5369 = vmatprep.subr.bf16.mxu0 0
        %5370 = vmatpush1.bf16.msra.mxu0 0
        %5371 = vmatprep.subr.bf16.mxu0 0
        %5372 = vmatpush1.bf16.msra.mxu0 0
        %5373 = vmatprep.subr.bf16.mxu0 0
        %5374 = vmatpush1.bf16.msra.mxu0 0
        %5375 = vmatprep.subr.bf16.mxu0 0
        %5376 = vmatpush1.bf16.msra.mxu0 0
        %5377 = vmatprep.subr.bf16.mxu0 0
        %5378 = vmatpush1.bf16.msra.mxu0 0
        %5379 = vmatprep.subr.bf16.mxu0 0
        %5380 = vmatpush1.bf16.msra.mxu0 0
        %5381 = vmatprep.subr.bf16.mxu0 0
        %5382 = vmatpush1.bf16.msra.mxu0 0
        %5383 = vmatprep.subr.bf16.mxu0 0
        %5384 = vmatpush1.bf16.msra.mxu0 0
        %5385 = vmatprep.subr.bf16.mxu0 0
        %5386 = vmatpush1.bf16.msra.mxu0 0
        %5387 = vmatprep.subr.bf16.mxu0 0
        %5388 = vmatpush1.bf16.msra.mxu0 0
        %5389 = vmatprep.subr.bf16.mxu0 0
        %5390 = vmatpush1.bf16.msra.mxu0 0
        %5391 = vmatprep.subr.bf16.mxu0 0
        %5392 = vmatpush1.bf16.msra.mxu0 0
        %5393 = vmatprep.subr.bf16.mxu0 0
        %5394 = vmatpush1.bf16.msra.mxu0 0
        %5395 = vmatprep.subr.bf16.mxu0 0
        %5396 = vmatpush1.bf16.msra.mxu0 0
        %5397 = vmatprep.mubr.bf16.mxu0 0
        %5398 = vmatmul.mubr.bf16.gmra.mrb[0].mxu0 %v4538
        %v5399 = vpop.f32.mrb[0].mxu0
        %v5400 = vadd.f32 %v5351, %v5399
        %v5401 = vpop.f32.mrb[0].mxu0
        %v5402 = vpop.f32.mrb[0].mxu0
        %v5403 = vadd.f32 %v5351, %v5402
        %v5404 = vpop.f32.mrb[0].mxu0
        %5405 = vmatprep.mubr.bf16.mxu0 0
        %5406 = vmatmul.mubr.bf16.gmra.mrb[0].mxu0 %v4541
        %v5407 = vpop.f32.mrb[0].mxu0
        %v5408 = vadd.f32 %v5351, %v5407
        %v5409 = vpop.f32.mrb[0].mxu0
        %v5410 = vpop.f32.mrb[0].mxu0
        %v5411 = vpop.f32.mrb[0].mxu0
        %5412 = vdwg.mxu0
        %s5413 = scalar_lea.vmem %s630, 34
        %v5414 = vld [vmem:[%s5413] sm:$0x1]
        %v5416 = vlaneseq
        %v5417 = vshrl.u32 %v5416, 7
        %v5418 = vsub.s32 0, %v5417
        %v5419 = vrot.slane %v5414, %v5418
        %v5425 = vunpack.c.l.b16 %v5273
        %v5426 = vunpack.c.l.b16 %v5274
        %v5427 = vunpack.c.l.b16 %v5275
        %v5428 = vunpack.c.l.b16 %v5276
        %v5429 = vpack.c.b16 %v5426, %v5425
        %v5430 = vpack.c.b16 %v5428, %v5427
        %5433 = vmatprep.subr.bf16.mxu0 0
        %5434 = vmatpush1.bf16.msra.mxu0 %v5429
        %5435 = vmatprep.subr.bf16.mxu0 0
        %5436 = vmatpush1.bf16.msra.mxu0 %v5430
        %5437 = vmatprep.subr.bf16.mxu0 0
        %5438 = vmatpush1.bf16.msra.mxu0 0
        %5439 = vmatprep.subr.bf16.mxu0 0
        %5440 = vmatpush1.bf16.msra.mxu0 0
        %5441 = vmatprep.subr.bf16.mxu0 0
        %5442 = vmatpush1.bf16.msra.mxu0 0
        %5443 = vmatprep.subr.bf16.mxu0 0
        %5444 = vmatpush1.bf16.msra.mxu0 0
        %5445 = vmatprep.subr.bf16.mxu0 0
        %5446 = vmatpush1.bf16.msra.mxu0 0
        %5447 = vmatprep.subr.bf16.mxu0 0
        %5448 = vmatpush1.bf16.msra.mxu0 0
        %5449 = vmatprep.subr.bf16.mxu0 0
        %5450 = vmatpush1.bf16.msra.mxu0 0
        %5451 = vmatprep.subr.bf16.mxu0 0
        %5452 = vmatpush1.bf16.msra.mxu0 0
        %5453 = vmatprep.subr.bf16.mxu0 0
        %5454 = vmatpush1.bf16.msra.mxu0 0
        %5455 = vmatprep.subr.bf16.mxu0 0
        %5456 = vmatpush1.bf16.msra.mxu0 0
        %5457 = vmatprep.subr.bf16.mxu0 0
        %5458 = vmatpush1.bf16.msra.mxu0 0
        %5459 = vmatprep.subr.bf16.mxu0 0
        %5460 = vmatpush1.bf16.msra.mxu0 0
        %5461 = vmatprep.subr.bf16.mxu0 0
        %5462 = vmatpush1.bf16.msra.mxu0 0
        %5463 = vmatprep.subr.bf16.mxu0 0
        %5464 = vmatpush1.bf16.msra.mxu0 0
        %5465 = vmatprep.mubr.bf16.mxu0 0
        %5466 = vmatmul.mubr.bf16.gmra.mrb[0].mxu0 %v4538
        %v5467 = vpop.f32.mrb[0].mxu0
        %v5468 = vadd.f32 %v5419, %v5467
        %v5469 = vpop.f32.mrb[0].mxu0
        %v5470 = vpop.f32.mrb[0].mxu0
        %v5471 = vadd.f32 %v5419, %v5470
        %v5472 = vpop.f32.mrb[0].mxu0
        %5473 = vmatprep.mubr.bf16.mxu0 0
        %5474 = vmatmul.mubr.bf16.gmra.mrb[0].mxu0 %v4541
        %v5475 = vpop.f32.mrb[0].mxu0
        %v5476 = vadd.f32 %v5419, %v5475
        %v5477 = vpop.f32.mrb[0].mxu0
        %v5478 = vpop.f32.mrb[0].mxu0
        %v5479 = vpop.f32.mrb[0].mxu0
        %5480 = vdwg.mxu0
        %v5481 = vpack.c.bf16 %v5335, %v5332
        %v5482 = vpack.c.bf16 %v5340, %v5340
        %v5483 = vpack.c.bf16 %v5403, %v5400
        %v5484 = vpack.c.bf16 %v5408, %v5408
        %v5486 = vsel %vm1055, %v5481, 0
        %v5489 = vsel %vm1055, %v5482, 0
        %v5492 = vsel %vm1055, %v5483, 0
        %v5495 = vsel %vm1055, %v5484, 0
        %5497 = vmatprep.subr.bf16.mxu0 0
        %5498 = vmatpush1.bf16.xpose.msra.mxu0 %v5492
        %5499 = vmatprep.subr.bf16.mxu0 0
        %5500 = vmatpush1.bf16.xpose.msra.mxu0 %v5495
        %5501 = vmatprep.subr.bf16.mxu0 0
        %5502 = vmatpush1.bf16.xpose.msra.mxu0 0
        %5503 = vmatprep.subr.bf16.mxu0 0
        %5504 = vmatpush1.bf16.xpose.msra.mxu0 0
        %5505 = vmatprep.subr.bf16.mxu0 0
        %5506 = vmatpush1.bf16.xpose.msra.mxu0 0
        %5507 = vmatprep.subr.bf16.mxu0 0
        %5508 = vmatpush1.bf16.xpose.msra.mxu0 0
        %5509 = vmatprep.subr.bf16.mxu0 0
        %5510 = vmatpush1.bf16.xpose.msra.mxu0 0
        %5511 = vmatprep.subr.bf16.mxu0 0
        %5512 = vmatpush1.bf16.xpose.msra.mxu0 0
        %5513 = vmatprep.subr.bf16.mxu0 0
        %5514 = vmatpush1.bf16.xpose.msra.mxu0 0
        %5515 = vmatprep.subr.bf16.mxu0 0
        %5516 = vmatpush1.bf16.xpose.msra.mxu0 0
        %5517 = vmatprep.subr.bf16.mxu0 0
        %5518 = vmatpush1.bf16.xpose.msra.mxu0 0
        %5519 = vmatprep.subr.bf16.mxu0 0
        %5520 = vmatpush1.bf16.xpose.msra.mxu0 0
        %5521 = vmatprep.subr.bf16.mxu0 0
        %5522 = vmatpush1.bf16.xpose.msra.mxu0 0
        %5523 = vmatprep.subr.bf16.mxu0 0
        %5524 = vmatpush1.bf16.xpose.msra.mxu0 0
        %5525 = vmatprep.subr.bf16.mxu0 0
        %5526 = vmatpush1.bf16.xpose.msra.mxu0 0
        %5527 = vmatprep.subr.bf16.mxu0 0
        %5528 = vmatpush1.bf16.xpose.msra.mxu0 0
        %5529 = vmatprep.mubr.bf16.mxu0 0
        %5530 = vmatmul.mubr.bf16.gmra.mrb[0].mxu0 %v5486
        %v5531 = vpop.f32.mrb[0].mxu0
        %v5532 = vadd.f32 0.0, %v5531
        %v5533 = vpop.f32.mrb[0].mxu0
        %v5534 = vpop.f32.mrb[0].mxu0
        %v5535 = vadd.f32 0.0, %v5534
        %v5536 = vpop.f32.mrb[0].mxu0
        %5537 = vmatprep.mubr.bf16.mxu0 0
        %5538 = vmatmul.mubr.bf16.gmra.mrb[0].mxu0 %v5489
        %v5539 = vpop.f32.mrb[0].mxu0
        %v5540 = vadd.f32 0.0, %v5539
        %v5541 = vpop.f32.mrb[0].mxu0
        %v5542 = vpop.f32.mrb[0].mxu0
        %v5543 = vpop.f32.mrb[0].mxu0
        %5544 = vdwg.mxu0
        %v5545 = vsel %vm1116, %v5532, -inf
        %5546 = vmax.xlane.f32.xlu0 %v5545
        %v5547 = vpop.xlane.xlu0 %5546
        %v5548 = vsel %vm1116, %v5535, -inf
        %5549 = vmax.xlane.f32.xlu0 %v5548
        %v5550 = vpop.xlane.xlu0 %5549
        %v5551 = vsel %vm1116, %v5540, -inf
        %5552 = vmax.xlane.f32.xlu0 %v5551
        %v5553 = vpop.xlane.xlu0 %5552
        %v5554 = vsub.f32 %v5532, %v5547
        %v5555 = vsub.f32 %v5535, %v5550
        %v5556 = vsub.f32 %v5540, %v5553
        %v5557 = vmul.f32 %v5554, 1.442695
        %v5558 = vpow.pop %v5557
        %v5559 = vmul.f32 %v5555, 1.442695
        %v5560 = vpow.pop %v5559
        %v5561 = vmul.f32 %v5556, 1.442695
        %v5562 = vpow.pop %v5561
        %v5563 = vsel %vm1116, %v5558, 0.0
        %5564 = vadd.xlane.f32.xlu0 %v5563
        %v5565 = vpop.xlane.xlu0 %5564
        %v5566 = vsel %vm1116, %v5560, 0.0
        %5567 = vadd.xlane.f32.xlu0 %v5566
        %v5568 = vpop.xlane.xlu0 %5567
        %v5569 = vsel %vm1116, %v5562, 0.0
        %5570 = vadd.xlane.f32.xlu0 %v5569
        %v5571 = vpop.xlane.xlu0 %5570
        %v5572 = vrcp.pop %v5565
        %v5573 = vrcp.pop %v5568
        %v5574 = vrcp.pop %v5571
        %v5575 = vmul.f32 %v5558, %v5572
        %v5576 = vmul.f32 %v5560, %v5573
        %v5577 = vmul.f32 %v5562, %v5574
        %v5578 = vpack.c.bf16 %v5576, %v5575
        %v5579 = vpack.c.bf16 %v5577, %v5577
        %v5580 = vpack.c.bf16 %v5471, %v5468
        %v5581 = vpack.c.bf16 %v5476, %v5476
        %v5583 = vsel %vm1116, %v5578, 0
        %v5586 = vsel %vm1116, %v5579, 0
        %v5589 = vsel %vm1160, %v5581, 0
        %5591 = vmatprep.subr.bf16.mxu0 0
        %5592 = vmatpush1.bf16.msra.mxu0 %v5580
        %5593 = vmatprep.subr.bf16.mxu0 0
        %5594 = vmatpush1.bf16.msra.mxu0 %v5589
        %5595 = vmatprep.subr.bf16.mxu0 0
        %5596 = vmatpush1.bf16.msra.mxu0 0
        %5597 = vmatprep.subr.bf16.mxu0 0
        %5598 = vmatpush1.bf16.msra.mxu0 0
        %5599 = vmatprep.subr.bf16.mxu0 0
        %5600 = vmatpush1.bf16.msra.mxu0 0
        %5601 = vmatprep.subr.bf16.mxu0 0
        %5602 = vmatpush1.bf16.msra.mxu0 0
        %5603 = vmatprep.subr.bf16.mxu0 0
        %5604 = vmatpush1.bf16.msra.mxu0 0
        %5605 = vmatprep.subr.bf16.mxu0 0
        %5606 = vmatpush1.bf16.msra.mxu0 0
        %5607 = vmatprep.subr.bf16.mxu0 0
        %5608 = vmatpush1.bf16.msra.mxu0 0
        %5609 = vmatprep.subr.bf16.mxu0 0
        %5610 = vmatpush1.bf16.msra.mxu0 0
        %5611 = vmatprep.subr.bf16.mxu0 0
        %5612 = vmatpush1.bf16.msra.mxu0 0
        %5613 = vmatprep.subr.bf16.mxu0 0
        %5614 = vmatpush1.bf16.msra.mxu0 0
        %5615 = vmatprep.subr.bf16.mxu0 0
        %5616 = vmatpush1.bf16.msra.mxu0 0
        %5617 = vmatprep.subr.bf16.mxu0 0
        %5618 = vmatpush1.bf16.msra.mxu0 0
        %5619 = vmatprep.subr.bf16.mxu0 0
        %5620 = vmatpush1.bf16.msra.mxu0 0
        %5621 = vmatprep.subr.bf16.mxu0 0
        %5622 = vmatpush1.bf16.msra.mxu0 0
        %5623 = vmatprep.mubr.bf16.mxu0 0
        %5624 = vmatmul.mubr.bf16.gmra.mrb[0].mxu0 %v5583
        %v5625 = vpop.f32.mrb[0].mxu0
        %v5626 = vadd.f32 0.0, %v5625
        %v5627 = vpop.f32.mrb[0].mxu0
        %v5628 = vpop.f32.mrb[0].mxu0
        %v5629 = vadd.f32 0.0, %v5628
        %v5630 = vpop.f32.mrb[0].mxu0
        %5631 = vmatprep.mubr.bf16.mxu0 0
        %5632 = vmatmul.mubr.bf16.gmra.mrb[0].mxu0 %v5586
        %v5633 = vpop.f32.mrb[0].mxu0
        %v5634 = vadd.f32 0.0, %v5633
        %v5635 = vpop.f32.mrb[0].mxu0
        %v5636 = vpop.f32.mrb[0].mxu0
        %v5637 = vpop.f32.mrb[0].mxu0
        %5638 = vdwg.mxu0
        %s5639 = scalar_lea.vmem %s624, 432
        %v5640 = vld [vmem:[%s5639] sm:$0xf]
        %v5641 = vld [vmem:[%s5639 + $0x4] sm:$0xf]
        %v5642 = vld [vmem:[%s5639 + $0x8] sm:$0xf]
        %v5643 = vld [vmem:[%s5639 + $0xc] sm:$0xf]
        %s5644 = scalar_lea.vmem %s624, 496
        %v5645 = vld [vmem:[%s5644] sm:$0xf]
        %v5646 = vld [vmem:[%s5644 + $0x4] sm:$0xf]
        %v5647 = vld [vmem:[%s5644 + $0x8] sm:$0xf]
        %v5648 = vld [vmem:[%s5644 + $0xc] sm:$0xf]
        %s5649 = scalar_lea.vmem %s624, 560
        %v5650 = vld [vmem:[%s5649] sm:$0xf]
        %v5651 = vld [vmem:[%s5649 + $0x4] sm:$0xf]
        %v5652 = vld [vmem:[%s5649 + $0x8] sm:$0xf]
        %v5653 = vld [vmem:[%s5649 + $0xc] sm:$0xf]
        %s5654 = scalar_lea.vmem %s630, 27
        %v5655 = vld [vmem:[%s5654] sm:$0x1]
        %v5657 = vlaneseq
        %v5658 = vshrl.u32 %v5657, 7
        %v5659 = vsub.s32 0, %v5658
        %v5660 = vrot.slane %v5655, %v5659
        %v5666 = vunpack.c.l.b16 %v5640
        %v5667 = vunpack.c.l.b16 %v5641
        %v5668 = vunpack.c.l.b16 %v5642
        %v5669 = vunpack.c.l.b16 %v5643
        %v5670 = vpack.c.b16 %v5667, %v5666
        %v5671 = vpack.c.b16 %v5669, %v5668
        %5674 = vmatprep.subr.bf16.mxu0 0
        %5675 = vmatpush1.bf16.msra.mxu0 %v5670
        %5676 = vmatprep.subr.bf16.mxu0 0
        %5677 = vmatpush1.bf16.msra.mxu0 %v5671
        %5678 = vmatprep.subr.bf16.mxu0 0
        %5679 = vmatpush1.bf16.msra.mxu0 0
        %5680 = vmatprep.subr.bf16.mxu0 0
        %5681 = vmatpush1.bf16.msra.mxu0 0
        %5682 = vmatprep.subr.bf16.mxu0 0
        %5683 = vmatpush1.bf16.msra.mxu0 0
        %5684 = vmatprep.subr.bf16.mxu0 0
        %5685 = vmatpush1.bf16.msra.mxu0 0
        %5686 = vmatprep.subr.bf16.mxu0 0
        %5687 = vmatpush1.bf16.msra.mxu0 0
        %5688 = vmatprep.subr.bf16.mxu0 0
        %5689 = vmatpush1.bf16.msra.mxu0 0
        %5690 = vmatprep.subr.bf16.mxu0 0
        %5691 = vmatpush1.bf16.msra.mxu0 0
        %5692 = vmatprep.subr.bf16.mxu0 0
        %5693 = vmatpush1.bf16.msra.mxu0 0
        %5694 = vmatprep.subr.bf16.mxu0 0
        %5695 = vmatpush1.bf16.msra.mxu0 0
        %5696 = vmatprep.subr.bf16.mxu0 0
        %5697 = vmatpush1.bf16.msra.mxu0 0
        %5698 = vmatprep.subr.bf16.mxu0 0
        %5699 = vmatpush1.bf16.msra.mxu0 0
        %5700 = vmatprep.subr.bf16.mxu0 0
        %5701 = vmatpush1.bf16.msra.mxu0 0
        %5702 = vmatprep.subr.bf16.mxu0 0
        %5703 = vmatpush1.bf16.msra.mxu0 0
        %5704 = vmatprep.subr.bf16.mxu0 0
        %5705 = vmatpush1.bf16.msra.mxu0 0
        %5706 = vmatprep.mubr.bf16.mxu0 0
        %5707 = vmatmul.mubr.bf16.gmra.mrb[0].mxu0 %v4538
        %v5708 = vpop.f32.mrb[0].mxu0
        %v5709 = vadd.f32 %v5660, %v5708
        %v5710 = vpop.f32.mrb[0].mxu0
        %v5711 = vpop.f32.mrb[0].mxu0
        %v5712 = vadd.f32 %v5660, %v5711
        %v5713 = vpop.f32.mrb[0].mxu0
        %5714 = vmatprep.mubr.bf16.mxu0 0
        %5715 = vmatmul.mubr.bf16.gmra.mrb[0].mxu0 %v4541
        %v5716 = vpop.f32.mrb[0].mxu0
        %v5717 = vadd.f32 %v5660, %v5716
        %v5718 = vpop.f32.mrb[0].mxu0
        %v5719 = vpop.f32.mrb[0].mxu0
        %v5720 = vpop.f32.mrb[0].mxu0
        %5721 = vdwg.mxu0
        %s5722 = scalar_lea.vmem %s630, 31
        %v5723 = vld [vmem:[%s5722] sm:$0x1]
        %v5725 = vlaneseq
        %v5726 = vshrl.u32 %v5725, 7
        %v5727 = vsub.s32 0, %v5726
        %v5728 = vrot.slane %v5723, %v5727
        %v5734 = vunpack.c.l.b16 %v5645
        %v5735 = vunpack.c.l.b16 %v5646
        %v5736 = vunpack.c.l.b16 %v5647
        %v5737 = vunpack.c.l.b16 %v5648
        %v5738 = vpack.c.b16 %v5735, %v5734
        %v5739 = vpack.c.b16 %v5737, %v5736
        %5742 = vmatprep.subr.bf16.mxu0 0
        %5743 = vmatpush1.bf16.msra.mxu0 %v5738
        %5744 = vmatprep.subr.bf16.mxu0 0
        %5745 = vmatpush1.bf16.msra.mxu0 %v5739
        %5746 = vmatprep.subr.bf16.mxu0 0
        %5747 = vmatpush1.bf16.msra.mxu0 0
        %5748 = vmatprep.subr.bf16.mxu0 0
        %5749 = vmatpush1.bf16.msra.mxu0 0
        %5750 = vmatprep.subr.bf16.mxu0 0
        %5751 = vmatpush1.bf16.msra.mxu0 0
        %5752 = vmatprep.subr.bf16.mxu0 0
        %5753 = vmatpush1.bf16.msra.mxu0 0
        %5754 = vmatprep.subr.bf16.mxu0 0
        %5755 = vmatpush1.bf16.msra.mxu0 0
        %5756 = vmatprep.subr.bf16.mxu0 0
        %5757 = vmatpush1.bf16.msra.mxu0 0
        %5758 = vmatprep.subr.bf16.mxu0 0
        %5759 = vmatpush1.bf16.msra.mxu0 0
        %5760 = vmatprep.subr.bf16.mxu0 0
        %5761 = vmatpush1.bf16.msra.mxu0 0
        %5762 = vmatprep.subr.bf16.mxu0 0
        %5763 = vmatpush1.bf16.msra.mxu0 0
        %5764 = vmatprep.subr.bf16.mxu0 0
        %5765 = vmatpush1.bf16.msra.mxu0 0
        %5766 = vmatprep.subr.bf16.mxu0 0
        %5767 = vmatpush1.bf16.msra.mxu0 0
        %5768 = vmatprep.subr.bf16.mxu0 0
        %5769 = vmatpush1.bf16.msra.mxu0 0
        %5770 = vmatprep.subr.bf16.mxu0 0
        %5771 = vmatpush1.bf16.msra.mxu0 0
        %5772 = vmatprep.subr.bf16.mxu0 0
        %5773 = vmatpush1.bf16.msra.mxu0 0
        %5774 = vmatprep.mubr.bf16.mxu0 0
        %5775 = vmatmul.mubr.bf16.gmra.mrb[0].mxu0 %v4538
        %v5776 = vpop.f32.mrb[0].mxu0
        %v5777 = vadd.f32 %v5728, %v5776
        %v5778 = vpop.f32.mrb[0].mxu0
        %v5779 = vpop.f32.mrb[0].mxu0
        %v5780 = vadd.f32 %v5728, %v5779
        %v5781 = vpop.f32.mrb[0].mxu0
        %5782 = vmatprep.mubr.bf16.mxu0 0
        %5783 = vmatmul.mubr.bf16.gmra.mrb[0].mxu0 %v4541
        %v5784 = vpop.f32.mrb[0].mxu0
        %v5785 = vadd.f32 %v5728, %v5784
        %v5786 = vpop.f32.mrb[0].mxu0
        %v5787 = vpop.f32.mrb[0].mxu0
        %v5788 = vpop.f32.mrb[0].mxu0
        %5789 = vdwg.mxu0
        %s5790 = scalar_lea.vmem %s630, 35
        %v5791 = vld [vmem:[%s5790] sm:$0x1]
        %v5793 = vlaneseq
        %v5794 = vshrl.u32 %v5793, 7
        %v5795 = vsub.s32 0, %v5794
        %v5796 = vrot.slane %v5791, %v5795
        %v5802 = vunpack.c.l.b16 %v5650
        %v5803 = vunpack.c.l.b16 %v5651
        %v5804 = vunpack.c.l.b16 %v5652
        %v5805 = vunpack.c.l.b16 %v5653
        %v5806 = vpack.c.b16 %v5803, %v5802
        %v5807 = vpack.c.b16 %v5805, %v5804
        %5810 = vmatprep.subr.bf16.mxu0 0
        %5811 = vmatpush1.bf16.msra.mxu0 %v5806
        %5812 = vmatprep.subr.bf16.mxu0 0
        %5813 = vmatpush1.bf16.msra.mxu0 %v5807
        %5814 = vmatprep.subr.bf16.mxu0 0
        %5815 = vmatpush1.bf16.msra.mxu0 0
        %5816 = vmatprep.subr.bf16.mxu0 0
        %5817 = vmatpush1.bf16.msra.mxu0 0
        %5818 = vmatprep.subr.bf16.mxu0 0
        %5819 = vmatpush1.bf16.msra.mxu0 0
        %5820 = vmatprep.subr.bf16.mxu0 0
        %5821 = vmatpush1.bf16.msra.mxu0 0
        %5822 = vmatprep.subr.bf16.mxu0 0
        %5823 = vmatpush1.bf16.msra.mxu0 0
        %5824 = vmatprep.subr.bf16.mxu0 0
        %5825 = vmatpush1.bf16.msra.mxu0 0
        %5826 = vmatprep.subr.bf16.mxu0 0
        %5827 = vmatpush1.bf16.msra.mxu0 0
        %5828 = vmatprep.subr.bf16.mxu0 0
        %5829 = vmatpush1.bf16.msra.mxu0 0
        %5830 = vmatprep.subr.bf16.mxu0 0
        %5831 = vmatpush1.bf16.msra.mxu0 0
        %5832 = vmatprep.subr.bf16.mxu0 0
        %5833 = vmatpush1.bf16.msra.mxu0 0
        %5834 = vmatprep.subr.bf16.mxu0 0
        %5835 = vmatpush1.bf16.msra.mxu0 0
        %5836 = vmatprep.subr.bf16.mxu0 0
        %5837 = vmatpush1.bf16.msra.mxu0 0
        %5838 = vmatprep.subr.bf16.mxu0 0
        %5839 = vmatpush1.bf16.msra.mxu0 0
        %5840 = vmatprep.subr.bf16.mxu0 0
        %5841 = vmatpush1.bf16.msra.mxu0 0
        %5842 = vmatprep.mubr.bf16.mxu0 0
        %5843 = vmatmul.mubr.bf16.gmra.mrb[0].mxu0 %v4538
        %v5844 = vpop.f32.mrb[0].mxu0
        %v5845 = vadd.f32 %v5796, %v5844
        %v5846 = vpop.f32.mrb[0].mxu0
        %v5847 = vpop.f32.mrb[0].mxu0
        %v5848 = vadd.f32 %v5796, %v5847
        %v5849 = vpop.f32.mrb[0].mxu0
        %5850 = vmatprep.mubr.bf16.mxu0 0
        %5851 = vmatmul.mubr.bf16.gmra.mrb[0].mxu0 %v4541
        %v5852 = vpop.f32.mrb[0].mxu0
        %v5853 = vadd.f32 %v5796, %v5852
        %v5854 = vpop.f32.mrb[0].mxu0
        %v5855 = vpop.f32.mrb[0].mxu0
        %v5856 = vpop.f32.mrb[0].mxu0
        %5857 = vdwg.mxu0
        %v5858 = vpack.c.bf16 %v5712, %v5709
        %v5859 = vpack.c.bf16 %v5717, %v5717
        %v5860 = vpack.c.bf16 %v5780, %v5777
        %v5861 = vpack.c.bf16 %v5785, %v5785
        %v5863 = vsel %vm1055, %v5858, 0
        %v5866 = vsel %vm1055, %v5859, 0
        %v5869 = vsel %vm1055, %v5860, 0
        %v5872 = vsel %vm1055, %v5861, 0
        %5874 = vmatprep.subr.bf16.mxu0 0
        %5875 = vmatpush1.bf16.xpose.msra.mxu0 %v5869
        %5876 = vmatprep.subr.bf16.mxu0 0
        %5877 = vmatpush1.bf16.xpose.msra.mxu0 %v5872
        %5878 = vmatprep.subr.bf16.mxu0 0
        %5879 = vmatpush1.bf16.xpose.msra.mxu0 0
        %5880 = vmatprep.subr.bf16.mxu0 0
        %5881 = vmatpush1.bf16.xpose.msra.mxu0 0
        %5882 = vmatprep.subr.bf16.mxu0 0
        %5883 = vmatpush1.bf16.xpose.msra.mxu0 0
        %5884 = vmatprep.subr.bf16.mxu0 0
        %5885 = vmatpush1.bf16.xpose.msra.mxu0 0
        %5886 = vmatprep.subr.bf16.mxu0 0
        %5887 = vmatpush1.bf16.xpose.msra.mxu0 0
        %5888 = vmatprep.subr.bf16.mxu0 0
        %5889 = vmatpush1.bf16.xpose.msra.mxu0 0
        %5890 = vmatprep.subr.bf16.mxu0 0
        %5891 = vmatpush1.bf16.xpose.msra.mxu0 0
        %5892 = vmatprep.subr.bf16.mxu0 0
        %5893 = vmatpush1.bf16.xpose.msra.mxu0 0
        %5894 = vmatprep.subr.bf16.mxu0 0
        %5895 = vmatpush1.bf16.xpose.msra.mxu0 0
        %5896 = vmatprep.subr.bf16.mxu0 0
        %5897 = vmatpush1.bf16.xpose.msra.mxu0 0
        %5898 = vmatprep.subr.bf16.mxu0 0
        %5899 = vmatpush1.bf16.xpose.msra.mxu0 0
        %5900 = vmatprep.subr.bf16.mxu0 0
        %5901 = vmatpush1.bf16.xpose.msra.mxu0 0
        %5902 = vmatprep.subr.bf16.mxu0 0
        %5903 = vmatpush1.bf16.xpose.msra.mxu0 0
        %5904 = vmatprep.subr.bf16.mxu0 0
        %5905 = vmatpush1.bf16.xpose.msra.mxu0 0
        %5906 = vmatprep.mubr.bf16.mxu0 0
        %5907 = vmatmul.mubr.bf16.gmra.mrb[0].mxu0 %v5863
        %v5908 = vpop.f32.mrb[0].mxu0
        %v5909 = vadd.f32 0.0, %v5908
        %v5910 = vpop.f32.mrb[0].mxu0
        %v5911 = vpop.f32.mrb[0].mxu0
        %v5912 = vadd.f32 0.0, %v5911
        %v5913 = vpop.f32.mrb[0].mxu0
        %5914 = vmatprep.mubr.bf16.mxu0 0
        %5915 = vmatmul.mubr.bf16.gmra.mrb[0].mxu0 %v5866
        %v5916 = vpop.f32.mrb[0].mxu0
        %v5917 = vadd.f32 0.0, %v5916
        %v5918 = vpop.f32.mrb[0].mxu0
        %v5919 = vpop.f32.mrb[0].mxu0
        %v5920 = vpop.f32.mrb[0].mxu0
        %5921 = vdwg.mxu0
        %v5922 = vsel %vm1116, %v5909, -inf
        %5923 = vmax.xlane.f32.xlu0 %v5922
        %v5924 = vpop.xlane.xlu0 %5923
        %v5925 = vsel %vm1116, %v5912, -inf
        %5926 = vmax.xlane.f32.xlu0 %v5925
        %v5927 = vpop.xlane.xlu0 %5926
        %v5928 = vsel %vm1116, %v5917, -inf
        %5929 = vmax.xlane.f32.xlu0 %v5928
        %v5930 = vpop.xlane.xlu0 %5929
        %v5931 = vsub.f32 %v5909, %v5924
        %v5932 = vsub.f32 %v5912, %v5927
        %v5933 = vsub.f32 %v5917, %v5930
        %v5934 = vmul.f32 %v5931, 1.442695
        %v5935 = vpow.pop %v5934
        %v5936 = vmul.f32 %v5932, 1.442695
        %v5937 = vpow.pop %v5936
        %v5938 = vmul.f32 %v5933, 1.442695
        %v5939 = vpow.pop %v5938
        %v5940 = vsel %vm1116, %v5935, 0.0
        %5941 = vadd.xlane.f32.xlu0 %v5940
        %v5942 = vpop.xlane.xlu0 %5941
        %v5943 = vsel %vm1116, %v5937, 0.0
        %5944 = vadd.xlane.f32.xlu0 %v5943
        %v5945 = vpop.xlane.xlu0 %5944
        %v5946 = vsel %vm1116, %v5939, 0.0
        %5947 = vadd.xlane.f32.xlu0 %v5946
        %v5948 = vpop.xlane.xlu0 %5947
        %v5949 = vrcp.pop %v5942
        %v5950 = vrcp.pop %v5945
        %v5951 = vrcp.pop %v5948
        %v5952 = vmul.f32 %v5935, %v5949
        %v5953 = vmul.f32 %v5937, %v5950
        %v5954 = vmul.f32 %v5939, %v5951
        %v5955 = vpack.c.bf16 %v5953, %v5952
        %v5956 = vpack.c.bf16 %v5954, %v5954
        %v5957 = vpack.c.bf16 %v5848, %v5845
        %v5958 = vpack.c.bf16 %v5853, %v5853
        %v5960 = vsel %vm1116, %v5955, 0
        %v5963 = vsel %vm1116, %v5956, 0
        %v5966 = vsel %vm1160, %v5958, 0
        %5968 = vmatprep.subr.bf16.mxu0 0
        %5969 = vmatpush1.bf16.msra.mxu0 %v5957
        %5970 = vmatprep.subr.bf16.mxu0 0
        %5971 = vmatpush1.bf16.msra.mxu0 %v5966
        %5972 = vmatprep.subr.bf16.mxu0 0
        %5973 = vmatpush1.bf16.msra.mxu0 0
        %5974 = vmatprep.subr.bf16.mxu0 0
        %5975 = vmatpush1.bf16.msra.mxu0 0
        %5976 = vmatprep.subr.bf16.mxu0 0
        %5977 = vmatpush1.bf16.msra.mxu0 0
        %5978 = vmatprep.subr.bf16.mxu0 0
        %5979 = vmatpush1.bf16.msra.mxu0 0
        %5980 = vmatprep.subr.bf16.mxu0 0
        %5981 = vmatpush1.bf16.msra.mxu0 0
        %5982 = vmatprep.subr.bf16.mxu0 0
        %5983 = vmatpush1.bf16.msra.mxu0 0
        %5984 = vmatprep.subr.bf16.mxu0 0
        %5985 = vmatpush1.bf16.msra.mxu0 0
        %5986 = vmatprep.subr.bf16.mxu0 0
        %5987 = vmatpush1.bf16.msra.mxu0 0
        %5988 = vmatprep.subr.bf16.mxu0 0
        %5989 = vmatpush1.bf16.msra.mxu0 0
        %5990 = vmatprep.subr.bf16.mxu0 0
        %5991 = vmatpush1.bf16.msra.mxu0 0
        %5992 = vmatprep.subr.bf16.mxu0 0
        %5993 = vmatpush1.bf16.msra.mxu0 0
        %5994 = vmatprep.subr.bf16.mxu0 0
        %5995 = vmatpush1.bf16.msra.mxu0 0
        %5996 = vmatprep.subr.bf16.mxu0 0
        %5997 = vmatpush1.bf16.msra.mxu0 0
        %5998 = vmatprep.subr.bf16.mxu0 0
        %5999 = vmatpush1.bf16.msra.mxu0 0
        %6000 = vmatprep.mubr.bf16.mxu0 0
        %6001 = vmatmul.mubr.bf16.gmra.mrb[0].mxu0 %v5960
        %v6002 = vpop.f32.mrb[0].mxu0
        %v6003 = vadd.f32 0.0, %v6002
        %v6004 = vpop.f32.mrb[0].mxu0
        %v6005 = vpop.f32.mrb[0].mxu0
        %v6006 = vadd.f32 0.0, %v6005
        %v6007 = vpop.f32.mrb[0].mxu0
        %6008 = vmatprep.mubr.bf16.mxu0 0
        %6009 = vmatmul.mubr.bf16.gmra.mrb[0].mxu0 %v5963
        %v6010 = vpop.f32.mrb[0].mxu0
        %v6011 = vadd.f32 0.0, %v6010
        %v6012 = vpop.f32.mrb[0].mxu0
        %v6013 = vpop.f32.mrb[0].mxu0
        %v6014 = vpop.f32.mrb[0].mxu0
        %6015 = vdwg.mxu0
        %6019 = vrot.lane.b32.xlu0 %v5249, 8
        %v6020 = vpop.permute.xlu0 %6019
        %6021 = vrot.lane.b32.xlu0 %v5252, 8
        %v6022 = vpop.permute.xlu0 %6021
        %6023 = vrot.lane.b32.xlu0 %v5257, 8
        %v6024 = vpop.permute.xlu0 %6023
        %6031 = vrot.lane.b32.xlu0 %v5626, 16
        %v6032 = vpop.permute.xlu0 %6031
        %6033 = vrot.lane.b32.xlu0 %v5629, 16
        %v6034 = vpop.permute.xlu0 %6033
        %6035 = vrot.lane.b32.xlu0 %v5634, 16
        %v6036 = vpop.permute.xlu0 %6035
        %6043 = vrot.lane.b32.xlu0 %v6003, 24
        %v6044 = vpop.permute.xlu0 %6043
        %6045 = vrot.lane.b32.xlu0 %v6006, 24
        %v6046 = vpop.permute.xlu0 %6045
        %6047 = vrot.lane.b32.xlu0 %v6011, 24
        %v6048 = vpop.permute.xlu0 %6047
        %v6052 = vsel %vm1055, %v4872, %v6020
        %v6053 = vsel %vm1055, %v4875, %v6022
        %v6054 = vsel %vm1055, %v4880, %v6024
        %v6055 = vsel %vm2382, %v6052, %v6032
        %v6056 = vsel %vm2382, %v6053, %v6034
        %v6057 = vsel %vm2382, %v6054, %v6036
        %v6058 = vsel %vm1116, %v6055, %v6044
        %v6059 = vsel %vm1116, %v6056, %v6046
        %v6060 = vsel %vm1116, %v6057, %v6048
        %v6061 = vpack.c.bf16 %v6059, %v6058
        %v6062 = vpack.c.bf16 %v6060, %v6060
        %s6063 = scalar_lea.vmem %s637, 32
        %v6064 = vld [vmem:[%s6063] sm:$0xf]
        %v6065 = vld [vmem:[%s6063 + $0x4] sm:$0xf]
        %v6066 = vld [vmem:[%s6063 + $0x8] sm:$0xf]
        %v6067 = vld [vmem:[%s6063 + $0xc] sm:$0xf]
        %v6068 = vlaneseq
        %v6069 = vshrl.u32 %v6068, 7
        %v6070 = vsub.s32 6, %v6069
        %v6071 = vrot.slane %v4445, %v6070
        %v6076 = vunpack.c.l.b16 %v6064
        %v6077 = vunpack.c.l.b16 %v6065
        %v6078 = vunpack.c.l.b16 %v6066
        %v6079 = vunpack.c.l.b16 %v6067
        %v6080 = vpack.c.b16 %v6077, %v6076
        %v6081 = vpack.c.b16 %v6079, %v6078
        %v6085 = vsel %vm771, %v6061, 0
        %v6088 = vsel %vm771, %v6062, 0
        %6090 = vmatprep.subr.bf16.mxu0 0
        %6091 = vmatpush1.bf16.msra.mxu0 %v6080
        %6092 = vmatprep.subr.bf16.mxu0 0
        %6093 = vmatpush1.bf16.msra.mxu0 %v6081
        %6094 = vmatprep.subr.bf16.mxu0 0
        %6095 = vmatpush1.bf16.msra.mxu0 0
        %6096 = vmatprep.subr.bf16.mxu0 0
        %6097 = vmatpush1.bf16.msra.mxu0 0
        %6098 = vmatprep.subr.bf16.mxu0 0
        %6099 = vmatpush1.bf16.msra.mxu0 0
        %6100 = vmatprep.subr.bf16.mxu0 0
        %6101 = vmatpush1.bf16.msra.mxu0 0
        %6102 = vmatprep.subr.bf16.mxu0 0
        %6103 = vmatpush1.bf16.msra.mxu0 0
        %6104 = vmatprep.subr.bf16.mxu0 0
        %6105 = vmatpush1.bf16.msra.mxu0 0
        %6106 = vmatprep.subr.bf16.mxu0 0
        %6107 = vmatpush1.bf16.msra.mxu0 0
        %6108 = vmatprep.subr.bf16.mxu0 0
        %6109 = vmatpush1.bf16.msra.mxu0 0
        %6110 = vmatprep.subr.bf16.mxu0 0
        %6111 = vmatpush1.bf16.msra.mxu0 0
        %6112 = vmatprep.subr.bf16.mxu0 0
        %6113 = vmatpush1.bf16.msra.mxu0 0
        %6114 = vmatprep.subr.bf16.mxu0 0
        %6115 = vmatpush1.bf16.msra.mxu0 0
        %6116 = vmatprep.subr.bf16.mxu0 0
        %6117 = vmatpush1.bf16.msra.mxu0 0
        %6118 = vmatprep.subr.bf16.mxu0 0
        %6119 = vmatpush1.bf16.msra.mxu0 0
        %6120 = vmatprep.subr.bf16.mxu0 0
        %6121 = vmatpush1.bf16.msra.mxu0 0
        %6122 = vmatprep.mubr.bf16.mxu0 0
        %6123 = vmatmul.mubr.bf16.gmra.mrb[0].mxu0 %v6085
        %v6124 = vpop.f32.mrb[0].mxu0
        %v6125 = vadd.f32 %v6071, %v6124
        %v6126 = vpop.f32.mrb[0].mxu0
        %v6127 = vpop.f32.mrb[0].mxu0
        %v6128 = vadd.f32 %v6071, %v6127
        %v6129 = vpop.f32.mrb[0].mxu0
        %6130 = vmatprep.mubr.bf16.mxu0 0
        %6131 = vmatmul.mubr.bf16.gmra.mrb[0].mxu0 %v6088
        %v6132 = vpop.f32.mrb[0].mxu0
        %v6133 = vadd.f32 %v6071, %v6132
        %v6134 = vpop.f32.mrb[0].mxu0
        %v6135 = vpop.f32.mrb[0].mxu0
        %v6136 = vpop.f32.mrb[0].mxu0
        %6137 = vdwg.mxu0
        %v6138 = vadd.f32 %v4441, %v6125
        %v6139 = vadd.f32 %v4442, %v6128
        %v6140 = vadd.f32 %v4443, %v6133
        %v6141 = vsel %vm771, %v6138, 0.0
        %6142 = vadd.xlane.f32.xlu0 %v6141
        %v6143 = vpop.xlane.xlu0 %6142
        %v6144 = vsel %vm771, %v6139, 0.0
        %6145 = vadd.xlane.f32.xlu0 %v6144
        %v6146 = vpop.xlane.xlu0 %6145
        %v6147 = vsel %vm771, %v6140, 0.0
        %6148 = vadd.xlane.f32.xlu0 %v6147
        %v6149 = vpop.xlane.xlu0 %6148
        %v6150 = vmul.f32 %v6143, %v781
        %v6151 = vmul.f32 %v6146, %v781
        %v6152 = vmul.f32 %v6149, %v781
        %v6153 = vsub.f32 %v6138, %v6150
        %v6154 = vsub.f32 %v6139, %v6151
        %v6155 = vsub.f32 %v6140, %v6152
        %v6156 = vmul.f32 %v6153, %v6153
        %v6157 = vmul.f32 %v6154, %v6154
        %v6158 = vmul.f32 %v6155, %v6155
        %v6159 = vsel %vm771, %v6156, 0.0
        %6160 = vadd.xlane.f32.xlu0 %v6159
        %v6161 = vpop.xlane.xlu0 %6160
        %v6162 = vsel %vm771, %v6157, 0.0
        %6163 = vadd.xlane.f32.xlu0 %v6162
        %v6164 = vpop.xlane.xlu0 %6163
        %v6165 = vsel %vm771, %v6158, 0.0
        %6166 = vadd.xlane.f32.xlu0 %v6165
        %v6167 = vpop.xlane.xlu0 %6166
        %v6168 = vmul.f32 %v6161, %v781
        %v6169 = vmul.f32 %v6164, %v781
        %v6170 = vmul.f32 %v6167, %v781
        %v6171 = vadd.f32 %v6168, 1e-05
        %v6172 = vadd.f32 %v6169, 1e-05
        %v6173 = vadd.f32 %v6170, 1e-05
        %v6174 = vrsqrt.pop %v6171
        %v6175 = vrsqrt.pop %v6172
        %v6176 = vrsqrt.pop %v6173
        %v6177 = vmul.f32 %v6153, %v6174
        %v6178 = vmul.f32 %v6154, %v6175
        %v6179 = vmul.f32 %v6155, %v6176
        %v6180 = vlaneseq
        %v6181 = vshrl.u32 %v6180, 7
        %v6182 = vsub.s32 1, %v6181
        %v6183 = vrot.slane %v4445, %v6182
        %v6184 = vmul.f32 %v6177, %v6183
        %v6185 = vmul.f32 %v6178, %v6183
        %v6186 = vmul.f32 %v6179, %v6183
        %v6187 = vlaneseq
        %v6188 = vshrl.u32 %v6187, 7
        %v6189 = vsub.s32 4, %v6188
        %v6190 = vrot.slane %v4445, %v6189
        %v6191 = vadd.f32 %v6184, %v6190
        %v6192 = vadd.f32 %v6185, %v6190
        %v6193 = vadd.f32 %v6186, %v6190
        %v6194 = vpack.c.bf16 %v6192, %v6191
        %v6195 = vpack.c.bf16 %v6193, %v6193
        %s6196 = scalar_lea.vmem %s624, 576
        %v6197 = vld [vmem:[%s6196] sm:$0xf]
        %v6198 = vld [vmem:[%s6196 + $0x4] sm:$0xf]
        %v6199 = vld [vmem:[%s6196 + $0x8] sm:$0xf]
        %v6200 = vld [vmem:[%s6196 + $0xc] sm:$0xf]
        %s6201 = scalar_lea.vmem %s624, 640
        %v6202 = vld [vmem:[%s6201] sm:$0xf]
        %v6203 = vld [vmem:[%s6201 + $0x4] sm:$0xf]
        %v6204 = vld [vmem:[%s6201 + $0x8] sm:$0xf]
        %v6205 = vld [vmem:[%s6201 + $0xc] sm:$0xf]
        %s6206 = scalar_lea.vmem %s624, 704
        %v6207 = vld [vmem:[%s6206] sm:$0xf]
        %v6208 = vld [vmem:[%s6206 + $0x4] sm:$0xf]
        %v6209 = vld [vmem:[%s6206 + $0x8] sm:$0xf]
        %v6210 = vld [vmem:[%s6206 + $0xc] sm:$0xf]
        %s6211 = scalar_lea.vmem %s630, 36
        %v6212 = vld [vmem:[%s6211] sm:$0x1]
        %v6214 = vlaneseq
        %v6215 = vshrl.u32 %v6214, 7
        %v6216 = vsub.s32 0, %v6215
        %v6217 = vrot.slane %v6212, %v6216
        %v6223 = vunpack.c.l.b16 %v6197
        %v6224 = vunpack.c.l.b16 %v6198
        %v6225 = vunpack.c.l.b16 %v6199
        %v6226 = vunpack.c.l.b16 %v6200
        %v6227 = vpack.c.b16 %v6224, %v6223
        %v6228 = vpack.c.b16 %v6226, %v6225
        %v6232 = vsel %vm771, %v6194, 0
        %v6235 = vsel %vm771, %v6195, 0
        %6237 = vmatprep.subr.bf16.mxu0 0
        %6238 = vmatpush1.bf16.msra.mxu0 %v6227
        %6239 = vmatprep.subr.bf16.mxu0 0
        %6240 = vmatpush1.bf16.msra.mxu0 %v6228
        %6241 = vmatprep.subr.bf16.mxu0 0
        %6242 = vmatpush1.bf16.msra.mxu0 0
        %6243 = vmatprep.subr.bf16.mxu0 0
        %6244 = vmatpush1.bf16.msra.mxu0 0
        %6245 = vmatprep.subr.bf16.mxu0 0
        %6246 = vmatpush1.bf16.msra.mxu0 0
        %6247 = vmatprep.subr.bf16.mxu0 0
        %6248 = vmatpush1.bf16.msra.mxu0 0
        %6249 = vmatprep.subr.bf16.mxu0 0
        %6250 = vmatpush1.bf16.msra.mxu0 0
        %6251 = vmatprep.subr.bf16.mxu0 0
        %6252 = vmatpush1.bf16.msra.mxu0 0
        %6253 = vmatprep.subr.bf16.mxu0 0
        %6254 = vmatpush1.bf16.msra.mxu0 0
        %6255 = vmatprep.subr.bf16.mxu0 0
        %6256 = vmatpush1.bf16.msra.mxu0 0
        %6257 = vmatprep.subr.bf16.mxu0 0
        %6258 = vmatpush1.bf16.msra.mxu0 0
        %6259 = vmatprep.subr.bf16.mxu0 0
        %6260 = vmatpush1.bf16.msra.mxu0 0
        %6261 = vmatprep.subr.bf16.mxu0 0
        %6262 = vmatpush1.bf16.msra.mxu0 0
        %6263 = vmatprep.subr.bf16.mxu0 0
        %6264 = vmatpush1.bf16.msra.mxu0 0
        %6265 = vmatprep.subr.bf16.mxu0 0
        %6266 = vmatpush1.bf16.msra.mxu0 0
        %6267 = vmatprep.subr.bf16.mxu0 0
        %6268 = vmatpush1.bf16.msra.mxu0 0
        %6269 = vmatprep.mubr.bf16.mxu0 0
        %6270 = vmatmul.mubr.bf16.gmra.mrb[0].mxu0 %v6232
        %v6271 = vpop.f32.mrb[0].mxu0
        %v6272 = vadd.f32 %v6217, %v6271
        %v6273 = vpop.f32.mrb[0].mxu0
        %v6274 = vpop.f32.mrb[0].mxu0
        %v6275 = vadd.f32 %v6217, %v6274
        %v6276 = vpop.f32.mrb[0].mxu0
        %6277 = vmatprep.mubr.bf16.mxu0 0
        %6278 = vmatmul.mubr.bf16.gmra.mrb[0].mxu0 %v6235
        %v6279 = vpop.f32.mrb[0].mxu0
        %v6280 = vadd.f32 %v6217, %v6279
        %v6281 = vpop.f32.mrb[0].mxu0
        %v6282 = vpop.f32.mrb[0].mxu0
        %v6283 = vpop.f32.mrb[0].mxu0
        %6284 = vdwg.mxu0
        %s6285 = scalar_lea.vmem %s630, 40
        %v6286 = vld [vmem:[%s6285] sm:$0x1]
        %v6288 = vlaneseq
        %v6289 = vshrl.u32 %v6288, 7
        %v6290 = vsub.s32 0, %v6289
        %v6291 = vrot.slane %v6286, %v6290
        %v6297 = vunpack.c.l.b16 %v6202
        %v6298 = vunpack.c.l.b16 %v6203
        %v6299 = vunpack.c.l.b16 %v6204
        %v6300 = vunpack.c.l.b16 %v6205
        %v6301 = vpack.c.b16 %v6298, %v6297
        %v6302 = vpack.c.b16 %v6300, %v6299
        %6305 = vmatprep.subr.bf16.mxu0 0
        %6306 = vmatpush1.bf16.msra.mxu0 %v6301
        %6307 = vmatprep.subr.bf16.mxu0 0
        %6308 = vmatpush1.bf16.msra.mxu0 %v6302
        %6309 = vmatprep.subr.bf16.mxu0 0
        %6310 = vmatpush1.bf16.msra.mxu0 0
        %6311 = vmatprep.subr.bf16.mxu0 0
        %6312 = vmatpush1.bf16.msra.mxu0 0
        %6313 = vmatprep.subr.bf16.mxu0 0
        %6314 = vmatpush1.bf16.msra.mxu0 0
        %6315 = vmatprep.subr.bf16.mxu0 0
        %6316 = vmatpush1.bf16.msra.mxu0 0
        %6317 = vmatprep.subr.bf16.mxu0 0
        %6318 = vmatpush1.bf16.msra.mxu0 0
        %6319 = vmatprep.subr.bf16.mxu0 0
        %6320 = vmatpush1.bf16.msra.mxu0 0
        %6321 = vmatprep.subr.bf16.mxu0 0
        %6322 = vmatpush1.bf16.msra.mxu0 0
        %6323 = vmatprep.subr.bf16.mxu0 0
        %6324 = vmatpush1.bf16.msra.mxu0 0
        %6325 = vmatprep.subr.bf16.mxu0 0
        %6326 = vmatpush1.bf16.msra.mxu0 0
        %6327 = vmatprep.subr.bf16.mxu0 0
        %6328 = vmatpush1.bf16.msra.mxu0 0
        %6329 = vmatprep.subr.bf16.mxu0 0
        %6330 = vmatpush1.bf16.msra.mxu0 0
        %6331 = vmatprep.subr.bf16.mxu0 0
        %6332 = vmatpush1.bf16.msra.mxu0 0
        %6333 = vmatprep.subr.bf16.mxu0 0
        %6334 = vmatpush1.bf16.msra.mxu0 0
        %6335 = vmatprep.subr.bf16.mxu0 0
        %6336 = vmatpush1.bf16.msra.mxu0 0
        %6337 = vmatprep.mubr.bf16.mxu0 0
        %6338 = vmatmul.mubr.bf16.gmra.mrb[0].mxu0 %v2633
        %v6339 = vpop.f32.mrb[0].mxu0
        %v6340 = vadd.f32 %v6291, %v6339
        %v6341 = vpop.f32.mrb[0].mxu0
        %v6342 = vpop.f32.mrb[0].mxu0
        %v6343 = vadd.f32 %v6291, %v6342
        %v6344 = vpop.f32.mrb[0].mxu0
        %6345 = vmatprep.mubr.bf16.mxu0 0
        %6346 = vmatmul.mubr.bf16.gmra.mrb[0].mxu0 %v2636
        %v6347 = vpop.f32.mrb[0].mxu0
        %v6348 = vadd.f32 %v6291, %v6347
        %v6349 = vpop.f32.mrb[0].mxu0
        %v6350 = vpop.f32.mrb[0].mxu0
        %v6351 = vadd.f32 %v6291, %v6350
        %v6352 = vpop.f32.mrb[0].mxu0
        %6353 = vdwg.mxu0
        %s6354 = scalar_lea.vmem %s630, 44
        %v6355 = vld [vmem:[%s6354] sm:$0x1]
        %v6357 = vlaneseq
        %v6358 = vshrl.u32 %v6357, 7
        %v6359 = vsub.s32 0, %v6358
        %v6360 = vrot.slane %v6355, %v6359
        %v6366 = vunpack.c.l.b16 %v6207
        %v6367 = vunpack.c.l.b16 %v6208
        %v6368 = vunpack.c.l.b16 %v6209
        %v6369 = vunpack.c.l.b16 %v6210
        %v6370 = vpack.c.b16 %v6367, %v6366
        %v6371 = vpack.c.b16 %v6369, %v6368
        %6374 = vmatprep.subr.bf16.mxu0 0
        %6375 = vmatpush1.bf16.msra.mxu0 %v6370
        %6376 = vmatprep.subr.bf16.mxu0 0
        %6377 = vmatpush1.bf16.msra.mxu0 %v6371
        %6378 = vmatprep.subr.bf16.mxu0 0
        %6379 = vmatpush1.bf16.msra.mxu0 0
        %6380 = vmatprep.subr.bf16.mxu0 0
        %6381 = vmatpush1.bf16.msra.mxu0 0
        %6382 = vmatprep.subr.bf16.mxu0 0
        %6383 = vmatpush1.bf16.msra.mxu0 0
        %6384 = vmatprep.subr.bf16.mxu0 0
        %6385 = vmatpush1.bf16.msra.mxu0 0
        %6386 = vmatprep.subr.bf16.mxu0 0
        %6387 = vmatpush1.bf16.msra.mxu0 0
        %6388 = vmatprep.subr.bf16.mxu0 0
        %6389 = vmatpush1.bf16.msra.mxu0 0
        %6390 = vmatprep.subr.bf16.mxu0 0
        %6391 = vmatpush1.bf16.msra.mxu0 0
        %6392 = vmatprep.subr.bf16.mxu0 0
        %6393 = vmatpush1.bf16.msra.mxu0 0
        %6394 = vmatprep.subr.bf16.mxu0 0
        %6395 = vmatpush1.bf16.msra.mxu0 0
        %6396 = vmatprep.subr.bf16.mxu0 0
        %6397 = vmatpush1.bf16.msra.mxu0 0
        %6398 = vmatprep.subr.bf16.mxu0 0
        %6399 = vmatpush1.bf16.msra.mxu0 0
        %6400 = vmatprep.subr.bf16.mxu0 0
        %6401 = vmatpush1.bf16.msra.mxu0 0
        %6402 = vmatprep.subr.bf16.mxu0 0
        %6403 = vmatpush1.bf16.msra.mxu0 0
        %6404 = vmatprep.subr.bf16.mxu0 0
        %6405 = vmatpush1.bf16.msra.mxu0 0
        %6406 = vmatprep.mubr.bf16.mxu0 0
        %6407 = vmatmul.mubr.bf16.gmra.mrb[0].mxu0 %v2633
        %v6408 = vpop.f32.mrb[0].mxu0
        %v6409 = vadd.f32 %v6360, %v6408
        %v6410 = vpop.f32.mrb[0].mxu0
        %v6411 = vpop.f32.mrb[0].mxu0
        %v6412 = vadd.f32 %v6360, %v6411
        %v6413 = vpop.f32.mrb[0].mxu0
        %6414 = vmatprep.mubr.bf16.mxu0 0
        %6415 = vmatmul.mubr.bf16.gmra.mrb[0].mxu0 %v2636
        %v6416 = vpop.f32.mrb[0].mxu0
        %v6417 = vadd.f32 %v6360, %v6416
        %v6418 = vpop.f32.mrb[0].mxu0
        %v6419 = vpop.f32.mrb[0].mxu0
        %v6420 = vadd.f32 %v6360, %v6419
        %v6421 = vpop.f32.mrb[0].mxu0
        %6422 = vdwg.mxu0
        %v6423 = vpack.c.bf16 %v6275, %v6272
        %v6424 = vpack.c.bf16 %v6280, %v6280
        %v6425 = vpack.c.bf16 %v6343, %v6340
        %v6426 = vpack.c.bf16 %v6351, %v6348
        %v6428 = vsel %vm1055, %v6423, 0
        %v6431 = vsel %vm1055, %v6424, 0
        %v6434 = vsel %vm1055, %v6425, 0
        %v6437 = vsel %vm1055, %v6426, 0
        %6439 = vmatprep.subr.bf16.mxu0 0
        %6440 = vmatpush1.bf16.xpose.msra.mxu0 %v6434
        %6441 = vmatprep.subr.bf16.mxu0 0
        %6442 = vmatpush1.bf16.xpose.msra.mxu0 %v6437
        %6443 = vmatprep.subr.bf16.mxu0 0
        %6444 = vmatpush1.bf16.xpose.msra.mxu0 0
        %6445 = vmatprep.subr.bf16.mxu0 0
        %6446 = vmatpush1.bf16.xpose.msra.mxu0 0
        %6447 = vmatprep.subr.bf16.mxu0 0
        %6448 = vmatpush1.bf16.xpose.msra.mxu0 0
        %6449 = vmatprep.subr.bf16.mxu0 0
        %6450 = vmatpush1.bf16.xpose.msra.mxu0 0
        %6451 = vmatprep.subr.bf16.mxu0 0
        %6452 = vmatpush1.bf16.xpose.msra.mxu0 0
        %6453 = vmatprep.subr.bf16.mxu0 0
        %6454 = vmatpush1.bf16.xpose.msra.mxu0 0
        %6455 = vmatprep.subr.bf16.mxu0 0
        %6456 = vmatpush1.bf16.xpose.msra.mxu0 0
        %6457 = vmatprep.subr.bf16.mxu0 0
        %6458 = vmatpush1.bf16.xpose.msra.mxu0 0
        %6459 = vmatprep.subr.bf16.mxu0 0
        %6460 = vmatpush1.bf16.xpose.msra.mxu0 0
        %6461 = vmatprep.subr.bf16.mxu0 0
        %6462 = vmatpush1.bf16.xpose.msra.mxu0 0
        %6463 = vmatprep.subr.bf16.mxu0 0
        %6464 = vmatpush1.bf16.xpose.msra.mxu0 0
        %6465 = vmatprep.subr.bf16.mxu0 0
        %6466 = vmatpush1.bf16.xpose.msra.mxu0 0
        %6467 = vmatprep.subr.bf16.mxu0 0
        %6468 = vmatpush1.bf16.xpose.msra.mxu0 0
        %6469 = vmatprep.subr.bf16.mxu0 0
        %6470 = vmatpush1.bf16.xpose.msra.mxu0 0
        %6471 = vmatprep.mubr.bf16.mxu0 0
        %6472 = vmatmul.mubr.bf16.gmra.mrb[0].mxu0 %v6428
        %v6473 = vpop.f32.mrb[0].mxu0
        %v6474 = vadd.f32 0.0, %v6473
        %v6475 = vpop.f32.mrb[0].mxu0
        %v6476 = vpop.f32.mrb[0].mxu0
        %v6477 = vadd.f32 0.0, %v6476
        %v6478 = vpop.f32.mrb[0].mxu0
        %6479 = vmatprep.mubr.bf16.mxu0 0
        %6480 = vmatmul.mubr.bf16.gmra.mrb[0].mxu0 %v6431
        %v6481 = vpop.f32.mrb[0].mxu0
        %v6482 = vadd.f32 0.0, %v6481
        %v6483 = vpop.f32.mrb[0].mxu0
        %v6484 = vpop.f32.mrb[0].mxu0
        %v6485 = vpop.f32.mrb[0].mxu0
        %6486 = vdwg.mxu0
        %v6487 = vsel %vm771, %v6474, -inf
        %6488 = vmax.xlane.f32.xlu0 %v6487
        %v6489 = vpop.xlane.xlu0 %6488
        %v6490 = vsel %vm771, %v6477, -inf
        %6491 = vmax.xlane.f32.xlu0 %v6490
        %v6492 = vpop.xlane.xlu0 %6491
        %v6493 = vsel %vm771, %v6482, -inf
        %6494 = vmax.xlane.f32.xlu0 %v6493
        %v6495 = vpop.xlane.xlu0 %6494
        %v6496 = vsub.f32 %v6474, %v6489
        %v6497 = vsub.f32 %v6477, %v6492
        %v6498 = vsub.f32 %v6482, %v6495
        %v6499 = vmul.f32 %v6496, 1.442695
        %v6500 = vpow.pop %v6499
        %v6501 = vmul.f32 %v6497, 1.442695
        %v6502 = vpow.pop %v6501
        %v6503 = vmul.f32 %v6498, 1.442695
        %v6504 = vpow.pop %v6503
        %v6505 = vsel %vm771, %v6500, 0.0
        %6506 = vadd.xlane.f32.xlu0 %v6505
        %v6507 = vpop.xlane.xlu0 %6506
        %v6508 = vsel %vm771, %v6502, 0.0
        %6509 = vadd.xlane.f32.xlu0 %v6508
        %v6510 = vpop.xlane.xlu0 %6509
        %v6511 = vsel %vm771, %v6504, 0.0
        %6512 = vadd.xlane.f32.xlu0 %v6511
        %v6513 = vpop.xlane.xlu0 %6512
        %v6514 = vrcp.pop %v6507
        %v6515 = vrcp.pop %v6510
        %v6516 = vrcp.pop %v6513
        %v6517 = vmul.f32 %v6500, %v6514
        %v6518 = vmul.f32 %v6502, %v6515
        %v6519 = vmul.f32 %v6504, %v6516
        %v6520 = vpack.c.bf16 %v6518, %v6517
        %v6521 = vpack.c.bf16 %v6519, %v6519
        %v6522 = vpack.c.bf16 %v6412, %v6409
        %v6523 = vpack.c.bf16 %v6420, %v6417
        %v6525 = vsel %vm771, %v6520, 0
        %v6528 = vsel %vm771, %v6521, 0
        %6530 = vmatprep.subr.bf16.mxu0 0
        %6531 = vmatpush1.bf16.msra.mxu0 %v6522
        %6532 = vmatprep.subr.bf16.mxu0 0
        %6533 = vmatpush1.bf16.msra.mxu0 %v6523
        %6534 = vmatprep.subr.bf16.mxu0 0
        %6535 = vmatpush1.bf16.msra.mxu0 0
        %6536 = vmatprep.subr.bf16.mxu0 0
        %6537 = vmatpush1.bf16.msra.mxu0 0
        %6538 = vmatprep.subr.bf16.mxu0 0
        %6539 = vmatpush1.bf16.msra.mxu0 0
        %6540 = vmatprep.subr.bf16.mxu0 0
        %6541 = vmatpush1.bf16.msra.mxu0 0
        %6542 = vmatprep.subr.bf16.mxu0 0
        %6543 = vmatpush1.bf16.msra.mxu0 0
        %6544 = vmatprep.subr.bf16.mxu0 0
        %6545 = vmatpush1.bf16.msra.mxu0 0
        %6546 = vmatprep.subr.bf16.mxu0 0
        %6547 = vmatpush1.bf16.msra.mxu0 0
        %6548 = vmatprep.subr.bf16.mxu0 0
        %6549 = vmatpush1.bf16.msra.mxu0 0
        %6550 = vmatprep.subr.bf16.mxu0 0
        %6551 = vmatpush1.bf16.msra.mxu0 0
        %6552 = vmatprep.subr.bf16.mxu0 0
        %6553 = vmatpush1.bf16.msra.mxu0 0
        %6554 = vmatprep.subr.bf16.mxu0 0
        %6555 = vmatpush1.bf16.msra.mxu0 0
        %6556 = vmatprep.subr.bf16.mxu0 0
        %6557 = vmatpush1.bf16.msra.mxu0 0
        %6558 = vmatprep.subr.bf16.mxu0 0
        %6559 = vmatpush1.bf16.msra.mxu0 0
        %6560 = vmatprep.subr.bf16.mxu0 0
        %6561 = vmatpush1.bf16.msra.mxu0 0
        %6562 = vmatprep.mubr.bf16.mxu0 0
        %6563 = vmatmul.mubr.bf16.gmra.mrb[0].mxu0 %v6525
        %v6564 = vpop.f32.mrb[0].mxu0
        %v6565 = vadd.f32 0.0, %v6564
        %v6566 = vpop.f32.mrb[0].mxu0
        %v6567 = vpop.f32.mrb[0].mxu0
        %v6568 = vadd.f32 0.0, %v6567
        %v6569 = vpop.f32.mrb[0].mxu0
        %6570 = vmatprep.mubr.bf16.mxu0 0
        %6571 = vmatmul.mubr.bf16.gmra.mrb[0].mxu0 %v6528
        %v6572 = vpop.f32.mrb[0].mxu0
        %v6573 = vadd.f32 0.0, %v6572
        %v6574 = vpop.f32.mrb[0].mxu0
        %v6575 = vpop.f32.mrb[0].mxu0
        %v6576 = vpop.f32.mrb[0].mxu0
        %6577 = vdwg.mxu0
        %s6578 = scalar_lea.vmem %s624, 592
        %v6579 = vld [vmem:[%s6578] sm:$0xf]
        %v6580 = vld [vmem:[%s6578 + $0x4] sm:$0xf]
        %v6581 = vld [vmem:[%s6578 + $0x8] sm:$0xf]
        %v6582 = vld [vmem:[%s6578 + $0xc] sm:$0xf]
        %s6583 = scalar_lea.vmem %s624, 656
        %v6584 = vld [vmem:[%s6583] sm:$0xf]
        %v6585 = vld [vmem:[%s6583 + $0x4] sm:$0xf]
        %v6586 = vld [vmem:[%s6583 + $0x8] sm:$0xf]
        %v6587 = vld [vmem:[%s6583 + $0xc] sm:$0xf]
        %s6588 = scalar_lea.vmem %s624, 720
        %v6589 = vld [vmem:[%s6588] sm:$0xf]
        %v6590 = vld [vmem:[%s6588 + $0x4] sm:$0xf]
        %v6591 = vld [vmem:[%s6588 + $0x8] sm:$0xf]
        %v6592 = vld [vmem:[%s6588 + $0xc] sm:$0xf]
        %s6593 = scalar_lea.vmem %s630, 37
        %v6594 = vld [vmem:[%s6593] sm:$0x1]
        %v6596 = vlaneseq
        %v6597 = vshrl.u32 %v6596, 7
        %v6598 = vsub.s32 0, %v6597
        %v6599 = vrot.slane %v6594, %v6598
        %v6605 = vunpack.c.l.b16 %v6579
        %v6606 = vunpack.c.l.b16 %v6580
        %v6607 = vunpack.c.l.b16 %v6581
        %v6608 = vunpack.c.l.b16 %v6582
        %v6609 = vpack.c.b16 %v6606, %v6605
        %v6610 = vpack.c.b16 %v6608, %v6607
        %6613 = vmatprep.subr.bf16.mxu0 0
        %6614 = vmatpush1.bf16.msra.mxu0 %v6609
        %6615 = vmatprep.subr.bf16.mxu0 0
        %6616 = vmatpush1.bf16.msra.mxu0 %v6610
        %6617 = vmatprep.subr.bf16.mxu0 0
        %6618 = vmatpush1.bf16.msra.mxu0 0
        %6619 = vmatprep.subr.bf16.mxu0 0
        %6620 = vmatpush1.bf16.msra.mxu0 0
        %6621 = vmatprep.subr.bf16.mxu0 0
        %6622 = vmatpush1.bf16.msra.mxu0 0
        %6623 = vmatprep.subr.bf16.mxu0 0
        %6624 = vmatpush1.bf16.msra.mxu0 0
        %6625 = vmatprep.subr.bf16.mxu0 0
        %6626 = vmatpush1.bf16.msra.mxu0 0
        %6627 = vmatprep.subr.bf16.mxu0 0
        %6628 = vmatpush1.bf16.msra.mxu0 0
        %6629 = vmatprep.subr.bf16.mxu0 0
        %6630 = vmatpush1.bf16.msra.mxu0 0
        %6631 = vmatprep.subr.bf16.mxu0 0
        %6632 = vmatpush1.bf16.msra.mxu0 0
        %6633 = vmatprep.subr.bf16.mxu0 0
        %6634 = vmatpush1.bf16.msra.mxu0 0
        %6635 = vmatprep.subr.bf16.mxu0 0
        %6636 = vmatpush1.bf16.msra.mxu0 0
        %6637 = vmatprep.subr.bf16.mxu0 0
        %6638 = vmatpush1.bf16.msra.mxu0 0
        %6639 = vmatprep.subr.bf16.mxu0 0
        %6640 = vmatpush1.bf16.msra.mxu0 0
        %6641 = vmatprep.subr.bf16.mxu0 0
        %6642 = vmatpush1.bf16.msra.mxu0 0
        %6643 = vmatprep.subr.bf16.mxu0 0
        %6644 = vmatpush1.bf16.msra.mxu0 0
        %6645 = vmatprep.mubr.bf16.mxu0 0
        %6646 = vmatmul.mubr.bf16.gmra.mrb[0].mxu0 %v6232
        %v6647 = vpop.f32.mrb[0].mxu0
        %v6648 = vadd.f32 %v6599, %v6647
        %v6649 = vpop.f32.mrb[0].mxu0
        %v6650 = vpop.f32.mrb[0].mxu0
        %v6651 = vadd.f32 %v6599, %v6650
        %v6652 = vpop.f32.mrb[0].mxu0
        %6653 = vmatprep.mubr.bf16.mxu0 0
        %6654 = vmatmul.mubr.bf16.gmra.mrb[0].mxu0 %v6235
        %v6655 = vpop.f32.mrb[0].mxu0
        %v6656 = vadd.f32 %v6599, %v6655
        %v6657 = vpop.f32.mrb[0].mxu0
        %v6658 = vpop.f32.mrb[0].mxu0
        %v6659 = vpop.f32.mrb[0].mxu0
        %6660 = vdwg.mxu0
        %s6661 = scalar_lea.vmem %s630, 41
        %v6662 = vld [vmem:[%s6661] sm:$0x1]
        %v6664 = vlaneseq
        %v6665 = vshrl.u32 %v6664, 7
        %v6666 = vsub.s32 0, %v6665
        %v6667 = vrot.slane %v6662, %v6666
        %v6673 = vunpack.c.l.b16 %v6584
        %v6674 = vunpack.c.l.b16 %v6585
        %v6675 = vunpack.c.l.b16 %v6586
        %v6676 = vunpack.c.l.b16 %v6587
        %v6677 = vpack.c.b16 %v6674, %v6673
        %v6678 = vpack.c.b16 %v6676, %v6675
        %6681 = vmatprep.subr.bf16.mxu0 0
        %6682 = vmatpush1.bf16.msra.mxu0 %v6677
        %6683 = vmatprep.subr.bf16.mxu0 0
        %6684 = vmatpush1.bf16.msra.mxu0 %v6678
        %6685 = vmatprep.subr.bf16.mxu0 0
        %6686 = vmatpush1.bf16.msra.mxu0 0
        %6687 = vmatprep.subr.bf16.mxu0 0
        %6688 = vmatpush1.bf16.msra.mxu0 0
        %6689 = vmatprep.subr.bf16.mxu0 0
        %6690 = vmatpush1.bf16.msra.mxu0 0
        %6691 = vmatprep.subr.bf16.mxu0 0
        %6692 = vmatpush1.bf16.msra.mxu0 0
        %6693 = vmatprep.subr.bf16.mxu0 0
        %6694 = vmatpush1.bf16.msra.mxu0 0
        %6695 = vmatprep.subr.bf16.mxu0 0
        %6696 = vmatpush1.bf16.msra.mxu0 0
        %6697 = vmatprep.subr.bf16.mxu0 0
        %6698 = vmatpush1.bf16.msra.mxu0 0
        %6699 = vmatprep.subr.bf16.mxu0 0
        %6700 = vmatpush1.bf16.msra.mxu0 0
        %6701 = vmatprep.subr.bf16.mxu0 0
        %6702 = vmatpush1.bf16.msra.mxu0 0
        %6703 = vmatprep.subr.bf16.mxu0 0
        %6704 = vmatpush1.bf16.msra.mxu0 0
        %6705 = vmatprep.subr.bf16.mxu0 0
        %6706 = vmatpush1.bf16.msra.mxu0 0
        %6707 = vmatprep.subr.bf16.mxu0 0
        %6708 = vmatpush1.bf16.msra.mxu0 0
        %6709 = vmatprep.subr.bf16.mxu0 0
        %6710 = vmatpush1.bf16.msra.mxu0 0
        %6711 = vmatprep.subr.bf16.mxu0 0
        %6712 = vmatpush1.bf16.msra.mxu0 0
        %6713 = vmatprep.mubr.bf16.mxu0 0
        %6714 = vmatmul.mubr.bf16.gmra.mrb[0].mxu0 %v2633
        %v6715 = vpop.f32.mrb[0].mxu0
        %v6716 = vadd.f32 %v6667, %v6715
        %v6717 = vpop.f32.mrb[0].mxu0
        %v6718 = vpop.f32.mrb[0].mxu0
        %v6719 = vadd.f32 %v6667, %v6718
        %v6720 = vpop.f32.mrb[0].mxu0
        %6721 = vmatprep.mubr.bf16.mxu0 0
        %6722 = vmatmul.mubr.bf16.gmra.mrb[0].mxu0 %v2636
        %v6723 = vpop.f32.mrb[0].mxu0
        %v6724 = vadd.f32 %v6667, %v6723
        %v6725 = vpop.f32.mrb[0].mxu0
        %v6726 = vpop.f32.mrb[0].mxu0
        %v6727 = vadd.f32 %v6667, %v6726
        %v6728 = vpop.f32.mrb[0].mxu0
        %6729 = vdwg.mxu0
        %s6730 = scalar_lea.vmem %s630, 45
        %v6731 = vld [vmem:[%s6730] sm:$0x1]
        %v6733 = vlaneseq
        %v6734 = vshrl.u32 %v6733, 7
        %v6735 = vsub.s32 0, %v6734
        %v6736 = vrot.slane %v6731, %v6735
        %v6742 = vunpack.c.l.b16 %v6589
        %v6743 = vunpack.c.l.b16 %v6590
        %v6744 = vunpack.c.l.b16 %v6591
        %v6745 = vunpack.c.l.b16 %v6592
        %v6746 = vpack.c.b16 %v6743, %v6742
        %v6747 = vpack.c.b16 %v6745, %v6744
        %6750 = vmatprep.subr.bf16.mxu0 0
        %6751 = vmatpush1.bf16.msra.mxu0 %v6746
        %6752 = vmatprep.subr.bf16.mxu0 0
        %6753 = vmatpush1.bf16.msra.mxu0 %v6747
        %6754 = vmatprep.subr.bf16.mxu0 0
        %6755 = vmatpush1.bf16.msra.mxu0 0
        %6756 = vmatprep.subr.bf16.mxu0 0
        %6757 = vmatpush1.bf16.msra.mxu0 0
        %6758 = vmatprep.subr.bf16.mxu0 0
        %6759 = vmatpush1.bf16.msra.mxu0 0
        %6760 = vmatprep.subr.bf16.mxu0 0
        %6761 = vmatpush1.bf16.msra.mxu0 0
        %6762 = vmatprep.subr.bf16.mxu0 0
        %6763 = vmatpush1.bf16.msra.mxu0 0
        %6764 = vmatprep.subr.bf16.mxu0 0
        %6765 = vmatpush1.bf16.msra.mxu0 0
        %6766 = vmatprep.subr.bf16.mxu0 0
        %6767 = vmatpush1.bf16.msra.mxu0 0
        %6768 = vmatprep.subr.bf16.mxu0 0
        %6769 = vmatpush1.bf16.msra.mxu0 0
        %6770 = vmatprep.subr.bf16.mxu0 0
        %6771 = vmatpush1.bf16.msra.mxu0 0
        %6772 = vmatprep.subr.bf16.mxu0 0
        %6773 = vmatpush1.bf16.msra.mxu0 0
        %6774 = vmatprep.subr.bf16.mxu0 0
        %6775 = vmatpush1.bf16.msra.mxu0 0
        %6776 = vmatprep.subr.bf16.mxu0 0
        %6777 = vmatpush1.bf16.msra.mxu0 0
        %6778 = vmatprep.subr.bf16.mxu0 0
        %6779 = vmatpush1.bf16.msra.mxu0 0
        %6780 = vmatprep.subr.bf16.mxu0 0
        %6781 = vmatpush1.bf16.msra.mxu0 0
        %6782 = vmatprep.mubr.bf16.mxu0 0
        %6783 = vmatmul.mubr.bf16.gmra.mrb[0].mxu0 %v2633
        %v6784 = vpop.f32.mrb[0].mxu0
        %v6785 = vadd.f32 %v6736, %v6784
        %v6786 = vpop.f32.mrb[0].mxu0
        %v6787 = vpop.f32.mrb[0].mxu0
        %v6788 = vadd.f32 %v6736, %v6787
        %v6789 = vpop.f32.mrb[0].mxu0
        %6790 = vmatprep.mubr.bf16.mxu0 0
        %6791 = vmatmul.mubr.bf16.gmra.mrb[0].mxu0 %v2636
        %v6792 = vpop.f32.mrb[0].mxu0
        %v6793 = vadd.f32 %v6736, %v6792
        %v6794 = vpop.f32.mrb[0].mxu0
        %v6795 = vpop.f32.mrb[0].mxu0
        %v6796 = vadd.f32 %v6736, %v6795
        %v6797 = vpop.f32.mrb[0].mxu0
        %6798 = vdwg.mxu0
        %v6799 = vpack.c.bf16 %v6651, %v6648
        %v6800 = vpack.c.bf16 %v6656, %v6656
        %v6801 = vpack.c.bf16 %v6719, %v6716
        %v6802 = vpack.c.bf16 %v6727, %v6724
        %v6804 = vsel %vm1055, %v6799, 0
        %v6807 = vsel %vm1055, %v6800, 0
        %v6810 = vsel %vm1055, %v6801, 0
        %v6813 = vsel %vm1055, %v6802, 0
        %6815 = vmatprep.subr.bf16.mxu0 0
        %6816 = vmatpush1.bf16.xpose.msra.mxu0 %v6810
        %6817 = vmatprep.subr.bf16.mxu0 0
        %6818 = vmatpush1.bf16.xpose.msra.mxu0 %v6813
        %6819 = vmatprep.subr.bf16.mxu0 0
        %6820 = vmatpush1.bf16.xpose.msra.mxu0 0
        %6821 = vmatprep.subr.bf16.mxu0 0
        %6822 = vmatpush1.bf16.xpose.msra.mxu0 0
        %6823 = vmatprep.subr.bf16.mxu0 0
        %6824 = vmatpush1.bf16.xpose.msra.mxu0 0
        %6825 = vmatprep.subr.bf16.mxu0 0
        %6826 = vmatpush1.bf16.xpose.msra.mxu0 0
        %6827 = vmatprep.subr.bf16.mxu0 0
        %6828 = vmatpush1.bf16.xpose.msra.mxu0 0
        %6829 = vmatprep.subr.bf16.mxu0 0
        %6830 = vmatpush1.bf16.xpose.msra.mxu0 0
        %6831 = vmatprep.subr.bf16.mxu0 0
        %6832 = vmatpush1.bf16.xpose.msra.mxu0 0
        %6833 = vmatprep.subr.bf16.mxu0 0
        %6834 = vmatpush1.bf16.xpose.msra.mxu0 0
        %6835 = vmatprep.subr.bf16.mxu0 0
        %6836 = vmatpush1.bf16.xpose.msra.mxu0 0
        %6837 = vmatprep.subr.bf16.mxu0 0
        %6838 = vmatpush1.bf16.xpose.msra.mxu0 0
        %6839 = vmatprep.subr.bf16.mxu0 0
        %6840 = vmatpush1.bf16.xpose.msra.mxu0 0
        %6841 = vmatprep.subr.bf16.mxu0 0
        %6842 = vmatpush1.bf16.xpose.msra.mxu0 0
        %6843 = vmatprep.subr.bf16.mxu0 0
        %6844 = vmatpush1.bf16.xpose.msra.mxu0 0
        %6845 = vmatprep.subr.bf16.mxu0 0
        %6846 = vmatpush1.bf16.xpose.msra.mxu0 0
        %6847 = vmatprep.mubr.bf16.mxu0 0
        %6848 = vmatmul.mubr.bf16.gmra.mrb[0].mxu0 %v6804
        %v6849 = vpop.f32.mrb[0].mxu0
        %v6850 = vadd.f32 0.0, %v6849
        %v6851 = vpop.f32.mrb[0].mxu0
        %v6852 = vpop.f32.mrb[0].mxu0
        %v6853 = vadd.f32 0.0, %v6852
        %v6854 = vpop.f32.mrb[0].mxu0
        %6855 = vmatprep.mubr.bf16.mxu0 0
        %6856 = vmatmul.mubr.bf16.gmra.mrb[0].mxu0 %v6807
        %v6857 = vpop.f32.mrb[0].mxu0
        %v6858 = vadd.f32 0.0, %v6857
        %v6859 = vpop.f32.mrb[0].mxu0
        %v6860 = vpop.f32.mrb[0].mxu0
        %v6861 = vpop.f32.mrb[0].mxu0
        %6862 = vdwg.mxu0
        %v6863 = vsel %vm771, %v6850, -inf
        %6864 = vmax.xlane.f32.xlu0 %v6863
        %v6865 = vpop.xlane.xlu0 %6864
        %v6866 = vsel %vm771, %v6853, -inf
        %6867 = vmax.xlane.f32.xlu0 %v6866
        %v6868 = vpop.xlane.xlu0 %6867
        %v6869 = vsel %vm771, %v6858, -inf
        %6870 = vmax.xlane.f32.xlu0 %v6869
        %v6871 = vpop.xlane.xlu0 %6870
        %v6872 = vsub.f32 %v6850, %v6865
        %v6873 = vsub.f32 %v6853, %v6868
        %v6874 = vsub.f32 %v6858, %v6871
        %v6875 = vmul.f32 %v6872, 1.442695
        %v6876 = vpow.pop %v6875
        %v6877 = vmul.f32 %v6873, 1.442695
        %v6878 = vpow.pop %v6877
        %v6879 = vmul.f32 %v6874, 1.442695
        %v6880 = vpow.pop %v6879
        %v6881 = vsel %vm771, %v6876, 0.0
        %6882 = vadd.xlane.f32.xlu0 %v6881
        %v6883 = vpop.xlane.xlu0 %6882
        %v6884 = vsel %vm771, %v6878, 0.0
        %6885 = vadd.xlane.f32.xlu0 %v6884
        %v6886 = vpop.xlane.xlu0 %6885
        %v6887 = vsel %vm771, %v6880, 0.0
        %6888 = vadd.xlane.f32.xlu0 %v6887
        %v6889 = vpop.xlane.xlu0 %6888
        %v6890 = vrcp.pop %v6883
        %v6891 = vrcp.pop %v6886
        %v6892 = vrcp.pop %v6889
        %v6893 = vmul.f32 %v6876, %v6890
        %v6894 = vmul.f32 %v6878, %v6891
        %v6895 = vmul.f32 %v6880, %v6892
        %v6896 = vpack.c.bf16 %v6894, %v6893
        %v6897 = vpack.c.bf16 %v6895, %v6895
        %v6898 = vpack.c.bf16 %v6788, %v6785
        %v6899 = vpack.c.bf16 %v6796, %v6793
        %v6901 = vsel %vm771, %v6896, 0
        %v6904 = vsel %vm771, %v6897, 0
        %6906 = vmatprep.subr.bf16.mxu0 0
        %6907 = vmatpush1.bf16.msra.mxu0 %v6898
        %6908 = vmatprep.subr.bf16.mxu0 0
        %6909 = vmatpush1.bf16.msra.mxu0 %v6899
        %6910 = vmatprep.subr.bf16.mxu0 0
        %6911 = vmatpush1.bf16.msra.mxu0 0
        %6912 = vmatprep.subr.bf16.mxu0 0
        %6913 = vmatpush1.bf16.msra.mxu0 0
        %6914 = vmatprep.subr.bf16.mxu0 0
        %6915 = vmatpush1.bf16.msra.mxu0 0
        %6916 = vmatprep.subr.bf16.mxu0 0
        %6917 = vmatpush1.bf16.msra.mxu0 0
        %6918 = vmatprep.subr.bf16.mxu0 0
        %6919 = vmatpush1.bf16.msra.mxu0 0
        %6920 = vmatprep.subr.bf16.mxu0 0
        %6921 = vmatpush1.bf16.msra.mxu0 0
        %6922 = vmatprep.subr.bf16.mxu0 0
        %6923 = vmatpush1.bf16.msra.mxu0 0
        %6924 = vmatprep.subr.bf16.mxu0 0
        %6925 = vmatpush1.bf16.msra.mxu0 0
        %6926 = vmatprep.subr.bf16.mxu0 0
        %6927 = vmatpush1.bf16.msra.mxu0 0
        %6928 = vmatprep.subr.bf16.mxu0 0
        %6929 = vmatpush1.bf16.msra.mxu0 0
        %6930 = vmatprep.subr.bf16.mxu0 0
        %6931 = vmatpush1.bf16.msra.mxu0 0
        %6932 = vmatprep.subr.bf16.mxu0 0
        %6933 = vmatpush1.bf16.msra.mxu0 0
        %6934 = vmatprep.subr.bf16.mxu0 0
        %6935 = vmatpush1.bf16.msra.mxu0 0
        %6936 = vmatprep.subr.bf16.mxu0 0
        %6937 = vmatpush1.bf16.msra.mxu0 0
        %6938 = vmatprep.mubr.bf16.mxu0 0
        %6939 = vmatmul.mubr.bf16.gmra.mrb[0].mxu0 %v6901
        %v6940 = vpop.f32.mrb[0].mxu0
        %v6941 = vadd.f32 0.0, %v6940
        %v6942 = vpop.f32.mrb[0].mxu0
        %v6943 = vpop.f32.mrb[0].mxu0
        %v6944 = vadd.f32 0.0, %v6943
        %v6945 = vpop.f32.mrb[0].mxu0
        %6946 = vmatprep.mubr.bf16.mxu0 0
        %6947 = vmatmul.mubr.bf16.gmra.mrb[0].mxu0 %v6904
        %v6948 = vpop.f32.mrb[0].mxu0
        %v6949 = vadd.f32 0.0, %v6948
        %v6950 = vpop.f32.mrb[0].mxu0
        %v6951 = vpop.f32.mrb[0].mxu0
        %v6952 = vpop.f32.mrb[0].mxu0
        %6953 = vdwg.mxu0
        %s6954 = scalar_lea.vmem %s624, 608
        %v6955 = vld [vmem:[%s6954] sm:$0xf]
        %v6956 = vld [vmem:[%s6954 + $0x4] sm:$0xf]
        %v6957 = vld [vmem:[%s6954 + $0x8] sm:$0xf]
        %v6958 = vld [vmem:[%s6954 + $0xc] sm:$0xf]
        %s6959 = scalar_lea.vmem %s624, 672
        %v6960 = vld [vmem:[%s6959] sm:$0xf]
        %v6961 = vld [vmem:[%s6959 + $0x4] sm:$0xf]
        %v6962 = vld [vmem:[%s6959 + $0x8] sm:$0xf]
        %v6963 = vld [vmem:[%s6959 + $0xc] sm:$0xf]
        %s6964 = scalar_lea.vmem %s624, 736
        %v6965 = vld [vmem:[%s6964] sm:$0xf]
        %v6966 = vld [vmem:[%s6964 + $0x4] sm:$0xf]
        %v6967 = vld [vmem:[%s6964 + $0x8] sm:$0xf]
        %v6968 = vld [vmem:[%s6964 + $0xc] sm:$0xf]
        %s6969 = scalar_lea.vmem %s630, 38
        %v6970 = vld [vmem:[%s6969] sm:$0x1]
        %v6972 = vlaneseq
        %v6973 = vshrl.u32 %v6972, 7
        %v6974 = vsub.s32 0, %v6973
        %v6975 = vrot.slane %v6970, %v6974
        %v6981 = vunpack.c.l.b16 %v6955
        %v6982 = vunpack.c.l.b16 %v6956
        %v6983 = vunpack.c.l.b16 %v6957
        %v6984 = vunpack.c.l.b16 %v6958
        %v6985 = vpack.c.b16 %v6982, %v6981
        %v6986 = vpack.c.b16 %v6984, %v6983
        %6989 = vmatprep.subr.bf16.mxu0 0
        %6990 = vmatpush1.bf16.msra.mxu0 %v6985
        %6991 = vmatprep.subr.bf16.mxu0 0
        %6992 = vmatpush1.bf16.msra.mxu0 %v6986
        %6993 = vmatprep.subr.bf16.mxu0 0
        %6994 = vmatpush1.bf16.msra.mxu0 0
        %6995 = vmatprep.subr.bf16.mxu0 0
        %6996 = vmatpush1.bf16.msra.mxu0 0
        %6997 = vmatprep.subr.bf16.mxu0 0
        %6998 = vmatpush1.bf16.msra.mxu0 0
        %6999 = vmatprep.subr.bf16.mxu0 0
        %7000 = vmatpush1.bf16.msra.mxu0 0
        %7001 = vmatprep.subr.bf16.mxu0 0
        %7002 = vmatpush1.bf16.msra.mxu0 0
        %7003 = vmatprep.subr.bf16.mxu0 0
        %7004 = vmatpush1.bf16.msra.mxu0 0
        %7005 = vmatprep.subr.bf16.mxu0 0
        %7006 = vmatpush1.bf16.msra.mxu0 0
        %7007 = vmatprep.subr.bf16.mxu0 0
        %7008 = vmatpush1.bf16.msra.mxu0 0
        %7009 = vmatprep.subr.bf16.mxu0 0
        %7010 = vmatpush1.bf16.msra.mxu0 0
        %7011 = vmatprep.subr.bf16.mxu0 0
        %7012 = vmatpush1.bf16.msra.mxu0 0
        %7013 = vmatprep.subr.bf16.mxu0 0
        %7014 = vmatpush1.bf16.msra.mxu0 0
        %7015 = vmatprep.subr.bf16.mxu0 0
        %7016 = vmatpush1.bf16.msra.mxu0 0
        %7017 = vmatprep.subr.bf16.mxu0 0
        %7018 = vmatpush1.bf16.msra.mxu0 0
        %7019 = vmatprep.subr.bf16.mxu0 0
        %7020 = vmatpush1.bf16.msra.mxu0 0
        %7021 = vmatprep.mubr.bf16.mxu0 0
        %7022 = vmatmul.mubr.bf16.gmra.mrb[0].mxu0 %v6232
        %v7023 = vpop.f32.mrb[0].mxu0
        %v7024 = vadd.f32 %v6975, %v7023
        %v7025 = vpop.f32.mrb[0].mxu0
        %v7026 = vpop.f32.mrb[0].mxu0
        %v7027 = vadd.f32 %v6975, %v7026
        %v7028 = vpop.f32.mrb[0].mxu0
        %7029 = vmatprep.mubr.bf16.mxu0 0
        %7030 = vmatmul.mubr.bf16.gmra.mrb[0].mxu0 %v6235
        %v7031 = vpop.f32.mrb[0].mxu0
        %v7032 = vadd.f32 %v6975, %v7031
        %v7033 = vpop.f32.mrb[0].mxu0
        %v7034 = vpop.f32.mrb[0].mxu0
        %v7035 = vpop.f32.mrb[0].mxu0
        %7036 = vdwg.mxu0
        %s7037 = scalar_lea.vmem %s630, 42
        %v7038 = vld [vmem:[%s7037] sm:$0x1]
        %v7040 = vlaneseq
        %v7041 = vshrl.u32 %v7040, 7
        %v7042 = vsub.s32 0, %v7041
        %v7043 = vrot.slane %v7038, %v7042
        %v7049 = vunpack.c.l.b16 %v6960
        %v7050 = vunpack.c.l.b16 %v6961
        %v7051 = vunpack.c.l.b16 %v6962
        %v7052 = vunpack.c.l.b16 %v6963
        %v7053 = vpack.c.b16 %v7050, %v7049
        %v7054 = vpack.c.b16 %v7052, %v7051
        %7057 = vmatprep.subr.bf16.mxu0 0
        %7058 = vmatpush1.bf16.msra.mxu0 %v7053
        %7059 = vmatprep.subr.bf16.mxu0 0
        %7060 = vmatpush1.bf16.msra.mxu0 %v7054
        %7061 = vmatprep.subr.bf16.mxu0 0
        %7062 = vmatpush1.bf16.msra.mxu0 0
        %7063 = vmatprep.subr.bf16.mxu0 0
        %7064 = vmatpush1.bf16.msra.mxu0 0
        %7065 = vmatprep.subr.bf16.mxu0 0
        %7066 = vmatpush1.bf16.msra.mxu0 0
        %7067 = vmatprep.subr.bf16.mxu0 0
        %7068 = vmatpush1.bf16.msra.mxu0 0
        %7069 = vmatprep.subr.bf16.mxu0 0
        %7070 = vmatpush1.bf16.msra.mxu0 0
        %7071 = vmatprep.subr.bf16.mxu0 0
        %7072 = vmatpush1.bf16.msra.mxu0 0
        %7073 = vmatprep.subr.bf16.mxu0 0
        %7074 = vmatpush1.bf16.msra.mxu0 0
        %7075 = vmatprep.subr.bf16.mxu0 0
        %7076 = vmatpush1.bf16.msra.mxu0 0
        %7077 = vmatprep.subr.bf16.mxu0 0
        %7078 = vmatpush1.bf16.msra.mxu0 0
        %7079 = vmatprep.subr.bf16.mxu0 0
        %7080 = vmatpush1.bf16.msra.mxu0 0
        %7081 = vmatprep.subr.bf16.mxu0 0
        %7082 = vmatpush1.bf16.msra.mxu0 0
        %7083 = vmatprep.subr.bf16.mxu0 0
        %7084 = vmatpush1.bf16.msra.mxu0 0
        %7085 = vmatprep.subr.bf16.mxu0 0
        %7086 = vmatpush1.bf16.msra.mxu0 0
        %7087 = vmatprep.subr.bf16.mxu0 0
        %7088 = vmatpush1.bf16.msra.mxu0 0
        %7089 = vmatprep.mubr.bf16.mxu0 0
        %7090 = vmatmul.mubr.bf16.gmra.mrb[0].mxu0 %v2633
        %v7091 = vpop.f32.mrb[0].mxu0
        %v7092 = vadd.f32 %v7043, %v7091
        %v7093 = vpop.f32.mrb[0].mxu0
        %v7094 = vpop.f32.mrb[0].mxu0
        %v7095 = vadd.f32 %v7043, %v7094
        %v7096 = vpop.f32.mrb[0].mxu0
        %7097 = vmatprep.mubr.bf16.mxu0 0
        %7098 = vmatmul.mubr.bf16.gmra.mrb[0].mxu0 %v2636
        %v7099 = vpop.f32.mrb[0].mxu0
        %v7100 = vadd.f32 %v7043, %v7099
        %v7101 = vpop.f32.mrb[0].mxu0
        %v7102 = vpop.f32.mrb[0].mxu0
        %v7103 = vadd.f32 %v7043, %v7102
        %v7104 = vpop.f32.mrb[0].mxu0
        %7105 = vdwg.mxu0
        %s7106 = scalar_lea.vmem %s630, 46
        %v7107 = vld [vmem:[%s7106] sm:$0x1]
        %v7109 = vlaneseq
        %v7110 = vshrl.u32 %v7109, 7
        %v7111 = vsub.s32 0, %v7110
        %v7112 = vrot.slane %v7107, %v7111
        %v7118 = vunpack.c.l.b16 %v6965
        %v7119 = vunpack.c.l.b16 %v6966
        %v7120 = vunpack.c.l.b16 %v6967
        %v7121 = vunpack.c.l.b16 %v6968
        %v7122 = vpack.c.b16 %v7119, %v7118
        %v7123 = vpack.c.b16 %v7121, %v7120
        %7126 = vmatprep.subr.bf16.mxu0 0
        %7127 = vmatpush1.bf16.msra.mxu0 %v7122
        %7128 = vmatprep.subr.bf16.mxu0 0
        %7129 = vmatpush1.bf16.msra.mxu0 %v7123
        %7130 = vmatprep.subr.bf16.mxu0 0
        %7131 = vmatpush1.bf16.msra.mxu0 0
        %7132 = vmatprep.subr.bf16.mxu0 0
        %7133 = vmatpush1.bf16.msra.mxu0 0
        %7134 = vmatprep.subr.bf16.mxu0 0
        %7135 = vmatpush1.bf16.msra.mxu0 0
        %7136 = vmatprep.subr.bf16.mxu0 0
        %7137 = vmatpush1.bf16.msra.mxu0 0
        %7138 = vmatprep.subr.bf16.mxu0 0
        %7139 = vmatpush1.bf16.msra.mxu0 0
        %7140 = vmatprep.subr.bf16.mxu0 0
        %7141 = vmatpush1.bf16.msra.mxu0 0
        %7142 = vmatprep.subr.bf16.mxu0 0
        %7143 = vmatpush1.bf16.msra.mxu0 0
        %7144 = vmatprep.subr.bf16.mxu0 0
        %7145 = vmatpush1.bf16.msra.mxu0 0
        %7146 = vmatprep.subr.bf16.mxu0 0
        %7147 = vmatpush1.bf16.msra.mxu0 0
        %7148 = vmatprep.subr.bf16.mxu0 0
        %7149 = vmatpush1.bf16.msra.mxu0 0
        %7150 = vmatprep.subr.bf16.mxu0 0
        %7151 = vmatpush1.bf16.msra.mxu0 0
        %7152 = vmatprep.subr.bf16.mxu0 0
        %7153 = vmatpush1.bf16.msra.mxu0 0
        %7154 = vmatprep.subr.bf16.mxu0 0
        %7155 = vmatpush1.bf16.msra.mxu0 0
        %7156 = vmatprep.subr.bf16.mxu0 0
        %7157 = vmatpush1.bf16.msra.mxu0 0
        %7158 = vmatprep.mubr.bf16.mxu0 0
        %7159 = vmatmul.mubr.bf16.gmra.mrb[0].mxu0 %v2633
        %v7160 = vpop.f32.mrb[0].mxu0
        %v7161 = vadd.f32 %v7112, %v7160
        %v7162 = vpop.f32.mrb[0].mxu0
        %v7163 = vpop.f32.mrb[0].mxu0
        %v7164 = vadd.f32 %v7112, %v7163
        %v7165 = vpop.f32.mrb[0].mxu0
        %7166 = vmatprep.mubr.bf16.mxu0 0
        %7167 = vmatmul.mubr.bf16.gmra.mrb[0].mxu0 %v2636
        %v7168 = vpop.f32.mrb[0].mxu0
        %v7169 = vadd.f32 %v7112, %v7168
        %v7170 = vpop.f32.mrb[0].mxu0
        %v7171 = vpop.f32.mrb[0].mxu0
        %v7172 = vadd.f32 %v7112, %v7171
        %v7173 = vpop.f32.mrb[0].mxu0
        %7174 = vdwg.mxu0
        %v7175 = vpack.c.bf16 %v7027, %v7024
        %v7176 = vpack.c.bf16 %v7032, %v7032
        %v7177 = vpack.c.bf16 %v7095, %v7092
        %v7178 = vpack.c.bf16 %v7103, %v7100
        %v7180 = vsel %vm1055, %v7175, 0
        %v7183 = vsel %vm1055, %v7176, 0
        %v7186 = vsel %vm1055, %v7177, 0
        %v7189 = vsel %vm1055, %v7178, 0
        %7191 = vmatprep.subr.bf16.mxu0 0
        %7192 = vmatpush1.bf16.xpose.msra.mxu0 %v7186
        %7193 = vmatprep.subr.bf16.mxu0 0
        %7194 = vmatpush1.bf16.xpose.msra.mxu0 %v7189
        %7195 = vmatprep.subr.bf16.mxu0 0
        %7196 = vmatpush1.bf16.xpose.msra.mxu0 0
        %7197 = vmatprep.subr.bf16.mxu0 0
        %7198 = vmatpush1.bf16.xpose.msra.mxu0 0
        %7199 = vmatprep.subr.bf16.mxu0 0
        %7200 = vmatpush1.bf16.xpose.msra.mxu0 0
        %7201 = vmatprep.subr.bf16.mxu0 0
        %7202 = vmatpush1.bf16.xpose.msra.mxu0 0
        %7203 = vmatprep.subr.bf16.mxu0 0
        %7204 = vmatpush1.bf16.xpose.msra.mxu0 0
        %7205 = vmatprep.subr.bf16.mxu0 0
        %7206 = vmatpush1.bf16.xpose.msra.mxu0 0
        %7207 = vmatprep.subr.bf16.mxu0 0
        %7208 = vmatpush1.bf16.xpose.msra.mxu0 0
        %7209 = vmatprep.subr.bf16.mxu0 0
        %7210 = vmatpush1.bf16.xpose.msra.mxu0 0
        %7211 = vmatprep.subr.bf16.mxu0 0
        %7212 = vmatpush1.bf16.xpose.msra.mxu0 0
        %7213 = vmatprep.subr.bf16.mxu0 0
        %7214 = vmatpush1.bf16.xpose.msra.mxu0 0
        %7215 = vmatprep.subr.bf16.mxu0 0
        %7216 = vmatpush1.bf16.xpose.msra.mxu0 0
        %7217 = vmatprep.subr.bf16.mxu0 0
        %7218 = vmatpush1.bf16.xpose.msra.mxu0 0
        %7219 = vmatprep.subr.bf16.mxu0 0
        %7220 = vmatpush1.bf16.xpose.msra.mxu0 0
        %7221 = vmatprep.subr.bf16.mxu0 0
        %7222 = vmatpush1.bf16.xpose.msra.mxu0 0
        %7223 = vmatprep.mubr.bf16.mxu0 0
        %7224 = vmatmul.mubr.bf16.gmra.mrb[0].mxu0 %v7180
        %v7225 = vpop.f32.mrb[0].mxu0
        %v7226 = vadd.f32 0.0, %v7225
        %v7227 = vpop.f32.mrb[0].mxu0
        %v7228 = vpop.f32.mrb[0].mxu0
        %v7229 = vadd.f32 0.0, %v7228
        %v7230 = vpop.f32.mrb[0].mxu0
        %7231 = vmatprep.mubr.bf16.mxu0 0
        %7232 = vmatmul.mubr.bf16.gmra.mrb[0].mxu0 %v7183
        %v7233 = vpop.f32.mrb[0].mxu0
        %v7234 = vadd.f32 0.0, %v7233
        %v7235 = vpop.f32.mrb[0].mxu0
        %v7236 = vpop.f32.mrb[0].mxu0
        %v7237 = vpop.f32.mrb[0].mxu0
        %7238 = vdwg.mxu0
        %v7239 = vsel %vm771, %v7226, -inf
        %7240 = vmax.xlane.f32.xlu0 %v7239
        %v7241 = vpop.xlane.xlu0 %7240
        %v7242 = vsel %vm771, %v7229, -inf
        %7243 = vmax.xlane.f32.xlu0 %v7242
        %v7244 = vpop.xlane.xlu0 %7243
        %v7245 = vsel %vm771, %v7234, -inf
        %7246 = vmax.xlane.f32.xlu0 %v7245
        %v7247 = vpop.xlane.xlu0 %7246
        %v7248 = vsub.f32 %v7226, %v7241
        %v7249 = vsub.f32 %v7229, %v7244
        %v7250 = vsub.f32 %v7234, %v7247
        %v7251 = vmul.f32 %v7248, 1.442695
        %v7252 = vpow.pop %v7251
        %v7253 = vmul.f32 %v7249, 1.442695
        %v7254 = vpow.pop %v7253
        %v7255 = vmul.f32 %v7250, 1.442695
        %v7256 = vpow.pop %v7255
        %v7257 = vsel %vm771, %v7252, 0.0
        %7258 = vadd.xlane.f32.xlu0 %v7257
        %v7259 = vpop.xlane.xlu0 %7258
        %v7260 = vsel %vm771, %v7254, 0.0
        %7261 = vadd.xlane.f32.xlu0 %v7260
        %v7262 = vpop.xlane.xlu0 %7261
        %v7263 = vsel %vm771, %v7256, 0.0
        %7264 = vadd.xlane.f32.xlu0 %v7263
        %v7265 = vpop.xlane.xlu0 %7264
        %v7266 = vrcp.pop %v7259
        %v7267 = vrcp.pop %v7262
        %v7268 = vrcp.pop %v7265
        %v7269 = vmul.f32 %v7252, %v7266
        %v7270 = vmul.f32 %v7254, %v7267
        %v7271 = vmul.f32 %v7256, %v7268
        %v7272 = vpack.c.bf16 %v7270, %v7269
        %v7273 = vpack.c.bf16 %v7271, %v7271
        %v7274 = vpack.c.bf16 %v7164, %v7161
        %v7275 = vpack.c.bf16 %v7172, %v7169
        %v7277 = vsel %vm771, %v7272, 0
        %v7280 = vsel %vm771, %v7273, 0
        %7282 = vmatprep.subr.bf16.mxu0 0
        %7283 = vmatpush1.bf16.msra.mxu0 %v7274
        %7284 = vmatprep.subr.bf16.mxu0 0
        %7285 = vmatpush1.bf16.msra.mxu0 %v7275
        %7286 = vmatprep.subr.bf16.mxu0 0
        %7287 = vmatpush1.bf16.msra.mxu0 0
        %7288 = vmatprep.subr.bf16.mxu0 0
        %7289 = vmatpush1.bf16.msra.mxu0 0
        %7290 = vmatprep.subr.bf16.mxu0 0
        %7291 = vmatpush1.bf16.msra.mxu0 0
        %7292 = vmatprep.subr.bf16.mxu0 0
        %7293 = vmatpush1.bf16.msra.mxu0 0
        %7294 = vmatprep.subr.bf16.mxu0 0
        %7295 = vmatpush1.bf16.msra.mxu0 0
        %7296 = vmatprep.subr.bf16.mxu0 0
        %7297 = vmatpush1.bf16.msra.mxu0 0
        %7298 = vmatprep.subr.bf16.mxu0 0
        %7299 = vmatpush1.bf16.msra.mxu0 0
        %7300 = vmatprep.subr.bf16.mxu0 0
        %7301 = vmatpush1.bf16.msra.mxu0 0
        %7302 = vmatprep.subr.bf16.mxu0 0
        %7303 = vmatpush1.bf16.msra.mxu0 0
        %7304 = vmatprep.subr.bf16.mxu0 0
        %7305 = vmatpush1.bf16.msra.mxu0 0
        %7306 = vmatprep.subr.bf16.mxu0 0
        %7307 = vmatpush1.bf16.msra.mxu0 0
        %7308 = vmatprep.subr.bf16.mxu0 0
        %7309 = vmatpush1.bf16.msra.mxu0 0
        %7310 = vmatprep.subr.bf16.mxu0 0
        %7311 = vmatpush1.bf16.msra.mxu0 0
        %7312 = vmatprep.subr.bf16.mxu0 0
        %7313 = vmatpush1.bf16.msra.mxu0 0
        %7314 = vmatprep.mubr.bf16.mxu0 0
        %7315 = vmatmul.mubr.bf16.gmra.mrb[0].mxu0 %v7277
        %v7316 = vpop.f32.mrb[0].mxu0
        %v7317 = vadd.f32 0.0, %v7316
        %v7318 = vpop.f32.mrb[0].mxu0
        %v7319 = vpop.f32.mrb[0].mxu0
        %v7320 = vadd.f32 0.0, %v7319
        %v7321 = vpop.f32.mrb[0].mxu0
        %7322 = vmatprep.mubr.bf16.mxu0 0
        %7323 = vmatmul.mubr.bf16.gmra.mrb[0].mxu0 %v7280
        %v7324 = vpop.f32.mrb[0].mxu0
        %v7325 = vadd.f32 0.0, %v7324
        %v7326 = vpop.f32.mrb[0].mxu0
        %v7327 = vpop.f32.mrb[0].mxu0
        %v7328 = vpop.f32.mrb[0].mxu0
        %7329 = vdwg.mxu0
        %s7330 = scalar_lea.vmem %s624, 624
        %v7331 = vld [vmem:[%s7330] sm:$0xf]
        %v7332 = vld [vmem:[%s7330 + $0x4] sm:$0xf]
        %v7333 = vld [vmem:[%s7330 + $0x8] sm:$0xf]
        %v7334 = vld [vmem:[%s7330 + $0xc] sm:$0xf]
        %s7335 = scalar_lea.vmem %s624, 688
        %v7336 = vld [vmem:[%s7335] sm:$0xf]
        %v7337 = vld [vmem:[%s7335 + $0x4] sm:$0xf]
        %v7338 = vld [vmem:[%s7335 + $0x8] sm:$0xf]
        %v7339 = vld [vmem:[%s7335 + $0xc] sm:$0xf]
        %s7340 = scalar_lea.vmem %s624, 752
        %v7341 = vld [vmem:[%s7340] sm:$0xf]
        %v7342 = vld [vmem:[%s7340 + $0x4] sm:$0xf]
        %v7343 = vld [vmem:[%s7340 + $0x8] sm:$0xf]
        %v7344 = vld [vmem:[%s7340 + $0xc] sm:$0xf]
        %s7345 = scalar_lea.vmem %s630, 39
        %v7346 = vld [vmem:[%s7345] sm:$0x1]
        %v7348 = vlaneseq
        %v7349 = vshrl.u32 %v7348, 7
        %v7350 = vsub.s32 0, %v7349
        %v7351 = vrot.slane %v7346, %v7350
        %v7357 = vunpack.c.l.b16 %v7331
        %v7358 = vunpack.c.l.b16 %v7332
        %v7359 = vunpack.c.l.b16 %v7333
        %v7360 = vunpack.c.l.b16 %v7334
        %v7361 = vpack.c.b16 %v7358, %v7357
        %v7362 = vpack.c.b16 %v7360, %v7359
        %7365 = vmatprep.subr.bf16.mxu0 0
        %7366 = vmatpush1.bf16.msra.mxu0 %v7361
        %7367 = vmatprep.subr.bf16.mxu0 0
        %7368 = vmatpush1.bf16.msra.mxu0 %v7362
        %7369 = vmatprep.subr.bf16.mxu0 0
        %7370 = vmatpush1.bf16.msra.mxu0 0
        %7371 = vmatprep.subr.bf16.mxu0 0
        %7372 = vmatpush1.bf16.msra.mxu0 0
        %7373 = vmatprep.subr.bf16.mxu0 0
        %7374 = vmatpush1.bf16.msra.mxu0 0
        %7375 = vmatprep.subr.bf16.mxu0 0
        %7376 = vmatpush1.bf16.msra.mxu0 0
        %7377 = vmatprep.subr.bf16.mxu0 0
        %7378 = vmatpush1.bf16.msra.mxu0 0
        %7379 = vmatprep.subr.bf16.mxu0 0
        %7380 = vmatpush1.bf16.msra.mxu0 0
        %7381 = vmatprep.subr.bf16.mxu0 0
        %7382 = vmatpush1.bf16.msra.mxu0 0
        %7383 = vmatprep.subr.bf16.mxu0 0
        %7384 = vmatpush1.bf16.msra.mxu0 0
        %7385 = vmatprep.subr.bf16.mxu0 0
        %7386 = vmatpush1.bf16.msra.mxu0 0
        %7387 = vmatprep.subr.bf16.mxu0 0
        %7388 = vmatpush1.bf16.msra.mxu0 0
        %7389 = vmatprep.subr.bf16.mxu0 0
        %7390 = vmatpush1.bf16.msra.mxu0 0
        %7391 = vmatprep.subr.bf16.mxu0 0
        %7392 = vmatpush1.bf16.msra.mxu0 0
        %7393 = vmatprep.subr.bf16.mxu0 0
        %7394 = vmatpush1.bf16.msra.mxu0 0
        %7395 = vmatprep.subr.bf16.mxu0 0
        %7396 = vmatpush1.bf16.msra.mxu0 0
        %7397 = vmatprep.mubr.bf16.mxu0 0
        %7398 = vmatmul.mubr.bf16.gmra.mrb[0].mxu0 %v6232
        %v7399 = vpop.f32.mrb[0].mxu0
        %v7400 = vadd.f32 %v7351, %v7399
        %v7401 = vpop.f32.mrb[0].mxu0
        %v7402 = vpop.f32.mrb[0].mxu0
        %v7403 = vadd.f32 %v7351, %v7402
        %v7404 = vpop.f32.mrb[0].mxu0
        %7405 = vmatprep.mubr.bf16.mxu0 0
        %7406 = vmatmul.mubr.bf16.gmra.mrb[0].mxu0 %v6235
        %v7407 = vpop.f32.mrb[0].mxu0
        %v7408 = vadd.f32 %v7351, %v7407
        %v7409 = vpop.f32.mrb[0].mxu0
        %v7410 = vpop.f32.mrb[0].mxu0
        %v7411 = vpop.f32.mrb[0].mxu0
        %7412 = vdwg.mxu0
        %s7413 = scalar_lea.vmem %s630, 43
        %v7414 = vld [vmem:[%s7413] sm:$0x1]
        %v7416 = vlaneseq
        %v7417 = vshrl.u32 %v7416, 7
        %v7418 = vsub.s32 0, %v7417
        %v7419 = vrot.slane %v7414, %v7418
        %v7425 = vunpack.c.l.b16 %v7336
        %v7426 = vunpack.c.l.b16 %v7337
        %v7427 = vunpack.c.l.b16 %v7338
        %v7428 = vunpack.c.l.b16 %v7339
        %v7429 = vpack.c.b16 %v7426, %v7425
        %v7430 = vpack.c.b16 %v7428, %v7427
        %7433 = vmatprep.subr.bf16.mxu0 0
        %7434 = vmatpush1.bf16.msra.mxu0 %v7429
        %7435 = vmatprep.subr.bf16.mxu0 0
        %7436 = vmatpush1.bf16.msra.mxu0 %v7430
        %7437 = vmatprep.subr.bf16.mxu0 0
        %7438 = vmatpush1.bf16.msra.mxu0 0
        %7439 = vmatprep.subr.bf16.mxu0 0
        %7440 = vmatpush1.bf16.msra.mxu0 0
        %7441 = vmatprep.subr.bf16.mxu0 0
        %7442 = vmatpush1.bf16.msra.mxu0 0
        %7443 = vmatprep.subr.bf16.mxu0 0
        %7444 = vmatpush1.bf16.msra.mxu0 0
        %7445 = vmatprep.subr.bf16.mxu0 0
        %7446 = vmatpush1.bf16.msra.mxu0 0
        %7447 = vmatprep.subr.bf16.mxu0 0
        %7448 = vmatpush1.bf16.msra.mxu0 0
        %7449 = vmatprep.subr.bf16.mxu0 0
        %7450 = vmatpush1.bf16.msra.mxu0 0
        %7451 = vmatprep.subr.bf16.mxu0 0
        %7452 = vmatpush1.bf16.msra.mxu0 0
        %7453 = vmatprep.subr.bf16.mxu0 0
        %7454 = vmatpush1.bf16.msra.mxu0 0
        %7455 = vmatprep.subr.bf16.mxu0 0
        %7456 = vmatpush1.bf16.msra.mxu0 0
        %7457 = vmatprep.subr.bf16.mxu0 0
        %7458 = vmatpush1.bf16.msra.mxu0 0
        %7459 = vmatprep.subr.bf16.mxu0 0
        %7460 = vmatpush1.bf16.msra.mxu0 0
        %7461 = vmatprep.subr.bf16.mxu0 0
        %7462 = vmatpush1.bf16.msra.mxu0 0
        %7463 = vmatprep.subr.bf16.mxu0 0
        %7464 = vmatpush1.bf16.msra.mxu0 0
        %7465 = vmatprep.mubr.bf16.mxu0 0
        %7466 = vmatmul.mubr.bf16.gmra.mrb[0].mxu0 %v2633
        %v7467 = vpop.f32.mrb[0].mxu0
        %v7468 = vadd.f32 %v7419, %v7467
        %v7469 = vpop.f32.mrb[0].mxu0
        %v7470 = vpop.f32.mrb[0].mxu0
        %v7471 = vadd.f32 %v7419, %v7470
        %v7472 = vpop.f32.mrb[0].mxu0
        %7473 = vmatprep.mubr.bf16.mxu0 0
        %7474 = vmatmul.mubr.bf16.gmra.mrb[0].mxu0 %v2636
        %v7475 = vpop.f32.mrb[0].mxu0
        %v7476 = vadd.f32 %v7419, %v7475
        %v7477 = vpop.f32.mrb[0].mxu0
        %v7478 = vpop.f32.mrb[0].mxu0
        %v7479 = vadd.f32 %v7419, %v7478
        %v7480 = vpop.f32.mrb[0].mxu0
        %7481 = vdwg.mxu0
        %s7482 = scalar_lea.vmem %s630, 47
        %v7483 = vld [vmem:[%s7482] sm:$0x1]
        %v7485 = vlaneseq
        %v7486 = vshrl.u32 %v7485, 7
        %v7487 = vsub.s32 0, %v7486
        %v7488 = vrot.slane %v7483, %v7487
        %v7494 = vunpack.c.l.b16 %v7341
        %v7495 = vunpack.c.l.b16 %v7342
        %v7496 = vunpack.c.l.b16 %v7343
        %v7497 = vunpack.c.l.b16 %v7344
        %v7498 = vpack.c.b16 %v7495, %v7494
        %v7499 = vpack.c.b16 %v7497, %v7496
        %7502 = vmatprep.subr.bf16.mxu0 0
        %7503 = vmatpush1.bf16.msra.mxu0 %v7498
        %7504 = vmatprep.subr.bf16.mxu0 0
        %7505 = vmatpush1.bf16.msra.mxu0 %v7499
        %7506 = vmatprep.subr.bf16.mxu0 0
        %7507 = vmatpush1.bf16.msra.mxu0 0
        %7508 = vmatprep.subr.bf16.mxu0 0
        %7509 = vmatpush1.bf16.msra.mxu0 0
        %7510 = vmatprep.subr.bf16.mxu0 0
        %7511 = vmatpush1.bf16.msra.mxu0 0
        %7512 = vmatprep.subr.bf16.mxu0 0
        %7513 = vmatpush1.bf16.msra.mxu0 0
        %7514 = vmatprep.subr.bf16.mxu0 0
        %7515 = vmatpush1.bf16.msra.mxu0 0
        %7516 = vmatprep.subr.bf16.mxu0 0
        %7517 = vmatpush1.bf16.msra.mxu0 0
        %7518 = vmatprep.subr.bf16.mxu0 0
        %7519 = vmatpush1.bf16.msra.mxu0 0
        %7520 = vmatprep.subr.bf16.mxu0 0
        %7521 = vmatpush1.bf16.msra.mxu0 0
        %7522 = vmatprep.subr.bf16.mxu0 0
        %7523 = vmatpush1.bf16.msra.mxu0 0
        %7524 = vmatprep.subr.bf16.mxu0 0
        %7525 = vmatpush1.bf16.msra.mxu0 0
        %7526 = vmatprep.subr.bf16.mxu0 0
        %7527 = vmatpush1.bf16.msra.mxu0 0
        %7528 = vmatprep.subr.bf16.mxu0 0
        %7529 = vmatpush1.bf16.msra.mxu0 0
        %7530 = vmatprep.subr.bf16.mxu0 0
        %7531 = vmatpush1.bf16.msra.mxu0 0
        %7532 = vmatprep.subr.bf16.mxu0 0
        %7533 = vmatpush1.bf16.msra.mxu0 0
        %7534 = vmatprep.mubr.bf16.mxu0 0
        %7535 = vmatmul.mubr.bf16.gmra.mrb[0].mxu0 %v2633
        %v7536 = vpop.f32.mrb[0].mxu0
        %v7537 = vadd.f32 %v7488, %v7536
        %v7538 = vpop.f32.mrb[0].mxu0
        %v7539 = vpop.f32.mrb[0].mxu0
        %v7540 = vadd.f32 %v7488, %v7539
        %v7541 = vpop.f32.mrb[0].mxu0
        %7542 = vmatprep.mubr.bf16.mxu0 0
        %7543 = vmatmul.mubr.bf16.gmra.mrb[0].mxu0 %v2636
        %v7544 = vpop.f32.mrb[0].mxu0
        %v7545 = vadd.f32 %v7488, %v7544
        %v7546 = vpop.f32.mrb[0].mxu0
        %v7547 = vpop.f32.mrb[0].mxu0
        %v7548 = vadd.f32 %v7488, %v7547
        %v7549 = vpop.f32.mrb[0].mxu0
        %7550 = vdwg.mxu0
        %v7551 = vpack.c.bf16 %v7403, %v7400
        %v7552 = vpack.c.bf16 %v7408, %v7408
        %v7553 = vpack.c.bf16 %v7471, %v7468
        %v7554 = vpack.c.bf16 %v7479, %v7476
        %v7556 = vsel %vm1055, %v7551, 0
        %v7559 = vsel %vm1055, %v7552, 0
        %v7562 = vsel %vm1055, %v7553, 0
        %v7565 = vsel %vm1055, %v7554, 0
        %7567 = vmatprep.subr.bf16.mxu0 0
        %7568 = vmatpush1.bf16.xpose.msra.mxu0 %v7562
        %7569 = vmatprep.subr.bf16.mxu0 0
        %7570 = vmatpush1.bf16.xpose.msra.mxu0 %v7565
        %7571 = vmatprep.subr.bf16.mxu0 0
        %7572 = vmatpush1.bf16.xpose.msra.mxu0 0
        %7573 = vmatprep.subr.bf16.mxu0 0
        %7574 = vmatpush1.bf16.xpose.msra.mxu0 0
        %7575 = vmatprep.subr.bf16.mxu0 0
        %7576 = vmatpush1.bf16.xpose.msra.mxu0 0
        %7577 = vmatprep.subr.bf16.mxu0 0
        %7578 = vmatpush1.bf16.xpose.msra.mxu0 0
        %7579 = vmatprep.subr.bf16.mxu0 0
        %7580 = vmatpush1.bf16.xpose.msra.mxu0 0
        %7581 = vmatprep.subr.bf16.mxu0 0
        %7582 = vmatpush1.bf16.xpose.msra.mxu0 0
        %7583 = vmatprep.subr.bf16.mxu0 0
        %7584 = vmatpush1.bf16.xpose.msra.mxu0 0
        %7585 = vmatprep.subr.bf16.mxu0 0
        %7586 = vmatpush1.bf16.xpose.msra.mxu0 0
        %7587 = vmatprep.subr.bf16.mxu0 0
        %7588 = vmatpush1.bf16.xpose.msra.mxu0 0
        %7589 = vmatprep.subr.bf16.mxu0 0
        %7590 = vmatpush1.bf16.xpose.msra.mxu0 0
        %7591 = vmatprep.subr.bf16.mxu0 0
        %7592 = vmatpush1.bf16.xpose.msra.mxu0 0
        %7593 = vmatprep.subr.bf16.mxu0 0
        %7594 = vmatpush1.bf16.xpose.msra.mxu0 0
        %7595 = vmatprep.subr.bf16.mxu0 0
        %7596 = vmatpush1.bf16.xpose.msra.mxu0 0
        %7597 = vmatprep.subr.bf16.mxu0 0
        %7598 = vmatpush1.bf16.xpose.msra.mxu0 0
        %7599 = vmatprep.mubr.bf16.mxu0 0
        %7600 = vmatmul.mubr.bf16.gmra.mrb[0].mxu0 %v7556
        %v7601 = vpop.f32.mrb[0].mxu0
        %v7602 = vadd.f32 0.0, %v7601
        %v7603 = vpop.f32.mrb[0].mxu0
        %v7604 = vpop.f32.mrb[0].mxu0
        %v7605 = vadd.f32 0.0, %v7604
        %v7606 = vpop.f32.mrb[0].mxu0
        %7607 = vmatprep.mubr.bf16.mxu0 0
        %7608 = vmatmul.mubr.bf16.gmra.mrb[0].mxu0 %v7559
        %v7609 = vpop.f32.mrb[0].mxu0
        %v7610 = vadd.f32 0.0, %v7609
        %v7611 = vpop.f32.mrb[0].mxu0
        %v7612 = vpop.f32.mrb[0].mxu0
        %v7613 = vpop.f32.mrb[0].mxu0
        %7614 = vdwg.mxu0
        %v7615 = vsel %vm771, %v7602, -inf
        %7616 = vmax.xlane.f32.xlu0 %v7615
        %v7617 = vpop.xlane.xlu0 %7616
        %v7618 = vsel %vm771, %v7605, -inf
        %7619 = vmax.xlane.f32.xlu0 %v7618
        %v7620 = vpop.xlane.xlu0 %7619
        %v7621 = vsel %vm771, %v7610, -inf
        %7622 = vmax.xlane.f32.xlu0 %v7621
        %v7623 = vpop.xlane.xlu0 %7622
        %v7624 = vsub.f32 %v7602, %v7617
        %v7625 = vsub.f32 %v7605, %v7620
        %v7626 = vsub.f32 %v7610, %v7623
        %v7627 = vmul.f32 %v7624, 1.442695
        %v7628 = vpow.pop %v7627
        %v7629 = vmul.f32 %v7625, 1.442695
        %v7630 = vpow.pop %v7629
        %v7631 = vmul.f32 %v7626, 1.442695
        %v7632 = vpow.pop %v7631
        %v7633 = vsel %vm771, %v7628, 0.0
        %7634 = vadd.xlane.f32.xlu0 %v7633
        %v7635 = vpop.xlane.xlu0 %7634
        %v7636 = vsel %vm771, %v7630, 0.0
        %7637 = vadd.xlane.f32.xlu0 %v7636
        %v7638 = vpop.xlane.xlu0 %7637
        %v7639 = vsel %vm771, %v7632, 0.0
        %7640 = vadd.xlane.f32.xlu0 %v7639
        %v7641 = vpop.xlane.xlu0 %7640
        %v7642 = vrcp.pop %v7635
        %v7643 = vrcp.pop %v7638
        %v7644 = vrcp.pop %v7641
        %v7645 = vmul.f32 %v7628, %v7642
        %v7646 = vmul.f32 %v7630, %v7643
        %v7647 = vmul.f32 %v7632, %v7644
        %v7648 = vpack.c.bf16 %v7646, %v7645
        %v7649 = vpack.c.bf16 %v7647, %v7647
        %v7650 = vpack.c.bf16 %v7540, %v7537
        %v7651 = vpack.c.bf16 %v7548, %v7545
        %v7653 = vsel %vm771, %v7648, 0
        %v7656 = vsel %vm771, %v7649, 0
        %7658 = vmatprep.subr.bf16.mxu0 0
        %7659 = vmatpush1.bf16.msra.mxu0 %v7650
        %7660 = vmatprep.subr.bf16.mxu0 0
        %7661 = vmatpush1.bf16.msra.mxu0 %v7651
        %7662 = vmatprep.subr.bf16.mxu0 0
        %7663 = vmatpush1.bf16.msra.mxu0 0
        %7664 = vmatprep.subr.bf16.mxu0 0
        %7665 = vmatpush1.bf16.msra.mxu0 0
        %7666 = vmatprep.subr.bf16.mxu0 0
        %7667 = vmatpush1.bf16.msra.mxu0 0
        %7668 = vmatprep.subr.bf16.mxu0 0
        %7669 = vmatpush1.bf16.msra.mxu0 0
        %7670 = vmatprep.subr.bf16.mxu0 0
        %7671 = vmatpush1.bf16.msra.mxu0 0
        %7672 = vmatprep.subr.bf16.mxu0 0
        %7673 = vmatpush1.bf16.msra.mxu0 0
        %7674 = vmatprep.subr.bf16.mxu0 0
        %7675 = vmatpush1.bf16.msra.mxu0 0
        %7676 = vmatprep.subr.bf16.mxu0 0
        %7677 = vmatpush1.bf16.msra.mxu0 0
        %7678 = vmatprep.subr.bf16.mxu0 0
        %7679 = vmatpush1.bf16.msra.mxu0 0
        %7680 = vmatprep.subr.bf16.mxu0 0
        %7681 = vmatpush1.bf16.msra.mxu0 0
        %7682 = vmatprep.subr.bf16.mxu0 0
        %7683 = vmatpush1.bf16.msra.mxu0 0
        %7684 = vmatprep.subr.bf16.mxu0 0
        %7685 = vmatpush1.bf16.msra.mxu0 0
        %7686 = vmatprep.subr.bf16.mxu0 0
        %7687 = vmatpush1.bf16.msra.mxu0 0
        %7688 = vmatprep.subr.bf16.mxu0 0
        %7689 = vmatpush1.bf16.msra.mxu0 0
        %7690 = vmatprep.mubr.bf16.mxu0 0
        %7691 = vmatmul.mubr.bf16.gmra.mrb[0].mxu0 %v7653
        %v7692 = vpop.f32.mrb[0].mxu0
        %v7693 = vadd.f32 0.0, %v7692
        %v7694 = vpop.f32.mrb[0].mxu0
        %v7695 = vpop.f32.mrb[0].mxu0
        %v7696 = vadd.f32 0.0, %v7695
        %v7697 = vpop.f32.mrb[0].mxu0
        %7698 = vmatprep.mubr.bf16.mxu0 0
        %7699 = vmatmul.mubr.bf16.gmra.mrb[0].mxu0 %v7656
        %v7700 = vpop.f32.mrb[0].mxu0
        %v7701 = vadd.f32 0.0, %v7700
        %v7702 = vpop.f32.mrb[0].mxu0
        %v7703 = vpop.f32.mrb[0].mxu0
        %v7704 = vpop.f32.mrb[0].mxu0
        %7705 = vdwg.mxu0
        %7709 = vrot.lane.b32.xlu0 %v6941, 8
        %v7710 = vpop.permute.xlu0 %7709
        %7711 = vrot.lane.b32.xlu0 %v6944, 8
        %v7712 = vpop.permute.xlu0 %7711
        %7713 = vrot.lane.b32.xlu0 %v6949, 8
        %v7714 = vpop.permute.xlu0 %7713
        %7721 = vrot.lane.b32.xlu0 %v7317, 16
        %v7722 = vpop.permute.xlu0 %7721
        %7723 = vrot.lane.b32.xlu0 %v7320, 16
        %v7724 = vpop.permute.xlu0 %7723
        %7725 = vrot.lane.b32.xlu0 %v7325, 16
        %v7726 = vpop.permute.xlu0 %7725
        %7733 = vrot.lane.b32.xlu0 %v7693, 24
        %v7734 = vpop.permute.xlu0 %7733
        %7735 = vrot.lane.b32.xlu0 %v7696, 24
        %v7736 = vpop.permute.xlu0 %7735
        %7737 = vrot.lane.b32.xlu0 %v7701, 24
        %v7738 = vpop.permute.xlu0 %7737
        %v7742 = vsel %vm1055, %v6565, %v7710
        %v7743 = vsel %vm1055, %v6568, %v7712
        %v7744 = vsel %vm1055, %v6573, %v7714
        %v7745 = vsel %vm2382, %v7742, %v7722
        %v7746 = vsel %vm2382, %v7743, %v7724
        %v7747 = vsel %vm2382, %v7744, %v7726
        %v7748 = vsel %vm1116, %v7745, %v7734
        %v7749 = vsel %vm1116, %v7746, %v7736
        %v7750 = vsel %vm1116, %v7747, %v7738
        %v7751 = vpack.c.bf16 %v7749, %v7748
        %v7752 = vpack.c.bf16 %v7750, %v7750
        %s7753 = scalar_lea.vmem %s637, 48
        %v7754 = vld [vmem:[%s7753] sm:$0xf]
        %v7755 = vld [vmem:[%s7753 + $0x4] sm:$0xf]
        %v7756 = vld [vmem:[%s7753 + $0x8] sm:$0xf]
        %v7757 = vld [vmem:[%s7753 + $0xc] sm:$0xf]
        %v7758 = vlaneseq
        %v7759 = vshrl.u32 %v7758, 7
        %v7760 = vsub.s32 7, %v7759
        %v7761 = vrot.slane %v4445, %v7760
        %v7766 = vunpack.c.l.b16 %v7754
        %v7767 = vunpack.c.l.b16 %v7755
        %v7768 = vunpack.c.l.b16 %v7756
        %v7769 = vunpack.c.l.b16 %v7757
        %v7770 = vpack.c.b16 %v7767, %v7766
        %v7771 = vpack.c.b16 %v7769, %v7768
        %v7775 = vsel %vm771, %v7751, 0
        %v7778 = vsel %vm771, %v7752, 0
        %7780 = vmatprep.subr.bf16.mxu0 0
        %7781 = vmatpush1.bf16.msra.mxu0 %v7770
        %7782 = vmatprep.subr.bf16.mxu0 0
        %7783 = vmatpush1.bf16.msra.mxu0 %v7771
        %7784 = vmatprep.subr.bf16.mxu0 0
        %7785 = vmatpush1.bf16.msra.mxu0 0
        %7786 = vmatprep.subr.bf16.mxu0 0
        %7787 = vmatpush1.bf16.msra.mxu0 0
        %7788 = vmatprep.subr.bf16.mxu0 0
        %7789 = vmatpush1.bf16.msra.mxu0 0
        %7790 = vmatprep.subr.bf16.mxu0 0
        %7791 = vmatpush1.bf16.msra.mxu0 0
        %7792 = vmatprep.subr.bf16.mxu0 0
        %7793 = vmatpush1.bf16.msra.mxu0 0
        %7794 = vmatprep.subr.bf16.mxu0 0
        %7795 = vmatpush1.bf16.msra.mxu0 0
        %7796 = vmatprep.subr.bf16.mxu0 0
        %7797 = vmatpush1.bf16.msra.mxu0 0
        %7798 = vmatprep.subr.bf16.mxu0 0
        %7799 = vmatpush1.bf16.msra.mxu0 0
        %7800 = vmatprep.subr.bf16.mxu0 0
        %7801 = vmatpush1.bf16.msra.mxu0 0
        %7802 = vmatprep.subr.bf16.mxu0 0
        %7803 = vmatpush1.bf16.msra.mxu0 0
        %7804 = vmatprep.subr.bf16.mxu0 0
        %7805 = vmatpush1.bf16.msra.mxu0 0
        %7806 = vmatprep.subr.bf16.mxu0 0
        %7807 = vmatpush1.bf16.msra.mxu0 0
        %7808 = vmatprep.subr.bf16.mxu0 0
        %7809 = vmatpush1.bf16.msra.mxu0 0
        %7810 = vmatprep.subr.bf16.mxu0 0
        %7811 = vmatpush1.bf16.msra.mxu0 0
        %7812 = vmatprep.mubr.bf16.mxu0 0
        %7813 = vmatmul.mubr.bf16.gmra.mrb[0].mxu0 %v7775
        %v7814 = vpop.f32.mrb[0].mxu0
        %v7815 = vadd.f32 %v7761, %v7814
        %v7816 = vpop.f32.mrb[0].mxu0
        %v7817 = vpop.f32.mrb[0].mxu0
        %v7818 = vadd.f32 %v7761, %v7817
        %v7819 = vpop.f32.mrb[0].mxu0
        %7820 = vmatprep.mubr.bf16.mxu0 0
        %7821 = vmatmul.mubr.bf16.gmra.mrb[0].mxu0 %v7778
        %v7822 = vpop.f32.mrb[0].mxu0
        %v7823 = vadd.f32 %v7761, %v7822
        %v7824 = vpop.f32.mrb[0].mxu0
        %v7825 = vpop.f32.mrb[0].mxu0
        %v7826 = vpop.f32.mrb[0].mxu0
        %7827 = vdwg.mxu0
        %v7828 = vadd.f32 %v6138, %v7815
        %v7829 = vadd.f32 %v6139, %v7818
        %v7830 = vadd.f32 %v6140, %v7823
        %v7831 = vsel %vm771, %v7828, 0.0
        %7832 = vadd.xlane.f32.xlu0 %v7831
        %v7833 = vpop.xlane.xlu0 %7832
        %v7834 = vsel %vm771, %v7829, 0.0
        %7835 = vadd.xlane.f32.xlu0 %v7834
        %v7836 = vpop.xlane.xlu0 %7835
        %v7837 = vsel %vm771, %v7830, 0.0
        %7838 = vadd.xlane.f32.xlu0 %v7837
        %v7839 = vpop.xlane.xlu0 %7838
        %v7840 = vmul.f32 %v7833, %v781
        %v7841 = vmul.f32 %v7836, %v781
        %v7842 = vmul.f32 %v7839, %v781
        %v7843 = vsub.f32 %v7828, %v7840
        %v7844 = vsub.f32 %v7829, %v7841
        %v7845 = vsub.f32 %v7830, %v7842
        %v7846 = vmul.f32 %v7843, %v7843
        %v7847 = vmul.f32 %v7844, %v7844
        %v7848 = vmul.f32 %v7845, %v7845
        %v7849 = vsel %vm771, %v7846, 0.0
        %7850 = vadd.xlane.f32.xlu0 %v7849
        %v7851 = vpop.xlane.xlu0 %7850
        %v7852 = vsel %vm771, %v7847, 0.0
        %7853 = vadd.xlane.f32.xlu0 %v7852
        %v7854 = vpop.xlane.xlu0 %7853
        %v7855 = vsel %vm771, %v7848, 0.0
        %7856 = vadd.xlane.f32.xlu0 %v7855
        %v7857 = vpop.xlane.xlu0 %7856
        %v7858 = vmul.f32 %v7851, %v781
        %v7859 = vmul.f32 %v7854, %v781
        %v7860 = vmul.f32 %v7857, %v781
        %v7861 = vadd.f32 %v7858, 1e-05
        %v7862 = vadd.f32 %v7859, 1e-05
        %v7863 = vadd.f32 %v7860, 1e-05
        %v7864 = vrsqrt.pop %v7861
        %v7865 = vrsqrt.pop %v7862
        %v7866 = vrsqrt.pop %v7863
        %v7867 = vmul.f32 %v7843, %v7864
        %v7868 = vmul.f32 %v7844, %v7865
        %v7869 = vmul.f32 %v7845, %v7866
        %v7870 = vlaneseq
        %v7871 = vshrl.u32 %v7870, 7
        %v7872 = vsub.s32 2, %v7871
        %v7873 = vrot.slane %v4445, %v7872
        %v7874 = vmul.f32 %v7867, %v7873
        %v7875 = vmul.f32 %v7868, %v7873
        %v7876 = vmul.f32 %v7869, %v7873
        %v7877 = vlaneseq
        %v7878 = vshrl.u32 %v7877, 7
        %v7879 = vsub.s32 5, %v7878
        %v7880 = vrot.slane %v4445, %v7879
        %v7881 = vadd.f32 %v7874, %v7880
        %v7882 = vadd.f32 %v7875, %v7880
        %v7883 = vadd.f32 %v7876, %v7880
        %v7884 = vpack.c.bf16 %v7882, %v7881
        %v7885 = vpack.c.bf16 %v7883, %v7883
        %s7886 = scalar_lea.vmem %s644, 16
        %v7887 = vld [vmem:[%s7886] sm:$0xf]
        %v7888 = vld [vmem:[%s7886 + $0x4] sm:$0xf]
        %v7889 = vld [vmem:[%s7886 + $0x8] sm:$0xf]
        %v7890 = vld [vmem:[%s7886 + $0xc] sm:$0xf]
        %v7891 = vlaneseq
        %v7892 = vshrl.u32 %v7891, 7
        %v7893 = vsub.s32 0, %v7892
        %v7894 = vrot.slane %v4446, %v7893
        %v7899 = vunpack.c.l.b16 %v7887
        %v7900 = vunpack.c.l.b16 %v7888
        %v7901 = vunpack.c.l.b16 %v7889
        %v7902 = vunpack.c.l.b16 %v7890
        %v7903 = vpack.c.b16 %v7900, %v7899
        %v7904 = vpack.c.b16 %v7902, %v7901
        %v7908 = vsel %vm771, %v7884, 0
        %v7911 = vsel %vm771, %v7885, 0
        %7913 = vmatprep.subr.bf16.mxu0 0
        %7914 = vmatpush1.bf16.msra.mxu0 %v7903
        %7915 = vmatprep.subr.bf16.mxu0 0
        %7916 = vmatpush1.bf16.msra.mxu0 %v7904
        %7917 = vmatprep.subr.bf16.mxu0 0
        %7918 = vmatpush1.bf16.msra.mxu0 0
        %7919 = vmatprep.subr.bf16.mxu0 0
        %7920 = vmatpush1.bf16.msra.mxu0 0
        %7921 = vmatprep.subr.bf16.mxu0 0
        %7922 = vmatpush1.bf16.msra.mxu0 0
        %7923 = vmatprep.subr.bf16.mxu0 0
        %7924 = vmatpush1.bf16.msra.mxu0 0
        %7925 = vmatprep.subr.bf16.mxu0 0
        %7926 = vmatpush1.bf16.msra.mxu0 0
        %7927 = vmatprep.subr.bf16.mxu0 0
        %7928 = vmatpush1.bf16.msra.mxu0 0
        %7929 = vmatprep.subr.bf16.mxu0 0
        %7930 = vmatpush1.bf16.msra.mxu0 0
        %7931 = vmatprep.subr.bf16.mxu0 0
        %7932 = vmatpush1.bf16.msra.mxu0 0
        %7933 = vmatprep.subr.bf16.mxu0 0
        %7934 = vmatpush1.bf16.msra.mxu0 0
        %7935 = vmatprep.subr.bf16.mxu0 0
        %7936 = vmatpush1.bf16.msra.mxu0 0
        %7937 = vmatprep.subr.bf16.mxu0 0
        %7938 = vmatpush1.bf16.msra.mxu0 0
        %7939 = vmatprep.subr.bf16.mxu0 0
        %7940 = vmatpush1.bf16.msra.mxu0 0
        %7941 = vmatprep.subr.bf16.mxu0 0
        %7942 = vmatpush1.bf16.msra.mxu0 0
        %7943 = vmatprep.subr.bf16.mxu0 0
        %7944 = vmatpush1.bf16.msra.mxu0 0
        %7945 = vmatprep.mubr.bf16.mxu0 0
        %7946 = vmatmul.mubr.bf16.gmra.mrb[0].mxu0 %v7908
        %v7947 = vpop.f32.mrb[0].mxu0
        %v7948 = vadd.f32 %v7894, %v7947
        %v7949 = vpop.f32.mrb[0].mxu0
        %v7950 = vpop.f32.mrb[0].mxu0
        %v7951 = vadd.f32 %v7894, %v7950
        %v7952 = vpop.f32.mrb[0].mxu0
        %7953 = vmatprep.mubr.bf16.mxu0 0
        %7954 = vmatmul.mubr.bf16.gmra.mrb[0].mxu0 %v7911
        %v7955 = vpop.f32.mrb[0].mxu0
        %v7956 = vadd.f32 %v7894, %v7955
        %v7957 = vpop.f32.mrb[0].mxu0
        %v7958 = vpop.f32.mrb[0].mxu0
        %v7959 = vpop.f32.mrb[0].mxu0
        %7960 = vdwg.mxu0
        %v7961 = vmul.f32 %v7948, %v7948
        %v7962 = vmul.f32 %v7951, %v7951
        %v7963 = vmul.f32 %v7956, %v7956
        %v7964 = vmul.f32 %v7948, %v7961
        %v7965 = vmul.f32 %v7951, %v7962
        %v7966 = vmul.f32 %v7956, %v7963
        %v7967 = vmul.f32 %v7964, 0.044715
        %v7968 = vmul.f32 %v7965, 0.044715
        %v7969 = vmul.f32 %v7966, 0.044715
        %v7970 = vadd.f32 %v7948, %v7967
        %v7971 = vadd.f32 %v7951, %v7968
        %v7972 = vadd.f32 %v7956, %v7969
        %v7973 = vmul.f32 %v7970, 0.7978846
        %v7974 = vmul.f32 %v7971, 0.7978846
        %v7975 = vmul.f32 %v7972, 0.7978846
        %v7976 = vtanh.pop %v7973
        %v7977 = vtanh.pop %v7974
        %v7978 = vtanh.pop %v7975
        %v7979 = vadd.f32 %v7976, 1.0
        %v7980 = vadd.f32 %v7977, 1.0
        %v7981 = vadd.f32 %v7978, 1.0
        %v7982 = vmul.f32 %v7979, 0.5
        %v7983 = vmul.f32 %v7980, 0.5
        %v7984 = vmul.f32 %v7981, 0.5
        %v7985 = vmul.f32 %v7948, %v7982
        %v7986 = vmul.f32 %v7951, %v7983
        %v7987 = vmul.f32 %v7956, %v7984
        %v7988 = vpack.c.bf16 %v7986, %v7985
        %v7989 = vpack.c.bf16 %v7987, %v7987
        %s7990 = scalar_lea.vmem %s651, 64
        %v7991 = vld [vmem:[%s7990] sm:$0xf]
        %v7992 = vld [vmem:[%s7990 + $0x4] sm:$0xf]
        %v7993 = vld [vmem:[%s7990 + $0x8] sm:$0xf]
        %v7994 = vld [vmem:[%s7990 + $0xc] sm:$0xf]
        %v7995 = vld [vmem:[%s7990 + $0x10] sm:$0xf]
        %v7996 = vld [vmem:[%s7990 + $0x14] sm:$0xf]
        %v7997 = vld [vmem:[%s7990 + $0x18] sm:$0xf]
        %v7998 = vld [vmem:[%s7990 + $0x1c] sm:$0xf]
        %v7999 = vld [vmem:[%s7990 + $0x20] sm:$0xf]
        %v8000 = vld [vmem:[%s7990 + $0x24] sm:$0xf]
        %v8001 = vld [vmem:[%s7990 + $0x28] sm:$0xf]
        %v8002 = vld [vmem:[%s7990 + $0x2c] sm:$0xf]
        %v8003 = vld [vmem:[%s7990 + $0x30] sm:$0xf]
        %v8004 = vld [vmem:[%s7990 + $0x34] sm:$0xf]
        %v8005 = vld [vmem:[%s7990 + $0x38] sm:$0xf]
        %v8006 = vld [vmem:[%s7990 + $0x3c] sm:$0xf]
        %v8023 = vunpack.c.l.b16 %v7991
        %v8024 = vunpack.c.l.b16 %v7992
        %v8025 = vunpack.c.l.b16 %v7993
        %v8026 = vunpack.c.l.b16 %v7994
        %v8027 = vunpack.c.l.b16 %v7995
        %v8028 = vunpack.c.l.b16 %v7996
        %v8029 = vunpack.c.l.b16 %v7997
        %v8030 = vunpack.c.l.b16 %v7998
        %v8031 = vunpack.c.l.b16 %v7999
        %v8032 = vunpack.c.l.b16 %v8000
        %v8033 = vunpack.c.l.b16 %v8001
        %v8034 = vunpack.c.l.b16 %v8002
        %v8035 = vunpack.c.l.b16 %v8003
        %v8036 = vunpack.c.l.b16 %v8004
        %v8037 = vunpack.c.l.b16 %v8005
        %v8038 = vunpack.c.l.b16 %v8006
        %v8039 = vpack.c.b16 %v8024, %v8023
        %v8040 = vpack.c.b16 %v8026, %v8025
        %v8041 = vpack.c.b16 %v8028, %v8027
        %v8042 = vpack.c.b16 %v8030, %v8029
        %v8043 = vpack.c.b16 %v8032, %v8031
        %v8044 = vpack.c.b16 %v8034, %v8033
        %v8045 = vpack.c.b16 %v8036, %v8035
        %v8046 = vpack.c.b16 %v8038, %v8037
        %8055 = vmatprep.subr.bf16.mxu0 0
        %8056 = vmatpush1.bf16.msra.mxu0 %v8039
        %8057 = vmatprep.subr.bf16.mxu0 0
        %8058 = vmatpush1.bf16.msra.mxu0 %v8040
        %8059 = vmatprep.subr.bf16.mxu0 0
        %8060 = vmatpush1.bf16.msra.mxu0 %v8041
        %8061 = vmatprep.subr.bf16.mxu0 0
        %8062 = vmatpush1.bf16.msra.mxu0 %v8042
        %8063 = vmatprep.subr.bf16.mxu0 0
        %8064 = vmatpush1.bf16.msra.mxu0 %v8043
        %8065 = vmatprep.subr.bf16.mxu0 0
        %8066 = vmatpush1.bf16.msra.mxu0 %v8044
        %8067 = vmatprep.subr.bf16.mxu0 0
        %8068 = vmatpush1.bf16.msra.mxu0 %v8045
        %8069 = vmatprep.subr.bf16.mxu0 0
        %8070 = vmatpush1.bf16.msra.mxu0 %v8046
        %8071 = vmatprep.subr.bf16.mxu0 0
        %8072 = vmatpush1.bf16.msra.mxu0 0
        %8073 = vmatprep.subr.bf16.mxu0 0
        %8074 = vmatpush1.bf16.msra.mxu0 0
        %8075 = vmatprep.subr.bf16.mxu0 0
        %8076 = vmatpush1.bf16.msra.mxu0 0
        %8077 = vmatprep.subr.bf16.mxu0 0
        %8078 = vmatpush1.bf16.msra.mxu0 0
        %8079 = vmatprep.subr.bf16.mxu0 0
        %8080 = vmatpush1.bf16.msra.mxu0 0
        %8081 = vmatprep.subr.bf16.mxu0 0
        %8082 = vmatpush1.bf16.msra.mxu0 0
        %8083 = vmatprep.subr.bf16.mxu0 0
        %8084 = vmatpush1.bf16.msra.mxu0 0
        %8085 = vmatprep.subr.bf16.mxu0 0
        %8086 = vmatpush1.bf16.msra.mxu0 0
        %8087 = vmatprep.mubr.bf16.mxu0 0
        %8088 = vmatmul.mubr.bf16.gmra.mrb[0].mxu0 %v7988
        %v8089 = vpop.f32.mrb[0].mxu0
        %v8090 = vadd.f32 0.0, %v8089
        %v8091 = vpop.f32.mrb[0].mxu0
        %v8092 = vpop.f32.mrb[0].mxu0
        %v8093 = vadd.f32 0.0, %v8092
        %v8094 = vpop.f32.mrb[0].mxu0
        %8095 = vmatprep.mubr.bf16.mxu0 0
        %8096 = vmatmul.mubr.bf16.gmra.mrb[0].mxu0 %v7989
        %v8097 = vpop.f32.mrb[0].mxu0
        %v8098 = vadd.f32 0.0, %v8097
        %v8099 = vpop.f32.mrb[0].mxu0
        %v8100 = vpop.f32.mrb[0].mxu0
        %v8101 = vpop.f32.mrb[0].mxu0
        %8102 = vdwg.mxu0
        %v8103 = vadd.f32 %v7828, %v8090
        %v8104 = vadd.f32 %v7829, %v8093
        %v8105 = vadd.f32 %v7830, %v8098
        %v8106 = vlaneseq
        %v8107 = vshrl.u32 %v8106, 7
        %v8108 = vsub.s32 1, %v8107
        %v8109 = vrot.slane %v4446, %v8108
        %v8110 = vadd.f32 %v8103, %v8109
        %v8111 = vadd.f32 %v8104, %v8109
        %v8112 = vadd.f32 %v8105, %v8109
        %8113 = vst.msk [vmem:[%s664] sm:$0xff] %vm771, %v8110
        %8114 = vst.msk [vmem:[%s664 + $0x8] sm:$0xff] %vm771, %v8111
        %8115 = vst.msk [vmem:[%s664 + $0x10] sm:$0xff] %vm771, %v8112
        // Predicated region
        $region81: #{layer_estimator_forward.1} parent=75 // pred_check
          %p8116 = pneg %p666
        $region82: #{layer_estimator_forward.1} parent=75 // pred_check_branch
          %8118 = sbr.rel (%p8116) target = $region84
        $region83: #{layer_estimator_forward.1} parent=75 // pred_region
          %v8119 = vld [vmem:[%s10] sm:$0x3]
          %v8121 = vsel %vm1055, %v8119, 0
          %8123 = vmatprep.subr.mxu0 0.0
          %8124 = vmatpush1.msra.mxu0 %v8112
          %8125 = vmatprep.subr.mxu0 0.0
          %8126 = vmatpush1.msra.mxu0 0.0
          %8127 = vmatprep.subr.mxu0 0.0
          %8128 = vmatpush1.msra.mxu0 0.0
          %8129 = vmatprep.subr.mxu0 0.0
          %8130 = vmatpush1.msra.mxu0 0.0
          %8131 = vmatprep.subr.mxu0 0.0
          %8132 = vmatpush1.msra.mxu0 0.0
          %8133 = vmatprep.subr.mxu0 0.0
          %8134 = vmatpush1.msra.mxu0 0.0
          %8135 = vmatprep.subr.mxu0 0.0
          %8136 = vmatpush1.msra.mxu0 0.0
          %8137 = vmatprep.subr.mxu0 0.0
          %8138 = vmatpush1.msra.mxu0 0.0
          %8139 = vmatprep.subr.mxu0 0.0
          %8140 = vmatpush1.msra.mxu0 0.0
          %8141 = vmatprep.subr.mxu0 0.0
          %8142 = vmatpush1.msra.mxu0 0.0
          %8143 = vmatprep.subr.mxu0 0.0
          %8144 = vmatpush1.msra.mxu0 0.0
          %8145 = vmatprep.subr.mxu0 0.0
          %8146 = vmatpush1.msra.mxu0 0.0
          %8147 = vmatprep.subr.mxu0 0.0
          %8148 = vmatpush1.msra.mxu0 0.0
          %8149 = vmatprep.subr.mxu0 0.0
          %8150 = vmatpush1.msra.mxu0 0.0
          %8151 = vmatprep.subr.mxu0 0.0
          %8152 = vmatpush1.msra.mxu0 0.0
          %8153 = vmatprep.subr.mxu0 0.0
          %8154 = vmatpush1.msra.mxu0 0.0
          %8155 = vmatprep.subr.mxu0 0.0
          %8156 = vmatpush1.msra.mxu0 0.0
          %8157 = vmatprep.subr.mxu0 0.0
          %8158 = vmatpush1.msra.mxu0 0.0
          %8159 = vmatprep.subr.mxu0 0.0
          %8160 = vmatpush1.msra.mxu0 0.0
          %8161 = vmatprep.subr.mxu0 0.0
          %8162 = vmatpush1.msra.mxu0 0.0
          %8163 = vmatprep.subr.mxu0 0.0
          %8164 = vmatpush1.msra.mxu0 0.0
          %8165 = vmatprep.subr.mxu0 0.0
          %8166 = vmatpush1.msra.mxu0 0.0
          %8167 = vmatprep.subr.mxu0 0.0
          %8168 = vmatpush1.msra.mxu0 0.0
          %8169 = vmatprep.subr.mxu0 0.0
          %8170 = vmatpush1.msra.mxu0 0.0
          %8171 = vmatprep.subr.mxu0 0.0
          %8172 = vmatpush1.msra.mxu0 0.0
          %8173 = vmatprep.subr.mxu0 0.0
          %8174 = vmatpush1.msra.mxu0 0.0
          %8175 = vmatprep.subr.mxu0 0.0
          %8176 = vmatpush1.msra.mxu0 0.0
          %8177 = vmatprep.subr.mxu0 0.0
          %8178 = vmatpush1.msra.mxu0 0.0
          %8179 = vmatprep.subr.mxu0 0.0
          %8180 = vmatpush1.msra.mxu0 0.0
          %8181 = vmatprep.subr.mxu0 0.0
          %8182 = vmatpush1.msra.mxu0 0.0
          %8183 = vmatprep.subr.mxu0 0.0
          %8184 = vmatpush1.msra.mxu0 0.0
          %8185 = vmatprep.subr.mxu0 0.0
          %8186 = vmatpush1.msra.mxu0 0.0
          %8187 = vmatprep.mubr.f32.mxu0 0.0
          %8188 = vmatmul.mubr.f32.gmra.mrb[0].mxu0 %v8121
          %v8189 = vpop.f32.mrb[0].mxu0
          %v8190 = vadd.f32 0.0, %v8189
          %v8191 = vpop.f32.mrb[0].mxu0
          %8192 = vdwg.mxu0
          %v8193 = vld [vmem:[%s11] sm:$0x1]
          %v8194 = vld [vmem:[%s11 + $0x1] sm:$0x1]
          %vm8195 = vcmask 254976
          %v8196 = vsel %vm8195, %v8190, 0.0
          %8197 = vadd.xlane.f32.xlu0 %v8196
          %v8198 = vpop.xlane.xlu0 %8197
          %v8199 = vmul.f32 %v8198, %v781
          %v8200 = vsub.f32 %v8190, %v8199
          %v8201 = vmul.f32 %v8200, %v8200
          %v8202 = vsel %vm8195, %v8201, 0.0
          %8203 = vadd.xlane.f32.xlu0 %v8202
          %v8204 = vpop.xlane.xlu0 %8203
          %v8205 = vmul.f32 %v8204, %v781
          %v8206 = vadd.f32 %v8205, 1e-05
          %v8207 = vrsqrt.pop %v8206
          %v8208 = vmul.f32 %v8200, %v8207
          %v8209 = vlaneseq
          %v8210 = vshrl.u32 %v8209, 7
          %v8211 = vsub.s32 0, %v8210
          %v8212 = vrot.slane %v8193, %v8211
          %v8213 = vmul.f32 %v8208, %v8212
          %v8214 = vlaneseq
          %v8215 = vshrl.u32 %v8214, 7
          %v8216 = vsub.s32 0, %v8215
          %v8217 = vrot.slane %v8194, %v8216
          %v8218 = vadd.f32 %v8213, %v8217
          %v8219 = vld [vmem:[%s12] sm:$0xff]
          %v8220 = vld [vmem:[%s12 + $0x8] sm:$0xff]
          %v8221 = vld [vmem:[%s12 + $0x10] sm:$0xff]
          %v8222 = vld [vmem:[%s12 + $0x18] sm:$0xff]
          %v8223 = vld [vmem:[%s13] sm:$0x1]
          %v8225 = vlaneseq
          %v8226 = vshrl.u32 %v8225, 7
          %v8227 = vsub.s32 0, %v8226
          %v8228 = vrot.slane %v8223, %v8227
          %v8231 = vsel %vm771, %v8218, 0
          %8233 = vmatprep.subr.mxu0 0.0
          %8234 = vmatpush1.msra.mxu0 %v8219
          %8235 = vmatprep.subr.mxu0 0.0
          %8236 = vmatpush1.msra.mxu0 %v8220
          %8237 = vmatprep.subr.mxu0 0.0
          %8238 = vmatpush1.msra.mxu0 %v8221
          %8239 = vmatprep.subr.mxu0 0.0
          %8240 = vmatpush1.msra.mxu0 %v8222
          %8241 = vmatprep.subr.mxu0 0.0
          %8242 = vmatpush1.msra.mxu0 0.0
          %8243 = vmatprep.subr.mxu0 0.0
          %8244 = vmatpush1.msra.mxu0 0.0
          %8245 = vmatprep.subr.mxu0 0.0
          %8246 = vmatpush1.msra.mxu0 0.0
          %8247 = vmatprep.subr.mxu0 0.0
          %8248 = vmatpush1.msra.mxu0 0.0
          %8249 = vmatprep.subr.mxu0 0.0
          %8250 = vmatpush1.msra.mxu0 0.0
          %8251 = vmatprep.subr.mxu0 0.0
          %8252 = vmatpush1.msra.mxu0 0.0
          %8253 = vmatprep.subr.mxu0 0.0
          %8254 = vmatpush1.msra.mxu0 0.0
          %8255 = vmatprep.subr.mxu0 0.0
          %8256 = vmatpush1.msra.mxu0 0.0
          %8257 = vmatprep.subr.mxu0 0.0
          %8258 = vmatpush1.msra.mxu0 0.0
          %8259 = vmatprep.subr.mxu0 0.0
          %8260 = vmatpush1.msra.mxu0 0.0
          %8261 = vmatprep.subr.mxu0 0.0
          %8262 = vmatpush1.msra.mxu0 0.0
          %8263 = vmatprep.subr.mxu0 0.0
          %8264 = vmatpush1.msra.mxu0 0.0
          %8265 = vmatprep.subr.mxu0 0.0
          %8266 = vmatpush1.msra.mxu0 0.0
          %8267 = vmatprep.subr.mxu0 0.0
          %8268 = vmatpush1.msra.mxu0 0.0
          %8269 = vmatprep.subr.mxu0 0.0
          %8270 = vmatpush1.msra.mxu0 0.0
          %8271 = vmatprep.subr.mxu0 0.0
          %8272 = vmatpush1.msra.mxu0 0.0
          %8273 = vmatprep.subr.mxu0 0.0
          %8274 = vmatpush1.msra.mxu0 0.0
          %8275 = vmatprep.subr.mxu0 0.0
          %8276 = vmatpush1.msra.mxu0 0.0
          %8277 = vmatprep.subr.mxu0 0.0
          %8278 = vmatpush1.msra.mxu0 0.0
          %8279 = vmatprep.subr.mxu0 0.0
          %8280 = vmatpush1.msra.mxu0 0.0
          %8281 = vmatprep.subr.mxu0 0.0
          %8282 = vmatpush1.msra.mxu0 0.0
          %8283 = vmatprep.subr.mxu0 0.0
          %8284 = vmatpush1.msra.mxu0 0.0
          %8285 = vmatprep.subr.mxu0 0.0
          %8286 = vmatpush1.msra.mxu0 0.0
          %8287 = vmatprep.subr.mxu0 0.0
          %8288 = vmatpush1.msra.mxu0 0.0
          %8289 = vmatprep.subr.mxu0 0.0
          %8290 = vmatpush1.msra.mxu0 0.0
          %8291 = vmatprep.subr.mxu0 0.0
          %8292 = vmatpush1.msra.mxu0 0.0
          %8293 = vmatprep.subr.mxu0 0.0
          %8294 = vmatpush1.msra.mxu0 0.0
          %8295 = vmatprep.subr.mxu0 0.0
          %8296 = vmatpush1.msra.mxu0 0.0
          %8297 = vmatprep.mubr.f32.mxu0 0.0
          %8298 = vmatmul.mubr.f32.gmra.mrb[0].mxu0 %v8231
          %v8299 = vpop.f32.mrb[0].mxu0
          %v8300 = vadd.f32 %v8228, %v8299
          %v8301 = vpop.f32.mrb[0].mxu0
          %8302 = vdwg.mxu0
          %vm8303 = vcmask 33792
          %v8304 = vsel %vm8303, %v8300, -inf
          %8305 = vmax.xlane.f32.xlu0 %v8304
          %v8306 = vpop.xlane.xlu0 %8305
          %v8307 = vsub.f32 %v8300, %v8306
          %v8308 = vmul.f32 %v8307, 1.442695
          %v8309 = vpow.pop %v8308
          %v8310 = vsel %vm8303, %v8309, 0.0
          %8311 = vadd.xlane.f32.xlu0 %v8310
          %v8312 = vpop.xlane.xlu0 %8311
          %v8313 = vrcp.pop %v8312
          %v8314 = vmul.f32 %v8309, %v8313
          %8315 = vst.msk [vmem:[%s613] sm:$0x3] %vm8303, %v8314
        $region84: #{layer_estimator_forward.1} parent=75 // pred_fallthru
          _
        %p8316 = scmp.lt.s32.totalorder %s34, 1
        %s8317 = scalar_select %p8316, %s34, 1
        %s8318 = smul.addr %s8317, 3
        %s8319 = smul.addr %s8318, 8
        %s8320 = scalar_lea.vmem %s14, %s8319
        %s8321 = sand.u32 %s405, 1
        %s8322 = scalar_lea.sflag [#allocation4], %s8321
        %s8323 = sand.u32 %s405, 1
        %s8324 = smul.addr %s8323, 2
        %s8325 = scalar_lea.vmem [#allocation3], %s8324
        // Predicated region
        $region85: #{layer_estimator_forward.1} parent=75 // pred_check
          %p8326 = pneg %p389
        $region86: #{layer_estimator_forward.1} parent=75 // pred_check_branch
          %8328 = sbr.rel (%p8326) target = $region88
        $region87: #{layer_estimator_forward.1} parent=75 // pred_region
          _
        $region88: #{layer_estimator_forward.1} parent=75 // pred_fallthru
          _
        // Predicated region
        $region89: #{layer_estimator_forward.1} parent=75 // pred_check
          %p8329 = pneg %p415
        $region90: #{layer_estimator_forward.1} parent=75 // pred_check_branch
          %8331 = sbr.rel (%p8329) target = $region92
        $region91: #{layer_estimator_forward.1} parent=75 // pred_region
          %s8333 = ssub.s32 32, 32
          %8334 = vsyncadd %s8322, %s8333
          %s8335 = smul.addr %s34, 32
          %s8336 = scalar_lea.hbm %s15, %s8335
          %s8338 = sshll.u32 %s8325, 4
          %s8339 = int_to_ptr.vmem [resolvable:$true] %s8338
          %8341 = dma.vmem_to_hbm [thread:$0]  %s8339, 32, %s8336, %s8322
        $region92: #{layer_estimator_forward.1} parent=75 // pred_fallthru
          _
      $region76: #{layer_estimator_forward.1} parent=5 // pred_fallthru
        _
      %p8342 = scmp.le.s32.totalorder 2, %s25
      // Predicated region
      $region93: #{layer_estimator_forward.1} parent=5 // pred_check
        %p8343 = pneg %p8342
      $region94: #{layer_estimator_forward.1} parent=5 // pred_check_branch
        %8345 = sbr.rel (%p8343) target = $region96
      $region95: #{layer_estimator_forward.1} parent=5 // pred_region
        %s8346 = ssub.s32 %s25, 2
        // Predicated region
        $region97: #{layer_estimator_forward.1} parent=95 // pred_check
          %p8347 = pneg %p395
        $region98: #{layer_estimator_forward.1} parent=95 // pred_check_branch
          %8349 = sbr.rel (%p8347) target = $region100
        $region99: #{layer_estimator_forward.1} parent=95 // pred_region
          %p8350 = scmp.lt.s32.totalorder %s36, 1
          %s8351 = scalar_select %p8350, %s36, 1
          %s8352 = smul.addr %s8351, 3
          %s8353 = smul.addr %s8352, 8
          %s8354 = scalar_lea.vmem %s14, %s8353
        $region100: #{layer_estimator_forward.1} parent=95 // pred_fallthru
          _
        // Predicated region
        $region101: #{layer_estimator_forward.1} parent=95 // pred_check
          %p8355 = pneg %p421
        $region102: #{layer_estimator_forward.1} parent=95 // pred_check_branch
          %8357 = sbr.rel (%p8355) target = $region104
        $region103: #{layer_estimator_forward.1} parent=95 // pred_region
          %s8358 = sand.u32 %s406, 1
          %s8359 = scalar_lea.sflag [#allocation4], %s8358
          %s8360 = sand.u32 %s406, 1
          %s8361 = smul.addr %s8360, 2
          %s8362 = scalar_lea.vmem [#allocation3], %s8361
          %8363 = dma.done %s8359, 32
        $region104: #{layer_estimator_forward.1} parent=95 // pred_fallthru
          _
      $region96: #{layer_estimator_forward.1} parent=5 // pred_fallthru
        _
    $region6: #{layer_estimator_forward.1} parent=1 // loop_footer
      %s29 = sadd.s32 1, %s25
    $region7: #{layer_estimator_forward.1} parent=1 // loop_footer_branch
      %24 = sbr.rel target = $region3
    $region8: #{layer_estimator_forward.1} parent=1 // loop_exit
      _
    %8364 = vsyncpa [#allocation4], 1
    %s8365 = scalar_lea.sflag [#allocation4], 1
    %8366 = vsyncpa %s8365, 1

</llo_original>
